<compile_context>
chip_gen: v5e
topology: v5e:2x2
jax: 0.10.0
libtpu: 0.0.40
codegen_flags: <defaults>
</compile_context>

<pallas_src>
import functools

import jax
import jax.numpy as jnp
from jax.experimental import pallas as pl
from jax.experimental.pallas import tpu as pltpu

EPS = 1e-5
TN = 128  # output-channel block width (lane-dense, one MXU tile wide)


def _ceil_to(x, m):
    return ((x + m - 1) // m) * m


# -----------------------------------------------------------------------------
# Shared fused epilogue: bias already added; BatchNorm (biased batch variance,
# two-pass form) + ReLU, all in f32 (v5e has no bf16 VPU path).
# -----------------------------------------------------------------------------
def _bn_relu_store(y, g, t, o_ref, inv_p):
    mean = jnp.sum(y, axis=0, keepdims=True) * inv_p
    d = y - mean
    var = jnp.sum(d * d, axis=0, keepdims=True) * inv_p
    scale = jax.lax.rsqrt(var + EPS) * g
    o_ref[...] = jnp.maximum(d * scale + t, 0.0)


# -----------------------------------------------------------------------------
# Kernel 1: dense (1x1 conv) fused matmul + bias + BN + ReLU.
#   x: (P, K) bf16 (full K resident), w: (K, TN) bf16 block,
#   b/g/t: (1, TN) f32, o: (P, TN) f32.  Grid = Cout blocks, "parallel".
# -----------------------------------------------------------------------------
def _dense_kernel(x_ref, w_ref, b_ref, g_ref, t_ref, o_ref, *, inv_p):
    y = jnp.dot(x_ref[...], w_ref[...],
                preferred_element_type=jnp.float32) + b_ref[...]
    _bn_relu_store(y, g_ref[...], t_ref[...], o_ref, inv_p)


def dense_conv_bn_relu(x2d, w2d, b, gamma, beta):
    """x2d: (P, K), w2d: (K, Cout) -> (P, Cout) f32."""
    P, K = x2d.shape
    Cout = w2d.shape[1]
    Cp = _ceil_to(Cout, TN)

    xb = x2d.astype(jnp.bfloat16)
    wb = jnp.pad(w2d, ((0, 0), (0, Cp - Cout))).astype(jnp.bfloat16)
    bp = jnp.pad(b, (0, Cp - Cout)).astype(jnp.float32).reshape(1, Cp)
    gp = jnp.pad(gamma, (0, Cp - Cout)).astype(jnp.float32).reshape(1, Cp)
    tp = jnp.pad(beta, (0, Cp - Cout)).astype(jnp.float32).reshape(1, Cp)

    out = pl.pallas_call(
        functools.partial(_dense_kernel, inv_p=1.0 / P),
        out_shape=jax.ShapeDtypeStruct((P, Cp), jnp.float32),
        grid_spec=pltpu.PrefetchScalarGridSpec(
            num_scalar_prefetch=0,
            grid=(Cp // TN,),
            in_specs=[
                pl.BlockSpec((P, K), lambda i: (0, 0)),
                pl.BlockSpec((K, TN), lambda i: (0, i)),
                pl.BlockSpec((1, TN), lambda i: (0, i)),
                pl.BlockSpec((1, TN), lambda i: (0, i)),
                pl.BlockSpec((1, TN), lambda i: (0, i)),
            ],
            out_specs=pl.BlockSpec((P, TN), lambda i: (0, i)),
        ),
        compiler_params=pltpu.CompilerParams(
            dimension_semantics=("parallel",)),
    )(xb, wb, bp, gp, tp)
    return out[:, :Cout]


# -----------------------------------------------------------------------------
# Kernel 2: 7-tap (1x7 / 7x1) conv fused matmul + bias + BN + ReLU.
#   x rows are ordered (padded_conv_axis, group) with `group` = product of the
#   other spatial dims * N; the 3 zero row-groups on each side implement the
#   conv padding.  Tap j contributes rows [j*group, j*group + P) so the whole
#   conv is 7 shifted static row-slice matmuls into a resident accumulator.
# -----------------------------------------------------------------------------
def _taps_kernel(x_ref, w_ref, b_ref, g_ref, t_ref, o_ref, *,
                 n_taps, group, out_rows, inv_p):
    acc = jnp.dot(x_ref[0:out_rows, :], w_ref[0],
                  preferred_element_type=jnp.float32)
    for j in range(1, n_taps):
        lo = j * group
        acc = acc + jnp.dot(x_ref[lo:lo + out_rows, :], w_ref[j],
                            preferred_element_type=jnp.float32)
    _bn_relu_store(acc + b_ref[...], g_ref[...], t_ref[...], o_ref, inv_p)


def taps_conv_bn_relu(x_rows, w_taps, b, gamma, beta, group):
    """x_rows: ((S + taps - 1) * group, Cin) zero-padded rows,
    w_taps: (taps, Cin, Cout) -> (S * group, Cout) f32."""
    R, Cin = x_rows.shape
    n_taps, _, Cout = w_taps.shape
    P = R - (n_taps - 1) * group
    Cp = _ceil_to(Cout, TN)

    xb = x_rows.astype(jnp.bfloat16)
    wb = jnp.pad(w_taps, ((0, 0), (0, 0), (0, Cp - Cout))).astype(jnp.bfloat16)
    bp = jnp.pad(b, (0, Cp - Cout)).astype(jnp.float32).reshape(1, Cp)
    gp = jnp.pad(gamma, (0, Cp - Cout)).astype(jnp.float32).reshape(1, Cp)
    tp = jnp.pad(beta, (0, Cp - Cout)).astype(jnp.float32).reshape(1, Cp)

    out = pl.pallas_call(
        functools.partial(_taps_kernel, n_taps=n_taps, group=group,
                          out_rows=P, inv_p=1.0 / P),
        out_shape=jax.ShapeDtypeStruct((P, Cp), jnp.float32),
        grid_spec=pltpu.PrefetchScalarGridSpec(
            num_scalar_prefetch=0,
            grid=(Cp // TN,),
            in_specs=[
                pl.BlockSpec((R, Cin), lambda i: (0, 0)),
                pl.BlockSpec((n_taps, Cin, TN), lambda i: (0, 0, i)),
                pl.BlockSpec((1, TN), lambda i: (0, i)),
                pl.BlockSpec((1, TN), lambda i: (0, i)),
                pl.BlockSpec((1, TN), lambda i: (0, i)),
            ],
            out_specs=pl.BlockSpec((P, TN), lambda i: (0, i)),
        ),
        compiler_params=pltpu.CompilerParams(
            dimension_semantics=("parallel",)),
    )(xb, wb, bp, gp, tp)
    return out[:, :Cout]


# -----------------------------------------------------------------------------
# Conv block wrappers (layout glue in plain JAX, compute in Pallas)
# -----------------------------------------------------------------------------
def conv_1x7_bn_relu(x_nhwc, p):
    """Conv (1,7), padding (0,3) + BN + ReLU."""
    N, H, W, C = x_nhwc.shape
    cout = p["w"].shape[0]
    g = N * H
    xt = jnp.transpose(x_nhwc, (2, 0, 1, 3)).reshape(W, g, C)       # (W, N*H, C)
    xt = jnp.pad(xt, ((3, 3), (0, 0), (0, 0))).reshape((W + 6) * g, C)
    w_taps = jnp.transpose(p["w"][:, :, 0, :], (2, 1, 0))           # (7, C, cout)
    y = taps_conv_bn_relu(xt, w_taps, p["b"], p["gamma"], p["beta"], group=g)
    return jnp.transpose(y.reshape(W, N, H, cout), (1, 2, 0, 3))    # NHWC


def conv_7x1_bn_relu(x_nhwc, p):
    """Conv (7,1), padding (3,0) + BN + ReLU."""
    N, H, W, C = x_nhwc.shape
    cout = p["w"].shape[0]
    g = N * W
    xt = jnp.transpose(x_nhwc, (1, 0, 2, 3)).reshape(H, g, C)       # (H, N*W, C)
    xt = jnp.pad(xt, ((3, 3), (0, 0), (0, 0))).reshape((H + 6) * g, C)
    w_taps = jnp.transpose(p["w"][:, :, :, 0], (2, 1, 0))           # (7, C, cout)
    y = taps_conv_bn_relu(xt, w_taps, p["b"], p["gamma"], p["beta"], group=g)
    return jnp.transpose(y.reshape(H, N, W, cout), (1, 0, 2, 3))    # NHWC


# -----------------------------------------------------------------------------
# Inception_B forward
# -----------------------------------------------------------------------------
CONV_SPECS = {  # name: (cin, cout, kh, kw, ph, pw)
    "c12": (1024, 128, 1, 1, 0, 0),
    "c21": (1024, 384, 1, 1, 0, 0),
    "c31": (1024, 192, 1, 1, 0, 0),
    "c32": (192, 224, 1, 7, 0, 3),
    "c33": (224, 256, 1, 7, 0, 3),
    "c41": (1024, 192, 1, 1, 0, 0),
    "c42": (192, 192, 1, 7, 0, 3),
    "c43": (192, 224, 7, 1, 3, 0),
    "c44": (224, 224, 1, 7, 0, 3),
    "c45": (224, 256, 7, 1, 3, 0),
}

_HEAD = ("c12", "c21", "c31", "c41")   # the four 1x1 branch-head convs


def inception_b_forward(x_nchw, params):
    x = jnp.transpose(x_nchw, (0, 2, 3, 1))            # NCHW -> NHWC
    N, H, W, C = x.shape
    P = N * H * W

    # AvgPool2d((1,1), stride=1) in branch 1 is an identity -> elided.
    # Fused 1x1 branch heads (c12 | c21 | c31 | c41) as a single matmul.
    w_cat = jnp.concatenate([params[n]["w"][:, :, 0, 0].T for n in _HEAD], 1)
    b_cat = jnp.concatenate([params[n]["b"] for n in _HEAD])
    g_cat = jnp.concatenate([params[n]["gamma"] for n in _HEAD])
    t_cat = jnp.concatenate([params[n]["beta"] for n in _HEAD])
    y = dense_conv_bn_relu(x.reshape(P, C), w_cat, b_cat, g_cat, t_cat)

    heads, off = [], 0
    for n in _HEAD:
        co = CONV_SPECS[n][1]
        heads.append(y[:, off:off + co].reshape(N, H, W, co))
        off += co
    x1, x2, x3, x4 = heads

    # branch 3
    x3 = conv_1x7_bn_relu(x3, params["c32"])
    x3 = conv_1x7_bn_relu(x3, params["c33"])
    # branch 4
    x4 = conv_1x7_bn_relu(x4, params["c42"])
    x4 = conv_7x1_bn_relu(x4, params["c43"])
    x4 = conv_1x7_bn_relu(x4, params["c44"])
    x4 = conv_7x1_bn_relu(x4, params["c45"])

    out = jnp.concatenate([x1, x2, x3, x4], axis=-1)   # 128+384+256+256 = 1024
    return jnp.transpose(out, (0, 3, 1, 2))            # back to NCHW


# -----------------------------------------------------------------------------
# Pure-JAX reference (XLA conv path, same bf16 matmul inputs) for correctness
# -----------------------------------------------------------------------------
def _ref_block(x_nhwc, p, kh, kw, ph, pw):
    xb = x_nhwc.astype(jnp.bfloat16)
    wb = jnp.transpose(p["w"], (2, 3, 1, 0)).astype(jnp.bfloat16)   # HWIO
    y = jax.lax.conv_general_dilated(
        xb, wb, window_strides=(1, 1), padding=((ph, ph), (pw, pw)),
        dimension_numbers=("NHWC", "HWIO", "NHWC"),
        preferred_element_type=jnp.float32) + p["b"]
    mean = jnp.mean(y, axis=(0, 1, 2), keepdims=True)
    var = jnp.mean((y - mean) ** 2, axis=(0, 1, 2), keepdims=True)
    return jnp.maximum((y - mean) * jax.lax.rsqrt(var + EPS) * p["gamma"]
                       + p["beta"], 0.0)


def ref_forward(x_nchw, params):
    x = jnp.transpose(x_nchw, (0, 2, 3, 1))

    def blk(h, name):
        _, _, kh, kw, ph, pw = CONV_SPECS[name]
        return _ref_block(h, params[name], kh, kw, ph, pw)

    x1 = blk(x, "c12")
    x2 = blk(x, "c21")
    x3 = blk(x, "c31"); x3 = blk(x3, "c32"); x3 = blk(x3, "c33")
    x4 = blk(x, "c41"); x4 = blk(x4, "c42"); x4 = blk(x4, "c43")
    x4 = blk(x4, "c44"); x4 = blk(x4, "c45")
    out = jnp.concatenate([x1, x2, x3, x4], axis=-1)
    return jnp.transpose(out, (0, 3, 1, 2))


# -----------------------------------------------------------------------------
# Deterministic parameter init (PyTorch-like shapes; gamma=1, beta=0)
# -----------------------------------------------------------------------------
def init_params(key):
    names = list(CONV_SPECS)
    keys = jax.random.split(key, len(names))
    params = {}
    for name, k in zip(names, keys):
        cin, cout, kh, kw, _, _ = CONV_SPECS[name]
        k1, k2 = jax.random.split(k)
        fan_in = cin * kh * kw
        params[name] = dict(
            w=jax.random.normal(k1, (cout, cin, kh, kw), jnp.float32)
              * (fan_in ** -0.5),
            b=jax.random.normal(k2, (cout,), jnp.float32) * 0.01,
            gamma=jnp.ones((cout,), jnp.float32),
            beta=jnp.zeros((cout,), jnp.float32),
        )
    return params


if __name__ == "__main__":
    key = jax.random.PRNGKey(0)
    kx, kp = jax.random.split(key)

    # Channel count (1024) is fixed by the module; small batch/spatial dims.
    x = jax.random.normal(kx, (2, 1024, 8, 8), jnp.float32)
    params = init_params(kp)

    out = jax.block_until_ready(jax.jit(inception_b_forward)(x, params))
    assert out.shape == (2, 1024, 8, 8), out.shape

    ref = jax.block_until_ready(jax.jit(ref_forward)(x, params))
    err = float(jnp.max(jnp.abs(out - ref)))
    assert jnp.allclose(out, ref, atol=3e-2, rtol=3e-2), err

    print("KERNEL_OK")
</pallas_src>

<mosaic_0001>
module attributes {stable_mosaic.version = 11 : i64} {
  func.func @_dense_kernel(%arg0: i32, %arg1: memref<128x1024xbf16, #tpu.memory_space<vmem>>, %arg2: memref<1024x128xbf16, #tpu.memory_space<vmem>>, %arg3: memref<1x128xf32, #tpu.memory_space<vmem>>, %arg4: memref<1x128xf32, #tpu.memory_space<vmem>>, %arg5: memref<1x128xf32, #tpu.memory_space<vmem>>, %arg6: memref<128x128xf32, #tpu.memory_space<vmem>>) attributes {dimension_semantics = [#tpu.dimension_semantics<parallel>], iteration_bounds = array<i64: 7>, scalar_prefetch = 0 : i64, scratch_operands = 0 : i64, tpu.core_type = #tpu.core_type<tc>, window_params = [{pipeline_mode = #tpu.pipeline_mode<synchronous>, transform_indices = @transform_0, window_bounds = array<i64: 128, 1024>}, {transform_indices = @transform_1, window_bounds = array<i64: 1024, 128>}, {transform_indices = @transform_2, window_bounds = array<i64: 1, 128>}, {transform_indices = @transform_3, window_bounds = array<i64: 1, 128>}, {transform_indices = @transform_4, window_bounds = array<i64: 1, 128>}, {transform_indices = @transform_5, window_bounds = array<i64: 128, 128>}]} {
    %c0 = arith.constant 0 : index
    %c0_0 = arith.constant 0 : index
    %0 = vector.load %arg1[%c0, %c0_0] : memref<128x1024xbf16, #tpu.memory_space<vmem>>, vector<128x1024xbf16>
    %c0_1 = arith.constant 0 : index
    %c0_2 = arith.constant 0 : index
    %1 = vector.load %arg2[%c0_1, %c0_2] : memref<1024x128xbf16, #tpu.memory_space<vmem>>, vector<1024x128xbf16>
    %cst = arith.constant dense<0.000000e+00> : vector<128x128xf32>
    %2 = tpu.matmul %0, %1, %cst {dimension_numbers = #tpu.dot_dimension_numbers<[1], [0], [0], [1], [0, 0, 1, 1], [], []>} : vector<128x1024xbf16>, vector<1024x128xbf16>, vector<128x128xf32> -> vector<128x128xf32>
    %c0_3 = arith.constant 0 : index
    %c0_4 = arith.constant 0 : index
    %3 = vector.load %arg3[%c0_3, %c0_4] : memref<1x128xf32, #tpu.memory_space<vmem>>, vector<1x128xf32>
    %4 = vector.broadcast %3 : vector<1x128xf32> to vector<128x128xf32>
    %5 = arith.addf %2, %4 : vector<128x128xf32>
    %c0_5 = arith.constant 0 : index
    %c0_6 = arith.constant 0 : index
    %6 = vector.load %arg4[%c0_5, %c0_6] : memref<1x128xf32, #tpu.memory_space<vmem>>, vector<1x128xf32>
    %c0_7 = arith.constant 0 : index
    %c0_8 = arith.constant 0 : index
    %7 = vector.load %arg5[%c0_7, %c0_8] : memref<1x128xf32, #tpu.memory_space<vmem>>, vector<1x128xf32>
    %cst_9 = arith.constant dense<0.000000e+00> : vector<128xf32>
    %8 = vector.multi_reduction <add>, %5, %cst_9 [0] : vector<128x128xf32> to vector<128xf32>
    %9 = vector.shape_cast %8 : vector<128xf32> to vector<1x128xf32>
    %cst_10 = arith.constant 7.812500e-03 : f32
    %10 = vector.broadcast %cst_10 : f32 to vector<1x128xf32>
    %11 = arith.mulf %9, %10 : vector<1x128xf32>
    %12 = vector.broadcast %11 : vector<1x128xf32> to vector<128x128xf32>
    %13 = arith.subf %5, %12 : vector<128x128xf32>
    %14 = arith.mulf %13, %13 : vector<128x128xf32>
    %cst_11 = arith.constant dense<0.000000e+00> : vector<128xf32>
    %15 = vector.multi_reduction <add>, %14, %cst_11 [0] : vector<128x128xf32> to vector<128xf32>
    %16 = vector.shape_cast %15 : vector<128xf32> to vector<1x128xf32>
    %cst_12 = arith.constant 7.812500e-03 : f32
    %17 = vector.broadcast %cst_12 : f32 to vector<1x128xf32>
    %18 = arith.mulf %16, %17 : vector<1x128xf32>
    %cst_13 = arith.constant 9.99999974E-6 : f32
    %19 = vector.broadcast %cst_13 : f32 to vector<1x128xf32>
    %20 = arith.addf %18, %19 : vector<1x128xf32>
    %21 = math.rsqrt %20 : vector<1x128xf32>
    %22 = arith.mulf %21, %6 : vector<1x128xf32>
    %23 = vector.broadcast %22 : vector<1x128xf32> to vector<128x128xf32>
    %24 = arith.mulf %13, %23 : vector<128x128xf32>
    %25 = vector.broadcast %7 : vector<1x128xf32> to vector<128x128xf32>
    %26 = arith.addf %24, %25 : vector<128x128xf32>
    %cst_14 = arith.constant 0.000000e+00 : f32
    %27 = vector.broadcast %cst_14 : f32 to vector<128x128xf32>
    %28 = arith.maximumf %26, %27 : vector<128x128xf32>
    %c0_15 = arith.constant 0 : index
    %c0_16 = arith.constant 0 : index
    %29 = vector.load %arg6[%c0_15, %c0_16] : memref<128x128xf32, #tpu.memory_space<vmem>>, vector<128x128xf32>
    tpu.vector_store %arg6[%c0_15, %c0_16], %28 {strides = array<i32>} : memref<128x128xf32, #tpu.memory_space<vmem>>, vector<128x128xf32>,
    return
  }
  func.func @transform_0(%arg0: i32) -> (i32, i32) {
    %c0_i32 = arith.constant 0 : i32
    %c0_i32_0 = arith.constant 0 : i32
    %c0_i32_1 = arith.constant 0 : i32
    return %c0_i32, %c0_i32_0 : i32, i32
  }
  func.func @transform_1(%arg0: i32) -> (i32, i32) {
    %c0_i32 = arith.constant 0 : i32
    %c0_i32_0 = arith.constant 0 : i32
    return %c0_i32, %arg0 : i32, i32
  }
  func.func @transform_2(%arg0: i32) -> (i32, i32) {
    %c0_i32 = arith.constant 0 : i32
    %c0_i32_0 = arith.constant 0 : i32
    return %c0_i32, %arg0 : i32, i32
  }
  func.func @transform_3(%arg0: i32) -> (i32, i32) {
    %c0_i32 = arith.constant 0 : i32
    %c0_i32_0 = arith.constant 0 : i32
    return %c0_i32, %arg0 : i32, i32
  }
  func.func @transform_4(%arg0: i32) -> (i32, i32) {
    %c0_i32 = arith.constant 0 : i32
    %c0_i32_0 = arith.constant 0 : i32
    return %c0_i32, %arg0 : i32, i32
  }
  func.func @transform_5(%arg0: i32) -> (i32, i32) {
    %c0_i32 = arith.constant 0 : i32
    %c0_i32_0 = arith.constant 0 : i32
    return %c0_i32, %arg0 : i32, i32
  }
}

module attributes {stable_mosaic.version = 11 : i64} {
  func.func @_taps_kernel(%arg0: i32, %arg1: memref<224x192xbf16, #tpu.memory_space<vmem>>, %arg2: memref<7x192x128xbf16, #tpu.memory_space<vmem>>, %arg3: memref<1x128xf32, #tpu.memory_space<vmem>>, %arg4: memref<1x128xf32, #tpu.memory_space<vmem>>, %arg5: memref<1x128xf32, #tpu.memory_space<vmem>>, %arg6: memref<128x128xf32, #tpu.memory_space<vmem>>) attributes {dimension_semantics = [#tpu.dimension_semantics<parallel>], iteration_bounds = array<i64: 2>, scalar_prefetch = 0 : i64, scratch_operands = 0 : i64, tpu.core_type = #tpu.core_type<tc>, window_params = [{pipeline_mode = #tpu.pipeline_mode<synchronous>, transform_indices = @transform_0, window_bounds = array<i64: 224, 192>}, {transform_indices = @transform_1, window_bounds = array<i64: 7, 192, 128>}, {transform_indices = @transform_2, window_bounds = array<i64: 1, 128>}, {transform_indices = @transform_3, window_bounds = array<i64: 1, 128>}, {transform_indices = @transform_4, window_bounds = array<i64: 1, 128>}, {transform_indices = @transform_5, window_bounds = array<i64: 128, 128>}]} {
    %c0 = arith.constant 0 : index
    %c0_0 = arith.constant 0 : index
    %0 = vector.load %arg1[%c0, %c0_0] : memref<224x192xbf16, #tpu.memory_space<vmem>>, vector<128x192xbf16>
    %c0_1 = arith.constant 0 : index
    %c0_2 = arith.constant 0 : index
    %c0_3 = arith.constant 0 : index
    %1 = vector.load %arg2[%c0_1, %c0_2, %c0_3] : memref<7x192x128xbf16, #tpu.memory_space<vmem>>, vector<1x192x128xbf16>
    %2 = vector.shape_cast %1 : vector<1x192x128xbf16> to vector<192x128xbf16>
    %cst = arith.constant dense<0.000000e+00> : vector<128x128xf32>
    %3 = tpu.matmul %0, %2, %cst {dimension_numbers = #tpu.dot_dimension_numbers<[1], [0], [0], [1], [0, 0, 1, 1], [], []>} : vector<128x192xbf16>, vector<192x128xbf16>, vector<128x128xf32> -> vector<128x128xf32>
    %c16 = arith.constant 16 : index
    %c0_4 = arith.constant 0 : index
    %4 = vector.load %arg1[%c16, %c0_4] : memref<224x192xbf16, #tpu.memory_space<vmem>>, vector<128x192xbf16>
    %c1 = arith.constant 1 : index
    %c0_5 = arith.constant 0 : index
    %c0_6 = arith.constant 0 : index
    %5 = vector.load %arg2[%c1, %c0_5, %c0_6] : memref<7x192x128xbf16, #tpu.memory_space<vmem>>, vector<1x192x128xbf16>
    %6 = vector.shape_cast %5 : vector<1x192x128xbf16> to vector<192x128xbf16>
    %cst_7 = arith.constant dense<0.000000e+00> : vector<128x128xf32>
    %7 = tpu.matmul %4, %6, %cst_7 {dimension_numbers = #tpu.dot_dimension_numbers<[1], [0], [0], [1], [0, 0, 1, 1], [], []>} : vector<128x192xbf16>, vector<192x128xbf16>, vector<128x128xf32> -> vector<128x128xf32>
    %8 = arith.addf %3, %7 : vector<128x128xf32>
    %c32 = arith.constant 32 : index
    %c0_8 = arith.constant 0 : index
    %9 = vector.load %arg1[%c32, %c0_8] : memref<224x192xbf16, #tpu.memory_space<vmem>>, vector<128x192xbf16>
    %c2 = arith.constant 2 : index
    %c0_9 = arith.constant 0 : index
    %c0_10 = arith.constant 0 : index
    %10 = vector.load %arg2[%c2, %c0_9, %c0_10] : memref<7x192x128xbf16, #tpu.memory_space<vmem>>, vector<1x192x128xbf16>
    %11 = vector.shape_cast %10 : vector<1x192x128xbf16> to vector<192x128xbf16>
    %cst_11 = arith.constant dense<0.000000e+00> : vector<128x128xf32>
    %12 = tpu.matmul %9, %11, %cst_11 {dimension_numbers = #tpu.dot_dimension_numbers<[1], [0], [0], [1], [0, 0, 1, 1], [], []>} : vector<128x192xbf16>, vector<192x128xbf16>, vector<128x128xf32> -> vector<128x128xf32>
    %13 = arith.addf %8, %12 : vector<128x128xf32>
    %c48 = arith.constant 48 : index
    %c0_12 = arith.constant 0 : index
    %14 = vector.load %arg1[%c48, %c0_12] : memref<224x192xbf16, #tpu.memory_space<vmem>>, vector<128x192xbf16>
    %c3 = arith.constant 3 : index
    %c0_13 = arith.constant 0 : index
    %c0_14 = arith.constant 0 : index
    %15 = vector.load %arg2[%c3, %c0_13, %c0_14] : memref<7x192x128xbf16, #tpu.memory_space<vmem>>, vector<1x192x128xbf16>
    %16 = vector.shape_cast %15 : vector<1x192x128xbf16> to vector<192x128xbf16>
    %cst_15 = arith.constant dense<0.000000e+00> : vector<128x128xf32>
    %17 = tpu.matmul %14, %16, %cst_15 {dimension_numbers = #tpu.dot_dimension_numbers<[1], [0], [0], [1], [0, 0, 1, 1], [], []>} : vector<128x192xbf16>, vector<192x128xbf16>, vector<128x128xf32> -> vector<128x128xf32>
    %18 = arith.addf %13, %17 : vector<128x128xf32>
    %c64 = arith.constant 64 : index
    %c0_16 = arith.constant 0 : index
    %19 = vector.load %arg1[%c64, %c0_16] : memref<224x192xbf16, #tpu.memory_space<vmem>>, vector<128x192xbf16>
    %c4 = arith.constant 4 : index
    %c0_17 = arith.constant 0 : index
    %c0_18 = arith.constant 0 : index
    %20 = vector.load %arg2[%c4, %c0_17, %c0_18] : memref<7x192x128xbf16, #tpu.memory_space<vmem>>, vector<1x192x128xbf16>
    %21 = vector.shape_cast %20 : vector<1x192x128xbf16> to vector<192x128xbf16>
    %cst_19 = arith.constant dense<0.000000e+00> : vector<128x128xf32>
    %22 = tpu.matmul %19, %21, %cst_19 {dimension_numbers = #tpu.dot_dimension_numbers<[1], [0], [0], [1], [0, 0, 1, 1], [], []>} : vector<128x192xbf16>, vector<192x128xbf16>, vector<128x128xf32> -> vector<128x128xf32>
    %23 = arith.addf %18, %22 : vector<128x128xf32>
    %c80 = arith.constant 80 : index
    %c0_20 = arith.constant 0 : index
    %24 = vector.load %arg1[%c80, %c0_20] : memref<224x192xbf16, #tpu.memory_space<vmem>>, vector<128x192xbf16>
    %c5 = arith.constant 5 : index
    %c0_21 = arith.constant 0 : index
    %c0_22 = arith.constant 0 : index
    %25 = vector.load %arg2[%c5, %c0_21, %c0_22] : memref<7x192x128xbf16, #tpu.memory_space<vmem>>, vector<1x192x128xbf16>
    %26 = vector.shape_cast %25 : vector<1x192x128xbf16> to vector<192x128xbf16>
    %cst_23 = arith.constant dense<0.000000e+00> : vector<128x128xf32>
    %27 = tpu.matmul %24, %26, %cst_23 {dimension_numbers = #tpu.dot_dimension_numbers<[1], [0], [0], [1], [0, 0, 1, 1], [], []>} : vector<128x192xbf16>, vector<192x128xbf16>, vector<128x128xf32> -> vector<128x128xf32>
    %28 = arith.addf %23, %27 : vector<128x128xf32>
    %c96 = arith.constant 96 : index
    %c0_24 = arith.constant 0 : index
    %29 = vector.load %arg1[%c96, %c0_24] : memref<224x192xbf16, #tpu.memory_space<vmem>>, vector<128x192xbf16>
    %c6 = arith.constant 6 : index
    %c0_25 = arith.constant 0 : index
    %c0_26 = arith.constant 0 : index
    %30 = vector.load %arg2[%c6, %c0_25, %c0_26] : memref<7x192x128xbf16, #tpu.memory_space<vmem>>, vector<1x192x128xbf16>
    %31 = vector.shape_cast %30 : vector<1x192x128xbf16> to vector<192x128xbf16>
    %cst_27 = arith.constant dense<0.000000e+00> : vector<128x128xf32>
    %32 = tpu.matmul %29, %31, %cst_27 {dimension_numbers = #tpu.dot_dimension_numbers<[1], [0], [0], [1], [0, 0, 1, 1], [], []>} : vector<128x192xbf16>, vector<192x128xbf16>, vector<128x128xf32> -> vector<128x128xf32>
    %33 = arith.addf %28, %32 : vector<128x128xf32>
    %c0_28 = arith.constant 0 : index
    %c0_29 = arith.constant 0 : index
    %34 = vector.load %arg3[%c0_28, %c0_29] : memref<1x128xf32, #tpu.memory_space<vmem>>, vector<1x128xf32>
    %35 = vector.broadcast %34 : vector<1x128xf32> to vector<128x128xf32>
    %36 = arith.addf %33, %35 : vector<128x128xf32>
    %c0_30 = arith.constant 0 : index
    %c0_31 = arith.constant 0 : index
    %37 = vector.load %arg4[%c0_30, %c0_31] : memref<1x128xf32, #tpu.memory_space<vmem>>, vector<1x128xf32>
    %c0_32 = arith.constant 0 : index
    %c0_33 = arith.constant 0 : index
    %38 = vector.load %arg5[%c0_32, %c0_33] : memref<1x128xf32, #tpu.memory_space<vmem>>, vector<1x128xf32>
    %cst_34 = arith.constant dense<0.000000e+00> : vector<128xf32>
    %39 = vector.multi_reduction <add>, %36, %cst_34 [0] : vector<128x128xf32> to vector<128xf32>
    %40 = vector.shape_cast %39 : vector<128xf32> to vector<1x128xf32>
    %cst_35 = arith.constant 7.812500e-03 : f32
    %41 = vector.broadcast %cst_35 : f32 to vector<1x128xf32>
    %42 = arith.mulf %40, %41 : vector<1x128xf32>
    %43 = vector.broadcast %42 : vector<1x128xf32> to vector<128x128xf32>
    %44 = arith.subf %36, %43 : vector<128x128xf32>
    %45 = arith.mulf %44, %44 : vector<128x128xf32>
    %cst_36 = arith.constant dense<0.000000e+00> : vector<128xf32>
    %46 = vector.multi_reduction <add>, %45, %cst_36 [0] : vector<128x128xf32> to vector<128xf32>
    %47 = vector.shape_cast %46 : vector<128xf32> to vector<1x128xf32>
    %cst_37 = arith.constant 7.812500e-03 : f32
    %48 = vector.broadcast %cst_37 : f32 to vector<1x128xf32>
    %49 = arith.mulf %47, %48 : vector<1x128xf32>
    %cst_38 = arith.constant 9.99999974E-6 : f32
    %50 = vector.broadcast %cst_38 : f32 to vector<1x128xf32>
    %51 = arith.addf %49, %50 : vector<1x128xf32>
    %52 = math.rsqrt %51 : vector<1x128xf32>
    %53 = arith.mulf %52, %37 : vector<1x128xf32>
    %54 = vector.broadcast %53 : vector<1x128xf32> to vector<128x128xf32>
    %55 = arith.mulf %44, %54 : vector<128x128xf32>
    %56 = vector.broadcast %38 : vector<1x128xf32> to vector<128x128xf32>
    %57 = arith.addf %55, %56 : vector<128x128xf32>
    %cst_39 = arith.constant 0.000000e+00 : f32
    %58 = vector.broadcast %cst_39 : f32 to vector<128x128xf32>
    %59 = arith.maximumf %57, %58 : vector<128x128xf32>
    %c0_40 = arith.constant 0 : index
    %c0_41 = arith.constant 0 : index
    %60 = vector.load %arg6[%c0_40, %c0_41] : memref<128x128xf32, #tpu.memory_space<vmem>>, vector<128x128xf32>
    tpu.vector_store %arg6[%c0_40, %c0_41], %59 {strides = array<i32>} : memref<128x128xf32, #tpu.memory_space<vmem>>, vector<128x128xf32>,
    return
  }
  func.func @transform_0(%arg0: i32) -> (i32, i32) {
    %c0_i32 = arith.constant 0 : i32
    %c0_i32_0 = arith.constant 0 : i32
    %c0_i32_1 = arith.constant 0 : i32
    return %c0_i32, %c0_i32_0 : i32, i32
  }
  func.func @transform_1(%arg0: i32) -> (i32, i32, i32) {
    %c0_i32 = arith.constant 0 : i32
    %c0_i32_0 = arith.constant 0 : i32
    %c0_i32_1 = arith.constant 0 : i32
    return %c0_i32, %c0_i32_0, %arg0 : i32, i32, i32
  }
  func.func @transform_2(%arg0: i32) -> (i32, i32) {
    %c0_i32 = arith.constant 0 : i32
    %c0_i32_0 = arith.constant 0 : i32
    return %c0_i32, %arg0 : i32, i32
  }
  func.func @transform_3(%arg0: i32) -> (i32, i32) {
    %c0_i32 = arith.constant 0 : i32
    %c0_i32_0 = arith.constant 0 : i32
    return %c0_i32, %arg0 : i32, i32
  }
  func.func @transform_4(%arg0: i32) -> (i32, i32) {
    %c0_i32 = arith.constant 0 : i32
    %c0_i32_0 = arith.constant 0 : i32
    return %c0_i32, %arg0 : i32, i32
  }
  func.func @transform_5(%arg0: i32) -> (i32, i32) {
    %c0_i32 = arith.constant 0 : i32
    %c0_i32_0 = arith.constant 0 : i32
    return %c0_i32, %arg0 : i32, i32
  }
}

module attributes {stable_mosaic.version = 11 : i64} {
  func.func @_taps_kernel(%arg0: i32, %arg1: memref<224x224xbf16, #tpu.memory_space<vmem>>, %arg2: memref<7x224x128xbf16, #tpu.memory_space<vmem>>, %arg3: memref<1x128xf32, #tpu.memory_space<vmem>>, %arg4: memref<1x128xf32, #tpu.memory_space<vmem>>, %arg5: memref<1x128xf32, #tpu.memory_space<vmem>>, %arg6: memref<128x128xf32, #tpu.memory_space<vmem>>) attributes {dimension_semantics = [#tpu.dimension_semantics<parallel>], iteration_bounds = array<i64: 2>, scalar_prefetch = 0 : i64, scratch_operands = 0 : i64, tpu.core_type = #tpu.core_type<tc>, window_params = [{pipeline_mode = #tpu.pipeline_mode<synchronous>, transform_indices = @transform_0, window_bounds = array<i64: 224, 224>}, {transform_indices = @transform_1, window_bounds = array<i64: 7, 224, 128>}, {transform_indices = @transform_2, window_bounds = array<i64: 1, 128>}, {transform_indices = @transform_3, window_bounds = array<i64: 1, 128>}, {transform_indices = @transform_4, window_bounds = array<i64: 1, 128>}, {transform_indices = @transform_5, window_bounds = array<i64: 128, 128>}]} {
    %c0 = arith.constant 0 : index
    %c0_0 = arith.constant 0 : index
    %0 = vector.load %arg1[%c0, %c0_0] : memref<224x224xbf16, #tpu.memory_space<vmem>>, vector<128x224xbf16>
    %c0_1 = arith.constant 0 : index
    %c0_2 = arith.constant 0 : index
    %c0_3 = arith.constant 0 : index
    %1 = vector.load %arg2[%c0_1, %c0_2, %c0_3] : memref<7x224x128xbf16, #tpu.memory_space<vmem>>, vector<1x224x128xbf16>
    %2 = vector.shape_cast %1 : vector<1x224x128xbf16> to vector<224x128xbf16>
    %cst = arith.constant dense<0.000000e+00> : vector<128x128xf32>
    %3 = tpu.matmul %0, %2, %cst {dimension_numbers = #tpu.dot_dimension_numbers<[1], [0], [0], [1], [0, 0, 1, 1], [], []>} : vector<128x224xbf16>, vector<224x128xbf16>, vector<128x128xf32> -> vector<128x128xf32>
    %c16 = arith.constant 16 : index
    %c0_4 = arith.constant 0 : index
    %4 = vector.load %arg1[%c16, %c0_4] : memref<224x224xbf16, #tpu.memory_space<vmem>>, vector<128x224xbf16>
    %c1 = arith.constant 1 : index
    %c0_5 = arith.constant 0 : index
    %c0_6 = arith.constant 0 : index
    %5 = vector.load %arg2[%c1, %c0_5, %c0_6] : memref<7x224x128xbf16, #tpu.memory_space<vmem>>, vector<1x224x128xbf16>
    %6 = vector.shape_cast %5 : vector<1x224x128xbf16> to vector<224x128xbf16>
    %cst_7 = arith.constant dense<0.000000e+00> : vector<128x128xf32>
    %7 = tpu.matmul %4, %6, %cst_7 {dimension_numbers = #tpu.dot_dimension_numbers<[1], [0], [0], [1], [0, 0, 1, 1], [], []>} : vector<128x224xbf16>, vector<224x128xbf16>, vector<128x128xf32> -> vector<128x128xf32>
    %8 = arith.addf %3, %7 : vector<128x128xf32>
    %c32 = arith.constant 32 : index
    %c0_8 = arith.constant 0 : index
    %9 = vector.load %arg1[%c32, %c0_8] : memref<224x224xbf16, #tpu.memory_space<vmem>>, vector<128x224xbf16>
    %c2 = arith.constant 2 : index
    %c0_9 = arith.constant 0 : index
    %c0_10 = arith.constant 0 : index
    %10 = vector.load %arg2[%c2, %c0_9, %c0_10] : memref<7x224x128xbf16, #tpu.memory_space<vmem>>, vector<1x224x128xbf16>
    %11 = vector.shape_cast %10 : vector<1x224x128xbf16> to vector<224x128xbf16>
    %cst_11 = arith.constant dense<0.000000e+00> : vector<128x128xf32>
    %12 = tpu.matmul %9, %11, %cst_11 {dimension_numbers = #tpu.dot_dimension_numbers<[1], [0], [0], [1], [0, 0, 1, 1], [], []>} : vector<128x224xbf16>, vector<224x128xbf16>, vector<128x128xf32> -> vector<128x128xf32>
    %13 = arith.addf %8, %12 : vector<128x128xf32>
    %c48 = arith.constant 48 : index
    %c0_12 = arith.constant 0 : index
    %14 = vector.load %arg1[%c48, %c0_12] : memref<224x224xbf16, #tpu.memory_space<vmem>>, vector<128x224xbf16>
    %c3 = arith.constant 3 : index
    %c0_13 = arith.constant 0 : index
    %c0_14 = arith.constant 0 : index
    %15 = vector.load %arg2[%c3, %c0_13, %c0_14] : memref<7x224x128xbf16, #tpu.memory_space<vmem>>, vector<1x224x128xbf16>
    %16 = vector.shape_cast %15 : vector<1x224x128xbf16> to vector<224x128xbf16>
    %cst_15 = arith.constant dense<0.000000e+00> : vector<128x128xf32>
    %17 = tpu.matmul %14, %16, %cst_15 {dimension_numbers = #tpu.dot_dimension_numbers<[1], [0], [0], [1], [0, 0, 1, 1], [], []>} : vector<128x224xbf16>, vector<224x128xbf16>, vector<128x128xf32> -> vector<128x128xf32>
    %18 = arith.addf %13, %17 : vector<128x128xf32>
    %c64 = arith.constant 64 : index
    %c0_16 = arith.constant 0 : index
    %19 = vector.load %arg1[%c64, %c0_16] : memref<224x224xbf16, #tpu.memory_space<vmem>>, vector<128x224xbf16>
    %c4 = arith.constant 4 : index
    %c0_17 = arith.constant 0 : index
    %c0_18 = arith.constant 0 : index
    %20 = vector.load %arg2[%c4, %c0_17, %c0_18] : memref<7x224x128xbf16, #tpu.memory_space<vmem>>, vector<1x224x128xbf16>
    %21 = vector.shape_cast %20 : vector<1x224x128xbf16> to vector<224x128xbf16>
    %cst_19 = arith.constant dense<0.000000e+00> : vector<128x128xf32>
    %22 = tpu.matmul %19, %21, %cst_19 {dimension_numbers = #tpu.dot_dimension_numbers<[1], [0], [0], [1], [0, 0, 1, 1], [], []>} : vector<128x224xbf16>, vector<224x128xbf16>, vector<128x128xf32> -> vector<128x128xf32>
    %23 = arith.addf %18, %22 : vector<128x128xf32>
    %c80 = arith.constant 80 : index
    %c0_20 = arith.constant 0 : index
    %24 = vector.load %arg1[%c80, %c0_20] : memref<224x224xbf16, #tpu.memory_space<vmem>>, vector<128x224xbf16>
    %c5 = arith.constant 5 : index
    %c0_21 = arith.constant 0 : index
    %c0_22 = arith.constant 0 : index
    %25 = vector.load %arg2[%c5, %c0_21, %c0_22] : memref<7x224x128xbf16, #tpu.memory_space<vmem>>, vector<1x224x128xbf16>
    %26 = vector.shape_cast %25 : vector<1x224x128xbf16> to vector<224x128xbf16>
    %cst_23 = arith.constant dense<0.000000e+00> : vector<128x128xf32>
    %27 = tpu.matmul %24, %26, %cst_23 {dimension_numbers = #tpu.dot_dimension_numbers<[1], [0], [0], [1], [0, 0, 1, 1], [], []>} : vector<128x224xbf16>, vector<224x128xbf16>, vector<128x128xf32> -> vector<128x128xf32>
    %28 = arith.addf %23, %27 : vector<128x128xf32>
    %c96 = arith.constant 96 : index
    %c0_24 = arith.constant 0 : index
    %29 = vector.load %arg1[%c96, %c0_24] : memref<224x224xbf16, #tpu.memory_space<vmem>>, vector<128x224xbf16>
    %c6 = arith.constant 6 : index
    %c0_25 = arith.constant 0 : index
    %c0_26 = arith.constant 0 : index
    %30 = vector.load %arg2[%c6, %c0_25, %c0_26] : memref<7x224x128xbf16, #tpu.memory_space<vmem>>, vector<1x224x128xbf16>
    %31 = vector.shape_cast %30 : vector<1x224x128xbf16> to vector<224x128xbf16>
    %cst_27 = arith.constant dense<0.000000e+00> : vector<128x128xf32>
    %32 = tpu.matmul %29, %31, %cst_27 {dimension_numbers = #tpu.dot_dimension_numbers<[1], [0], [0], [1], [0, 0, 1, 1], [], []>} : vector<128x224xbf16>, vector<224x128xbf16>, vector<128x128xf32> -> vector<128x128xf32>
    %33 = arith.addf %28, %32 : vector<128x128xf32>
    %c0_28 = arith.constant 0 : index
    %c0_29 = arith.constant 0 : index
    %34 = vector.load %arg3[%c0_28, %c0_29] : memref<1x128xf32, #tpu.memory_space<vmem>>, vector<1x128xf32>
    %35 = vector.broadcast %34 : vector<1x128xf32> to vector<128x128xf32>
    %36 = arith.addf %33, %35 : vector<128x128xf32>
    %c0_30 = arith.constant 0 : index
    %c0_31 = arith.constant 0 : index
    %37 = vector.load %arg4[%c0_30, %c0_31] : memref<1x128xf32, #tpu.memory_space<vmem>>, vector<1x128xf32>
    %c0_32 = arith.constant 0 : index
    %c0_33 = arith.constant 0 : index
    %38 = vector.load %arg5[%c0_32, %c0_33] : memref<1x128xf32, #tpu.memory_space<vmem>>, vector<1x128xf32>
    %cst_34 = arith.constant dense<0.000000e+00> : vector<128xf32>
    %39 = vector.multi_reduction <add>, %36, %cst_34 [0] : vector<128x128xf32> to vector<128xf32>
    %40 = vector.shape_cast %39 : vector<128xf32> to vector<1x128xf32>
    %cst_35 = arith.constant 7.812500e-03 : f32
    %41 = vector.broadcast %cst_35 : f32 to vector<1x128xf32>
    %42 = arith.mulf %40, %41 : vector<1x128xf32>
    %43 = vector.broadcast %42 : vector<1x128xf32> to vector<128x128xf32>
    %44 = arith.subf %36, %43 : vector<128x128xf32>
    %45 = arith.mulf %44, %44 : vector<128x128xf32>
    %cst_36 = arith.constant dense<0.000000e+00> : vector<128xf32>
    %46 = vector.multi_reduction <add>, %45, %cst_36 [0] : vector<128x128xf32> to vector<128xf32>
    %47 = vector.shape_cast %46 : vector<128xf32> to vector<1x128xf32>
    %cst_37 = arith.constant 7.812500e-03 : f32
    %48 = vector.broadcast %cst_37 : f32 to vector<1x128xf32>
    %49 = arith.mulf %47, %48 : vector<1x128xf32>
    %cst_38 = arith.constant 9.99999974E-6 : f32
    %50 = vector.broadcast %cst_38 : f32 to vector<1x128xf32>
    %51 = arith.addf %49, %50 : vector<1x128xf32>
    %52 = math.rsqrt %51 : vector<1x128xf32>
    %53 = arith.mulf %52, %37 : vector<1x128xf32>
    %54 = vector.broadcast %53 : vector<1x128xf32> to vector<128x128xf32>
    %55 = arith.mulf %44, %54 : vector<128x128xf32>
    %56 = vector.broadcast %38 : vector<1x128xf32> to vector<128x128xf32>
    %57 = arith.addf %55, %56 : vector<128x128xf32>
    %cst_39 = arith.constant 0.000000e+00 : f32
    %58 = vector.broadcast %cst_39 : f32 to vector<128x128xf32>
    %59 = arith.maximumf %57, %58 : vector<128x128xf32>
    %c0_40 = arith.constant 0 : index
    %c0_41 = arith.constant 0 : index
    %60 = vector.load %arg6[%c0_40, %c0_41] : memref<128x128xf32, #tpu.memory_space<vmem>>, vector<128x128xf32>
    tpu.vector_store %arg6[%c0_40, %c0_41], %59 {strides = array<i32>} : memref<128x128xf32, #tpu.memory_space<vmem>>, vector<128x128xf32>,
    return
  }
  func.func @transform_0(%arg0: i32) -> (i32, i32) {
    %c0_i32 = arith.constant 0 : i32
    %c0_i32_0 = arith.constant 0 : i32
    %c0_i32_1 = arith.constant 0 : i32
    return %c0_i32, %c0_i32_0 : i32, i32
  }
  func.func @transform_1(%arg0: i32) -> (i32, i32, i32) {
    %c0_i32 = arith.constant 0 : i32
    %c0_i32_0 = arith.constant 0 : i32
    %c0_i32_1 = arith.constant 0 : i32
    return %c0_i32, %c0_i32_0, %arg0 : i32, i32, i32
  }
  func.func @transform_2(%arg0: i32) -> (i32, i32) {
    %c0_i32 = arith.constant 0 : i32
    %c0_i32_0 = arith.constant 0 : i32
    return %c0_i32, %arg0 : i32, i32
  }
  func.func @transform_3(%arg0: i32) -> (i32, i32) {
    %c0_i32 = arith.constant 0 : i32
    %c0_i32_0 = arith.constant 0 : i32
    return %c0_i32, %arg0 : i32, i32
  }
  func.func @transform_4(%arg0: i32) -> (i32, i32) {
    %c0_i32 = arith.constant 0 : i32
    %c0_i32_0 = arith.constant 0 : i32
    return %c0_i32, %arg0 : i32, i32
  }
  func.func @transform_5(%arg0: i32) -> (i32, i32) {
    %c0_i32 = arith.constant 0 : i32
    %c0_i32_0 = arith.constant 0 : i32
    return %c0_i32, %arg0 : i32, i32
  }
}

</mosaic_0001>

<llo_original>
// kernel: inception_b_forward.7
$region0: #{inception_b_forward.7}
  #allocation0 [shape = 'u32[]', space=smem, size = 0x4, offset = 0x4, fixed_abs, tag = 'smem constant byte address 0x4 - core index']
  #allocation1 [shape = 'u32[72,128]{1,0:T(1,128)}', space=vmem, size = 0x9000, scoped, tag = 'internal scratch']
  %s0 = inlined_call_operand.vmem [shape: bf16[128,1024], index: 0, kind: input, shape index: {}]
  %s1 = inlined_call_operand.vmem [shape: bf16[1024,896], index: 1, kind: input, shape index: {}]
  %s2 = inlined_call_operand.vmem [shape: f32[1,896], index: 2, kind: input, shape index: {}]
  %s3 = inlined_call_operand.vmem [shape: f32[1,896], index: 3, kind: input, shape index: {}]
  %s4 = inlined_call_operand.vmem [shape: f32[1,896], index: 4, kind: input, shape index: {}]
  %s5 = inlined_call_operand.vmem [shape: f32[128,896], index: 5, kind: output, shape index: {}]
  %s6 = sld [smem:[#allocation0]]
  $region128: #{inception_b_forward.7} parent=0
    _
  %s8 = ssub.s32 1, %s6
  %s9 = scalar_select 0, %s8, %s6
  $region1: #{inception_b_forward.7} parent=0
    #allocation2 [shape = 'u8[524288]{0}', space=vmem, size = 0x80000, scoped, tag = 'input window, operand 1']
    #allocation3 [shape = 'u8[131072]{0}', space=vmem, size = 0x20000, scoped, tag = 'output window, operand 0']
    loop: start=0, step=1, limit=9
    $region2: #{inception_b_forward.7} parent=1 // loop_pre_header
      _
    $region3: #{inception_b_forward.7} parent=1 // loop_header
      %s11 = sphi 0, %s15
      %p12 = scmp.ge.s32.totalorder %s11, 9
      %s19 = sphi 0, %s19
      %s21 = sphi 0, %s19
      %s22 = sphi 0, %s21
      %s36 = sphi 0, %s22
      %s42 = sphi 0, %s44
      %s45 = sphi 0, %s42
      %s46 = sphi 0, %s45
      %s62 = sphi 0, %s46
      %s68 = sphi 0, %s70
      %s71 = sphi 0, %s68
      %s72 = sphi 0, %s71
      %s88 = sphi 0, %s72
      %s94 = sphi 0, %s96
      %s97 = sphi 0, %s94
      %s98 = sphi 0, %s97
      %s114 = sphi 0, %s98
      %s120 = sphi 0, %s122
      %s123 = sphi 0, %s120
      %s124 = sphi 0, %s123
      %s140 = sphi 0, %s124
      %s146 = sphi 0, %s148
      %s149 = sphi 0, %s146
      %s150 = sphi 0, %s149
      %s166 = sphi 0, %s150
    $region4: #{inception_b_forward.7} parent=1 // loop_header_branch
      %14 = sbr.rel (%p12) target = $region8
    $region5: #{inception_b_forward.7} parent=1 // loop_body
      %s16 = ssub.s32 %s11, 1
      %s17 = ssub.s32 %s11, 2
      %s18 = sadd.s32 %s11, 1
      %s20 = sadd.s32 %s19, 1
      %p23 = scmp.eq.s32.totalorder %s11, 6
      %p24 = scmp.ne.s32.totalorder %s19, %s21
      %p25 = scmp.eq.s32.totalorder %s11, 0
      %p26 = por %p24, %p25
      %p27 = scmp.ne.s32.totalorder %s19, %s21
      %p28 = scmp.eq.s32.totalorder %s16, 6
      %p29 = por %p27, %p28
      %p30 = scmp.ne.s32.totalorder %s21, %s22
      %p31 = scmp.eq.s32.totalorder %s16, 0
      %p32 = por %p30, %p31
      %p33 = scmp.ne.s32.totalorder %s21, %s22
      %p34 = scmp.eq.s32.totalorder %s17, 6
      %p35 = por %p33, %p34
      %p37 = scmp.ne.s32.totalorder %s22, %s36
      %p38 = scmp.eq.s32.totalorder %s17, 0
      %p39 = por %p37, %p38
      %s40 = ssub.s32 %s11, %s18
      %p41 = scmp.eq.s32.totalorder %s40, 0
      %s43 = sadd.s32 %s42, 1
      %s44 = scalar_select %p41, %s42, %s43
      %p47 = pneg %p41
      %p48 = scmp.eq.s32.totalorder %s11, 6
      %p49 = por %p47, %p48
      %p50 = scmp.ne.s32.totalorder %s42, %s45
      %p51 = scmp.eq.s32.totalorder %s11, 0
      %p52 = por %p50, %p51
      %p53 = scmp.ne.s32.totalorder %s42, %s45
      %p54 = scmp.eq.s32.totalorder %s16, 6
      %p55 = por %p53, %p54
      %p56 = scmp.ne.s32.totalorder %s45, %s46
      %p57 = scmp.eq.s32.totalorder %s16, 0
      %p58 = por %p56, %p57
      %p59 = scmp.ne.s32.totalorder %s45, %s46
      %p60 = scmp.eq.s32.totalorder %s17, 6
      %p61 = por %p59, %p60
      %p63 = scmp.ne.s32.totalorder %s46, %s62
      %p64 = scmp.eq.s32.totalorder %s17, 0
      %p65 = por %p63, %p64
      %s66 = ssub.s32 %s11, %s18
      %p67 = scmp.eq.s32.totalorder %s66, 0
      %s69 = sadd.s32 %s68, 1
      %s70 = scalar_select %p67, %s68, %s69
      %p73 = pneg %p67
      %p74 = scmp.eq.s32.totalorder %s11, 6
      %p75 = por %p73, %p74
      %p76 = scmp.ne.s32.totalorder %s68, %s71
      %p77 = scmp.eq.s32.totalorder %s11, 0
      %p78 = por %p76, %p77
      %p79 = scmp.ne.s32.totalorder %s68, %s71
      %p80 = scmp.eq.s32.totalorder %s16, 6
      %p81 = por %p79, %p80
      %p82 = scmp.ne.s32.totalorder %s71, %s72
      %p83 = scmp.eq.s32.totalorder %s16, 0
      %p84 = por %p82, %p83
      %p85 = scmp.ne.s32.totalorder %s71, %s72
      %p86 = scmp.eq.s32.totalorder %s17, 6
      %p87 = por %p85, %p86
      %p89 = scmp.ne.s32.totalorder %s72, %s88
      %p90 = scmp.eq.s32.totalorder %s17, 0
      %p91 = por %p89, %p90
      %s92 = ssub.s32 %s11, %s18
      %p93 = scmp.eq.s32.totalorder %s92, 0
      %s95 = sadd.s32 %s94, 1
      %s96 = scalar_select %p93, %s94, %s95
      %p99 = pneg %p93
      %p100 = scmp.eq.s32.totalorder %s11, 6
      %p101 = por %p99, %p100
      %p102 = scmp.ne.s32.totalorder %s94, %s97
      %p103 = scmp.eq.s32.totalorder %s11, 0
      %p104 = por %p102, %p103
      %p105 = scmp.ne.s32.totalorder %s94, %s97
      %p106 = scmp.eq.s32.totalorder %s16, 6
      %p107 = por %p105, %p106
      %p108 = scmp.ne.s32.totalorder %s97, %s98
      %p109 = scmp.eq.s32.totalorder %s16, 0
      %p110 = por %p108, %p109
      %p111 = scmp.ne.s32.totalorder %s97, %s98
      %p112 = scmp.eq.s32.totalorder %s17, 6
      %p113 = por %p111, %p112
      %p115 = scmp.ne.s32.totalorder %s98, %s114
      %p116 = scmp.eq.s32.totalorder %s17, 0
      %p117 = por %p115, %p116
      %s118 = ssub.s32 %s11, %s18
      %p119 = scmp.eq.s32.totalorder %s118, 0
      %s121 = sadd.s32 %s120, 1
      %s122 = scalar_select %p119, %s120, %s121
      %p125 = pneg %p119
      %p126 = scmp.eq.s32.totalorder %s11, 6
      %p127 = por %p125, %p126
      %p128 = scmp.ne.s32.totalorder %s120, %s123
      %p129 = scmp.eq.s32.totalorder %s11, 0
      %p130 = por %p128, %p129
      %p131 = scmp.ne.s32.totalorder %s120, %s123
      %p132 = scmp.eq.s32.totalorder %s16, 6
      %p133 = por %p131, %p132
      %p134 = scmp.ne.s32.totalorder %s123, %s124
      %p135 = scmp.eq.s32.totalorder %s16, 0
      %p136 = por %p134, %p135
      %p137 = scmp.ne.s32.totalorder %s123, %s124
      %p138 = scmp.eq.s32.totalorder %s17, 6
      %p139 = por %p137, %p138
      %p141 = scmp.ne.s32.totalorder %s124, %s140
      %p142 = scmp.eq.s32.totalorder %s17, 0
      %p143 = por %p141, %p142
      %s144 = ssub.s32 %s11, %s18
      %p145 = scmp.eq.s32.totalorder %s144, 0
      %s147 = sadd.s32 %s146, 1
      %s148 = scalar_select %p145, %s146, %s147
      %p151 = pneg %p145
      %p152 = scmp.eq.s32.totalorder %s11, 6
      %p153 = por %p151, %p152
      %p154 = scmp.ne.s32.totalorder %s146, %s149
      %p155 = scmp.eq.s32.totalorder %s11, 0
      %p156 = por %p154, %p155
      %p157 = scmp.ne.s32.totalorder %s146, %s149
      %p158 = scmp.eq.s32.totalorder %s16, 6
      %p159 = por %p157, %p158
      %p160 = scmp.ne.s32.totalorder %s149, %s150
      %p161 = scmp.eq.s32.totalorder %s16, 0
      %p162 = por %p160, %p161
      %p163 = scmp.ne.s32.totalorder %s149, %s150
      %p164 = scmp.eq.s32.totalorder %s17, 6
      %p165 = por %p163, %p164
      %p167 = scmp.ne.s32.totalorder %s150, %s166
      %p168 = scmp.eq.s32.totalorder %s17, 0
      %p169 = por %p167, %p168
      %p170 = scmp.le.s32.totalorder 1, %s11
      %p171 = scmp.lt.s32.totalorder %s11, 8
      %p172 = pnand %p170, %p171
      %p173 = pneg %p172
      // Predicated region
      $region9: #{inception_b_forward.7} parent=5 // pred_check
        _
      $region10: #{inception_b_forward.7} parent=5 // pred_check_branch
        %175 = sbr.rel (%p172) target = $region12
      $region11: #{inception_b_forward.7} parent=5 // pred_region
        %s176 = ssub.s32 %s11, 1
        // Predicated region
        $region13: #{inception_b_forward.7} parent=11 // pred_check
          %p177 = pneg %p32
        $region14: #{inception_b_forward.7} parent=11 // pred_check_branch
          %179 = sbr.rel (%p177) target = $region16
        $region15: #{inception_b_forward.7} parent=11 // pred_region
          _
        $region16: #{inception_b_forward.7} parent=11 // pred_fallthru
          _
      $region12: #{inception_b_forward.7} parent=5 // pred_fallthru
        _
      %p180 = scmp.lt.s32.totalorder %s11, 7
      // Predicated region
      $region17: #{inception_b_forward.7} parent=5 // pred_check
        %p181 = pneg %p180
      $region18: #{inception_b_forward.7} parent=5 // pred_check_branch
        %183 = sbr.rel (%p181) target = $region20
      $region19: #{inception_b_forward.7} parent=5 // pred_region
        // Predicated region
        $region21: #{inception_b_forward.7} parent=19 // pred_check
          %p184 = pneg %p52
        $region22: #{inception_b_forward.7} parent=19 // pred_check_branch
          %186 = sbr.rel (%p184) target = $region24
        $region23: #{inception_b_forward.7} parent=19 // pred_region
          %s187 = sand.u32 %s42, 1
          %s188 = sand.u32 %s42, 1
          %s189 = smul.addr %s188, 512
          %s190 = scalar_lea.vmem [#allocation2], %s189
          %s191 = smul.addr %s11, 4
          %s192 = scalar_lea.vmem %s1, %s191
          // Predicated region
          $region25: #{inception_b_forward.7} parent=23 // pred_check
            _
          $region26: #{inception_b_forward.7} parent=23 // pred_check_branch
            %194 = sbr.rel (0) target = $region28
          $region27: #{inception_b_forward.7} parent=23 // pred_region
            // Predicated region
            $region29: #{inception_b_forward.7} parent=27 // pred_check
              _
            $region30: #{inception_b_forward.7} parent=27 // pred_check_branch
              %196 = sbr.rel target = $region32
            $region31: #{inception_b_forward.7} parent=27 // pred_region
              // Predicated region
              $region44: #{inception_b_forward.7} parent=31 // pred_check
                _
              $region45: #{inception_b_forward.7} parent=31 // pred_check_branch
                %466 = sbr.rel (0) target = $region47
              $region46: #{inception_b_forward.7} parent=31 // pred_region
                loop: start=0, step=1, limit=1
                $region48: #{inception_b_forward.7} parent=46 // loop_pre_header
                  _
                $region49: #{inception_b_forward.7} parent=46 // loop_header
                  %s468 = sphi 0, %s472
                  %p469 = scmp.ge.s32.totalorder %s468, 1
                  %s473 = sphi %s192, %s192
                  %s474 = sphi %s190, %s190
                $region50: #{inception_b_forward.7} parent=46 // loop_header_branch
                  %471 = sbr.rel (%p469) target = $region54
                $region51: #{inception_b_forward.7} parent=46 // loop_body
                  _
                $region52: #{inception_b_forward.7} parent=46 // loop_footer
                  %s472 = sadd.s32 1, %s468
                $region53: #{inception_b_forward.7} parent=46 // loop_footer_branch
                  %467 = sbr.rel target = $region49
                $region54: #{inception_b_forward.7} parent=46 // loop_exit
                  _
                %s476 = ssub.s32 16, 1
                loop: start=0, step=1, limit=1
                $region55: #{inception_b_forward.7} parent=46 // loop_pre_header
                  _
                $region56: #{inception_b_forward.7} parent=46 // loop_header
                  %s478 = sphi 0, %s482
                  %p479 = scmp.ge.s32.totalorder %s478, 1
                  %s483 = sphi %s192, %s192
                  %s484 = sphi %s190, %s190
                $region57: #{inception_b_forward.7} parent=46 // loop_header_branch
                  %481 = sbr.rel (%p479) target = $region61
                $region58: #{inception_b_forward.7} parent=46 // loop_body
                  %v485 = vld [vmem:[%s483] sm:%s476]
                  %486 = vst [vmem:[%s484] sm:%s476] %v485
                  %v487 = vld [vmem:[%s483 + $0x1c] sm:%s476]
                  %488 = vst [vmem:[%s484 + $0x4] sm:%s476] %v487
                  %v489 = vld [vmem:[%s483 + $0x38] sm:%s476]
                  %490 = vst [vmem:[%s484 + $0x8] sm:%s476] %v489
                  %v491 = vld [vmem:[%s483 + $0x54] sm:%s476]
                  %492 = vst [vmem:[%s484 + $0xc] sm:%s476] %v491
                  %v493 = vld [vmem:[%s483 + $0x70] sm:%s476]
                  %494 = vst [vmem:[%s484 + $0x10] sm:%s476] %v493
                  %v495 = vld [vmem:[%s483 + $0x8c] sm:%s476]
                  %496 = vst [vmem:[%s484 + $0x14] sm:%s476] %v495
                  %v497 = vld [vmem:[%s483 + $0xa8] sm:%s476]
                  %498 = vst [vmem:[%s484 + $0x18] sm:%s476] %v497
                  %v499 = vld [vmem:[%s483 + $0xc4] sm:%s476]
                  %500 = vst [vmem:[%s484 + $0x1c] sm:%s476] %v499
                  %v501 = vld [vmem:[%s483 + $0xe0] sm:%s476]
                  %502 = vst [vmem:[%s484 + $0x20] sm:%s476] %v501
                  %v503 = vld [vmem:[%s483 + $0xfc] sm:%s476]
                  %504 = vst [vmem:[%s484 + $0x24] sm:%s476] %v503
                  %v505 = vld [vmem:[%s483 + $0x118] sm:%s476]
                  %506 = vst [vmem:[%s484 + $0x28] sm:%s476] %v505
                  %v507 = vld [vmem:[%s483 + $0x134] sm:%s476]
                  %508 = vst [vmem:[%s484 + $0x2c] sm:%s476] %v507
                  %v509 = vld [vmem:[%s483 + $0x150] sm:%s476]
                  %510 = vst [vmem:[%s484 + $0x30] sm:%s476] %v509
                  %v511 = vld [vmem:[%s483 + $0x16c] sm:%s476]
                  %512 = vst [vmem:[%s484 + $0x34] sm:%s476] %v511
                  %v513 = vld [vmem:[%s483 + $0x188] sm:%s476]
                  %514 = vst [vmem:[%s484 + $0x38] sm:%s476] %v513
                  %v515 = vld [vmem:[%s483 + $0x1a4] sm:%s476]
                  %516 = vst [vmem:[%s484 + $0x3c] sm:%s476] %v515
                  %v517 = vld [vmem:[%s483 + $0x1c0] sm:%s476]
                  %518 = vst [vmem:[%s484 + $0x40] sm:%s476] %v517
                  %v519 = vld [vmem:[%s483 + $0x1dc] sm:%s476]
                  %520 = vst [vmem:[%s484 + $0x44] sm:%s476] %v519
                  %v521 = vld [vmem:[%s483 + $0x1f8] sm:%s476]
                  %522 = vst [vmem:[%s484 + $0x48] sm:%s476] %v521
                  %v523 = vld [vmem:[%s483 + $0x214] sm:%s476]
                  %524 = vst [vmem:[%s484 + $0x4c] sm:%s476] %v523
                  %v525 = vld [vmem:[%s483 + $0x230] sm:%s476]
                  %526 = vst [vmem:[%s484 + $0x50] sm:%s476] %v525
                  %v527 = vld [vmem:[%s483 + $0x24c] sm:%s476]
                  %528 = vst [vmem:[%s484 + $0x54] sm:%s476] %v527
                  %v529 = vld [vmem:[%s483 + $0x268] sm:%s476]
                  %530 = vst [vmem:[%s484 + $0x58] sm:%s476] %v529
                  %v531 = vld [vmem:[%s483 + $0x284] sm:%s476]
                  %532 = vst [vmem:[%s484 + $0x5c] sm:%s476] %v531
                  %v533 = vld [vmem:[%s483 + $0x2a0] sm:%s476]
                  %534 = vst [vmem:[%s484 + $0x60] sm:%s476] %v533
                  %v535 = vld [vmem:[%s483 + $0x2bc] sm:%s476]
                  %536 = vst [vmem:[%s484 + $0x64] sm:%s476] %v535
                  %v537 = vld [vmem:[%s483 + $0x2d8] sm:%s476]
                  %538 = vst [vmem:[%s484 + $0x68] sm:%s476] %v537
                  %v539 = vld [vmem:[%s483 + $0x2f4] sm:%s476]
                  %540 = vst [vmem:[%s484 + $0x6c] sm:%s476] %v539
                  %v541 = vld [vmem:[%s483 + $0x310] sm:%s476]
                  %542 = vst [vmem:[%s484 + $0x70] sm:%s476] %v541
                  %v543 = vld [vmem:[%s483 + $0x32c] sm:%s476]
                  %544 = vst [vmem:[%s484 + $0x74] sm:%s476] %v543
                  %v545 = vld [vmem:[%s483 + $0x348] sm:%s476]
                  %546 = vst [vmem:[%s484 + $0x78] sm:%s476] %v545
                  %v547 = vld [vmem:[%s483 + $0x364] sm:%s476]
                  %548 = vst [vmem:[%s484 + $0x7c] sm:%s476] %v547
                  %v549 = vld [vmem:[%s483 + $0x380] sm:%s476]
                  %550 = vst [vmem:[%s484 + $0x80] sm:%s476] %v549
                  %v551 = vld [vmem:[%s483 + $0x39c] sm:%s476]
                  %552 = vst [vmem:[%s484 + $0x84] sm:%s476] %v551
                  %v553 = vld [vmem:[%s483 + $0x3b8] sm:%s476]
                  %554 = vst [vmem:[%s484 + $0x88] sm:%s476] %v553
                  %v555 = vld [vmem:[%s483 + $0x3d4] sm:%s476]
                  %556 = vst [vmem:[%s484 + $0x8c] sm:%s476] %v555
                  %v557 = vld [vmem:[%s483 + $0x3f0] sm:%s476]
                  %558 = vst [vmem:[%s484 + $0x90] sm:%s476] %v557
                  %v559 = vld [vmem:[%s483 + $0x40c] sm:%s476]
                  %560 = vst [vmem:[%s484 + $0x94] sm:%s476] %v559
                  %v561 = vld [vmem:[%s483 + $0x428] sm:%s476]
                  %562 = vst [vmem:[%s484 + $0x98] sm:%s476] %v561
                  %v563 = vld [vmem:[%s483 + $0x444] sm:%s476]
                  %564 = vst [vmem:[%s484 + $0x9c] sm:%s476] %v563
                  %v565 = vld [vmem:[%s483 + $0x460] sm:%s476]
                  %566 = vst [vmem:[%s484 + $0xa0] sm:%s476] %v565
                  %v567 = vld [vmem:[%s483 + $0x47c] sm:%s476]
                  %568 = vst [vmem:[%s484 + $0xa4] sm:%s476] %v567
                  %v569 = vld [vmem:[%s483 + $0x498] sm:%s476]
                  %570 = vst [vmem:[%s484 + $0xa8] sm:%s476] %v569
                  %v571 = vld [vmem:[%s483 + $0x4b4] sm:%s476]
                  %572 = vst [vmem:[%s484 + $0xac] sm:%s476] %v571
                  %v573 = vld [vmem:[%s483 + $0x4d0] sm:%s476]
                  %574 = vst [vmem:[%s484 + $0xb0] sm:%s476] %v573
                  %v575 = vld [vmem:[%s483 + $0x4ec] sm:%s476]
                  %576 = vst [vmem:[%s484 + $0xb4] sm:%s476] %v575
                  %v577 = vld [vmem:[%s483 + $0x508] sm:%s476]
                  %578 = vst [vmem:[%s484 + $0xb8] sm:%s476] %v577
                  %v579 = vld [vmem:[%s483 + $0x524] sm:%s476]
                  %580 = vst [vmem:[%s484 + $0xbc] sm:%s476] %v579
                  %v581 = vld [vmem:[%s483 + $0x540] sm:%s476]
                  %582 = vst [vmem:[%s484 + $0xc0] sm:%s476] %v581
                  %v583 = vld [vmem:[%s483 + $0x55c] sm:%s476]
                  %584 = vst [vmem:[%s484 + $0xc4] sm:%s476] %v583
                  %v585 = vld [vmem:[%s483 + $0x578] sm:%s476]
                  %586 = vst [vmem:[%s484 + $0xc8] sm:%s476] %v585
                  %v587 = vld [vmem:[%s483 + $0x594] sm:%s476]
                  %588 = vst [vmem:[%s484 + $0xcc] sm:%s476] %v587
                  %v589 = vld [vmem:[%s483 + $0x5b0] sm:%s476]
                  %590 = vst [vmem:[%s484 + $0xd0] sm:%s476] %v589
                  %v591 = vld [vmem:[%s483 + $0x5cc] sm:%s476]
                  %592 = vst [vmem:[%s484 + $0xd4] sm:%s476] %v591
                  %v593 = vld [vmem:[%s483 + $0x5e8] sm:%s476]
                  %594 = vst [vmem:[%s484 + $0xd8] sm:%s476] %v593
                  %v595 = vld [vmem:[%s483 + $0x604] sm:%s476]
                  %596 = vst [vmem:[%s484 + $0xdc] sm:%s476] %v595
                  %v597 = vld [vmem:[%s483 + $0x620] sm:%s476]
                  %598 = vst [vmem:[%s484 + $0xe0] sm:%s476] %v597
                  %v599 = vld [vmem:[%s483 + $0x63c] sm:%s476]
                  %600 = vst [vmem:[%s484 + $0xe4] sm:%s476] %v599
                  %v601 = vld [vmem:[%s483 + $0x658] sm:%s476]
                  %602 = vst [vmem:[%s484 + $0xe8] sm:%s476] %v601
                  %v603 = vld [vmem:[%s483 + $0x674] sm:%s476]
                  %604 = vst [vmem:[%s484 + $0xec] sm:%s476] %v603
                  %v605 = vld [vmem:[%s483 + $0x690] sm:%s476]
                  %606 = vst [vmem:[%s484 + $0xf0] sm:%s476] %v605
                  %v607 = vld [vmem:[%s483 + $0x6ac] sm:%s476]
                  %608 = vst [vmem:[%s484 + $0xf4] sm:%s476] %v607
                  %v609 = vld [vmem:[%s483 + $0x6c8] sm:%s476]
                  %610 = vst [vmem:[%s484 + $0xf8] sm:%s476] %v609
                  %v611 = vld [vmem:[%s483 + $0x6e4] sm:%s476]
                  %612 = vst [vmem:[%s484 + $0xfc] sm:%s476] %v611
                  %v613 = vld [vmem:[%s483 + $0x700] sm:%s476]
                  %614 = vst [vmem:[%s484 + $0x100] sm:%s476] %v613
                  %v615 = vld [vmem:[%s483 + $0x71c] sm:%s476]
                  %616 = vst [vmem:[%s484 + $0x104] sm:%s476] %v615
                  %v617 = vld [vmem:[%s483 + $0x738] sm:%s476]
                  %618 = vst [vmem:[%s484 + $0x108] sm:%s476] %v617
                  %v619 = vld [vmem:[%s483 + $0x754] sm:%s476]
                  %620 = vst [vmem:[%s484 + $0x10c] sm:%s476] %v619
                  %v621 = vld [vmem:[%s483 + $0x770] sm:%s476]
                  %622 = vst [vmem:[%s484 + $0x110] sm:%s476] %v621
                  %v623 = vld [vmem:[%s483 + $0x78c] sm:%s476]
                  %624 = vst [vmem:[%s484 + $0x114] sm:%s476] %v623
                  %v625 = vld [vmem:[%s483 + $0x7a8] sm:%s476]
                  %626 = vst [vmem:[%s484 + $0x118] sm:%s476] %v625
                  %v627 = vld [vmem:[%s483 + $0x7c4] sm:%s476]
                  %628 = vst [vmem:[%s484 + $0x11c] sm:%s476] %v627
                  %v629 = vld [vmem:[%s483 + $0x7e0] sm:%s476]
                  %630 = vst [vmem:[%s484 + $0x120] sm:%s476] %v629
                  %v631 = vld [vmem:[%s483 + $0x7fc] sm:%s476]
                  %632 = vst [vmem:[%s484 + $0x124] sm:%s476] %v631
                  %v633 = vld [vmem:[%s483 + $0x818] sm:%s476]
                  %634 = vst [vmem:[%s484 + $0x128] sm:%s476] %v633
                  %v635 = vld [vmem:[%s483 + $0x834] sm:%s476]
                  %636 = vst [vmem:[%s484 + $0x12c] sm:%s476] %v635
                  %v637 = vld [vmem:[%s483 + $0x850] sm:%s476]
                  %638 = vst [vmem:[%s484 + $0x130] sm:%s476] %v637
                  %v639 = vld [vmem:[%s483 + $0x86c] sm:%s476]
                  %640 = vst [vmem:[%s484 + $0x134] sm:%s476] %v639
                  %v641 = vld [vmem:[%s483 + $0x888] sm:%s476]
                  %642 = vst [vmem:[%s484 + $0x138] sm:%s476] %v641
                  %v643 = vld [vmem:[%s483 + $0x8a4] sm:%s476]
                  %644 = vst [vmem:[%s484 + $0x13c] sm:%s476] %v643
                  %v645 = vld [vmem:[%s483 + $0x8c0] sm:%s476]
                  %646 = vst [vmem:[%s484 + $0x140] sm:%s476] %v645
                  %v647 = vld [vmem:[%s483 + $0x8dc] sm:%s476]
                  %648 = vst [vmem:[%s484 + $0x144] sm:%s476] %v647
                  %v649 = vld [vmem:[%s483 + $0x8f8] sm:%s476]
                  %650 = vst [vmem:[%s484 + $0x148] sm:%s476] %v649
                  %v651 = vld [vmem:[%s483 + $0x914] sm:%s476]
                  %652 = vst [vmem:[%s484 + $0x14c] sm:%s476] %v651
                  %v653 = vld [vmem:[%s483 + $0x930] sm:%s476]
                  %654 = vst [vmem:[%s484 + $0x150] sm:%s476] %v653
                  %v655 = vld [vmem:[%s483 + $0x94c] sm:%s476]
                  %656 = vst [vmem:[%s484 + $0x154] sm:%s476] %v655
                  %v657 = vld [vmem:[%s483 + $0x968] sm:%s476]
                  %658 = vst [vmem:[%s484 + $0x158] sm:%s476] %v657
                  %v659 = vld [vmem:[%s483 + $0x984] sm:%s476]
                  %660 = vst [vmem:[%s484 + $0x15c] sm:%s476] %v659
                  %v661 = vld [vmem:[%s483 + $0x9a0] sm:%s476]
                  %662 = vst [vmem:[%s484 + $0x160] sm:%s476] %v661
                  %v663 = vld [vmem:[%s483 + $0x9bc] sm:%s476]
                  %664 = vst [vmem:[%s484 + $0x164] sm:%s476] %v663
                  %v665 = vld [vmem:[%s483 + $0x9d8] sm:%s476]
                  %666 = vst [vmem:[%s484 + $0x168] sm:%s476] %v665
                  %v667 = vld [vmem:[%s483 + $0x9f4] sm:%s476]
                  %668 = vst [vmem:[%s484 + $0x16c] sm:%s476] %v667
                  %v669 = vld [vmem:[%s483 + $0xa10] sm:%s476]
                  %670 = vst [vmem:[%s484 + $0x170] sm:%s476] %v669
                  %v671 = vld [vmem:[%s483 + $0xa2c] sm:%s476]
                  %672 = vst [vmem:[%s484 + $0x174] sm:%s476] %v671
                  %v673 = vld [vmem:[%s483 + $0xa48] sm:%s476]
                  %674 = vst [vmem:[%s484 + $0x178] sm:%s476] %v673
                  %v675 = vld [vmem:[%s483 + $0xa64] sm:%s476]
                  %676 = vst [vmem:[%s484 + $0x17c] sm:%s476] %v675
                  %v677 = vld [vmem:[%s483 + $0xa80] sm:%s476]
                  %678 = vst [vmem:[%s484 + $0x180] sm:%s476] %v677
                  %v679 = vld [vmem:[%s483 + $0xa9c] sm:%s476]
                  %680 = vst [vmem:[%s484 + $0x184] sm:%s476] %v679
                  %v681 = vld [vmem:[%s483 + $0xab8] sm:%s476]
                  %682 = vst [vmem:[%s484 + $0x188] sm:%s476] %v681
                  %v683 = vld [vmem:[%s483 + $0xad4] sm:%s476]
                  %684 = vst [vmem:[%s484 + $0x18c] sm:%s476] %v683
                  %v685 = vld [vmem:[%s483 + $0xaf0] sm:%s476]
                  %686 = vst [vmem:[%s484 + $0x190] sm:%s476] %v685
                  %v687 = vld [vmem:[%s483 + $0xb0c] sm:%s476]
                  %688 = vst [vmem:[%s484 + $0x194] sm:%s476] %v687
                  %v689 = vld [vmem:[%s483 + $0xb28] sm:%s476]
                  %690 = vst [vmem:[%s484 + $0x198] sm:%s476] %v689
                  %v691 = vld [vmem:[%s483 + $0xb44] sm:%s476]
                  %692 = vst [vmem:[%s484 + $0x19c] sm:%s476] %v691
                  %v693 = vld [vmem:[%s483 + $0xb60] sm:%s476]
                  %694 = vst [vmem:[%s484 + $0x1a0] sm:%s476] %v693
                  %v695 = vld [vmem:[%s483 + $0xb7c] sm:%s476]
                  %696 = vst [vmem:[%s484 + $0x1a4] sm:%s476] %v695
                  %v697 = vld [vmem:[%s483 + $0xb98] sm:%s476]
                  %698 = vst [vmem:[%s484 + $0x1a8] sm:%s476] %v697
                  %v699 = vld [vmem:[%s483 + $0xbb4] sm:%s476]
                  %700 = vst [vmem:[%s484 + $0x1ac] sm:%s476] %v699
                  %v701 = vld [vmem:[%s483 + $0xbd0] sm:%s476]
                  %702 = vst [vmem:[%s484 + $0x1b0] sm:%s476] %v701
                  %v703 = vld [vmem:[%s483 + $0xbec] sm:%s476]
                  %704 = vst [vmem:[%s484 + $0x1b4] sm:%s476] %v703
                  %v705 = vld [vmem:[%s483 + $0xc08] sm:%s476]
                  %706 = vst [vmem:[%s484 + $0x1b8] sm:%s476] %v705
                  %v707 = vld [vmem:[%s483 + $0xc24] sm:%s476]
                  %708 = vst [vmem:[%s484 + $0x1bc] sm:%s476] %v707
                  %v709 = vld [vmem:[%s483 + $0xc40] sm:%s476]
                  %710 = vst [vmem:[%s484 + $0x1c0] sm:%s476] %v709
                  %v711 = vld [vmem:[%s483 + $0xc5c] sm:%s476]
                  %712 = vst [vmem:[%s484 + $0x1c4] sm:%s476] %v711
                  %v713 = vld [vmem:[%s483 + $0xc78] sm:%s476]
                  %714 = vst [vmem:[%s484 + $0x1c8] sm:%s476] %v713
                  %v715 = vld [vmem:[%s483 + $0xc94] sm:%s476]
                  %716 = vst [vmem:[%s484 + $0x1cc] sm:%s476] %v715
                  %v717 = vld [vmem:[%s483 + $0xcb0] sm:%s476]
                  %718 = vst [vmem:[%s484 + $0x1d0] sm:%s476] %v717
                  %v719 = vld [vmem:[%s483 + $0xccc] sm:%s476]
                  %720 = vst [vmem:[%s484 + $0x1d4] sm:%s476] %v719
                  %v721 = vld [vmem:[%s483 + $0xce8] sm:%s476]
                  %722 = vst [vmem:[%s484 + $0x1d8] sm:%s476] %v721
                  %v723 = vld [vmem:[%s483 + $0xd04] sm:%s476]
                  %724 = vst [vmem:[%s484 + $0x1dc] sm:%s476] %v723
                  %v725 = vld [vmem:[%s483 + $0xd20] sm:%s476]
                  %726 = vst [vmem:[%s484 + $0x1e0] sm:%s476] %v725
                  %v727 = vld [vmem:[%s483 + $0xd3c] sm:%s476]
                  %728 = vst [vmem:[%s484 + $0x1e4] sm:%s476] %v727
                  %v729 = vld [vmem:[%s483 + $0xd58] sm:%s476]
                  %730 = vst [vmem:[%s484 + $0x1e8] sm:%s476] %v729
                  %v731 = vld [vmem:[%s483 + $0xd74] sm:%s476]
                  %732 = vst [vmem:[%s484 + $0x1ec] sm:%s476] %v731
                  %v733 = vld [vmem:[%s483 + $0xd90] sm:%s476]
                  %734 = vst [vmem:[%s484 + $0x1f0] sm:%s476] %v733
                  %v735 = vld [vmem:[%s483 + $0xdac] sm:%s476]
                  %736 = vst [vmem:[%s484 + $0x1f4] sm:%s476] %v735
                  %v737 = vld [vmem:[%s483 + $0xdc8] sm:%s476]
                  %738 = vst [vmem:[%s484 + $0x1f8] sm:%s476] %v737
                  %v739 = vld [vmem:[%s483 + $0xde4] sm:%s476]
                  %740 = vst [vmem:[%s484 + $0x1fc] sm:%s476] %v739
                $region59: #{inception_b_forward.7} parent=46 // loop_footer
                  %s482 = sadd.s32 1, %s478
                $region60: #{inception_b_forward.7} parent=46 // loop_footer_branch
                  %477 = sbr.rel target = $region56
                $region61: #{inception_b_forward.7} parent=46 // loop_exit
                  _
              $region47: #{inception_b_forward.7} parent=31 // pred_fallthru
                _
            $region32: #{inception_b_forward.7} parent=27 // pred_fallthru
              _
            // Predicated region
            $region33: #{inception_b_forward.7} parent=27 // pred_check
              _
            $region34: #{inception_b_forward.7} parent=27 // pred_check_branch
              %198 = sbr.rel (0) target = $region36
            $region35: #{inception_b_forward.7} parent=27 // pred_region
              %s200 = ssub.s32 16, 1
              loop: start=0, step=1, limit=1
              $region37: #{inception_b_forward.7} parent=35 // loop_pre_header
                _
              $region38: #{inception_b_forward.7} parent=35 // loop_header
                %s202 = sphi 0, %s206
                %p203 = scmp.ge.s32.totalorder %s202, 1
                %s207 = sphi %s192, %s192
                %s208 = sphi %s190, %s190
              $region39: #{inception_b_forward.7} parent=35 // loop_header_branch
                %205 = sbr.rel (%p203) target = $region43
              $region40: #{inception_b_forward.7} parent=35 // loop_body
                %v209 = vld [vmem:[%s207] sm:%s200]
                %210 = vst [vmem:[%s208] sm:%s200] %v209
                %v211 = vld [vmem:[%s207 + $0x1c] sm:%s200]
                %212 = vst [vmem:[%s208 + $0x4] sm:%s200] %v211
                %v213 = vld [vmem:[%s207 + $0x38] sm:%s200]
                %214 = vst [vmem:[%s208 + $0x8] sm:%s200] %v213
                %v215 = vld [vmem:[%s207 + $0x54] sm:%s200]
                %216 = vst [vmem:[%s208 + $0xc] sm:%s200] %v215
                %v217 = vld [vmem:[%s207 + $0x70] sm:%s200]
                %218 = vst [vmem:[%s208 + $0x10] sm:%s200] %v217
                %v219 = vld [vmem:[%s207 + $0x8c] sm:%s200]
                %220 = vst [vmem:[%s208 + $0x14] sm:%s200] %v219
                %v221 = vld [vmem:[%s207 + $0xa8] sm:%s200]
                %222 = vst [vmem:[%s208 + $0x18] sm:%s200] %v221
                %v223 = vld [vmem:[%s207 + $0xc4] sm:%s200]
                %224 = vst [vmem:[%s208 + $0x1c] sm:%s200] %v223
                %v225 = vld [vmem:[%s207 + $0xe0] sm:%s200]
                %226 = vst [vmem:[%s208 + $0x20] sm:%s200] %v225
                %v227 = vld [vmem:[%s207 + $0xfc] sm:%s200]
                %228 = vst [vmem:[%s208 + $0x24] sm:%s200] %v227
                %v229 = vld [vmem:[%s207 + $0x118] sm:%s200]
                %230 = vst [vmem:[%s208 + $0x28] sm:%s200] %v229
                %v231 = vld [vmem:[%s207 + $0x134] sm:%s200]
                %232 = vst [vmem:[%s208 + $0x2c] sm:%s200] %v231
                %v233 = vld [vmem:[%s207 + $0x150] sm:%s200]
                %234 = vst [vmem:[%s208 + $0x30] sm:%s200] %v233
                %v235 = vld [vmem:[%s207 + $0x16c] sm:%s200]
                %236 = vst [vmem:[%s208 + $0x34] sm:%s200] %v235
                %v237 = vld [vmem:[%s207 + $0x188] sm:%s200]
                %238 = vst [vmem:[%s208 + $0x38] sm:%s200] %v237
                %v239 = vld [vmem:[%s207 + $0x1a4] sm:%s200]
                %240 = vst [vmem:[%s208 + $0x3c] sm:%s200] %v239
                %v241 = vld [vmem:[%s207 + $0x1c0] sm:%s200]
                %242 = vst [vmem:[%s208 + $0x40] sm:%s200] %v241
                %v243 = vld [vmem:[%s207 + $0x1dc] sm:%s200]
                %244 = vst [vmem:[%s208 + $0x44] sm:%s200] %v243
                %v245 = vld [vmem:[%s207 + $0x1f8] sm:%s200]
                %246 = vst [vmem:[%s208 + $0x48] sm:%s200] %v245
                %v247 = vld [vmem:[%s207 + $0x214] sm:%s200]
                %248 = vst [vmem:[%s208 + $0x4c] sm:%s200] %v247
                %v249 = vld [vmem:[%s207 + $0x230] sm:%s200]
                %250 = vst [vmem:[%s208 + $0x50] sm:%s200] %v249
                %v251 = vld [vmem:[%s207 + $0x24c] sm:%s200]
                %252 = vst [vmem:[%s208 + $0x54] sm:%s200] %v251
                %v253 = vld [vmem:[%s207 + $0x268] sm:%s200]
                %254 = vst [vmem:[%s208 + $0x58] sm:%s200] %v253
                %v255 = vld [vmem:[%s207 + $0x284] sm:%s200]
                %256 = vst [vmem:[%s208 + $0x5c] sm:%s200] %v255
                %v257 = vld [vmem:[%s207 + $0x2a0] sm:%s200]
                %258 = vst [vmem:[%s208 + $0x60] sm:%s200] %v257
                %v259 = vld [vmem:[%s207 + $0x2bc] sm:%s200]
                %260 = vst [vmem:[%s208 + $0x64] sm:%s200] %v259
                %v261 = vld [vmem:[%s207 + $0x2d8] sm:%s200]
                %262 = vst [vmem:[%s208 + $0x68] sm:%s200] %v261
                %v263 = vld [vmem:[%s207 + $0x2f4] sm:%s200]
                %264 = vst [vmem:[%s208 + $0x6c] sm:%s200] %v263
                %v265 = vld [vmem:[%s207 + $0x310] sm:%s200]
                %266 = vst [vmem:[%s208 + $0x70] sm:%s200] %v265
                %v267 = vld [vmem:[%s207 + $0x32c] sm:%s200]
                %268 = vst [vmem:[%s208 + $0x74] sm:%s200] %v267
                %v269 = vld [vmem:[%s207 + $0x348] sm:%s200]
                %270 = vst [vmem:[%s208 + $0x78] sm:%s200] %v269
                %v271 = vld [vmem:[%s207 + $0x364] sm:%s200]
                %272 = vst [vmem:[%s208 + $0x7c] sm:%s200] %v271
                %v273 = vld [vmem:[%s207 + $0x380] sm:%s200]
                %274 = vst [vmem:[%s208 + $0x80] sm:%s200] %v273
                %v275 = vld [vmem:[%s207 + $0x39c] sm:%s200]
                %276 = vst [vmem:[%s208 + $0x84] sm:%s200] %v275
                %v277 = vld [vmem:[%s207 + $0x3b8] sm:%s200]
                %278 = vst [vmem:[%s208 + $0x88] sm:%s200] %v277
                %v279 = vld [vmem:[%s207 + $0x3d4] sm:%s200]
                %280 = vst [vmem:[%s208 + $0x8c] sm:%s200] %v279
                %v281 = vld [vmem:[%s207 + $0x3f0] sm:%s200]
                %282 = vst [vmem:[%s208 + $0x90] sm:%s200] %v281
                %v283 = vld [vmem:[%s207 + $0x40c] sm:%s200]
                %284 = vst [vmem:[%s208 + $0x94] sm:%s200] %v283
                %v285 = vld [vmem:[%s207 + $0x428] sm:%s200]
                %286 = vst [vmem:[%s208 + $0x98] sm:%s200] %v285
                %v287 = vld [vmem:[%s207 + $0x444] sm:%s200]
                %288 = vst [vmem:[%s208 + $0x9c] sm:%s200] %v287
                %v289 = vld [vmem:[%s207 + $0x460] sm:%s200]
                %290 = vst [vmem:[%s208 + $0xa0] sm:%s200] %v289
                %v291 = vld [vmem:[%s207 + $0x47c] sm:%s200]
                %292 = vst [vmem:[%s208 + $0xa4] sm:%s200] %v291
                %v293 = vld [vmem:[%s207 + $0x498] sm:%s200]
                %294 = vst [vmem:[%s208 + $0xa8] sm:%s200] %v293
                %v295 = vld [vmem:[%s207 + $0x4b4] sm:%s200]
                %296 = vst [vmem:[%s208 + $0xac] sm:%s200] %v295
                %v297 = vld [vmem:[%s207 + $0x4d0] sm:%s200]
                %298 = vst [vmem:[%s208 + $0xb0] sm:%s200] %v297
                %v299 = vld [vmem:[%s207 + $0x4ec] sm:%s200]
                %300 = vst [vmem:[%s208 + $0xb4] sm:%s200] %v299
                %v301 = vld [vmem:[%s207 + $0x508] sm:%s200]
                %302 = vst [vmem:[%s208 + $0xb8] sm:%s200] %v301
                %v303 = vld [vmem:[%s207 + $0x524] sm:%s200]
                %304 = vst [vmem:[%s208 + $0xbc] sm:%s200] %v303
                %v305 = vld [vmem:[%s207 + $0x540] sm:%s200]
                %306 = vst [vmem:[%s208 + $0xc0] sm:%s200] %v305
                %v307 = vld [vmem:[%s207 + $0x55c] sm:%s200]
                %308 = vst [vmem:[%s208 + $0xc4] sm:%s200] %v307
                %v309 = vld [vmem:[%s207 + $0x578] sm:%s200]
                %310 = vst [vmem:[%s208 + $0xc8] sm:%s200] %v309
                %v311 = vld [vmem:[%s207 + $0x594] sm:%s200]
                %312 = vst [vmem:[%s208 + $0xcc] sm:%s200] %v311
                %v313 = vld [vmem:[%s207 + $0x5b0] sm:%s200]
                %314 = vst [vmem:[%s208 + $0xd0] sm:%s200] %v313
                %v315 = vld [vmem:[%s207 + $0x5cc] sm:%s200]
                %316 = vst [vmem:[%s208 + $0xd4] sm:%s200] %v315
                %v317 = vld [vmem:[%s207 + $0x5e8] sm:%s200]
                %318 = vst [vmem:[%s208 + $0xd8] sm:%s200] %v317
                %v319 = vld [vmem:[%s207 + $0x604] sm:%s200]
                %320 = vst [vmem:[%s208 + $0xdc] sm:%s200] %v319
                %v321 = vld [vmem:[%s207 + $0x620] sm:%s200]
                %322 = vst [vmem:[%s208 + $0xe0] sm:%s200] %v321
                %v323 = vld [vmem:[%s207 + $0x63c] sm:%s200]
                %324 = vst [vmem:[%s208 + $0xe4] sm:%s200] %v323
                %v325 = vld [vmem:[%s207 + $0x658] sm:%s200]
                %326 = vst [vmem:[%s208 + $0xe8] sm:%s200] %v325
                %v327 = vld [vmem:[%s207 + $0x674] sm:%s200]
                %328 = vst [vmem:[%s208 + $0xec] sm:%s200] %v327
                %v329 = vld [vmem:[%s207 + $0x690] sm:%s200]
                %330 = vst [vmem:[%s208 + $0xf0] sm:%s200] %v329
                %v331 = vld [vmem:[%s207 + $0x6ac] sm:%s200]
                %332 = vst [vmem:[%s208 + $0xf4] sm:%s200] %v331
                %v333 = vld [vmem:[%s207 + $0x6c8] sm:%s200]
                %334 = vst [vmem:[%s208 + $0xf8] sm:%s200] %v333
                %v335 = vld [vmem:[%s207 + $0x6e4] sm:%s200]
                %336 = vst [vmem:[%s208 + $0xfc] sm:%s200] %v335
                %v337 = vld [vmem:[%s207 + $0x700] sm:%s200]
                %338 = vst [vmem:[%s208 + $0x100] sm:%s200] %v337
                %v339 = vld [vmem:[%s207 + $0x71c] sm:%s200]
                %340 = vst [vmem:[%s208 + $0x104] sm:%s200] %v339
                %v341 = vld [vmem:[%s207 + $0x738] sm:%s200]
                %342 = vst [vmem:[%s208 + $0x108] sm:%s200] %v341
                %v343 = vld [vmem:[%s207 + $0x754] sm:%s200]
                %344 = vst [vmem:[%s208 + $0x10c] sm:%s200] %v343
                %v345 = vld [vmem:[%s207 + $0x770] sm:%s200]
                %346 = vst [vmem:[%s208 + $0x110] sm:%s200] %v345
                %v347 = vld [vmem:[%s207 + $0x78c] sm:%s200]
                %348 = vst [vmem:[%s208 + $0x114] sm:%s200] %v347
                %v349 = vld [vmem:[%s207 + $0x7a8] sm:%s200]
                %350 = vst [vmem:[%s208 + $0x118] sm:%s200] %v349
                %v351 = vld [vmem:[%s207 + $0x7c4] sm:%s200]
                %352 = vst [vmem:[%s208 + $0x11c] sm:%s200] %v351
                %v353 = vld [vmem:[%s207 + $0x7e0] sm:%s200]
                %354 = vst [vmem:[%s208 + $0x120] sm:%s200] %v353
                %v355 = vld [vmem:[%s207 + $0x7fc] sm:%s200]
                %356 = vst [vmem:[%s208 + $0x124] sm:%s200] %v355
                %v357 = vld [vmem:[%s207 + $0x818] sm:%s200]
                %358 = vst [vmem:[%s208 + $0x128] sm:%s200] %v357
                %v359 = vld [vmem:[%s207 + $0x834] sm:%s200]
                %360 = vst [vmem:[%s208 + $0x12c] sm:%s200] %v359
                %v361 = vld [vmem:[%s207 + $0x850] sm:%s200]
                %362 = vst [vmem:[%s208 + $0x130] sm:%s200] %v361
                %v363 = vld [vmem:[%s207 + $0x86c] sm:%s200]
                %364 = vst [vmem:[%s208 + $0x134] sm:%s200] %v363
                %v365 = vld [vmem:[%s207 + $0x888] sm:%s200]
                %366 = vst [vmem:[%s208 + $0x138] sm:%s200] %v365
                %v367 = vld [vmem:[%s207 + $0x8a4] sm:%s200]
                %368 = vst [vmem:[%s208 + $0x13c] sm:%s200] %v367
                %v369 = vld [vmem:[%s207 + $0x8c0] sm:%s200]
                %370 = vst [vmem:[%s208 + $0x140] sm:%s200] %v369
                %v371 = vld [vmem:[%s207 + $0x8dc] sm:%s200]
                %372 = vst [vmem:[%s208 + $0x144] sm:%s200] %v371
                %v373 = vld [vmem:[%s207 + $0x8f8] sm:%s200]
                %374 = vst [vmem:[%s208 + $0x148] sm:%s200] %v373
                %v375 = vld [vmem:[%s207 + $0x914] sm:%s200]
                %376 = vst [vmem:[%s208 + $0x14c] sm:%s200] %v375
                %v377 = vld [vmem:[%s207 + $0x930] sm:%s200]
                %378 = vst [vmem:[%s208 + $0x150] sm:%s200] %v377
                %v379 = vld [vmem:[%s207 + $0x94c] sm:%s200]
                %380 = vst [vmem:[%s208 + $0x154] sm:%s200] %v379
                %v381 = vld [vmem:[%s207 + $0x968] sm:%s200]
                %382 = vst [vmem:[%s208 + $0x158] sm:%s200] %v381
                %v383 = vld [vmem:[%s207 + $0x984] sm:%s200]
                %384 = vst [vmem:[%s208 + $0x15c] sm:%s200] %v383
                %v385 = vld [vmem:[%s207 + $0x9a0] sm:%s200]
                %386 = vst [vmem:[%s208 + $0x160] sm:%s200] %v385
                %v387 = vld [vmem:[%s207 + $0x9bc] sm:%s200]
                %388 = vst [vmem:[%s208 + $0x164] sm:%s200] %v387
                %v389 = vld [vmem:[%s207 + $0x9d8] sm:%s200]
                %390 = vst [vmem:[%s208 + $0x168] sm:%s200] %v389
                %v391 = vld [vmem:[%s207 + $0x9f4] sm:%s200]
                %392 = vst [vmem:[%s208 + $0x16c] sm:%s200] %v391
                %v393 = vld [vmem:[%s207 + $0xa10] sm:%s200]
                %394 = vst [vmem:[%s208 + $0x170] sm:%s200] %v393
                %v395 = vld [vmem:[%s207 + $0xa2c] sm:%s200]
                %396 = vst [vmem:[%s208 + $0x174] sm:%s200] %v395
                %v397 = vld [vmem:[%s207 + $0xa48] sm:%s200]
                %398 = vst [vmem:[%s208 + $0x178] sm:%s200] %v397
                %v399 = vld [vmem:[%s207 + $0xa64] sm:%s200]
                %400 = vst [vmem:[%s208 + $0x17c] sm:%s200] %v399
                %v401 = vld [vmem:[%s207 + $0xa80] sm:%s200]
                %402 = vst [vmem:[%s208 + $0x180] sm:%s200] %v401
                %v403 = vld [vmem:[%s207 + $0xa9c] sm:%s200]
                %404 = vst [vmem:[%s208 + $0x184] sm:%s200] %v403
                %v405 = vld [vmem:[%s207 + $0xab8] sm:%s200]
                %406 = vst [vmem:[%s208 + $0x188] sm:%s200] %v405
                %v407 = vld [vmem:[%s207 + $0xad4] sm:%s200]
                %408 = vst [vmem:[%s208 + $0x18c] sm:%s200] %v407
                %v409 = vld [vmem:[%s207 + $0xaf0] sm:%s200]
                %410 = vst [vmem:[%s208 + $0x190] sm:%s200] %v409
                %v411 = vld [vmem:[%s207 + $0xb0c] sm:%s200]
                %412 = vst [vmem:[%s208 + $0x194] sm:%s200] %v411
                %v413 = vld [vmem:[%s207 + $0xb28] sm:%s200]
                %414 = vst [vmem:[%s208 + $0x198] sm:%s200] %v413
                %v415 = vld [vmem:[%s207 + $0xb44] sm:%s200]
                %416 = vst [vmem:[%s208 + $0x19c] sm:%s200] %v415
                %v417 = vld [vmem:[%s207 + $0xb60] sm:%s200]
                %418 = vst [vmem:[%s208 + $0x1a0] sm:%s200] %v417
                %v419 = vld [vmem:[%s207 + $0xb7c] sm:%s200]
                %420 = vst [vmem:[%s208 + $0x1a4] sm:%s200] %v419
                %v421 = vld [vmem:[%s207 + $0xb98] sm:%s200]
                %422 = vst [vmem:[%s208 + $0x1a8] sm:%s200] %v421
                %v423 = vld [vmem:[%s207 + $0xbb4] sm:%s200]
                %424 = vst [vmem:[%s208 + $0x1ac] sm:%s200] %v423
                %v425 = vld [vmem:[%s207 + $0xbd0] sm:%s200]
                %426 = vst [vmem:[%s208 + $0x1b0] sm:%s200] %v425
                %v427 = vld [vmem:[%s207 + $0xbec] sm:%s200]
                %428 = vst [vmem:[%s208 + $0x1b4] sm:%s200] %v427
                %v429 = vld [vmem:[%s207 + $0xc08] sm:%s200]
                %430 = vst [vmem:[%s208 + $0x1b8] sm:%s200] %v429
                %v431 = vld [vmem:[%s207 + $0xc24] sm:%s200]
                %432 = vst [vmem:[%s208 + $0x1bc] sm:%s200] %v431
                %v433 = vld [vmem:[%s207 + $0xc40] sm:%s200]
                %434 = vst [vmem:[%s208 + $0x1c0] sm:%s200] %v433
                %v435 = vld [vmem:[%s207 + $0xc5c] sm:%s200]
                %436 = vst [vmem:[%s208 + $0x1c4] sm:%s200] %v435
                %v437 = vld [vmem:[%s207 + $0xc78] sm:%s200]
                %438 = vst [vmem:[%s208 + $0x1c8] sm:%s200] %v437
                %v439 = vld [vmem:[%s207 + $0xc94] sm:%s200]
                %440 = vst [vmem:[%s208 + $0x1cc] sm:%s200] %v439
                %v441 = vld [vmem:[%s207 + $0xcb0] sm:%s200]
                %442 = vst [vmem:[%s208 + $0x1d0] sm:%s200] %v441
                %v443 = vld [vmem:[%s207 + $0xccc] sm:%s200]
                %444 = vst [vmem:[%s208 + $0x1d4] sm:%s200] %v443
                %v445 = vld [vmem:[%s207 + $0xce8] sm:%s200]
                %446 = vst [vmem:[%s208 + $0x1d8] sm:%s200] %v445
                %v447 = vld [vmem:[%s207 + $0xd04] sm:%s200]
                %448 = vst [vmem:[%s208 + $0x1dc] sm:%s200] %v447
                %v449 = vld [vmem:[%s207 + $0xd20] sm:%s200]
                %450 = vst [vmem:[%s208 + $0x1e0] sm:%s200] %v449
                %v451 = vld [vmem:[%s207 + $0xd3c] sm:%s200]
                %452 = vst [vmem:[%s208 + $0x1e4] sm:%s200] %v451
                %v453 = vld [vmem:[%s207 + $0xd58] sm:%s200]
                %454 = vst [vmem:[%s208 + $0x1e8] sm:%s200] %v453
                %v455 = vld [vmem:[%s207 + $0xd74] sm:%s200]
                %456 = vst [vmem:[%s208 + $0x1ec] sm:%s200] %v455
                %v457 = vld [vmem:[%s207 + $0xd90] sm:%s200]
                %458 = vst [vmem:[%s208 + $0x1f0] sm:%s200] %v457
                %v459 = vld [vmem:[%s207 + $0xdac] sm:%s200]
                %460 = vst [vmem:[%s208 + $0x1f4] sm:%s200] %v459
                %v461 = vld [vmem:[%s207 + $0xdc8] sm:%s200]
                %462 = vst [vmem:[%s208 + $0x1f8] sm:%s200] %v461
                %v463 = vld [vmem:[%s207 + $0xde4] sm:%s200]
                %464 = vst [vmem:[%s208 + $0x1fc] sm:%s200] %v463
              $region41: #{inception_b_forward.7} parent=35 // loop_footer
                %s206 = sadd.s32 1, %s202
              $region42: #{inception_b_forward.7} parent=35 // loop_footer_branch
                %201 = sbr.rel target = $region38
              $region43: #{inception_b_forward.7} parent=35 // loop_exit
                _
            $region36: #{inception_b_forward.7} parent=27 // pred_fallthru
              _
          $region28: #{inception_b_forward.7} parent=23 // pred_fallthru
            _
          %741 = vnop
        $region24: #{inception_b_forward.7} parent=19 // pred_fallthru
          _
        // Predicated region
        $region62: #{inception_b_forward.7} parent=19 // pred_check
          %p742 = pneg %p78
        $region63: #{inception_b_forward.7} parent=19 // pred_check_branch
          %744 = sbr.rel (%p742) target = $region65
        $region64: #{inception_b_forward.7} parent=19 // pred_region
          %p745 = scmp.lt.s32.totalorder %s11, 6
          %s746 = scalar_select %p745, %s11, 6
          %s747 = scalar_lea.vmem %s2, %s746
        $region65: #{inception_b_forward.7} parent=19 // pred_fallthru
          _
        // Predicated region
        $region66: #{inception_b_forward.7} parent=19 // pred_check
          %p748 = pneg %p104
        $region67: #{inception_b_forward.7} parent=19 // pred_check_branch
          %750 = sbr.rel (%p748) target = $region69
        $region68: #{inception_b_forward.7} parent=19 // pred_region
          %p751 = scmp.lt.s32.totalorder %s11, 6
          %s752 = scalar_select %p751, %s11, 6
          %s753 = scalar_lea.vmem %s3, %s752
        $region69: #{inception_b_forward.7} parent=19 // pred_fallthru
          _
        // Predicated region
        $region70: #{inception_b_forward.7} parent=19 // pred_check
          %p754 = pneg %p130
        $region71: #{inception_b_forward.7} parent=19 // pred_check_branch
          %756 = sbr.rel (%p754) target = $region73
        $region72: #{inception_b_forward.7} parent=19 // pred_region
          %p757 = scmp.lt.s32.totalorder %s11, 6
          %s758 = scalar_select %p757, %s11, 6
          %s759 = scalar_lea.vmem %s4, %s758
        $region73: #{inception_b_forward.7} parent=19 // pred_fallthru
          _
      $region20: #{inception_b_forward.7} parent=5 // pred_fallthru
        _
      %p760 = scmp.le.s32.totalorder 1, %s11
      %p761 = scmp.lt.s32.totalorder %s11, 8
      %p762 = pnand %p760, %p761
      %p763 = pneg %p762
      // Predicated region
      $region74: #{inception_b_forward.7} parent=5 // pred_check
        _
      $region75: #{inception_b_forward.7} parent=5 // pred_check_branch
        %765 = sbr.rel (%p762) target = $region77
      $region76: #{inception_b_forward.7} parent=5 // pred_region
        %s766 = ssub.s32 %s11, 1
        %s767 = sand.u32 %s45, 1
        %s768 = sand.u32 %s45, 1
        %s769 = smul.addr %s768, 512
        %s770 = scalar_lea.vmem [#allocation2], %s769
        // Predicated region
        $region78: #{inception_b_forward.7} parent=76 // pred_check
          %p771 = pneg %p58
        $region79: #{inception_b_forward.7} parent=76 // pred_check_branch
          %773 = sbr.rel (%p771) target = $region81
        $region80: #{inception_b_forward.7} parent=76 // pred_region
          _
        $region81: #{inception_b_forward.7} parent=76 // pred_fallthru
          _
        %p774 = pneg %p32
        %p775 = pneg %p29
        %s776 = sand.u32 %s45, 1
        %s777 = sand.u32 %s45, 1
        %s778 = smul.addr %s777, 512
        %s779 = scalar_lea.vmem [#allocation2], %s778
        %p780 = pneg %p58
        %p781 = pneg %p55
        %p782 = scmp.lt.s32.totalorder %s16, 6
        %s783 = scalar_select %p782, %s16, 6
        %s784 = scalar_lea.vmem %s2, %s783
        %p785 = pneg %p84
        %p786 = pneg %p81
        %p787 = scmp.lt.s32.totalorder %s16, 6
        %s788 = scalar_select %p787, %s16, 6
        %s789 = scalar_lea.vmem %s3, %s788
        %p790 = pneg %p110
        %p791 = pneg %p107
        %p792 = scmp.lt.s32.totalorder %s16, 6
        %s793 = scalar_select %p792, %s16, 6
        %s794 = scalar_lea.vmem %s4, %s793
        %p795 = pneg %p136
        %p796 = pneg %p133
        %p797 = pneg %p162
        %p798 = pneg %p159
        %s799 = sand.u32 %s149, 1
        %s800 = sand.u32 %s149, 1
        %s801 = smul.addr %s800, 128
        %s802 = scalar_lea.vmem [#allocation3], %s801
        %p803 = scmp.lt.s32.totalorder %s16, 6
        %s804 = scalar_select %p803, %s16, 6
        %s805 = scalar_lea.vmem %s2, %s804
        %p806 = scmp.lt.s32.totalorder %s16, 6
        %s807 = scalar_select %p806, %s16, 6
        %s808 = scalar_lea.vmem %s3, %s807
        %p809 = scmp.lt.s32.totalorder %s16, 6
        %s810 = scalar_select %p809, %s16, 6
        %s811 = scalar_lea.vmem %s4, %s810
        %v812 = vld [vmem:[%s0] sm:$0xff]
        %v813 = vld [vmem:[%s0 + $0x8] sm:$0xff]
        %v814 = vld [vmem:[%s0 + $0x10] sm:$0xff]
        %v815 = vld [vmem:[%s0 + $0x18] sm:$0xff]
        %v816 = vld [vmem:[%s0 + $0x20] sm:$0xff]
        %v817 = vld [vmem:[%s0 + $0x28] sm:$0xff]
        %v818 = vld [vmem:[%s0 + $0x30] sm:$0xff]
        %v819 = vld [vmem:[%s0 + $0x38] sm:$0xff]
        %v820 = vld [vmem:[%s0 + $0x40] sm:$0xff]
        %v821 = vld [vmem:[%s0 + $0x48] sm:$0xff]
        %v822 = vld [vmem:[%s0 + $0x50] sm:$0xff]
        %v823 = vld [vmem:[%s0 + $0x58] sm:$0xff]
        %v824 = vld [vmem:[%s0 + $0x60] sm:$0xff]
        %v825 = vld [vmem:[%s0 + $0x68] sm:$0xff]
        %v826 = vld [vmem:[%s0 + $0x70] sm:$0xff]
        %v827 = vld [vmem:[%s0 + $0x78] sm:$0xff]
        %v828 = vld [vmem:[%s0 + $0x80] sm:$0xff]
        %v829 = vld [vmem:[%s0 + $0x88] sm:$0xff]
        %v830 = vld [vmem:[%s0 + $0x90] sm:$0xff]
        %v831 = vld [vmem:[%s0 + $0x98] sm:$0xff]
        %v832 = vld [vmem:[%s0 + $0xa0] sm:$0xff]
        %v833 = vld [vmem:[%s0 + $0xa8] sm:$0xff]
        %v834 = vld [vmem:[%s0 + $0xb0] sm:$0xff]
        %v835 = vld [vmem:[%s0 + $0xb8] sm:$0xff]
        %v836 = vld [vmem:[%s0 + $0xc0] sm:$0xff]
        %v837 = vld [vmem:[%s0 + $0xc8] sm:$0xff]
        %v838 = vld [vmem:[%s0 + $0xd0] sm:$0xff]
        %v839 = vld [vmem:[%s0 + $0xd8] sm:$0xff]
        %v840 = vld [vmem:[%s0 + $0xe0] sm:$0xff]
        %v841 = vld [vmem:[%s0 + $0xe8] sm:$0xff]
        %v842 = vld [vmem:[%s0 + $0xf0] sm:$0xff]
        %v843 = vld [vmem:[%s0 + $0xf8] sm:$0xff]
        %v844 = vld [vmem:[%s0 + $0x100] sm:$0xff]
        %v845 = vld [vmem:[%s0 + $0x108] sm:$0xff]
        %v846 = vld [vmem:[%s0 + $0x110] sm:$0xff]
        %v847 = vld [vmem:[%s0 + $0x118] sm:$0xff]
        %v848 = vld [vmem:[%s0 + $0x120] sm:$0xff]
        %v849 = vld [vmem:[%s0 + $0x128] sm:$0xff]
        %v850 = vld [vmem:[%s0 + $0x130] sm:$0xff]
        %v851 = vld [vmem:[%s0 + $0x138] sm:$0xff]
        %v852 = vld [vmem:[%s0 + $0x140] sm:$0xff]
        %v853 = vld [vmem:[%s0 + $0x148] sm:$0xff]
        %v854 = vld [vmem:[%s0 + $0x150] sm:$0xff]
        %v855 = vld [vmem:[%s0 + $0x158] sm:$0xff]
        %v856 = vld [vmem:[%s0 + $0x160] sm:$0xff]
        %v857 = vld [vmem:[%s0 + $0x168] sm:$0xff]
        %v858 = vld [vmem:[%s0 + $0x170] sm:$0xff]
        %v859 = vld [vmem:[%s0 + $0x178] sm:$0xff]
        %v860 = vld [vmem:[%s0 + $0x180] sm:$0xff]
        %v861 = vld [vmem:[%s0 + $0x188] sm:$0xff]
        %v862 = vld [vmem:[%s0 + $0x190] sm:$0xff]
        %v863 = vld [vmem:[%s0 + $0x198] sm:$0xff]
        %v864 = vld [vmem:[%s0 + $0x1a0] sm:$0xff]
        %v865 = vld [vmem:[%s0 + $0x1a8] sm:$0xff]
        %v866 = vld [vmem:[%s0 + $0x1b0] sm:$0xff]
        %v867 = vld [vmem:[%s0 + $0x1b8] sm:$0xff]
        %v868 = vld [vmem:[%s0 + $0x1c0] sm:$0xff]
        %v869 = vld [vmem:[%s0 + $0x1c8] sm:$0xff]
        %v870 = vld [vmem:[%s0 + $0x1d0] sm:$0xff]
        %v871 = vld [vmem:[%s0 + $0x1d8] sm:$0xff]
        %v872 = vld [vmem:[%s0 + $0x1e0] sm:$0xff]
        %v873 = vld [vmem:[%s0 + $0x1e8] sm:$0xff]
        %v874 = vld [vmem:[%s0 + $0x1f0] sm:$0xff]
        %v875 = vld [vmem:[%s0 + $0x1f8] sm:$0xff]
        %v876 = vld [vmem:[%s770] sm:$0xf]
        %v877 = vld [vmem:[%s770 + $0x4] sm:$0xf]
        %v878 = vld [vmem:[%s770 + $0x8] sm:$0xf]
        %v879 = vld [vmem:[%s770 + $0xc] sm:$0xf]
        %v880 = vld [vmem:[%s770 + $0x10] sm:$0xf]
        %v881 = vld [vmem:[%s770 + $0x14] sm:$0xf]
        %v882 = vld [vmem:[%s770 + $0x18] sm:$0xf]
        %v883 = vld [vmem:[%s770 + $0x1c] sm:$0xf]
        %v884 = vld [vmem:[%s770 + $0x20] sm:$0xf]
        %v885 = vld [vmem:[%s770 + $0x24] sm:$0xf]
        %v886 = vld [vmem:[%s770 + $0x28] sm:$0xf]
        %v887 = vld [vmem:[%s770 + $0x2c] sm:$0xf]
        %v888 = vld [vmem:[%s770 + $0x30] sm:$0xf]
        %v889 = vld [vmem:[%s770 + $0x34] sm:$0xf]
        %v890 = vld [vmem:[%s770 + $0x38] sm:$0xf]
        %v891 = vld [vmem:[%s770 + $0x3c] sm:$0xf]
        %v892 = vld [vmem:[%s770 + $0x40] sm:$0xf]
        %v893 = vld [vmem:[%s770 + $0x44] sm:$0xf]
        %v894 = vld [vmem:[%s770 + $0x48] sm:$0xf]
        %v895 = vld [vmem:[%s770 + $0x4c] sm:$0xf]
        %v896 = vld [vmem:[%s770 + $0x50] sm:$0xf]
        %v897 = vld [vmem:[%s770 + $0x54] sm:$0xf]
        %v898 = vld [vmem:[%s770 + $0x58] sm:$0xf]
        %v899 = vld [vmem:[%s770 + $0x5c] sm:$0xf]
        %v900 = vld [vmem:[%s770 + $0x60] sm:$0xf]
        %v901 = vld [vmem:[%s770 + $0x64] sm:$0xf]
        %v902 = vld [vmem:[%s770 + $0x68] sm:$0xf]
        %v903 = vld [vmem:[%s770 + $0x6c] sm:$0xf]
        %v904 = vld [vmem:[%s770 + $0x70] sm:$0xf]
        %v905 = vld [vmem:[%s770 + $0x74] sm:$0xf]
        %v906 = vld [vmem:[%s770 + $0x78] sm:$0xf]
        %v907 = vld [vmem:[%s770 + $0x7c] sm:$0xf]
        %v908 = vld [vmem:[%s770 + $0x80] sm:$0xf]
        %v909 = vld [vmem:[%s770 + $0x84] sm:$0xf]
        %v910 = vld [vmem:[%s770 + $0x88] sm:$0xf]
        %v911 = vld [vmem:[%s770 + $0x8c] sm:$0xf]
        %v912 = vld [vmem:[%s770 + $0x90] sm:$0xf]
        %v913 = vld [vmem:[%s770 + $0x94] sm:$0xf]
        %v914 = vld [vmem:[%s770 + $0x98] sm:$0xf]
        %v915 = vld [vmem:[%s770 + $0x9c] sm:$0xf]
        %v916 = vld [vmem:[%s770 + $0xa0] sm:$0xf]
        %v917 = vld [vmem:[%s770 + $0xa4] sm:$0xf]
        %v918 = vld [vmem:[%s770 + $0xa8] sm:$0xf]
        %v919 = vld [vmem:[%s770 + $0xac] sm:$0xf]
        %v920 = vld [vmem:[%s770 + $0xb0] sm:$0xf]
        %v921 = vld [vmem:[%s770 + $0xb4] sm:$0xf]
        %v922 = vld [vmem:[%s770 + $0xb8] sm:$0xf]
        %v923 = vld [vmem:[%s770 + $0xbc] sm:$0xf]
        %v924 = vld [vmem:[%s770 + $0xc0] sm:$0xf]
        %v925 = vld [vmem:[%s770 + $0xc4] sm:$0xf]
        %v926 = vld [vmem:[%s770 + $0xc8] sm:$0xf]
        %v927 = vld [vmem:[%s770 + $0xcc] sm:$0xf]
        %v928 = vld [vmem:[%s770 + $0xd0] sm:$0xf]
        %v929 = vld [vmem:[%s770 + $0xd4] sm:$0xf]
        %v930 = vld [vmem:[%s770 + $0xd8] sm:$0xf]
        %v931 = vld [vmem:[%s770 + $0xdc] sm:$0xf]
        %v932 = vld [vmem:[%s770 + $0xe0] sm:$0xf]
        %v933 = vld [vmem:[%s770 + $0xe4] sm:$0xf]
        %v934 = vld [vmem:[%s770 + $0xe8] sm:$0xf]
        %v935 = vld [vmem:[%s770 + $0xec] sm:$0xf]
        %v936 = vld [vmem:[%s770 + $0xf0] sm:$0xf]
        %v937 = vld [vmem:[%s770 + $0xf4] sm:$0xf]
        %v938 = vld [vmem:[%s770 + $0xf8] sm:$0xf]
        %v939 = vld [vmem:[%s770 + $0xfc] sm:$0xf]
        %v940 = vld [vmem:[%s770 + $0x100] sm:$0xf]
        %v941 = vld [vmem:[%s770 + $0x104] sm:$0xf]
        %v942 = vld [vmem:[%s770 + $0x108] sm:$0xf]
        %v943 = vld [vmem:[%s770 + $0x10c] sm:$0xf]
        %v944 = vld [vmem:[%s770 + $0x110] sm:$0xf]
        %v945 = vld [vmem:[%s770 + $0x114] sm:$0xf]
        %v946 = vld [vmem:[%s770 + $0x118] sm:$0xf]
        %v947 = vld [vmem:[%s770 + $0x11c] sm:$0xf]
        %v948 = vld [vmem:[%s770 + $0x120] sm:$0xf]
        %v949 = vld [vmem:[%s770 + $0x124] sm:$0xf]
        %v950 = vld [vmem:[%s770 + $0x128] sm:$0xf]
        %v951 = vld [vmem:[%s770 + $0x12c] sm:$0xf]
        %v952 = vld [vmem:[%s770 + $0x130] sm:$0xf]
        %v953 = vld [vmem:[%s770 + $0x134] sm:$0xf]
        %v954 = vld [vmem:[%s770 + $0x138] sm:$0xf]
        %v955 = vld [vmem:[%s770 + $0x13c] sm:$0xf]
        %v956 = vld [vmem:[%s770 + $0x140] sm:$0xf]
        %v957 = vld [vmem:[%s770 + $0x144] sm:$0xf]
        %v958 = vld [vmem:[%s770 + $0x148] sm:$0xf]
        %v959 = vld [vmem:[%s770 + $0x14c] sm:$0xf]
        %v960 = vld [vmem:[%s770 + $0x150] sm:$0xf]
        %v961 = vld [vmem:[%s770 + $0x154] sm:$0xf]
        %v962 = vld [vmem:[%s770 + $0x158] sm:$0xf]
        %v963 = vld [vmem:[%s770 + $0x15c] sm:$0xf]
        %v964 = vld [vmem:[%s770 + $0x160] sm:$0xf]
        %v965 = vld [vmem:[%s770 + $0x164] sm:$0xf]
        %v966 = vld [vmem:[%s770 + $0x168] sm:$0xf]
        %v967 = vld [vmem:[%s770 + $0x16c] sm:$0xf]
        %v968 = vld [vmem:[%s770 + $0x170] sm:$0xf]
        %v969 = vld [vmem:[%s770 + $0x174] sm:$0xf]
        %v970 = vld [vmem:[%s770 + $0x178] sm:$0xf]
        %v971 = vld [vmem:[%s770 + $0x17c] sm:$0xf]
        %v972 = vld [vmem:[%s770 + $0x180] sm:$0xf]
        %v973 = vld [vmem:[%s770 + $0x184] sm:$0xf]
        %v974 = vld [vmem:[%s770 + $0x188] sm:$0xf]
        %v975 = vld [vmem:[%s770 + $0x18c] sm:$0xf]
        %v976 = vld [vmem:[%s770 + $0x190] sm:$0xf]
        %v977 = vld [vmem:[%s770 + $0x194] sm:$0xf]
        %v978 = vld [vmem:[%s770 + $0x198] sm:$0xf]
        %v979 = vld [vmem:[%s770 + $0x19c] sm:$0xf]
        %v980 = vld [vmem:[%s770 + $0x1a0] sm:$0xf]
        %v981 = vld [vmem:[%s770 + $0x1a4] sm:$0xf]
        %v982 = vld [vmem:[%s770 + $0x1a8] sm:$0xf]
        %v983 = vld [vmem:[%s770 + $0x1ac] sm:$0xf]
        %v984 = vld [vmem:[%s770 + $0x1b0] sm:$0xf]
        %v985 = vld [vmem:[%s770 + $0x1b4] sm:$0xf]
        %v986 = vld [vmem:[%s770 + $0x1b8] sm:$0xf]
        %v987 = vld [vmem:[%s770 + $0x1bc] sm:$0xf]
        %v988 = vld [vmem:[%s770 + $0x1c0] sm:$0xf]
        %v989 = vld [vmem:[%s770 + $0x1c4] sm:$0xf]
        %v990 = vld [vmem:[%s770 + $0x1c8] sm:$0xf]
        %v991 = vld [vmem:[%s770 + $0x1cc] sm:$0xf]
        %v992 = vld [vmem:[%s770 + $0x1d0] sm:$0xf]
        %v993 = vld [vmem:[%s770 + $0x1d4] sm:$0xf]
        %v994 = vld [vmem:[%s770 + $0x1d8] sm:$0xf]
        %v995 = vld [vmem:[%s770 + $0x1dc] sm:$0xf]
        %v996 = vld [vmem:[%s770 + $0x1e0] sm:$0xf]
        %v997 = vld [vmem:[%s770 + $0x1e4] sm:$0xf]
        %v998 = vld [vmem:[%s770 + $0x1e8] sm:$0xf]
        %v999 = vld [vmem:[%s770 + $0x1ec] sm:$0xf]
        %v1000 = vld [vmem:[%s770 + $0x1f0] sm:$0xf]
        %v1001 = vld [vmem:[%s770 + $0x1f4] sm:$0xf]
        %v1002 = vld [vmem:[%s770 + $0x1f8] sm:$0xf]
        %v1003 = vld [vmem:[%s770 + $0x1fc] sm:$0xf]
        %v1004 = vld [vmem:[%s805] sm:$0x1]
        %v1006 = vperm.slane %v1004, 0
        %v1072 = vunpack.c.l.b16 %v812
        %v1073 = vunpack.c.h.b16 %v812
        %v1074 = vunpack.c.l.b16 %v813
        %v1075 = vunpack.c.h.b16 %v813
        %v1076 = vunpack.c.l.b16 %v814
        %v1077 = vunpack.c.h.b16 %v814
        %v1078 = vunpack.c.l.b16 %v815
        %v1079 = vunpack.c.h.b16 %v815
        %v1080 = vunpack.c.l.b16 %v816
        %v1081 = vunpack.c.h.b16 %v816
        %v1082 = vunpack.c.l.b16 %v817
        %v1083 = vunpack.c.h.b16 %v817
        %v1084 = vunpack.c.l.b16 %v818
        %v1085 = vunpack.c.h.b16 %v818
        %v1086 = vunpack.c.l.b16 %v819
        %v1087 = vunpack.c.h.b16 %v819
        %v1088 = vunpack.c.l.b16 %v820
        %v1089 = vunpack.c.h.b16 %v820
        %v1090 = vunpack.c.l.b16 %v821
        %v1091 = vunpack.c.h.b16 %v821
        %v1092 = vunpack.c.l.b16 %v822
        %v1093 = vunpack.c.h.b16 %v822
        %v1094 = vunpack.c.l.b16 %v823
        %v1095 = vunpack.c.h.b16 %v823
        %v1096 = vunpack.c.l.b16 %v824
        %v1097 = vunpack.c.h.b16 %v824
        %v1098 = vunpack.c.l.b16 %v825
        %v1099 = vunpack.c.h.b16 %v825
        %v1100 = vunpack.c.l.b16 %v826
        %v1101 = vunpack.c.h.b16 %v826
        %v1102 = vunpack.c.l.b16 %v827
        %v1103 = vunpack.c.h.b16 %v827
        %v1104 = vunpack.c.l.b16 %v828
        %v1105 = vunpack.c.h.b16 %v828
        %v1106 = vunpack.c.l.b16 %v829
        %v1107 = vunpack.c.h.b16 %v829
        %v1108 = vunpack.c.l.b16 %v830
        %v1109 = vunpack.c.h.b16 %v830
        %v1110 = vunpack.c.l.b16 %v831
        %v1111 = vunpack.c.h.b16 %v831
        %v1112 = vunpack.c.l.b16 %v832
        %v1113 = vunpack.c.h.b16 %v832
        %v1114 = vunpack.c.l.b16 %v833
        %v1115 = vunpack.c.h.b16 %v833
        %v1116 = vunpack.c.l.b16 %v834
        %v1117 = vunpack.c.h.b16 %v834
        %v1118 = vunpack.c.l.b16 %v835
        %v1119 = vunpack.c.h.b16 %v835
        %v1120 = vunpack.c.l.b16 %v836
        %v1121 = vunpack.c.h.b16 %v836
        %v1122 = vunpack.c.l.b16 %v837
        %v1123 = vunpack.c.h.b16 %v837
        %v1124 = vunpack.c.l.b16 %v838
        %v1125 = vunpack.c.h.b16 %v838
        %v1126 = vunpack.c.l.b16 %v839
        %v1127 = vunpack.c.h.b16 %v839
        %v1128 = vunpack.c.l.b16 %v840
        %v1129 = vunpack.c.h.b16 %v840
        %v1130 = vunpack.c.l.b16 %v841
        %v1131 = vunpack.c.h.b16 %v841
        %v1132 = vunpack.c.l.b16 %v842
        %v1133 = vunpack.c.h.b16 %v842
        %v1134 = vunpack.c.l.b16 %v843
        %v1135 = vunpack.c.h.b16 %v843
        %v1136 = vunpack.c.l.b16 %v844
        %v1137 = vunpack.c.h.b16 %v844
        %v1138 = vunpack.c.l.b16 %v845
        %v1139 = vunpack.c.h.b16 %v845
        %v1140 = vunpack.c.l.b16 %v846
        %v1141 = vunpack.c.h.b16 %v846
        %v1142 = vunpack.c.l.b16 %v847
        %v1143 = vunpack.c.h.b16 %v847
        %v1144 = vunpack.c.l.b16 %v848
        %v1145 = vunpack.c.h.b16 %v848
        %v1146 = vunpack.c.l.b16 %v849
        %v1147 = vunpack.c.h.b16 %v849
        %v1148 = vunpack.c.l.b16 %v850
        %v1149 = vunpack.c.h.b16 %v850
        %v1150 = vunpack.c.l.b16 %v851
        %v1151 = vunpack.c.h.b16 %v851
        %v1152 = vunpack.c.l.b16 %v852
        %v1153 = vunpack.c.h.b16 %v852
        %v1154 = vunpack.c.l.b16 %v853
        %v1155 = vunpack.c.h.b16 %v853
        %v1156 = vunpack.c.l.b16 %v854
        %v1157 = vunpack.c.h.b16 %v854
        %v1158 = vunpack.c.l.b16 %v855
        %v1159 = vunpack.c.h.b16 %v855
        %v1160 = vunpack.c.l.b16 %v856
        %v1161 = vunpack.c.h.b16 %v856
        %v1162 = vunpack.c.l.b16 %v857
        %v1163 = vunpack.c.h.b16 %v857
        %v1164 = vunpack.c.l.b16 %v858
        %v1165 = vunpack.c.h.b16 %v858
        %v1166 = vunpack.c.l.b16 %v859
        %v1167 = vunpack.c.h.b16 %v859
        %v1168 = vunpack.c.l.b16 %v860
        %v1169 = vunpack.c.h.b16 %v860
        %v1170 = vunpack.c.l.b16 %v861
        %v1171 = vunpack.c.h.b16 %v861
        %v1172 = vunpack.c.l.b16 %v862
        %v1173 = vunpack.c.h.b16 %v862
        %v1174 = vunpack.c.l.b16 %v863
        %v1175 = vunpack.c.h.b16 %v863
        %v1176 = vunpack.c.l.b16 %v864
        %v1177 = vunpack.c.h.b16 %v864
        %v1178 = vunpack.c.l.b16 %v865
        %v1179 = vunpack.c.h.b16 %v865
        %v1180 = vunpack.c.l.b16 %v866
        %v1181 = vunpack.c.h.b16 %v866
        %v1182 = vunpack.c.l.b16 %v867
        %v1183 = vunpack.c.h.b16 %v867
        %v1184 = vunpack.c.l.b16 %v868
        %v1185 = vunpack.c.h.b16 %v868
        %v1186 = vunpack.c.l.b16 %v869
        %v1187 = vunpack.c.h.b16 %v869
        %v1188 = vunpack.c.l.b16 %v870
        %v1189 = vunpack.c.h.b16 %v870
        %v1190 = vunpack.c.l.b16 %v871
        %v1191 = vunpack.c.h.b16 %v871
        %v1192 = vunpack.c.l.b16 %v872
        %v1193 = vunpack.c.h.b16 %v872
        %v1194 = vunpack.c.l.b16 %v873
        %v1195 = vunpack.c.h.b16 %v873
        %v1196 = vunpack.c.l.b16 %v874
        %v1197 = vunpack.c.h.b16 %v874
        %v1198 = vunpack.c.l.b16 %v875
        %v1199 = vunpack.c.h.b16 %v875
        %v1200 = vpack.c.b16 %v1080, %v1072
        %v1201 = vpack.c.b16 %v1081, %v1073
        %v1202 = vpack.c.b16 %v1082, %v1074
        %v1203 = vpack.c.b16 %v1083, %v1075
        %v1204 = vpack.c.b16 %v1084, %v1076
        %v1205 = vpack.c.b16 %v1085, %v1077
        %v1206 = vpack.c.b16 %v1086, %v1078
        %v1207 = vpack.c.b16 %v1087, %v1079
        %v1208 = vpack.c.b16 %v1096, %v1088
        %v1209 = vpack.c.b16 %v1097, %v1089
        %v1210 = vpack.c.b16 %v1098, %v1090
        %v1211 = vpack.c.b16 %v1099, %v1091
        %v1212 = vpack.c.b16 %v1100, %v1092
        %v1213 = vpack.c.b16 %v1101, %v1093
        %v1214 = vpack.c.b16 %v1102, %v1094
        %v1215 = vpack.c.b16 %v1103, %v1095
        %v1216 = vpack.c.b16 %v1112, %v1104
        %v1217 = vpack.c.b16 %v1113, %v1105
        %v1218 = vpack.c.b16 %v1114, %v1106
        %v1219 = vpack.c.b16 %v1115, %v1107
        %v1220 = vpack.c.b16 %v1116, %v1108
        %v1221 = vpack.c.b16 %v1117, %v1109
        %v1222 = vpack.c.b16 %v1118, %v1110
        %v1223 = vpack.c.b16 %v1119, %v1111
        %v1224 = vpack.c.b16 %v1128, %v1120
        %v1225 = vpack.c.b16 %v1129, %v1121
        %v1226 = vpack.c.b16 %v1130, %v1122
        %v1227 = vpack.c.b16 %v1131, %v1123
        %v1228 = vpack.c.b16 %v1132, %v1124
        %v1229 = vpack.c.b16 %v1133, %v1125
        %v1230 = vpack.c.b16 %v1134, %v1126
        %v1231 = vpack.c.b16 %v1135, %v1127
        %v1232 = vpack.c.b16 %v1144, %v1136
        %v1233 = vpack.c.b16 %v1145, %v1137
        %v1234 = vpack.c.b16 %v1146, %v1138
        %v1235 = vpack.c.b16 %v1147, %v1139
        %v1236 = vpack.c.b16 %v1148, %v1140
        %v1237 = vpack.c.b16 %v1149, %v1141
        %v1238 = vpack.c.b16 %v1150, %v1142
        %v1239 = vpack.c.b16 %v1151, %v1143
        %v1240 = vpack.c.b16 %v1160, %v1152
        %v1241 = vpack.c.b16 %v1161, %v1153
        %v1242 = vpack.c.b16 %v1162, %v1154
        %v1243 = vpack.c.b16 %v1163, %v1155
        %v1244 = vpack.c.b16 %v1164, %v1156
        %v1245 = vpack.c.b16 %v1165, %v1157
        %v1246 = vpack.c.b16 %v1166, %v1158
        %v1247 = vpack.c.b16 %v1167, %v1159
        %v1248 = vpack.c.b16 %v1176, %v1168
        %v1249 = vpack.c.b16 %v1177, %v1169
        %v1250 = vpack.c.b16 %v1178, %v1170
        %v1251 = vpack.c.b16 %v1179, %v1171
        %v1252 = vpack.c.b16 %v1180, %v1172
        %v1253 = vpack.c.b16 %v1181, %v1173
        %v1254 = vpack.c.b16 %v1182, %v1174
        %v1255 = vpack.c.b16 %v1183, %v1175
        %v1256 = vpack.c.b16 %v1192, %v1184
        %v1257 = vpack.c.b16 %v1193, %v1185
        %v1258 = vpack.c.b16 %v1194, %v1186
        %v1259 = vpack.c.b16 %v1195, %v1187
        %v1260 = vpack.c.b16 %v1196, %v1188
        %v1261 = vpack.c.b16 %v1197, %v1189
        %v1262 = vpack.c.b16 %v1198, %v1190
        %v1263 = vpack.c.b16 %v1199, %v1191
        %v1456 = vunpack.c.l.b16 %v876
        %v1457 = vunpack.c.l.b16 %v877
        %v1458 = vunpack.c.l.b16 %v878
        %v1459 = vunpack.c.l.b16 %v879
        %v1460 = vunpack.c.l.b16 %v880
        %v1461 = vunpack.c.l.b16 %v881
        %v1462 = vunpack.c.l.b16 %v882
        %v1463 = vunpack.c.l.b16 %v883
        %v1464 = vunpack.c.l.b16 %v884
        %v1465 = vunpack.c.l.b16 %v885
        %v1466 = vunpack.c.l.b16 %v886
        %v1467 = vunpack.c.l.b16 %v887
        %v1468 = vunpack.c.l.b16 %v888
        %v1469 = vunpack.c.l.b16 %v889
        %v1470 = vunpack.c.l.b16 %v890
        %v1471 = vunpack.c.l.b16 %v891
        %v1472 = vunpack.c.l.b16 %v892
        %v1473 = vunpack.c.l.b16 %v893
        %v1474 = vunpack.c.l.b16 %v894
        %v1475 = vunpack.c.l.b16 %v895
        %v1476 = vunpack.c.l.b16 %v896
        %v1477 = vunpack.c.l.b16 %v897
        %v1478 = vunpack.c.l.b16 %v898
        %v1479 = vunpack.c.l.b16 %v899
        %v1480 = vunpack.c.l.b16 %v900
        %v1481 = vunpack.c.l.b16 %v901
        %v1482 = vunpack.c.l.b16 %v902
        %v1483 = vunpack.c.l.b16 %v903
        %v1484 = vunpack.c.l.b16 %v904
        %v1485 = vunpack.c.l.b16 %v905
        %v1486 = vunpack.c.l.b16 %v906
        %v1487 = vunpack.c.l.b16 %v907
        %v1488 = vunpack.c.l.b16 %v908
        %v1489 = vunpack.c.l.b16 %v909
        %v1490 = vunpack.c.l.b16 %v910
        %v1491 = vunpack.c.l.b16 %v911
        %v1492 = vunpack.c.l.b16 %v912
        %v1493 = vunpack.c.l.b16 %v913
        %v1494 = vunpack.c.l.b16 %v914
        %v1495 = vunpack.c.l.b16 %v915
        %v1496 = vunpack.c.l.b16 %v916
        %v1497 = vunpack.c.l.b16 %v917
        %v1498 = vunpack.c.l.b16 %v918
        %v1499 = vunpack.c.l.b16 %v919
        %v1500 = vunpack.c.l.b16 %v920
        %v1501 = vunpack.c.l.b16 %v921
        %v1502 = vunpack.c.l.b16 %v922
        %v1503 = vunpack.c.l.b16 %v923
        %v1504 = vunpack.c.l.b16 %v924
        %v1505 = vunpack.c.l.b16 %v925
        %v1506 = vunpack.c.l.b16 %v926
        %v1507 = vunpack.c.l.b16 %v927
        %v1508 = vunpack.c.l.b16 %v928
        %v1509 = vunpack.c.l.b16 %v929
        %v1510 = vunpack.c.l.b16 %v930
        %v1511 = vunpack.c.l.b16 %v931
        %v1512 = vunpack.c.l.b16 %v932
        %v1513 = vunpack.c.l.b16 %v933
        %v1514 = vunpack.c.l.b16 %v934
        %v1515 = vunpack.c.l.b16 %v935
        %v1516 = vunpack.c.l.b16 %v936
        %v1517 = vunpack.c.l.b16 %v937
        %v1518 = vunpack.c.l.b16 %v938
        %v1519 = vunpack.c.l.b16 %v939
        %v1520 = vunpack.c.l.b16 %v940
        %v1521 = vunpack.c.l.b16 %v941
        %v1522 = vunpack.c.l.b16 %v942
        %v1523 = vunpack.c.l.b16 %v943
        %v1524 = vunpack.c.l.b16 %v944
        %v1525 = vunpack.c.l.b16 %v945
        %v1526 = vunpack.c.l.b16 %v946
        %v1527 = vunpack.c.l.b16 %v947
        %v1528 = vunpack.c.l.b16 %v948
        %v1529 = vunpack.c.l.b16 %v949
        %v1530 = vunpack.c.l.b16 %v950
        %v1531 = vunpack.c.l.b16 %v951
        %v1532 = vunpack.c.l.b16 %v952
        %v1533 = vunpack.c.l.b16 %v953
        %v1534 = vunpack.c.l.b16 %v954
        %v1535 = vunpack.c.l.b16 %v955
        %v1536 = vunpack.c.l.b16 %v956
        %v1537 = vunpack.c.l.b16 %v957
        %v1538 = vunpack.c.l.b16 %v958
        %v1539 = vunpack.c.l.b16 %v959
        %v1540 = vunpack.c.l.b16 %v960
        %v1541 = vunpack.c.l.b16 %v961
        %v1542 = vunpack.c.l.b16 %v962
        %v1543 = vunpack.c.l.b16 %v963
        %v1544 = vunpack.c.l.b16 %v964
        %v1545 = vunpack.c.l.b16 %v965
        %v1546 = vunpack.c.l.b16 %v966
        %v1547 = vunpack.c.l.b16 %v967
        %v1548 = vunpack.c.l.b16 %v968
        %v1549 = vunpack.c.l.b16 %v969
        %v1550 = vunpack.c.l.b16 %v970
        %v1551 = vunpack.c.l.b16 %v971
        %v1552 = vunpack.c.l.b16 %v972
        %v1553 = vunpack.c.l.b16 %v973
        %v1554 = vunpack.c.l.b16 %v974
        %v1555 = vunpack.c.l.b16 %v975
        %v1556 = vunpack.c.l.b16 %v976
        %v1557 = vunpack.c.l.b16 %v977
        %v1558 = vunpack.c.l.b16 %v978
        %v1559 = vunpack.c.l.b16 %v979
        %v1560 = vunpack.c.l.b16 %v980
        %v1561 = vunpack.c.l.b16 %v981
        %v1562 = vunpack.c.l.b16 %v982
        %v1563 = vunpack.c.l.b16 %v983
        %v1564 = vunpack.c.l.b16 %v984
        %v1565 = vunpack.c.l.b16 %v985
        %v1566 = vunpack.c.l.b16 %v986
        %v1567 = vunpack.c.l.b16 %v987
        %v1568 = vunpack.c.l.b16 %v988
        %v1569 = vunpack.c.l.b16 %v989
        %v1570 = vunpack.c.l.b16 %v990
        %v1571 = vunpack.c.l.b16 %v991
        %v1572 = vunpack.c.l.b16 %v992
        %v1573 = vunpack.c.l.b16 %v993
        %v1574 = vunpack.c.l.b16 %v994
        %v1575 = vunpack.c.l.b16 %v995
        %v1576 = vunpack.c.l.b16 %v996
        %v1577 = vunpack.c.l.b16 %v997
        %v1578 = vunpack.c.l.b16 %v998
        %v1579 = vunpack.c.l.b16 %v999
        %v1580 = vunpack.c.l.b16 %v1000
        %v1581 = vunpack.c.l.b16 %v1001
        %v1582 = vunpack.c.l.b16 %v1002
        %v1583 = vunpack.c.l.b16 %v1003
        %v1584 = vpack.c.b16 %v1457, %v1456
        %v1585 = vpack.c.b16 %v1459, %v1458
        %v1586 = vpack.c.b16 %v1461, %v1460
        %v1587 = vpack.c.b16 %v1463, %v1462
        %v1588 = vpack.c.b16 %v1465, %v1464
        %v1589 = vpack.c.b16 %v1467, %v1466
        %v1590 = vpack.c.b16 %v1469, %v1468
        %v1591 = vpack.c.b16 %v1471, %v1470
        %v1592 = vpack.c.b16 %v1473, %v1472
        %v1593 = vpack.c.b16 %v1475, %v1474
        %v1594 = vpack.c.b16 %v1477, %v1476
        %v1595 = vpack.c.b16 %v1479, %v1478
        %v1596 = vpack.c.b16 %v1481, %v1480
        %v1597 = vpack.c.b16 %v1483, %v1482
        %v1598 = vpack.c.b16 %v1485, %v1484
        %v1599 = vpack.c.b16 %v1487, %v1486
        %v1600 = vpack.c.b16 %v1489, %v1488
        %v1601 = vpack.c.b16 %v1491, %v1490
        %v1602 = vpack.c.b16 %v1493, %v1492
        %v1603 = vpack.c.b16 %v1495, %v1494
        %v1604 = vpack.c.b16 %v1497, %v1496
        %v1605 = vpack.c.b16 %v1499, %v1498
        %v1606 = vpack.c.b16 %v1501, %v1500
        %v1607 = vpack.c.b16 %v1503, %v1502
        %v1608 = vpack.c.b16 %v1505, %v1504
        %v1609 = vpack.c.b16 %v1507, %v1506
        %v1610 = vpack.c.b16 %v1509, %v1508
        %v1611 = vpack.c.b16 %v1511, %v1510
        %v1612 = vpack.c.b16 %v1513, %v1512
        %v1613 = vpack.c.b16 %v1515, %v1514
        %v1614 = vpack.c.b16 %v1517, %v1516
        %v1615 = vpack.c.b16 %v1519, %v1518
        %v1616 = vpack.c.b16 %v1521, %v1520
        %v1617 = vpack.c.b16 %v1523, %v1522
        %v1618 = vpack.c.b16 %v1525, %v1524
        %v1619 = vpack.c.b16 %v1527, %v1526
        %v1620 = vpack.c.b16 %v1529, %v1528
        %v1621 = vpack.c.b16 %v1531, %v1530
        %v1622 = vpack.c.b16 %v1533, %v1532
        %v1623 = vpack.c.b16 %v1535, %v1534
        %v1624 = vpack.c.b16 %v1537, %v1536
        %v1625 = vpack.c.b16 %v1539, %v1538
        %v1626 = vpack.c.b16 %v1541, %v1540
        %v1627 = vpack.c.b16 %v1543, %v1542
        %v1628 = vpack.c.b16 %v1545, %v1544
        %v1629 = vpack.c.b16 %v1547, %v1546
        %v1630 = vpack.c.b16 %v1549, %v1548
        %v1631 = vpack.c.b16 %v1551, %v1550
        %v1632 = vpack.c.b16 %v1553, %v1552
        %v1633 = vpack.c.b16 %v1555, %v1554
        %v1634 = vpack.c.b16 %v1557, %v1556
        %v1635 = vpack.c.b16 %v1559, %v1558
        %v1636 = vpack.c.b16 %v1561, %v1560
        %v1637 = vpack.c.b16 %v1563, %v1562
        %v1638 = vpack.c.b16 %v1565, %v1564
        %v1639 = vpack.c.b16 %v1567, %v1566
        %v1640 = vpack.c.b16 %v1569, %v1568
        %v1641 = vpack.c.b16 %v1571, %v1570
        %v1642 = vpack.c.b16 %v1573, %v1572
        %v1643 = vpack.c.b16 %v1575, %v1574
        %v1644 = vpack.c.b16 %v1577, %v1576
        %v1645 = vpack.c.b16 %v1579, %v1578
        %v1646 = vpack.c.b16 %v1581, %v1580
        %v1647 = vpack.c.b16 %v1583, %v1582
        %1712 = vmatpush.bf16.msra.mxu0 %v1591
        %1713 = vmatpush.bf16.msra.mxu0 %v1590
        %1714 = vmatpush.bf16.msra.mxu0 %v1589
        %1715 = vmatpush.bf16.msra.mxu0 %v1588
        %1716 = vmatpush.bf16.msra.mxu0 %v1587
        %1717 = vmatpush.bf16.msra.mxu0 %v1586
        %1718 = vmatpush.bf16.msra.mxu0 %v1585
        %1719 = vmatpush.bf16.msra.mxu0 %v1584
        %1720 = vmatmul.bf16.gmra.mxu0 %v1200
        %v1721 = vpop.f32.mrf.mxu0
        %v1722 = vadd.f32 %v1006, %v1721
        %v1723 = vpop.f32.mrf.mxu0
        %v1724 = vadd.f32 %v1006, %v1723
        %1725 = vmatmul.bf16.gmra.mxu0 %v1208
        %v1726 = vpop.f32.mrf.mxu0
        %v1727 = vadd.f32 %v1006, %v1726
        %v1728 = vpop.f32.mrf.mxu0
        %v1729 = vadd.f32 %v1006, %v1728
        %1730 = vmatmul.bf16.gmra.mxu0 %v1216
        %v1731 = vpop.f32.mrf.mxu0
        %v1732 = vadd.f32 %v1006, %v1731
        %v1733 = vpop.f32.mrf.mxu0
        %v1734 = vadd.f32 %v1006, %v1733
        %1735 = vmatmul.bf16.gmra.mxu0 %v1224
        %v1736 = vpop.f32.mrf.mxu0
        %v1737 = vadd.f32 %v1006, %v1736
        %v1738 = vpop.f32.mrf.mxu0
        %v1739 = vadd.f32 %v1006, %v1738
        %1740 = vmatmul.bf16.gmra.mxu0 %v1232
        %v1741 = vpop.f32.mrf.mxu0
        %v1742 = vadd.f32 %v1006, %v1741
        %v1743 = vpop.f32.mrf.mxu0
        %v1744 = vadd.f32 %v1006, %v1743
        %1745 = vmatmul.bf16.gmra.mxu0 %v1240
        %v1746 = vpop.f32.mrf.mxu0
        %v1747 = vadd.f32 %v1006, %v1746
        %v1748 = vpop.f32.mrf.mxu0
        %v1749 = vadd.f32 %v1006, %v1748
        %1750 = vmatmul.bf16.gmra.mxu0 %v1248
        %v1751 = vpop.f32.mrf.mxu0
        %v1752 = vadd.f32 %v1006, %v1751
        %v1753 = vpop.f32.mrf.mxu0
        %v1754 = vadd.f32 %v1006, %v1753
        %1755 = vmatmul.bf16.gmra.mxu0 %v1256
        %v1756 = vpop.f32.mrf.mxu0
        %v1757 = vadd.f32 %v1006, %v1756
        %v1758 = vpop.f32.mrf.mxu0
        %v1759 = vadd.f32 %v1006, %v1758
        %1760 = vdwg.mxu0
        %1761 = vmatpush.bf16.msra.mxu0 %v1599
        %1762 = vmatpush.bf16.msra.mxu0 %v1598
        %1763 = vmatpush.bf16.msra.mxu0 %v1597
        %1764 = vmatpush.bf16.msra.mxu0 %v1596
        %1765 = vmatpush.bf16.msra.mxu0 %v1595
        %1766 = vmatpush.bf16.msra.mxu0 %v1594
        %1767 = vmatpush.bf16.msra.mxu0 %v1593
        %1768 = vmatpush.bf16.msra.mxu0 %v1592
        %1769 = vmatmul.bf16.gmra.mxu0 %v1201
        %v1770 = vpop.f32.mrf.mxu0
        %v1771 = vadd.f32 %v1722, %v1770
        %v1772 = vpop.f32.mrf.mxu0
        %v1773 = vadd.f32 %v1724, %v1772
        %1774 = vmatmul.bf16.gmra.mxu0 %v1209
        %v1775 = vpop.f32.mrf.mxu0
        %v1776 = vadd.f32 %v1727, %v1775
        %v1777 = vpop.f32.mrf.mxu0
        %v1778 = vadd.f32 %v1729, %v1777
        %1779 = vmatmul.bf16.gmra.mxu0 %v1217
        %v1780 = vpop.f32.mrf.mxu0
        %v1781 = vadd.f32 %v1732, %v1780
        %v1782 = vpop.f32.mrf.mxu0
        %v1783 = vadd.f32 %v1734, %v1782
        %1784 = vmatmul.bf16.gmra.mxu0 %v1225
        %v1785 = vpop.f32.mrf.mxu0
        %v1786 = vadd.f32 %v1737, %v1785
        %v1787 = vpop.f32.mrf.mxu0
        %v1788 = vadd.f32 %v1739, %v1787
        %1789 = vmatmul.bf16.gmra.mxu0 %v1233
        %v1790 = vpop.f32.mrf.mxu0
        %v1791 = vadd.f32 %v1742, %v1790
        %v1792 = vpop.f32.mrf.mxu0
        %v1793 = vadd.f32 %v1744, %v1792
        %1794 = vmatmul.bf16.gmra.mxu0 %v1241
        %v1795 = vpop.f32.mrf.mxu0
        %v1796 = vadd.f32 %v1747, %v1795
        %v1797 = vpop.f32.mrf.mxu0
        %v1798 = vadd.f32 %v1749, %v1797
        %1799 = vmatmul.bf16.gmra.mxu0 %v1249
        %v1800 = vpop.f32.mrf.mxu0
        %v1801 = vadd.f32 %v1752, %v1800
        %v1802 = vpop.f32.mrf.mxu0
        %v1803 = vadd.f32 %v1754, %v1802
        %1804 = vmatmul.bf16.gmra.mxu0 %v1257
        %v1805 = vpop.f32.mrf.mxu0
        %v1806 = vadd.f32 %v1757, %v1805
        %v1807 = vpop.f32.mrf.mxu0
        %v1808 = vadd.f32 %v1759, %v1807
        %1809 = vdwg.mxu0
        %1810 = vmatpush.bf16.msra.mxu0 %v1607
        %1811 = vmatpush.bf16.msra.mxu0 %v1606
        %1812 = vmatpush.bf16.msra.mxu0 %v1605
        %1813 = vmatpush.bf16.msra.mxu0 %v1604
        %1814 = vmatpush.bf16.msra.mxu0 %v1603
        %1815 = vmatpush.bf16.msra.mxu0 %v1602
        %1816 = vmatpush.bf16.msra.mxu0 %v1601
        %1817 = vmatpush.bf16.msra.mxu0 %v1600
        %1818 = vmatmul.bf16.gmra.mxu0 %v1202
        %v1819 = vpop.f32.mrf.mxu0
        %v1820 = vadd.f32 %v1771, %v1819
        %v1821 = vpop.f32.mrf.mxu0
        %v1822 = vadd.f32 %v1773, %v1821
        %1823 = vmatmul.bf16.gmra.mxu0 %v1210
        %v1824 = vpop.f32.mrf.mxu0
        %v1825 = vadd.f32 %v1776, %v1824
        %v1826 = vpop.f32.mrf.mxu0
        %v1827 = vadd.f32 %v1778, %v1826
        %1828 = vmatmul.bf16.gmra.mxu0 %v1218
        %v1829 = vpop.f32.mrf.mxu0
        %v1830 = vadd.f32 %v1781, %v1829
        %v1831 = vpop.f32.mrf.mxu0
        %v1832 = vadd.f32 %v1783, %v1831
        %1833 = vmatmul.bf16.gmra.mxu0 %v1226
        %v1834 = vpop.f32.mrf.mxu0
        %v1835 = vadd.f32 %v1786, %v1834
        %v1836 = vpop.f32.mrf.mxu0
        %v1837 = vadd.f32 %v1788, %v1836
        %1838 = vmatmul.bf16.gmra.mxu0 %v1234
        %v1839 = vpop.f32.mrf.mxu0
        %v1840 = vadd.f32 %v1791, %v1839
        %v1841 = vpop.f32.mrf.mxu0
        %v1842 = vadd.f32 %v1793, %v1841
        %1843 = vmatmul.bf16.gmra.mxu0 %v1242
        %v1844 = vpop.f32.mrf.mxu0
        %v1845 = vadd.f32 %v1796, %v1844
        %v1846 = vpop.f32.mrf.mxu0
        %v1847 = vadd.f32 %v1798, %v1846
        %1848 = vmatmul.bf16.gmra.mxu0 %v1250
        %v1849 = vpop.f32.mrf.mxu0
        %v1850 = vadd.f32 %v1801, %v1849
        %v1851 = vpop.f32.mrf.mxu0
        %v1852 = vadd.f32 %v1803, %v1851
        %1853 = vmatmul.bf16.gmra.mxu0 %v1258
        %v1854 = vpop.f32.mrf.mxu0
        %v1855 = vadd.f32 %v1806, %v1854
        %v1856 = vpop.f32.mrf.mxu0
        %v1857 = vadd.f32 %v1808, %v1856
        %1858 = vdwg.mxu0
        %1859 = vmatpush.bf16.msra.mxu0 %v1615
        %1860 = vmatpush.bf16.msra.mxu0 %v1614
        %1861 = vmatpush.bf16.msra.mxu0 %v1613
        %1862 = vmatpush.bf16.msra.mxu0 %v1612
        %1863 = vmatpush.bf16.msra.mxu0 %v1611
        %1864 = vmatpush.bf16.msra.mxu0 %v1610
        %1865 = vmatpush.bf16.msra.mxu0 %v1609
        %1866 = vmatpush.bf16.msra.mxu0 %v1608
        %1867 = vmatmul.bf16.gmra.mxu0 %v1203
        %v1868 = vpop.f32.mrf.mxu0
        %v1869 = vadd.f32 %v1820, %v1868
        %v1870 = vpop.f32.mrf.mxu0
        %v1871 = vadd.f32 %v1822, %v1870
        %1872 = vmatmul.bf16.gmra.mxu0 %v1211
        %v1873 = vpop.f32.mrf.mxu0
        %v1874 = vadd.f32 %v1825, %v1873
        %v1875 = vpop.f32.mrf.mxu0
        %v1876 = vadd.f32 %v1827, %v1875
        %1877 = vmatmul.bf16.gmra.mxu0 %v1219
        %v1878 = vpop.f32.mrf.mxu0
        %v1879 = vadd.f32 %v1830, %v1878
        %v1880 = vpop.f32.mrf.mxu0
        %v1881 = vadd.f32 %v1832, %v1880
        %1882 = vmatmul.bf16.gmra.mxu0 %v1227
        %v1883 = vpop.f32.mrf.mxu0
        %v1884 = vadd.f32 %v1835, %v1883
        %v1885 = vpop.f32.mrf.mxu0
        %v1886 = vadd.f32 %v1837, %v1885
        %1887 = vmatmul.bf16.gmra.mxu0 %v1235
        %v1888 = vpop.f32.mrf.mxu0
        %v1889 = vadd.f32 %v1840, %v1888
        %v1890 = vpop.f32.mrf.mxu0
        %v1891 = vadd.f32 %v1842, %v1890
        %1892 = vmatmul.bf16.gmra.mxu0 %v1243
        %v1893 = vpop.f32.mrf.mxu0
        %v1894 = vadd.f32 %v1845, %v1893
        %v1895 = vpop.f32.mrf.mxu0
        %v1896 = vadd.f32 %v1847, %v1895
        %1897 = vmatmul.bf16.gmra.mxu0 %v1251
        %v1898 = vpop.f32.mrf.mxu0
        %v1899 = vadd.f32 %v1850, %v1898
        %v1900 = vpop.f32.mrf.mxu0
        %v1901 = vadd.f32 %v1852, %v1900
        %1902 = vmatmul.bf16.gmra.mxu0 %v1259
        %v1903 = vpop.f32.mrf.mxu0
        %v1904 = vadd.f32 %v1855, %v1903
        %v1905 = vpop.f32.mrf.mxu0
        %v1906 = vadd.f32 %v1857, %v1905
        %1907 = vdwg.mxu0
        %1908 = vmatpush.bf16.msra.mxu0 %v1623
        %1909 = vmatpush.bf16.msra.mxu0 %v1622
        %1910 = vmatpush.bf16.msra.mxu0 %v1621
        %1911 = vmatpush.bf16.msra.mxu0 %v1620
        %1912 = vmatpush.bf16.msra.mxu0 %v1619
        %1913 = vmatpush.bf16.msra.mxu0 %v1618
        %1914 = vmatpush.bf16.msra.mxu0 %v1617
        %1915 = vmatpush.bf16.msra.mxu0 %v1616
        %1916 = vmatmul.bf16.gmra.mxu0 %v1204
        %v1917 = vpop.f32.mrf.mxu0
        %v1918 = vadd.f32 %v1869, %v1917
        %v1919 = vpop.f32.mrf.mxu0
        %v1920 = vadd.f32 %v1871, %v1919
        %1921 = vmatmul.bf16.gmra.mxu0 %v1212
        %v1922 = vpop.f32.mrf.mxu0
        %v1923 = vadd.f32 %v1874, %v1922
        %v1924 = vpop.f32.mrf.mxu0
        %v1925 = vadd.f32 %v1876, %v1924
        %1926 = vmatmul.bf16.gmra.mxu0 %v1220
        %v1927 = vpop.f32.mrf.mxu0
        %v1928 = vadd.f32 %v1879, %v1927
        %v1929 = vpop.f32.mrf.mxu0
        %v1930 = vadd.f32 %v1881, %v1929
        %1931 = vmatmul.bf16.gmra.mxu0 %v1228
        %v1932 = vpop.f32.mrf.mxu0
        %v1933 = vadd.f32 %v1884, %v1932
        %v1934 = vpop.f32.mrf.mxu0
        %v1935 = vadd.f32 %v1886, %v1934
        %1936 = vmatmul.bf16.gmra.mxu0 %v1236
        %v1937 = vpop.f32.mrf.mxu0
        %v1938 = vadd.f32 %v1889, %v1937
        %v1939 = vpop.f32.mrf.mxu0
        %v1940 = vadd.f32 %v1891, %v1939
        %1941 = vmatmul.bf16.gmra.mxu0 %v1244
        %v1942 = vpop.f32.mrf.mxu0
        %v1943 = vadd.f32 %v1894, %v1942
        %v1944 = vpop.f32.mrf.mxu0
        %v1945 = vadd.f32 %v1896, %v1944
        %1946 = vmatmul.bf16.gmra.mxu0 %v1252
        %v1947 = vpop.f32.mrf.mxu0
        %v1948 = vadd.f32 %v1899, %v1947
        %v1949 = vpop.f32.mrf.mxu0
        %v1950 = vadd.f32 %v1901, %v1949
        %1951 = vmatmul.bf16.gmra.mxu0 %v1260
        %v1952 = vpop.f32.mrf.mxu0
        %v1953 = vadd.f32 %v1904, %v1952
        %v1954 = vpop.f32.mrf.mxu0
        %v1955 = vadd.f32 %v1906, %v1954
        %1956 = vdwg.mxu0
        %1957 = vmatpush.bf16.msra.mxu0 %v1631
        %1958 = vmatpush.bf16.msra.mxu0 %v1630
        %1959 = vmatpush.bf16.msra.mxu0 %v1629
        %1960 = vmatpush.bf16.msra.mxu0 %v1628
        %1961 = vmatpush.bf16.msra.mxu0 %v1627
        %1962 = vmatpush.bf16.msra.mxu0 %v1626
        %1963 = vmatpush.bf16.msra.mxu0 %v1625
        %1964 = vmatpush.bf16.msra.mxu0 %v1624
        %1965 = vmatmul.bf16.gmra.mxu0 %v1205
        %v1966 = vpop.f32.mrf.mxu0
        %v1967 = vadd.f32 %v1918, %v1966
        %v1968 = vpop.f32.mrf.mxu0
        %v1969 = vadd.f32 %v1920, %v1968
        %1970 = vmatmul.bf16.gmra.mxu0 %v1213
        %v1971 = vpop.f32.mrf.mxu0
        %v1972 = vadd.f32 %v1923, %v1971
        %v1973 = vpop.f32.mrf.mxu0
        %v1974 = vadd.f32 %v1925, %v1973
        %1975 = vmatmul.bf16.gmra.mxu0 %v1221
        %v1976 = vpop.f32.mrf.mxu0
        %v1977 = vadd.f32 %v1928, %v1976
        %v1978 = vpop.f32.mrf.mxu0
        %v1979 = vadd.f32 %v1930, %v1978
        %1980 = vmatmul.bf16.gmra.mxu0 %v1229
        %v1981 = vpop.f32.mrf.mxu0
        %v1982 = vadd.f32 %v1933, %v1981
        %v1983 = vpop.f32.mrf.mxu0
        %v1984 = vadd.f32 %v1935, %v1983
        %1985 = vmatmul.bf16.gmra.mxu0 %v1237
        %v1986 = vpop.f32.mrf.mxu0
        %v1987 = vadd.f32 %v1938, %v1986
        %v1988 = vpop.f32.mrf.mxu0
        %v1989 = vadd.f32 %v1940, %v1988
        %1990 = vmatmul.bf16.gmra.mxu0 %v1245
        %v1991 = vpop.f32.mrf.mxu0
        %v1992 = vadd.f32 %v1943, %v1991
        %v1993 = vpop.f32.mrf.mxu0
        %v1994 = vadd.f32 %v1945, %v1993
        %1995 = vmatmul.bf16.gmra.mxu0 %v1253
        %v1996 = vpop.f32.mrf.mxu0
        %v1997 = vadd.f32 %v1948, %v1996
        %v1998 = vpop.f32.mrf.mxu0
        %v1999 = vadd.f32 %v1950, %v1998
        %2000 = vmatmul.bf16.gmra.mxu0 %v1261
        %v2001 = vpop.f32.mrf.mxu0
        %v2002 = vadd.f32 %v1953, %v2001
        %v2003 = vpop.f32.mrf.mxu0
        %v2004 = vadd.f32 %v1955, %v2003
        %2005 = vdwg.mxu0
        %2006 = vmatpush.bf16.msra.mxu0 %v1639
        %2007 = vmatpush.bf16.msra.mxu0 %v1638
        %2008 = vmatpush.bf16.msra.mxu0 %v1637
        %2009 = vmatpush.bf16.msra.mxu0 %v1636
        %2010 = vmatpush.bf16.msra.mxu0 %v1635
        %2011 = vmatpush.bf16.msra.mxu0 %v1634
        %2012 = vmatpush.bf16.msra.mxu0 %v1633
        %2013 = vmatpush.bf16.msra.mxu0 %v1632
        %2014 = vmatmul.bf16.gmra.mxu0 %v1206
        %v2015 = vpop.f32.mrf.mxu0
        %v2016 = vadd.f32 %v1967, %v2015
        %v2017 = vpop.f32.mrf.mxu0
        %v2018 = vadd.f32 %v1969, %v2017
        %2019 = vmatmul.bf16.gmra.mxu0 %v1214
        %v2020 = vpop.f32.mrf.mxu0
        %v2021 = vadd.f32 %v1972, %v2020
        %v2022 = vpop.f32.mrf.mxu0
        %v2023 = vadd.f32 %v1974, %v2022
        %2024 = vmatmul.bf16.gmra.mxu0 %v1222
        %v2025 = vpop.f32.mrf.mxu0
        %v2026 = vadd.f32 %v1977, %v2025
        %v2027 = vpop.f32.mrf.mxu0
        %v2028 = vadd.f32 %v1979, %v2027
        %2029 = vmatmul.bf16.gmra.mxu0 %v1230
        %v2030 = vpop.f32.mrf.mxu0
        %v2031 = vadd.f32 %v1982, %v2030
        %v2032 = vpop.f32.mrf.mxu0
        %v2033 = vadd.f32 %v1984, %v2032
        %2034 = vmatmul.bf16.gmra.mxu0 %v1238
        %v2035 = vpop.f32.mrf.mxu0
        %v2036 = vadd.f32 %v1987, %v2035
        %v2037 = vpop.f32.mrf.mxu0
        %v2038 = vadd.f32 %v1989, %v2037
        %2039 = vmatmul.bf16.gmra.mxu0 %v1246
        %v2040 = vpop.f32.mrf.mxu0
        %v2041 = vadd.f32 %v1992, %v2040
        %v2042 = vpop.f32.mrf.mxu0
        %v2043 = vadd.f32 %v1994, %v2042
        %2044 = vmatmul.bf16.gmra.mxu0 %v1254
        %v2045 = vpop.f32.mrf.mxu0
        %v2046 = vadd.f32 %v1997, %v2045
        %v2047 = vpop.f32.mrf.mxu0
        %v2048 = vadd.f32 %v1999, %v2047
        %2049 = vmatmul.bf16.gmra.mxu0 %v1262
        %v2050 = vpop.f32.mrf.mxu0
        %v2051 = vadd.f32 %v2002, %v2050
        %v2052 = vpop.f32.mrf.mxu0
        %v2053 = vadd.f32 %v2004, %v2052
        %2054 = vdwg.mxu0
        %2055 = vmatpush.bf16.msra.mxu0 %v1647
        %2056 = vmatpush.bf16.msra.mxu0 %v1646
        %2057 = vmatpush.bf16.msra.mxu0 %v1645
        %2058 = vmatpush.bf16.msra.mxu0 %v1644
        %2059 = vmatpush.bf16.msra.mxu0 %v1643
        %2060 = vmatpush.bf16.msra.mxu0 %v1642
        %2061 = vmatpush.bf16.msra.mxu0 %v1641
        %2062 = vmatpush.bf16.msra.mxu0 %v1640
        %2063 = vmatmul.bf16.gmra.mxu0 %v1207
        %v2064 = vpop.f32.mrf.mxu0
        %v2065 = vadd.f32 %v2016, %v2064
        %v2066 = vpop.f32.mrf.mxu0
        %v2067 = vadd.f32 %v2018, %v2066
        %2068 = vmatmul.bf16.gmra.mxu0 %v1215
        %v2069 = vpop.f32.mrf.mxu0
        %v2070 = vadd.f32 %v2021, %v2069
        %v2071 = vpop.f32.mrf.mxu0
        %v2072 = vadd.f32 %v2023, %v2071
        %2073 = vmatmul.bf16.gmra.mxu0 %v1223
        %v2074 = vpop.f32.mrf.mxu0
        %v2075 = vadd.f32 %v2026, %v2074
        %v2076 = vpop.f32.mrf.mxu0
        %v2077 = vadd.f32 %v2028, %v2076
        %2078 = vmatmul.bf16.gmra.mxu0 %v1231
        %v2079 = vpop.f32.mrf.mxu0
        %v2080 = vadd.f32 %v2031, %v2079
        %v2081 = vpop.f32.mrf.mxu0
        %v2082 = vadd.f32 %v2033, %v2081
        %2083 = vmatmul.bf16.gmra.mxu0 %v1239
        %v2084 = vpop.f32.mrf.mxu0
        %v2085 = vadd.f32 %v2036, %v2084
        %v2086 = vpop.f32.mrf.mxu0
        %v2087 = vadd.f32 %v2038, %v2086
        %2088 = vmatmul.bf16.gmra.mxu0 %v1247
        %v2089 = vpop.f32.mrf.mxu0
        %v2090 = vadd.f32 %v2041, %v2089
        %v2091 = vpop.f32.mrf.mxu0
        %v2092 = vadd.f32 %v2043, %v2091
        %2093 = vmatmul.bf16.gmra.mxu0 %v1255
        %v2094 = vpop.f32.mrf.mxu0
        %v2095 = vadd.f32 %v2046, %v2094
        %v2096 = vpop.f32.mrf.mxu0
        %v2097 = vadd.f32 %v2048, %v2096
        %2098 = vmatmul.bf16.gmra.mxu0 %v1263
        %v2099 = vpop.f32.mrf.mxu0
        %v2100 = vadd.f32 %v2051, %v2099
        %v2101 = vpop.f32.mrf.mxu0
        %v2102 = vadd.f32 %v2053, %v2101
        %2103 = vdwg.mxu0
        %v2104 = vld [vmem:[%s808] sm:$0x1]
        %v2105 = vld [vmem:[%s811] sm:$0x1]
        %v2106 = vadd.f32 %v2065, %v2067
        %v2107 = vadd.f32 %v2106, %v2070
        %v2108 = vadd.f32 %v2107, %v2072
        %v2109 = vadd.f32 %v2108, %v2075
        %v2110 = vadd.f32 %v2109, %v2077
        %v2111 = vadd.f32 %v2110, %v2080
        %v2112 = vadd.f32 %v2111, %v2082
        %v2113 = vadd.f32 %v2112, %v2085
        %v2114 = vadd.f32 %v2113, %v2087
        %v2115 = vadd.f32 %v2114, %v2090
        %v2116 = vadd.f32 %v2115, %v2092
        %v2117 = vadd.f32 %v2116, %v2095
        %v2118 = vadd.f32 %v2117, %v2097
        %v2119 = vadd.f32 %v2118, %v2100
        %v2120 = vadd.f32 %v2119, %v2102
        %v2121 = vrot.slane %v2120, 4
        %v2122 = vadd.f32 %v2120, %v2121
        %v2123 = vrot.slane %v2122, 2
        %v2124 = vadd.f32 %v2122, %v2123
        %v2125 = vrot.slane %v2124, 1
        %v2126 = vadd.f32 %v2124, %v2125
        %v2127 = vmul.f32 %v2126, 0.0078125
        %v2128 = vsub.f32 %v2065, %v2127
        %v2129 = vsub.f32 %v2067, %v2127
        %v2130 = vsub.f32 %v2070, %v2127
        %v2131 = vsub.f32 %v2072, %v2127
        %v2132 = vsub.f32 %v2075, %v2127
        %v2133 = vsub.f32 %v2077, %v2127
        %v2134 = vsub.f32 %v2080, %v2127
        %v2135 = vsub.f32 %v2082, %v2127
        %v2136 = vsub.f32 %v2085, %v2127
        %v2137 = vsub.f32 %v2087, %v2127
        %v2138 = vsub.f32 %v2090, %v2127
        %v2139 = vsub.f32 %v2092, %v2127
        %v2140 = vsub.f32 %v2095, %v2127
        %v2141 = vsub.f32 %v2097, %v2127
        %v2142 = vsub.f32 %v2100, %v2127
        %v2143 = vsub.f32 %v2102, %v2127
        %v2144 = vmul.f32 %v2128, %v2128
        %v2145 = vmul.f32 %v2129, %v2129
        %v2146 = vmul.f32 %v2130, %v2130
        %v2147 = vmul.f32 %v2131, %v2131
        %v2148 = vmul.f32 %v2132, %v2132
        %v2149 = vmul.f32 %v2133, %v2133
        %v2150 = vmul.f32 %v2134, %v2134
        %v2151 = vmul.f32 %v2135, %v2135
        %v2152 = vmul.f32 %v2136, %v2136
        %v2153 = vmul.f32 %v2137, %v2137
        %v2154 = vmul.f32 %v2138, %v2138
        %v2155 = vmul.f32 %v2139, %v2139
        %v2156 = vmul.f32 %v2140, %v2140
        %v2157 = vmul.f32 %v2141, %v2141
        %v2158 = vmul.f32 %v2142, %v2142
        %v2159 = vmul.f32 %v2143, %v2143
        %v2160 = vadd.f32 %v2144, %v2145
        %v2161 = vadd.f32 %v2160, %v2146
        %v2162 = vadd.f32 %v2161, %v2147
        %v2163 = vadd.f32 %v2162, %v2148
        %v2164 = vadd.f32 %v2163, %v2149
        %v2165 = vadd.f32 %v2164, %v2150
        %v2166 = vadd.f32 %v2165, %v2151
        %v2167 = vadd.f32 %v2166, %v2152
        %v2168 = vadd.f32 %v2167, %v2153
        %v2169 = vadd.f32 %v2168, %v2154
        %v2170 = vadd.f32 %v2169, %v2155
        %v2171 = vadd.f32 %v2170, %v2156
        %v2172 = vadd.f32 %v2171, %v2157
        %v2173 = vadd.f32 %v2172, %v2158
        %v2174 = vadd.f32 %v2173, %v2159
        %v2175 = vrot.slane %v2174, 4
        %v2176 = vadd.f32 %v2174, %v2175
        %v2177 = vrot.slane %v2176, 2
        %v2178 = vadd.f32 %v2176, %v2177
        %v2179 = vrot.slane %v2178, 1
        %v2180 = vadd.f32 %v2178, %v2179
        %v2181 = vmul.f32 %v2180, 0.0078125
        %v2182 = vadd.f32 %v2181, 1e-05
        %v2183 = vrsqrt.pop %v2182
        %v2184 = vmul.f32 %v2183, %v2182
        %v2185 = vmul.f32 %v2184, %v2183
        %v2186 = vmul.f32 0.5, %v2185
        %v2187 = vsub.f32 1.5, %v2186
        %v2188 = vmul.f32 %v2183, %v2187
        %vm2189 = vweird.f32 %v2182
        %vm2190 = vweird.f32 %v2183
        %vm2191 = vmor %vm2189, %vm2190
        %v2192 = vsel %vm2191, %v2183, %v2188
        %v2193 = vmul.f32 %v2192, %v2104
        %v2194 = vperm.slane %v2193, 0
        %v2195 = vmul.f32 %v2128, %v2194
        %v2196 = vmul.f32 %v2129, %v2194
        %v2197 = vmul.f32 %v2130, %v2194
        %v2198 = vmul.f32 %v2131, %v2194
        %v2199 = vmul.f32 %v2132, %v2194
        %v2200 = vmul.f32 %v2133, %v2194
        %v2201 = vmul.f32 %v2134, %v2194
        %v2202 = vmul.f32 %v2135, %v2194
        %v2203 = vmul.f32 %v2136, %v2194
        %v2204 = vmul.f32 %v2137, %v2194
        %v2205 = vmul.f32 %v2138, %v2194
        %v2206 = vmul.f32 %v2139, %v2194
        %v2207 = vmul.f32 %v2140, %v2194
        %v2208 = vmul.f32 %v2141, %v2194
        %v2209 = vmul.f32 %v2142, %v2194
        %v2210 = vmul.f32 %v2143, %v2194
        %v2212 = vperm.slane %v2105, 0
        %v2214 = vadd.f32 %v2195, %v2212
        %v2215 = vadd.f32 %v2196, %v2212
        %v2216 = vadd.f32 %v2197, %v2212
        %v2217 = vadd.f32 %v2198, %v2212
        %v2218 = vadd.f32 %v2199, %v2212
        %v2219 = vadd.f32 %v2200, %v2212
        %v2220 = vadd.f32 %v2201, %v2212
        %v2221 = vadd.f32 %v2202, %v2212
        %v2222 = vadd.f32 %v2203, %v2212
        %v2223 = vadd.f32 %v2204, %v2212
        %v2224 = vadd.f32 %v2205, %v2212
        %v2225 = vadd.f32 %v2206, %v2212
        %v2226 = vadd.f32 %v2207, %v2212
        %v2227 = vadd.f32 %v2208, %v2212
        %v2228 = vadd.f32 %v2209, %v2212
        %v2229 = vadd.f32 %v2210, %v2212
        %v2230 = vmax.f32 %v2214, 0.0
        %v2231 = vmax.f32 %v2215, 0.0
        %v2232 = vmax.f32 %v2216, 0.0
        %v2233 = vmax.f32 %v2217, 0.0
        %v2234 = vmax.f32 %v2218, 0.0
        %v2235 = vmax.f32 %v2219, 0.0
        %v2236 = vmax.f32 %v2220, 0.0
        %v2237 = vmax.f32 %v2221, 0.0
        %v2238 = vmax.f32 %v2222, 0.0
        %v2239 = vmax.f32 %v2223, 0.0
        %v2240 = vmax.f32 %v2224, 0.0
        %v2241 = vmax.f32 %v2225, 0.0
        %v2242 = vmax.f32 %v2226, 0.0
        %v2243 = vmax.f32 %v2227, 0.0
        %v2244 = vmax.f32 %v2228, 0.0
        %v2245 = vmax.f32 %v2229, 0.0
        %2246 = vst [vmem:[%s802] sm:$0xff] %v2230
        %2247 = vst [vmem:[%s802 + $0x8] sm:$0xff] %v2231
        %2248 = vst [vmem:[%s802 + $0x10] sm:$0xff] %v2232
        %2249 = vst [vmem:[%s802 + $0x18] sm:$0xff] %v2233
        %2250 = vst [vmem:[%s802 + $0x20] sm:$0xff] %v2234
        %2251 = vst [vmem:[%s802 + $0x28] sm:$0xff] %v2235
        %2252 = vst [vmem:[%s802 + $0x30] sm:$0xff] %v2236
        %2253 = vst [vmem:[%s802 + $0x38] sm:$0xff] %v2237
        %2254 = vst [vmem:[%s802 + $0x40] sm:$0xff] %v2238
        %2255 = vst [vmem:[%s802 + $0x48] sm:$0xff] %v2239
        %2256 = vst [vmem:[%s802 + $0x50] sm:$0xff] %v2240
        %2257 = vst [vmem:[%s802 + $0x58] sm:$0xff] %v2241
        %2258 = vst [vmem:[%s802 + $0x60] sm:$0xff] %v2242
        %2259 = vst [vmem:[%s802 + $0x68] sm:$0xff] %v2243
        %2260 = vst [vmem:[%s802 + $0x70] sm:$0xff] %v2244
        %2261 = vst [vmem:[%s802 + $0x78] sm:$0xff] %v2245
        %s2262 = sand.u32 %s149, 1
        %s2263 = sand.u32 %s149, 1
        %s2264 = smul.addr %s2263, 128
        %s2265 = scalar_lea.vmem [#allocation3], %s2264
        // Predicated region
        $region82: #{inception_b_forward.7} parent=76 // pred_check
          %p2266 = pneg %p159
        $region83: #{inception_b_forward.7} parent=76 // pred_check_branch
          %2268 = sbr.rel (%p2266) target = $region85
        $region84: #{inception_b_forward.7} parent=76 // pred_region
          %s2269 = smul.addr %s16, 8
          %s2270 = scalar_lea.vmem %s5, %s2269
          // Predicated region
          $region86: #{inception_b_forward.7} parent=84 // pred_check
            _
          $region87: #{inception_b_forward.7} parent=84 // pred_check_branch
            %2272 = sbr.rel (0) target = $region89
          $region88: #{inception_b_forward.7} parent=84 // pred_region
            // Predicated region
            $region90: #{inception_b_forward.7} parent=88 // pred_check
              _
            $region91: #{inception_b_forward.7} parent=88 // pred_check_branch
              %2274 = sbr.rel (0) target = $region93
            $region92: #{inception_b_forward.7} parent=88 // pred_region
              // Predicated region
              $region105: #{inception_b_forward.7} parent=92 // pred_check
                _
              $region106: #{inception_b_forward.7} parent=92 // pred_check_branch
                %2320 = sbr.rel (0) target = $region108
              $region107: #{inception_b_forward.7} parent=92 // pred_region
                loop: start=0, step=1, limit=1
                $region109: #{inception_b_forward.7} parent=107 // loop_pre_header
                  _
                $region110: #{inception_b_forward.7} parent=107 // loop_header
                  %s2322 = sphi 0, %s2326
                  %p2323 = scmp.ge.s32.totalorder %s2322, 1
                  %s2327 = sphi %s2265, %s2265
                  %s2328 = sphi %s2270, %s2270
                $region111: #{inception_b_forward.7} parent=107 // loop_header_branch
                  %2325 = sbr.rel (%p2323) target = $region115
                $region112: #{inception_b_forward.7} parent=107 // loop_body
                  %v2329 = vld [vmem:[%s2327] sm:$0xff]
                  %2330 = vst [vmem:[%s2328] sm:$0xff] %v2329
                  %v2331 = vld [vmem:[%s2327 + $0x8] sm:$0xff]
                  %2332 = vst [vmem:[%s2328 + $0x38] sm:$0xff] %v2331
                  %v2333 = vld [vmem:[%s2327 + $0x10] sm:$0xff]
                  %2334 = vst [vmem:[%s2328 + $0x70] sm:$0xff] %v2333
                  %v2335 = vld [vmem:[%s2327 + $0x18] sm:$0xff]
                  %2336 = vst [vmem:[%s2328 + $0xa8] sm:$0xff] %v2335
                  %v2337 = vld [vmem:[%s2327 + $0x20] sm:$0xff]
                  %2338 = vst [vmem:[%s2328 + $0xe0] sm:$0xff] %v2337
                  %v2339 = vld [vmem:[%s2327 + $0x28] sm:$0xff]
                  %2340 = vst [vmem:[%s2328 + $0x118] sm:$0xff] %v2339
                  %v2341 = vld [vmem:[%s2327 + $0x30] sm:$0xff]
                  %2342 = vst [vmem:[%s2328 + $0x150] sm:$0xff] %v2341
                  %v2343 = vld [vmem:[%s2327 + $0x38] sm:$0xff]
                  %2344 = vst [vmem:[%s2328 + $0x188] sm:$0xff] %v2343
                  %v2345 = vld [vmem:[%s2327 + $0x40] sm:$0xff]
                  %2346 = vst [vmem:[%s2328 + $0x1c0] sm:$0xff] %v2345
                  %v2347 = vld [vmem:[%s2327 + $0x48] sm:$0xff]
                  %2348 = vst [vmem:[%s2328 + $0x1f8] sm:$0xff] %v2347
                  %v2349 = vld [vmem:[%s2327 + $0x50] sm:$0xff]
                  %2350 = vst [vmem:[%s2328 + $0x230] sm:$0xff] %v2349
                  %v2351 = vld [vmem:[%s2327 + $0x58] sm:$0xff]
                  %2352 = vst [vmem:[%s2328 + $0x268] sm:$0xff] %v2351
                  %v2353 = vld [vmem:[%s2327 + $0x60] sm:$0xff]
                  %2354 = vst [vmem:[%s2328 + $0x2a0] sm:$0xff] %v2353
                  %v2355 = vld [vmem:[%s2327 + $0x68] sm:$0xff]
                  %2356 = vst [vmem:[%s2328 + $0x2d8] sm:$0xff] %v2355
                  %v2357 = vld [vmem:[%s2327 + $0x70] sm:$0xff]
                  %2358 = vst [vmem:[%s2328 + $0x310] sm:$0xff] %v2357
                  %v2359 = vld [vmem:[%s2327 + $0x78] sm:$0xff]
                  %2360 = vst [vmem:[%s2328 + $0x348] sm:$0xff] %v2359
                $region113: #{inception_b_forward.7} parent=107 // loop_footer
                  %s2326 = sadd.s32 1, %s2322
                $region114: #{inception_b_forward.7} parent=107 // loop_footer_branch
                  %2321 = sbr.rel target = $region110
                $region115: #{inception_b_forward.7} parent=107 // loop_exit
                  _
              $region108: #{inception_b_forward.7} parent=92 // pred_fallthru
                _
              // Predicated region
              $region116: #{inception_b_forward.7} parent=92 // pred_check
                _
              $region117: #{inception_b_forward.7} parent=92 // pred_check_branch
                %2362 = sbr.rel target = $region119
              $region118: #{inception_b_forward.7} parent=92 // pred_region
                _
              $region119: #{inception_b_forward.7} parent=92 // pred_fallthru
                _
            $region93: #{inception_b_forward.7} parent=88 // pred_fallthru
              _
            // Predicated region
            $region94: #{inception_b_forward.7} parent=88 // pred_check
              _
            $region95: #{inception_b_forward.7} parent=88 // pred_check_branch
              %2276 = sbr.rel target = $region97
            $region96: #{inception_b_forward.7} parent=88 // pred_region
              %s2278 = ssub.s32 256, 1
              loop: start=0, step=1, limit=1
              $region98: #{inception_b_forward.7} parent=96 // loop_pre_header
                _
              $region99: #{inception_b_forward.7} parent=96 // loop_header
                %s2280 = sphi 0, %s2284
                %p2281 = scmp.ge.s32.totalorder %s2280, 1
                %s2285 = sphi %s2265, %s2265
                %s2286 = sphi %s2270, %s2270
              $region100: #{inception_b_forward.7} parent=96 // loop_header_branch
                %2283 = sbr.rel (%p2281) target = $region104
              $region101: #{inception_b_forward.7} parent=96 // loop_body
                %v2287 = vld [vmem:[%s2285] sm:%s2278]
                %2288 = vst [vmem:[%s2286] sm:%s2278] %v2287
                %v2289 = vld [vmem:[%s2285 + $0x8] sm:%s2278]
                %2290 = vst [vmem:[%s2286 + $0x38] sm:%s2278] %v2289
                %v2291 = vld [vmem:[%s2285 + $0x10] sm:%s2278]
                %2292 = vst [vmem:[%s2286 + $0x70] sm:%s2278] %v2291
                %v2293 = vld [vmem:[%s2285 + $0x18] sm:%s2278]
                %2294 = vst [vmem:[%s2286 + $0xa8] sm:%s2278] %v2293
                %v2295 = vld [vmem:[%s2285 + $0x20] sm:%s2278]
                %2296 = vst [vmem:[%s2286 + $0xe0] sm:%s2278] %v2295
                %v2297 = vld [vmem:[%s2285 + $0x28] sm:%s2278]
                %2298 = vst [vmem:[%s2286 + $0x118] sm:%s2278] %v2297
                %v2299 = vld [vmem:[%s2285 + $0x30] sm:%s2278]
                %2300 = vst [vmem:[%s2286 + $0x150] sm:%s2278] %v2299
                %v2301 = vld [vmem:[%s2285 + $0x38] sm:%s2278]
                %2302 = vst [vmem:[%s2286 + $0x188] sm:%s2278] %v2301
                %v2303 = vld [vmem:[%s2285 + $0x40] sm:%s2278]
                %2304 = vst [vmem:[%s2286 + $0x1c0] sm:%s2278] %v2303
                %v2305 = vld [vmem:[%s2285 + $0x48] sm:%s2278]
                %2306 = vst [vmem:[%s2286 + $0x1f8] sm:%s2278] %v2305
                %v2307 = vld [vmem:[%s2285 + $0x50] sm:%s2278]
                %2308 = vst [vmem:[%s2286 + $0x230] sm:%s2278] %v2307
                %v2309 = vld [vmem:[%s2285 + $0x58] sm:%s2278]
                %2310 = vst [vmem:[%s2286 + $0x268] sm:%s2278] %v2309
                %v2311 = vld [vmem:[%s2285 + $0x60] sm:%s2278]
                %2312 = vst [vmem:[%s2286 + $0x2a0] sm:%s2278] %v2311
                %v2313 = vld [vmem:[%s2285 + $0x68] sm:%s2278]
                %2314 = vst [vmem:[%s2286 + $0x2d8] sm:%s2278] %v2313
                %v2315 = vld [vmem:[%s2285 + $0x70] sm:%s2278]
                %2316 = vst [vmem:[%s2286 + $0x310] sm:%s2278] %v2315
                %v2317 = vld [vmem:[%s2285 + $0x78] sm:%s2278]
                %2318 = vst [vmem:[%s2286 + $0x348] sm:%s2278] %v2317
              $region102: #{inception_b_forward.7} parent=96 // loop_footer
                %s2284 = sadd.s32 1, %s2280
              $region103: #{inception_b_forward.7} parent=96 // loop_footer_branch
                %2279 = sbr.rel target = $region99
              $region104: #{inception_b_forward.7} parent=96 // loop_exit
                _
            $region97: #{inception_b_forward.7} parent=88 // pred_fallthru
              _
          $region89: #{inception_b_forward.7} parent=84 // pred_fallthru
            _
          %2363 = vnop
        $region85: #{inception_b_forward.7} parent=76 // pred_fallthru
          _
      $region77: #{inception_b_forward.7} parent=5 // pred_fallthru
        _
      %p2364 = scmp.le.s32.totalorder 2, %s11
      // Predicated region
      $region120: #{inception_b_forward.7} parent=5 // pred_check
        %p2365 = pneg %p2364
      $region121: #{inception_b_forward.7} parent=5 // pred_check_branch
        %2367 = sbr.rel (%p2365) target = $region123
      $region122: #{inception_b_forward.7} parent=5 // pred_region
        %s2368 = ssub.s32 %s11, 2
        // Predicated region
        $region124: #{inception_b_forward.7} parent=122 // pred_check
          %p2369 = pneg %p165
        $region125: #{inception_b_forward.7} parent=122 // pred_check_branch
          %2371 = sbr.rel (%p2369) target = $region127
        $region126: #{inception_b_forward.7} parent=122 // pred_region
          %s2372 = sand.u32 %s150, 1
          %s2373 = sand.u32 %s150, 1
          %s2374 = smul.addr %s2373, 128
          %s2375 = scalar_lea.vmem [#allocation3], %s2374
        $region127: #{inception_b_forward.7} parent=122 // pred_fallthru
          _
      $region123: #{inception_b_forward.7} parent=5 // pred_fallthru
        _
    $region6: #{inception_b_forward.7} parent=1 // loop_footer
      %s15 = sadd.s32 1, %s11
    $region7: #{inception_b_forward.7} parent=1 // loop_footer_branch
      %10 = sbr.rel target = $region3
    $region8: #{inception_b_forward.7} parent=1 // loop_exit
      _

// kernel: inception_b_forward.10
$region0: #{inception_b_forward.10}
  #allocation0 [shape = 'u32[]', space=smem, size = 0x4, offset = 0x4, fixed_abs, tag = 'smem constant byte address 0x4 - core index']
  #allocation1 [shape = 'u32[72,128]{1,0:T(1,128)}', space=vmem, size = 0x9000, scoped, tag = 'internal scratch']
  %s0 = inlined_call_operand.vmem [shape: bf16[224,192], index: 0, kind: input, shape index: {}]
  %s1 = inlined_call_operand.vmem [shape: bf16[7,192,256], index: 1, kind: input, shape index: {}]
  %s2 = inlined_call_operand.vmem [shape: f32[1,256], index: 2, kind: input, shape index: {}]
  %s3 = inlined_call_operand.vmem [shape: f32[1,256], index: 3, kind: input, shape index: {}]
  %s4 = inlined_call_operand.vmem [shape: f32[1,256], index: 4, kind: input, shape index: {}]
  %s5 = inlined_call_operand.vmem [shape: f32[128,256], index: 5, kind: output, shape index: {}]
  %s6 = sld [smem:[#allocation0]]
  $region128: #{inception_b_forward.10} parent=0
    _
  %s8 = ssub.s32 1, %s6
  %s9 = scalar_select 0, %s8, %s6
  $region1: #{inception_b_forward.10} parent=0
    #allocation2 [shape = 'u8[688128]{0}', space=vmem, size = 0xa8000, scoped, tag = 'input window, operand 1']
    #allocation3 [shape = 'u8[131072]{0}', space=vmem, size = 0x20000, scoped, tag = 'output window, operand 0']
    loop: start=0, step=1, limit=4
    $region2: #{inception_b_forward.10} parent=1 // loop_pre_header
      _
    $region3: #{inception_b_forward.10} parent=1 // loop_header
      %s11 = sphi 0, %s15
      %p12 = scmp.ge.s32.totalorder %s11, 4
      %s19 = sphi 0, %s19
      %s21 = sphi 0, %s19
      %s22 = sphi 0, %s21
      %s36 = sphi 0, %s22
      %s42 = sphi 0, %s44
      %s45 = sphi 0, %s42
      %s46 = sphi 0, %s45
      %s62 = sphi 0, %s46
      %s68 = sphi 0, %s70
      %s71 = sphi 0, %s68
      %s72 = sphi 0, %s71
      %s88 = sphi 0, %s72
      %s94 = sphi 0, %s96
      %s97 = sphi 0, %s94
      %s98 = sphi 0, %s97
      %s114 = sphi 0, %s98
      %s120 = sphi 0, %s122
      %s123 = sphi 0, %s120
      %s124 = sphi 0, %s123
      %s140 = sphi 0, %s124
      %s146 = sphi 0, %s148
      %s149 = sphi 0, %s146
      %s150 = sphi 0, %s149
      %s166 = sphi 0, %s150
    $region4: #{inception_b_forward.10} parent=1 // loop_header_branch
      %14 = sbr.rel (%p12) target = $region8
    $region5: #{inception_b_forward.10} parent=1 // loop_body
      %s16 = ssub.s32 %s11, 1
      %s17 = ssub.s32 %s11, 2
      %s18 = sadd.s32 %s11, 1
      %s20 = sadd.s32 %s19, 1
      %p23 = scmp.eq.s32.totalorder %s11, 1
      %p24 = scmp.ne.s32.totalorder %s19, %s21
      %p25 = scmp.eq.s32.totalorder %s11, 0
      %p26 = por %p24, %p25
      %p27 = scmp.ne.s32.totalorder %s19, %s21
      %p28 = scmp.eq.s32.totalorder %s16, 1
      %p29 = por %p27, %p28
      %p30 = scmp.ne.s32.totalorder %s21, %s22
      %p31 = scmp.eq.s32.totalorder %s16, 0
      %p32 = por %p30, %p31
      %p33 = scmp.ne.s32.totalorder %s21, %s22
      %p34 = scmp.eq.s32.totalorder %s17, 1
      %p35 = por %p33, %p34
      %p37 = scmp.ne.s32.totalorder %s22, %s36
      %p38 = scmp.eq.s32.totalorder %s17, 0
      %p39 = por %p37, %p38
      %s40 = ssub.s32 %s11, %s18
      %p41 = scmp.eq.s32.totalorder %s40, 0
      %s43 = sadd.s32 %s42, 1
      %s44 = scalar_select %p41, %s42, %s43
      %p47 = pneg %p41
      %p48 = scmp.eq.s32.totalorder %s11, 1
      %p49 = por %p47, %p48
      %p50 = scmp.ne.s32.totalorder %s42, %s45
      %p51 = scmp.eq.s32.totalorder %s11, 0
      %p52 = por %p50, %p51
      %p53 = scmp.ne.s32.totalorder %s42, %s45
      %p54 = scmp.eq.s32.totalorder %s16, 1
      %p55 = por %p53, %p54
      %p56 = scmp.ne.s32.totalorder %s45, %s46
      %p57 = scmp.eq.s32.totalorder %s16, 0
      %p58 = por %p56, %p57
      %p59 = scmp.ne.s32.totalorder %s45, %s46
      %p60 = scmp.eq.s32.totalorder %s17, 1
      %p61 = por %p59, %p60
      %p63 = scmp.ne.s32.totalorder %s46, %s62
      %p64 = scmp.eq.s32.totalorder %s17, 0
      %p65 = por %p63, %p64
      %s66 = ssub.s32 %s11, %s18
      %p67 = scmp.eq.s32.totalorder %s66, 0
      %s69 = sadd.s32 %s68, 1
      %s70 = scalar_select %p67, %s68, %s69
      %p73 = pneg %p67
      %p74 = scmp.eq.s32.totalorder %s11, 1
      %p75 = por %p73, %p74
      %p76 = scmp.ne.s32.totalorder %s68, %s71
      %p77 = scmp.eq.s32.totalorder %s11, 0
      %p78 = por %p76, %p77
      %p79 = scmp.ne.s32.totalorder %s68, %s71
      %p80 = scmp.eq.s32.totalorder %s16, 1
      %p81 = por %p79, %p80
      %p82 = scmp.ne.s32.totalorder %s71, %s72
      %p83 = scmp.eq.s32.totalorder %s16, 0
      %p84 = por %p82, %p83
      %p85 = scmp.ne.s32.totalorder %s71, %s72
      %p86 = scmp.eq.s32.totalorder %s17, 1
      %p87 = por %p85, %p86
      %p89 = scmp.ne.s32.totalorder %s72, %s88
      %p90 = scmp.eq.s32.totalorder %s17, 0
      %p91 = por %p89, %p90
      %s92 = ssub.s32 %s11, %s18
      %p93 = scmp.eq.s32.totalorder %s92, 0
      %s95 = sadd.s32 %s94, 1
      %s96 = scalar_select %p93, %s94, %s95
      %p99 = pneg %p93
      %p100 = scmp.eq.s32.totalorder %s11, 1
      %p101 = por %p99, %p100
      %p102 = scmp.ne.s32.totalorder %s94, %s97
      %p103 = scmp.eq.s32.totalorder %s11, 0
      %p104 = por %p102, %p103
      %p105 = scmp.ne.s32.totalorder %s94, %s97
      %p106 = scmp.eq.s32.totalorder %s16, 1
      %p107 = por %p105, %p106
      %p108 = scmp.ne.s32.totalorder %s97, %s98
      %p109 = scmp.eq.s32.totalorder %s16, 0
      %p110 = por %p108, %p109
      %p111 = scmp.ne.s32.totalorder %s97, %s98
      %p112 = scmp.eq.s32.totalorder %s17, 1
      %p113 = por %p111, %p112
      %p115 = scmp.ne.s32.totalorder %s98, %s114
      %p116 = scmp.eq.s32.totalorder %s17, 0
      %p117 = por %p115, %p116
      %s118 = ssub.s32 %s11, %s18
      %p119 = scmp.eq.s32.totalorder %s118, 0
      %s121 = sadd.s32 %s120, 1
      %s122 = scalar_select %p119, %s120, %s121
      %p125 = pneg %p119
      %p126 = scmp.eq.s32.totalorder %s11, 1
      %p127 = por %p125, %p126
      %p128 = scmp.ne.s32.totalorder %s120, %s123
      %p129 = scmp.eq.s32.totalorder %s11, 0
      %p130 = por %p128, %p129
      %p131 = scmp.ne.s32.totalorder %s120, %s123
      %p132 = scmp.eq.s32.totalorder %s16, 1
      %p133 = por %p131, %p132
      %p134 = scmp.ne.s32.totalorder %s123, %s124
      %p135 = scmp.eq.s32.totalorder %s16, 0
      %p136 = por %p134, %p135
      %p137 = scmp.ne.s32.totalorder %s123, %s124
      %p138 = scmp.eq.s32.totalorder %s17, 1
      %p139 = por %p137, %p138
      %p141 = scmp.ne.s32.totalorder %s124, %s140
      %p142 = scmp.eq.s32.totalorder %s17, 0
      %p143 = por %p141, %p142
      %s144 = ssub.s32 %s11, %s18
      %p145 = scmp.eq.s32.totalorder %s144, 0
      %s147 = sadd.s32 %s146, 1
      %s148 = scalar_select %p145, %s146, %s147
      %p151 = pneg %p145
      %p152 = scmp.eq.s32.totalorder %s11, 1
      %p153 = por %p151, %p152
      %p154 = scmp.ne.s32.totalorder %s146, %s149
      %p155 = scmp.eq.s32.totalorder %s11, 0
      %p156 = por %p154, %p155
      %p157 = scmp.ne.s32.totalorder %s146, %s149
      %p158 = scmp.eq.s32.totalorder %s16, 1
      %p159 = por %p157, %p158
      %p160 = scmp.ne.s32.totalorder %s149, %s150
      %p161 = scmp.eq.s32.totalorder %s16, 0
      %p162 = por %p160, %p161
      %p163 = scmp.ne.s32.totalorder %s149, %s150
      %p164 = scmp.eq.s32.totalorder %s17, 1
      %p165 = por %p163, %p164
      %p167 = scmp.ne.s32.totalorder %s150, %s166
      %p168 = scmp.eq.s32.totalorder %s17, 0
      %p169 = por %p167, %p168
      %p170 = scmp.le.s32.totalorder 1, %s11
      %p171 = scmp.lt.s32.totalorder %s11, 3
      %p172 = pnand %p170, %p171
      %p173 = pneg %p172
      // Predicated region
      $region9: #{inception_b_forward.10} parent=5 // pred_check
        _
      $region10: #{inception_b_forward.10} parent=5 // pred_check_branch
        %175 = sbr.rel (%p172) target = $region12
      $region11: #{inception_b_forward.10} parent=5 // pred_region
        %s176 = ssub.s32 %s11, 1
        // Predicated region
        $region13: #{inception_b_forward.10} parent=11 // pred_check
          %p177 = pneg %p32
        $region14: #{inception_b_forward.10} parent=11 // pred_check_branch
          %179 = sbr.rel (%p177) target = $region16
        $region15: #{inception_b_forward.10} parent=11 // pred_region
          _
        $region16: #{inception_b_forward.10} parent=11 // pred_fallthru
          _
      $region12: #{inception_b_forward.10} parent=5 // pred_fallthru
        _
      %p180 = scmp.lt.s32.totalorder %s11, 2
      // Predicated region
      $region17: #{inception_b_forward.10} parent=5 // pred_check
        %p181 = pneg %p180
      $region18: #{inception_b_forward.10} parent=5 // pred_check_branch
        %183 = sbr.rel (%p181) target = $region20
      $region19: #{inception_b_forward.10} parent=5 // pred_region
        // Predicated region
        $region21: #{inception_b_forward.10} parent=19 // pred_check
          %p184 = pneg %p52
        $region22: #{inception_b_forward.10} parent=19 // pred_check_branch
          %186 = sbr.rel (%p184) target = $region24
        $region23: #{inception_b_forward.10} parent=19 // pred_region
          %s187 = sand.u32 %s42, 1
          %s188 = sand.u32 %s42, 1
          %s189 = smul.addr %s188, 672
          %s190 = scalar_lea.vmem [#allocation2], %s189
          %s191 = smul.addr %s11, 4
          %s192 = scalar_lea.vmem %s1, %s191
          // Predicated region
          $region25: #{inception_b_forward.10} parent=23 // pred_check
            _
          $region26: #{inception_b_forward.10} parent=23 // pred_check_branch
            %194 = sbr.rel (0) target = $region28
          $region27: #{inception_b_forward.10} parent=23 // pred_region
            // Predicated region
            $region29: #{inception_b_forward.10} parent=27 // pred_check
              _
            $region30: #{inception_b_forward.10} parent=27 // pred_check_branch
              %196 = sbr.rel target = $region32
            $region31: #{inception_b_forward.10} parent=27 // pred_region
              // Predicated region
              $region44: #{inception_b_forward.10} parent=31 // pred_check
                _
              $region45: #{inception_b_forward.10} parent=31 // pred_check_branch
                %546 = sbr.rel (0) target = $region47
              $region46: #{inception_b_forward.10} parent=31 // pred_region
                loop: start=0, step=1, limit=1
                $region48: #{inception_b_forward.10} parent=46 // loop_pre_header
                  _
                $region49: #{inception_b_forward.10} parent=46 // loop_header
                  %s548 = sphi 0, %s552
                  %p549 = scmp.ge.s32.totalorder %s548, 1
                  %s553 = sphi %s192, %s192
                  %s554 = sphi %s190, %s190
                $region50: #{inception_b_forward.10} parent=46 // loop_header_branch
                  %551 = sbr.rel (%p549) target = $region54
                $region51: #{inception_b_forward.10} parent=46 // loop_body
                  _
                $region52: #{inception_b_forward.10} parent=46 // loop_footer
                  %s552 = sadd.s32 1, %s548
                $region53: #{inception_b_forward.10} parent=46 // loop_footer_branch
                  %547 = sbr.rel target = $region49
                $region54: #{inception_b_forward.10} parent=46 // loop_exit
                  _
                %s556 = ssub.s32 16, 1
                loop: start=0, step=1, limit=1
                $region55: #{inception_b_forward.10} parent=46 // loop_pre_header
                  _
                $region56: #{inception_b_forward.10} parent=46 // loop_header
                  %s558 = sphi 0, %s562
                  %p559 = scmp.ge.s32.totalorder %s558, 1
                  %s563 = sphi %s192, %s192
                  %s564 = sphi %s190, %s190
                $region57: #{inception_b_forward.10} parent=46 // loop_header_branch
                  %561 = sbr.rel (%p559) target = $region61
                $region58: #{inception_b_forward.10} parent=46 // loop_body
                  %v565 = vld [vmem:[%s563] sm:%s556]
                  %566 = vst [vmem:[%s564] sm:%s556] %v565
                  %v567 = vld [vmem:[%s563 + $0x8] sm:%s556]
                  %568 = vst [vmem:[%s564 + $0x4] sm:%s556] %v567
                  %v569 = vld [vmem:[%s563 + $0x10] sm:%s556]
                  %570 = vst [vmem:[%s564 + $0x8] sm:%s556] %v569
                  %v571 = vld [vmem:[%s563 + $0x18] sm:%s556]
                  %572 = vst [vmem:[%s564 + $0xc] sm:%s556] %v571
                  %v573 = vld [vmem:[%s563 + $0x20] sm:%s556]
                  %574 = vst [vmem:[%s564 + $0x10] sm:%s556] %v573
                  %v575 = vld [vmem:[%s563 + $0x28] sm:%s556]
                  %576 = vst [vmem:[%s564 + $0x14] sm:%s556] %v575
                  %v577 = vld [vmem:[%s563 + $0x30] sm:%s556]
                  %578 = vst [vmem:[%s564 + $0x18] sm:%s556] %v577
                  %v579 = vld [vmem:[%s563 + $0x38] sm:%s556]
                  %580 = vst [vmem:[%s564 + $0x1c] sm:%s556] %v579
                  %v581 = vld [vmem:[%s563 + $0x40] sm:%s556]
                  %582 = vst [vmem:[%s564 + $0x20] sm:%s556] %v581
                  %v583 = vld [vmem:[%s563 + $0x48] sm:%s556]
                  %584 = vst [vmem:[%s564 + $0x24] sm:%s556] %v583
                  %v585 = vld [vmem:[%s563 + $0x50] sm:%s556]
                  %586 = vst [vmem:[%s564 + $0x28] sm:%s556] %v585
                  %v587 = vld [vmem:[%s563 + $0x58] sm:%s556]
                  %588 = vst [vmem:[%s564 + $0x2c] sm:%s556] %v587
                  %v589 = vld [vmem:[%s563 + $0x60] sm:%s556]
                  %590 = vst [vmem:[%s564 + $0x30] sm:%s556] %v589
                  %v591 = vld [vmem:[%s563 + $0x68] sm:%s556]
                  %592 = vst [vmem:[%s564 + $0x34] sm:%s556] %v591
                  %v593 = vld [vmem:[%s563 + $0x70] sm:%s556]
                  %594 = vst [vmem:[%s564 + $0x38] sm:%s556] %v593
                  %v595 = vld [vmem:[%s563 + $0x78] sm:%s556]
                  %596 = vst [vmem:[%s564 + $0x3c] sm:%s556] %v595
                  %v597 = vld [vmem:[%s563 + $0x80] sm:%s556]
                  %598 = vst [vmem:[%s564 + $0x40] sm:%s556] %v597
                  %v599 = vld [vmem:[%s563 + $0x88] sm:%s556]
                  %600 = vst [vmem:[%s564 + $0x44] sm:%s556] %v599
                  %v601 = vld [vmem:[%s563 + $0x90] sm:%s556]
                  %602 = vst [vmem:[%s564 + $0x48] sm:%s556] %v601
                  %v603 = vld [vmem:[%s563 + $0x98] sm:%s556]
                  %604 = vst [vmem:[%s564 + $0x4c] sm:%s556] %v603
                  %v605 = vld [vmem:[%s563 + $0xa0] sm:%s556]
                  %606 = vst [vmem:[%s564 + $0x50] sm:%s556] %v605
                  %v607 = vld [vmem:[%s563 + $0xa8] sm:%s556]
                  %608 = vst [vmem:[%s564 + $0x54] sm:%s556] %v607
                  %v609 = vld [vmem:[%s563 + $0xb0] sm:%s556]
                  %610 = vst [vmem:[%s564 + $0x58] sm:%s556] %v609
                  %v611 = vld [vmem:[%s563 + $0xb8] sm:%s556]
                  %612 = vst [vmem:[%s564 + $0x5c] sm:%s556] %v611
                  %v613 = vld [vmem:[%s563 + $0xc0] sm:%s556]
                  %614 = vst [vmem:[%s564 + $0x60] sm:%s556] %v613
                  %v615 = vld [vmem:[%s563 + $0xc8] sm:%s556]
                  %616 = vst [vmem:[%s564 + $0x64] sm:%s556] %v615
                  %v617 = vld [vmem:[%s563 + $0xd0] sm:%s556]
                  %618 = vst [vmem:[%s564 + $0x68] sm:%s556] %v617
                  %v619 = vld [vmem:[%s563 + $0xd8] sm:%s556]
                  %620 = vst [vmem:[%s564 + $0x6c] sm:%s556] %v619
                  %v621 = vld [vmem:[%s563 + $0xe0] sm:%s556]
                  %622 = vst [vmem:[%s564 + $0x70] sm:%s556] %v621
                  %v623 = vld [vmem:[%s563 + $0xe8] sm:%s556]
                  %624 = vst [vmem:[%s564 + $0x74] sm:%s556] %v623
                  %v625 = vld [vmem:[%s563 + $0xf0] sm:%s556]
                  %626 = vst [vmem:[%s564 + $0x78] sm:%s556] %v625
                  %v627 = vld [vmem:[%s563 + $0xf8] sm:%s556]
                  %628 = vst [vmem:[%s564 + $0x7c] sm:%s556] %v627
                  %v629 = vld [vmem:[%s563 + $0x100] sm:%s556]
                  %630 = vst [vmem:[%s564 + $0x80] sm:%s556] %v629
                  %v631 = vld [vmem:[%s563 + $0x108] sm:%s556]
                  %632 = vst [vmem:[%s564 + $0x84] sm:%s556] %v631
                  %v633 = vld [vmem:[%s563 + $0x110] sm:%s556]
                  %634 = vst [vmem:[%s564 + $0x88] sm:%s556] %v633
                  %v635 = vld [vmem:[%s563 + $0x118] sm:%s556]
                  %636 = vst [vmem:[%s564 + $0x8c] sm:%s556] %v635
                  %v637 = vld [vmem:[%s563 + $0x120] sm:%s556]
                  %638 = vst [vmem:[%s564 + $0x90] sm:%s556] %v637
                  %v639 = vld [vmem:[%s563 + $0x128] sm:%s556]
                  %640 = vst [vmem:[%s564 + $0x94] sm:%s556] %v639
                  %v641 = vld [vmem:[%s563 + $0x130] sm:%s556]
                  %642 = vst [vmem:[%s564 + $0x98] sm:%s556] %v641
                  %v643 = vld [vmem:[%s563 + $0x138] sm:%s556]
                  %644 = vst [vmem:[%s564 + $0x9c] sm:%s556] %v643
                  %v645 = vld [vmem:[%s563 + $0x140] sm:%s556]
                  %646 = vst [vmem:[%s564 + $0xa0] sm:%s556] %v645
                  %v647 = vld [vmem:[%s563 + $0x148] sm:%s556]
                  %648 = vst [vmem:[%s564 + $0xa4] sm:%s556] %v647
                  %v649 = vld [vmem:[%s563 + $0x150] sm:%s556]
                  %650 = vst [vmem:[%s564 + $0xa8] sm:%s556] %v649
                  %v651 = vld [vmem:[%s563 + $0x158] sm:%s556]
                  %652 = vst [vmem:[%s564 + $0xac] sm:%s556] %v651
                  %v653 = vld [vmem:[%s563 + $0x160] sm:%s556]
                  %654 = vst [vmem:[%s564 + $0xb0] sm:%s556] %v653
                  %v655 = vld [vmem:[%s563 + $0x168] sm:%s556]
                  %656 = vst [vmem:[%s564 + $0xb4] sm:%s556] %v655
                  %v657 = vld [vmem:[%s563 + $0x170] sm:%s556]
                  %658 = vst [vmem:[%s564 + $0xb8] sm:%s556] %v657
                  %v659 = vld [vmem:[%s563 + $0x178] sm:%s556]
                  %660 = vst [vmem:[%s564 + $0xbc] sm:%s556] %v659
                  %v661 = vld [vmem:[%s563 + $0x180] sm:%s556]
                  %662 = vst [vmem:[%s564 + $0xc0] sm:%s556] %v661
                  %v663 = vld [vmem:[%s563 + $0x188] sm:%s556]
                  %664 = vst [vmem:[%s564 + $0xc4] sm:%s556] %v663
                  %v665 = vld [vmem:[%s563 + $0x190] sm:%s556]
                  %666 = vst [vmem:[%s564 + $0xc8] sm:%s556] %v665
                  %v667 = vld [vmem:[%s563 + $0x198] sm:%s556]
                  %668 = vst [vmem:[%s564 + $0xcc] sm:%s556] %v667
                  %v669 = vld [vmem:[%s563 + $0x1a0] sm:%s556]
                  %670 = vst [vmem:[%s564 + $0xd0] sm:%s556] %v669
                  %v671 = vld [vmem:[%s563 + $0x1a8] sm:%s556]
                  %672 = vst [vmem:[%s564 + $0xd4] sm:%s556] %v671
                  %v673 = vld [vmem:[%s563 + $0x1b0] sm:%s556]
                  %674 = vst [vmem:[%s564 + $0xd8] sm:%s556] %v673
                  %v675 = vld [vmem:[%s563 + $0x1b8] sm:%s556]
                  %676 = vst [vmem:[%s564 + $0xdc] sm:%s556] %v675
                  %v677 = vld [vmem:[%s563 + $0x1c0] sm:%s556]
                  %678 = vst [vmem:[%s564 + $0xe0] sm:%s556] %v677
                  %v679 = vld [vmem:[%s563 + $0x1c8] sm:%s556]
                  %680 = vst [vmem:[%s564 + $0xe4] sm:%s556] %v679
                  %v681 = vld [vmem:[%s563 + $0x1d0] sm:%s556]
                  %682 = vst [vmem:[%s564 + $0xe8] sm:%s556] %v681
                  %v683 = vld [vmem:[%s563 + $0x1d8] sm:%s556]
                  %684 = vst [vmem:[%s564 + $0xec] sm:%s556] %v683
                  %v685 = vld [vmem:[%s563 + $0x1e0] sm:%s556]
                  %686 = vst [vmem:[%s564 + $0xf0] sm:%s556] %v685
                  %v687 = vld [vmem:[%s563 + $0x1e8] sm:%s556]
                  %688 = vst [vmem:[%s564 + $0xf4] sm:%s556] %v687
                  %v689 = vld [vmem:[%s563 + $0x1f0] sm:%s556]
                  %690 = vst [vmem:[%s564 + $0xf8] sm:%s556] %v689
                  %v691 = vld [vmem:[%s563 + $0x1f8] sm:%s556]
                  %692 = vst [vmem:[%s564 + $0xfc] sm:%s556] %v691
                  %v693 = vld [vmem:[%s563 + $0x200] sm:%s556]
                  %694 = vst [vmem:[%s564 + $0x100] sm:%s556] %v693
                  %v695 = vld [vmem:[%s563 + $0x208] sm:%s556]
                  %696 = vst [vmem:[%s564 + $0x104] sm:%s556] %v695
                  %v697 = vld [vmem:[%s563 + $0x210] sm:%s556]
                  %698 = vst [vmem:[%s564 + $0x108] sm:%s556] %v697
                  %v699 = vld [vmem:[%s563 + $0x218] sm:%s556]
                  %700 = vst [vmem:[%s564 + $0x10c] sm:%s556] %v699
                  %v701 = vld [vmem:[%s563 + $0x220] sm:%s556]
                  %702 = vst [vmem:[%s564 + $0x110] sm:%s556] %v701
                  %v703 = vld [vmem:[%s563 + $0x228] sm:%s556]
                  %704 = vst [vmem:[%s564 + $0x114] sm:%s556] %v703
                  %v705 = vld [vmem:[%s563 + $0x230] sm:%s556]
                  %706 = vst [vmem:[%s564 + $0x118] sm:%s556] %v705
                  %v707 = vld [vmem:[%s563 + $0x238] sm:%s556]
                  %708 = vst [vmem:[%s564 + $0x11c] sm:%s556] %v707
                  %v709 = vld [vmem:[%s563 + $0x240] sm:%s556]
                  %710 = vst [vmem:[%s564 + $0x120] sm:%s556] %v709
                  %v711 = vld [vmem:[%s563 + $0x248] sm:%s556]
                  %712 = vst [vmem:[%s564 + $0x124] sm:%s556] %v711
                  %v713 = vld [vmem:[%s563 + $0x250] sm:%s556]
                  %714 = vst [vmem:[%s564 + $0x128] sm:%s556] %v713
                  %v715 = vld [vmem:[%s563 + $0x258] sm:%s556]
                  %716 = vst [vmem:[%s564 + $0x12c] sm:%s556] %v715
                  %v717 = vld [vmem:[%s563 + $0x260] sm:%s556]
                  %718 = vst [vmem:[%s564 + $0x130] sm:%s556] %v717
                  %v719 = vld [vmem:[%s563 + $0x268] sm:%s556]
                  %720 = vst [vmem:[%s564 + $0x134] sm:%s556] %v719
                  %v721 = vld [vmem:[%s563 + $0x270] sm:%s556]
                  %722 = vst [vmem:[%s564 + $0x138] sm:%s556] %v721
                  %v723 = vld [vmem:[%s563 + $0x278] sm:%s556]
                  %724 = vst [vmem:[%s564 + $0x13c] sm:%s556] %v723
                  %v725 = vld [vmem:[%s563 + $0x280] sm:%s556]
                  %726 = vst [vmem:[%s564 + $0x140] sm:%s556] %v725
                  %v727 = vld [vmem:[%s563 + $0x288] sm:%s556]
                  %728 = vst [vmem:[%s564 + $0x144] sm:%s556] %v727
                  %v729 = vld [vmem:[%s563 + $0x290] sm:%s556]
                  %730 = vst [vmem:[%s564 + $0x148] sm:%s556] %v729
                  %v731 = vld [vmem:[%s563 + $0x298] sm:%s556]
                  %732 = vst [vmem:[%s564 + $0x14c] sm:%s556] %v731
                  %v733 = vld [vmem:[%s563 + $0x2a0] sm:%s556]
                  %734 = vst [vmem:[%s564 + $0x150] sm:%s556] %v733
                  %v735 = vld [vmem:[%s563 + $0x2a8] sm:%s556]
                  %736 = vst [vmem:[%s564 + $0x154] sm:%s556] %v735
                  %v737 = vld [vmem:[%s563 + $0x2b0] sm:%s556]
                  %738 = vst [vmem:[%s564 + $0x158] sm:%s556] %v737
                  %v739 = vld [vmem:[%s563 + $0x2b8] sm:%s556]
                  %740 = vst [vmem:[%s564 + $0x15c] sm:%s556] %v739
                  %v741 = vld [vmem:[%s563 + $0x2c0] sm:%s556]
                  %742 = vst [vmem:[%s564 + $0x160] sm:%s556] %v741
                  %v743 = vld [vmem:[%s563 + $0x2c8] sm:%s556]
                  %744 = vst [vmem:[%s564 + $0x164] sm:%s556] %v743
                  %v745 = vld [vmem:[%s563 + $0x2d0] sm:%s556]
                  %746 = vst [vmem:[%s564 + $0x168] sm:%s556] %v745
                  %v747 = vld [vmem:[%s563 + $0x2d8] sm:%s556]
                  %748 = vst [vmem:[%s564 + $0x16c] sm:%s556] %v747
                  %v749 = vld [vmem:[%s563 + $0x2e0] sm:%s556]
                  %750 = vst [vmem:[%s564 + $0x170] sm:%s556] %v749
                  %v751 = vld [vmem:[%s563 + $0x2e8] sm:%s556]
                  %752 = vst [vmem:[%s564 + $0x174] sm:%s556] %v751
                  %v753 = vld [vmem:[%s563 + $0x2f0] sm:%s556]
                  %754 = vst [vmem:[%s564 + $0x178] sm:%s556] %v753
                  %v755 = vld [vmem:[%s563 + $0x2f8] sm:%s556]
                  %756 = vst [vmem:[%s564 + $0x17c] sm:%s556] %v755
                  %v757 = vld [vmem:[%s563 + $0x300] sm:%s556]
                  %758 = vst [vmem:[%s564 + $0x180] sm:%s556] %v757
                  %v759 = vld [vmem:[%s563 + $0x308] sm:%s556]
                  %760 = vst [vmem:[%s564 + $0x184] sm:%s556] %v759
                  %v761 = vld [vmem:[%s563 + $0x310] sm:%s556]
                  %762 = vst [vmem:[%s564 + $0x188] sm:%s556] %v761
                  %v763 = vld [vmem:[%s563 + $0x318] sm:%s556]
                  %764 = vst [vmem:[%s564 + $0x18c] sm:%s556] %v763
                  %v765 = vld [vmem:[%s563 + $0x320] sm:%s556]
                  %766 = vst [vmem:[%s564 + $0x190] sm:%s556] %v765
                  %v767 = vld [vmem:[%s563 + $0x328] sm:%s556]
                  %768 = vst [vmem:[%s564 + $0x194] sm:%s556] %v767
                  %v769 = vld [vmem:[%s563 + $0x330] sm:%s556]
                  %770 = vst [vmem:[%s564 + $0x198] sm:%s556] %v769
                  %v771 = vld [vmem:[%s563 + $0x338] sm:%s556]
                  %772 = vst [vmem:[%s564 + $0x19c] sm:%s556] %v771
                  %v773 = vld [vmem:[%s563 + $0x340] sm:%s556]
                  %774 = vst [vmem:[%s564 + $0x1a0] sm:%s556] %v773
                  %v775 = vld [vmem:[%s563 + $0x348] sm:%s556]
                  %776 = vst [vmem:[%s564 + $0x1a4] sm:%s556] %v775
                  %v777 = vld [vmem:[%s563 + $0x350] sm:%s556]
                  %778 = vst [vmem:[%s564 + $0x1a8] sm:%s556] %v777
                  %v779 = vld [vmem:[%s563 + $0x358] sm:%s556]
                  %780 = vst [vmem:[%s564 + $0x1ac] sm:%s556] %v779
                  %v781 = vld [vmem:[%s563 + $0x360] sm:%s556]
                  %782 = vst [vmem:[%s564 + $0x1b0] sm:%s556] %v781
                  %v783 = vld [vmem:[%s563 + $0x368] sm:%s556]
                  %784 = vst [vmem:[%s564 + $0x1b4] sm:%s556] %v783
                  %v785 = vld [vmem:[%s563 + $0x370] sm:%s556]
                  %786 = vst [vmem:[%s564 + $0x1b8] sm:%s556] %v785
                  %v787 = vld [vmem:[%s563 + $0x378] sm:%s556]
                  %788 = vst [vmem:[%s564 + $0x1bc] sm:%s556] %v787
                  %v789 = vld [vmem:[%s563 + $0x380] sm:%s556]
                  %790 = vst [vmem:[%s564 + $0x1c0] sm:%s556] %v789
                  %v791 = vld [vmem:[%s563 + $0x388] sm:%s556]
                  %792 = vst [vmem:[%s564 + $0x1c4] sm:%s556] %v791
                  %v793 = vld [vmem:[%s563 + $0x390] sm:%s556]
                  %794 = vst [vmem:[%s564 + $0x1c8] sm:%s556] %v793
                  %v795 = vld [vmem:[%s563 + $0x398] sm:%s556]
                  %796 = vst [vmem:[%s564 + $0x1cc] sm:%s556] %v795
                  %v797 = vld [vmem:[%s563 + $0x3a0] sm:%s556]
                  %798 = vst [vmem:[%s564 + $0x1d0] sm:%s556] %v797
                  %v799 = vld [vmem:[%s563 + $0x3a8] sm:%s556]
                  %800 = vst [vmem:[%s564 + $0x1d4] sm:%s556] %v799
                  %v801 = vld [vmem:[%s563 + $0x3b0] sm:%s556]
                  %802 = vst [vmem:[%s564 + $0x1d8] sm:%s556] %v801
                  %v803 = vld [vmem:[%s563 + $0x3b8] sm:%s556]
                  %804 = vst [vmem:[%s564 + $0x1dc] sm:%s556] %v803
                  %v805 = vld [vmem:[%s563 + $0x3c0] sm:%s556]
                  %806 = vst [vmem:[%s564 + $0x1e0] sm:%s556] %v805
                  %v807 = vld [vmem:[%s563 + $0x3c8] sm:%s556]
                  %808 = vst [vmem:[%s564 + $0x1e4] sm:%s556] %v807
                  %v809 = vld [vmem:[%s563 + $0x3d0] sm:%s556]
                  %810 = vst [vmem:[%s564 + $0x1e8] sm:%s556] %v809
                  %v811 = vld [vmem:[%s563 + $0x3d8] sm:%s556]
                  %812 = vst [vmem:[%s564 + $0x1ec] sm:%s556] %v811
                  %v813 = vld [vmem:[%s563 + $0x3e0] sm:%s556]
                  %814 = vst [vmem:[%s564 + $0x1f0] sm:%s556] %v813
                  %v815 = vld [vmem:[%s563 + $0x3e8] sm:%s556]
                  %816 = vst [vmem:[%s564 + $0x1f4] sm:%s556] %v815
                  %v817 = vld [vmem:[%s563 + $0x3f0] sm:%s556]
                  %818 = vst [vmem:[%s564 + $0x1f8] sm:%s556] %v817
                  %v819 = vld [vmem:[%s563 + $0x3f8] sm:%s556]
                  %820 = vst [vmem:[%s564 + $0x1fc] sm:%s556] %v819
                  %v821 = vld [vmem:[%s563 + $0x400] sm:%s556]
                  %822 = vst [vmem:[%s564 + $0x200] sm:%s556] %v821
                  %v823 = vld [vmem:[%s563 + $0x408] sm:%s556]
                  %824 = vst [vmem:[%s564 + $0x204] sm:%s556] %v823
                  %v825 = vld [vmem:[%s563 + $0x410] sm:%s556]
                  %826 = vst [vmem:[%s564 + $0x208] sm:%s556] %v825
                  %v827 = vld [vmem:[%s563 + $0x418] sm:%s556]
                  %828 = vst [vmem:[%s564 + $0x20c] sm:%s556] %v827
                  %v829 = vld [vmem:[%s563 + $0x420] sm:%s556]
                  %830 = vst [vmem:[%s564 + $0x210] sm:%s556] %v829
                  %v831 = vld [vmem:[%s563 + $0x428] sm:%s556]
                  %832 = vst [vmem:[%s564 + $0x214] sm:%s556] %v831
                  %v833 = vld [vmem:[%s563 + $0x430] sm:%s556]
                  %834 = vst [vmem:[%s564 + $0x218] sm:%s556] %v833
                  %v835 = vld [vmem:[%s563 + $0x438] sm:%s556]
                  %836 = vst [vmem:[%s564 + $0x21c] sm:%s556] %v835
                  %v837 = vld [vmem:[%s563 + $0x440] sm:%s556]
                  %838 = vst [vmem:[%s564 + $0x220] sm:%s556] %v837
                  %v839 = vld [vmem:[%s563 + $0x448] sm:%s556]
                  %840 = vst [vmem:[%s564 + $0x224] sm:%s556] %v839
                  %v841 = vld [vmem:[%s563 + $0x450] sm:%s556]
                  %842 = vst [vmem:[%s564 + $0x228] sm:%s556] %v841
                  %v843 = vld [vmem:[%s563 + $0x458] sm:%s556]
                  %844 = vst [vmem:[%s564 + $0x22c] sm:%s556] %v843
                  %v845 = vld [vmem:[%s563 + $0x460] sm:%s556]
                  %846 = vst [vmem:[%s564 + $0x230] sm:%s556] %v845
                  %v847 = vld [vmem:[%s563 + $0x468] sm:%s556]
                  %848 = vst [vmem:[%s564 + $0x234] sm:%s556] %v847
                  %v849 = vld [vmem:[%s563 + $0x470] sm:%s556]
                  %850 = vst [vmem:[%s564 + $0x238] sm:%s556] %v849
                  %v851 = vld [vmem:[%s563 + $0x478] sm:%s556]
                  %852 = vst [vmem:[%s564 + $0x23c] sm:%s556] %v851
                  %v853 = vld [vmem:[%s563 + $0x480] sm:%s556]
                  %854 = vst [vmem:[%s564 + $0x240] sm:%s556] %v853
                  %v855 = vld [vmem:[%s563 + $0x488] sm:%s556]
                  %856 = vst [vmem:[%s564 + $0x244] sm:%s556] %v855
                  %v857 = vld [vmem:[%s563 + $0x490] sm:%s556]
                  %858 = vst [vmem:[%s564 + $0x248] sm:%s556] %v857
                  %v859 = vld [vmem:[%s563 + $0x498] sm:%s556]
                  %860 = vst [vmem:[%s564 + $0x24c] sm:%s556] %v859
                  %v861 = vld [vmem:[%s563 + $0x4a0] sm:%s556]
                  %862 = vst [vmem:[%s564 + $0x250] sm:%s556] %v861
                  %v863 = vld [vmem:[%s563 + $0x4a8] sm:%s556]
                  %864 = vst [vmem:[%s564 + $0x254] sm:%s556] %v863
                  %v865 = vld [vmem:[%s563 + $0x4b0] sm:%s556]
                  %866 = vst [vmem:[%s564 + $0x258] sm:%s556] %v865
                  %v867 = vld [vmem:[%s563 + $0x4b8] sm:%s556]
                  %868 = vst [vmem:[%s564 + $0x25c] sm:%s556] %v867
                  %v869 = vld [vmem:[%s563 + $0x4c0] sm:%s556]
                  %870 = vst [vmem:[%s564 + $0x260] sm:%s556] %v869
                  %v871 = vld [vmem:[%s563 + $0x4c8] sm:%s556]
                  %872 = vst [vmem:[%s564 + $0x264] sm:%s556] %v871
                  %v873 = vld [vmem:[%s563 + $0x4d0] sm:%s556]
                  %874 = vst [vmem:[%s564 + $0x268] sm:%s556] %v873
                  %v875 = vld [vmem:[%s563 + $0x4d8] sm:%s556]
                  %876 = vst [vmem:[%s564 + $0x26c] sm:%s556] %v875
                  %v877 = vld [vmem:[%s563 + $0x4e0] sm:%s556]
                  %878 = vst [vmem:[%s564 + $0x270] sm:%s556] %v877
                  %v879 = vld [vmem:[%s563 + $0x4e8] sm:%s556]
                  %880 = vst [vmem:[%s564 + $0x274] sm:%s556] %v879
                  %v881 = vld [vmem:[%s563 + $0x4f0] sm:%s556]
                  %882 = vst [vmem:[%s564 + $0x278] sm:%s556] %v881
                  %v883 = vld [vmem:[%s563 + $0x4f8] sm:%s556]
                  %884 = vst [vmem:[%s564 + $0x27c] sm:%s556] %v883
                  %v885 = vld [vmem:[%s563 + $0x500] sm:%s556]
                  %886 = vst [vmem:[%s564 + $0x280] sm:%s556] %v885
                  %v887 = vld [vmem:[%s563 + $0x508] sm:%s556]
                  %888 = vst [vmem:[%s564 + $0x284] sm:%s556] %v887
                  %v889 = vld [vmem:[%s563 + $0x510] sm:%s556]
                  %890 = vst [vmem:[%s564 + $0x288] sm:%s556] %v889
                  %v891 = vld [vmem:[%s563 + $0x518] sm:%s556]
                  %892 = vst [vmem:[%s564 + $0x28c] sm:%s556] %v891
                  %v893 = vld [vmem:[%s563 + $0x520] sm:%s556]
                  %894 = vst [vmem:[%s564 + $0x290] sm:%s556] %v893
                  %v895 = vld [vmem:[%s563 + $0x528] sm:%s556]
                  %896 = vst [vmem:[%s564 + $0x294] sm:%s556] %v895
                  %v897 = vld [vmem:[%s563 + $0x530] sm:%s556]
                  %898 = vst [vmem:[%s564 + $0x298] sm:%s556] %v897
                  %v899 = vld [vmem:[%s563 + $0x538] sm:%s556]
                  %900 = vst [vmem:[%s564 + $0x29c] sm:%s556] %v899
                $region59: #{inception_b_forward.10} parent=46 // loop_footer
                  %s562 = sadd.s32 1, %s558
                $region60: #{inception_b_forward.10} parent=46 // loop_footer_branch
                  %557 = sbr.rel target = $region56
                $region61: #{inception_b_forward.10} parent=46 // loop_exit
                  _
              $region47: #{inception_b_forward.10} parent=31 // pred_fallthru
                _
            $region32: #{inception_b_forward.10} parent=27 // pred_fallthru
              _
            // Predicated region
            $region33: #{inception_b_forward.10} parent=27 // pred_check
              _
            $region34: #{inception_b_forward.10} parent=27 // pred_check_branch
              %198 = sbr.rel (0) target = $region36
            $region35: #{inception_b_forward.10} parent=27 // pred_region
              %s200 = ssub.s32 16, 1
              loop: start=0, step=1, limit=1
              $region37: #{inception_b_forward.10} parent=35 // loop_pre_header
                _
              $region38: #{inception_b_forward.10} parent=35 // loop_header
                %s202 = sphi 0, %s206
                %p203 = scmp.ge.s32.totalorder %s202, 1
                %s207 = sphi %s192, %s192
                %s208 = sphi %s190, %s190
              $region39: #{inception_b_forward.10} parent=35 // loop_header_branch
                %205 = sbr.rel (%p203) target = $region43
              $region40: #{inception_b_forward.10} parent=35 // loop_body
                %v209 = vld [vmem:[%s207] sm:%s200]
                %210 = vst [vmem:[%s208] sm:%s200] %v209
                %v211 = vld [vmem:[%s207 + $0x8] sm:%s200]
                %212 = vst [vmem:[%s208 + $0x4] sm:%s200] %v211
                %v213 = vld [vmem:[%s207 + $0x10] sm:%s200]
                %214 = vst [vmem:[%s208 + $0x8] sm:%s200] %v213
                %v215 = vld [vmem:[%s207 + $0x18] sm:%s200]
                %216 = vst [vmem:[%s208 + $0xc] sm:%s200] %v215
                %v217 = vld [vmem:[%s207 + $0x20] sm:%s200]
                %218 = vst [vmem:[%s208 + $0x10] sm:%s200] %v217
                %v219 = vld [vmem:[%s207 + $0x28] sm:%s200]
                %220 = vst [vmem:[%s208 + $0x14] sm:%s200] %v219
                %v221 = vld [vmem:[%s207 + $0x30] sm:%s200]
                %222 = vst [vmem:[%s208 + $0x18] sm:%s200] %v221
                %v223 = vld [vmem:[%s207 + $0x38] sm:%s200]
                %224 = vst [vmem:[%s208 + $0x1c] sm:%s200] %v223
                %v225 = vld [vmem:[%s207 + $0x40] sm:%s200]
                %226 = vst [vmem:[%s208 + $0x20] sm:%s200] %v225
                %v227 = vld [vmem:[%s207 + $0x48] sm:%s200]
                %228 = vst [vmem:[%s208 + $0x24] sm:%s200] %v227
                %v229 = vld [vmem:[%s207 + $0x50] sm:%s200]
                %230 = vst [vmem:[%s208 + $0x28] sm:%s200] %v229
                %v231 = vld [vmem:[%s207 + $0x58] sm:%s200]
                %232 = vst [vmem:[%s208 + $0x2c] sm:%s200] %v231
                %v233 = vld [vmem:[%s207 + $0x60] sm:%s200]
                %234 = vst [vmem:[%s208 + $0x30] sm:%s200] %v233
                %v235 = vld [vmem:[%s207 + $0x68] sm:%s200]
                %236 = vst [vmem:[%s208 + $0x34] sm:%s200] %v235
                %v237 = vld [vmem:[%s207 + $0x70] sm:%s200]
                %238 = vst [vmem:[%s208 + $0x38] sm:%s200] %v237
                %v239 = vld [vmem:[%s207 + $0x78] sm:%s200]
                %240 = vst [vmem:[%s208 + $0x3c] sm:%s200] %v239
                %v241 = vld [vmem:[%s207 + $0x80] sm:%s200]
                %242 = vst [vmem:[%s208 + $0x40] sm:%s200] %v241
                %v243 = vld [vmem:[%s207 + $0x88] sm:%s200]
                %244 = vst [vmem:[%s208 + $0x44] sm:%s200] %v243
                %v245 = vld [vmem:[%s207 + $0x90] sm:%s200]
                %246 = vst [vmem:[%s208 + $0x48] sm:%s200] %v245
                %v247 = vld [vmem:[%s207 + $0x98] sm:%s200]
                %248 = vst [vmem:[%s208 + $0x4c] sm:%s200] %v247
                %v249 = vld [vmem:[%s207 + $0xa0] sm:%s200]
                %250 = vst [vmem:[%s208 + $0x50] sm:%s200] %v249
                %v251 = vld [vmem:[%s207 + $0xa8] sm:%s200]
                %252 = vst [vmem:[%s208 + $0x54] sm:%s200] %v251
                %v253 = vld [vmem:[%s207 + $0xb0] sm:%s200]
                %254 = vst [vmem:[%s208 + $0x58] sm:%s200] %v253
                %v255 = vld [vmem:[%s207 + $0xb8] sm:%s200]
                %256 = vst [vmem:[%s208 + $0x5c] sm:%s200] %v255
                %v257 = vld [vmem:[%s207 + $0xc0] sm:%s200]
                %258 = vst [vmem:[%s208 + $0x60] sm:%s200] %v257
                %v259 = vld [vmem:[%s207 + $0xc8] sm:%s200]
                %260 = vst [vmem:[%s208 + $0x64] sm:%s200] %v259
                %v261 = vld [vmem:[%s207 + $0xd0] sm:%s200]
                %262 = vst [vmem:[%s208 + $0x68] sm:%s200] %v261
                %v263 = vld [vmem:[%s207 + $0xd8] sm:%s200]
                %264 = vst [vmem:[%s208 + $0x6c] sm:%s200] %v263
                %v265 = vld [vmem:[%s207 + $0xe0] sm:%s200]
                %266 = vst [vmem:[%s208 + $0x70] sm:%s200] %v265
                %v267 = vld [vmem:[%s207 + $0xe8] sm:%s200]
                %268 = vst [vmem:[%s208 + $0x74] sm:%s200] %v267
                %v269 = vld [vmem:[%s207 + $0xf0] sm:%s200]
                %270 = vst [vmem:[%s208 + $0x78] sm:%s200] %v269
                %v271 = vld [vmem:[%s207 + $0xf8] sm:%s200]
                %272 = vst [vmem:[%s208 + $0x7c] sm:%s200] %v271
                %v273 = vld [vmem:[%s207 + $0x100] sm:%s200]
                %274 = vst [vmem:[%s208 + $0x80] sm:%s200] %v273
                %v275 = vld [vmem:[%s207 + $0x108] sm:%s200]
                %276 = vst [vmem:[%s208 + $0x84] sm:%s200] %v275
                %v277 = vld [vmem:[%s207 + $0x110] sm:%s200]
                %278 = vst [vmem:[%s208 + $0x88] sm:%s200] %v277
                %v279 = vld [vmem:[%s207 + $0x118] sm:%s200]
                %280 = vst [vmem:[%s208 + $0x8c] sm:%s200] %v279
                %v281 = vld [vmem:[%s207 + $0x120] sm:%s200]
                %282 = vst [vmem:[%s208 + $0x90] sm:%s200] %v281
                %v283 = vld [vmem:[%s207 + $0x128] sm:%s200]
                %284 = vst [vmem:[%s208 + $0x94] sm:%s200] %v283
                %v285 = vld [vmem:[%s207 + $0x130] sm:%s200]
                %286 = vst [vmem:[%s208 + $0x98] sm:%s200] %v285
                %v287 = vld [vmem:[%s207 + $0x138] sm:%s200]
                %288 = vst [vmem:[%s208 + $0x9c] sm:%s200] %v287
                %v289 = vld [vmem:[%s207 + $0x140] sm:%s200]
                %290 = vst [vmem:[%s208 + $0xa0] sm:%s200] %v289
                %v291 = vld [vmem:[%s207 + $0x148] sm:%s200]
                %292 = vst [vmem:[%s208 + $0xa4] sm:%s200] %v291
                %v293 = vld [vmem:[%s207 + $0x150] sm:%s200]
                %294 = vst [vmem:[%s208 + $0xa8] sm:%s200] %v293
                %v295 = vld [vmem:[%s207 + $0x158] sm:%s200]
                %296 = vst [vmem:[%s208 + $0xac] sm:%s200] %v295
                %v297 = vld [vmem:[%s207 + $0x160] sm:%s200]
                %298 = vst [vmem:[%s208 + $0xb0] sm:%s200] %v297
                %v299 = vld [vmem:[%s207 + $0x168] sm:%s200]
                %300 = vst [vmem:[%s208 + $0xb4] sm:%s200] %v299
                %v301 = vld [vmem:[%s207 + $0x170] sm:%s200]
                %302 = vst [vmem:[%s208 + $0xb8] sm:%s200] %v301
                %v303 = vld [vmem:[%s207 + $0x178] sm:%s200]
                %304 = vst [vmem:[%s208 + $0xbc] sm:%s200] %v303
                %v305 = vld [vmem:[%s207 + $0x180] sm:%s200]
                %306 = vst [vmem:[%s208 + $0xc0] sm:%s200] %v305
                %v307 = vld [vmem:[%s207 + $0x188] sm:%s200]
                %308 = vst [vmem:[%s208 + $0xc4] sm:%s200] %v307
                %v309 = vld [vmem:[%s207 + $0x190] sm:%s200]
                %310 = vst [vmem:[%s208 + $0xc8] sm:%s200] %v309
                %v311 = vld [vmem:[%s207 + $0x198] sm:%s200]
                %312 = vst [vmem:[%s208 + $0xcc] sm:%s200] %v311
                %v313 = vld [vmem:[%s207 + $0x1a0] sm:%s200]
                %314 = vst [vmem:[%s208 + $0xd0] sm:%s200] %v313
                %v315 = vld [vmem:[%s207 + $0x1a8] sm:%s200]
                %316 = vst [vmem:[%s208 + $0xd4] sm:%s200] %v315
                %v317 = vld [vmem:[%s207 + $0x1b0] sm:%s200]
                %318 = vst [vmem:[%s208 + $0xd8] sm:%s200] %v317
                %v319 = vld [vmem:[%s207 + $0x1b8] sm:%s200]
                %320 = vst [vmem:[%s208 + $0xdc] sm:%s200] %v319
                %v321 = vld [vmem:[%s207 + $0x1c0] sm:%s200]
                %322 = vst [vmem:[%s208 + $0xe0] sm:%s200] %v321
                %v323 = vld [vmem:[%s207 + $0x1c8] sm:%s200]
                %324 = vst [vmem:[%s208 + $0xe4] sm:%s200] %v323
                %v325 = vld [vmem:[%s207 + $0x1d0] sm:%s200]
                %326 = vst [vmem:[%s208 + $0xe8] sm:%s200] %v325
                %v327 = vld [vmem:[%s207 + $0x1d8] sm:%s200]
                %328 = vst [vmem:[%s208 + $0xec] sm:%s200] %v327
                %v329 = vld [vmem:[%s207 + $0x1e0] sm:%s200]
                %330 = vst [vmem:[%s208 + $0xf0] sm:%s200] %v329
                %v331 = vld [vmem:[%s207 + $0x1e8] sm:%s200]
                %332 = vst [vmem:[%s208 + $0xf4] sm:%s200] %v331
                %v333 = vld [vmem:[%s207 + $0x1f0] sm:%s200]
                %334 = vst [vmem:[%s208 + $0xf8] sm:%s200] %v333
                %v335 = vld [vmem:[%s207 + $0x1f8] sm:%s200]
                %336 = vst [vmem:[%s208 + $0xfc] sm:%s200] %v335
                %v337 = vld [vmem:[%s207 + $0x200] sm:%s200]
                %338 = vst [vmem:[%s208 + $0x100] sm:%s200] %v337
                %v339 = vld [vmem:[%s207 + $0x208] sm:%s200]
                %340 = vst [vmem:[%s208 + $0x104] sm:%s200] %v339
                %v341 = vld [vmem:[%s207 + $0x210] sm:%s200]
                %342 = vst [vmem:[%s208 + $0x108] sm:%s200] %v341
                %v343 = vld [vmem:[%s207 + $0x218] sm:%s200]
                %344 = vst [vmem:[%s208 + $0x10c] sm:%s200] %v343
                %v345 = vld [vmem:[%s207 + $0x220] sm:%s200]
                %346 = vst [vmem:[%s208 + $0x110] sm:%s200] %v345
                %v347 = vld [vmem:[%s207 + $0x228] sm:%s200]
                %348 = vst [vmem:[%s208 + $0x114] sm:%s200] %v347
                %v349 = vld [vmem:[%s207 + $0x230] sm:%s200]
                %350 = vst [vmem:[%s208 + $0x118] sm:%s200] %v349
                %v351 = vld [vmem:[%s207 + $0x238] sm:%s200]
                %352 = vst [vmem:[%s208 + $0x11c] sm:%s200] %v351
                %v353 = vld [vmem:[%s207 + $0x240] sm:%s200]
                %354 = vst [vmem:[%s208 + $0x120] sm:%s200] %v353
                %v355 = vld [vmem:[%s207 + $0x248] sm:%s200]
                %356 = vst [vmem:[%s208 + $0x124] sm:%s200] %v355
                %v357 = vld [vmem:[%s207 + $0x250] sm:%s200]
                %358 = vst [vmem:[%s208 + $0x128] sm:%s200] %v357
                %v359 = vld [vmem:[%s207 + $0x258] sm:%s200]
                %360 = vst [vmem:[%s208 + $0x12c] sm:%s200] %v359
                %v361 = vld [vmem:[%s207 + $0x260] sm:%s200]
                %362 = vst [vmem:[%s208 + $0x130] sm:%s200] %v361
                %v363 = vld [vmem:[%s207 + $0x268] sm:%s200]
                %364 = vst [vmem:[%s208 + $0x134] sm:%s200] %v363
                %v365 = vld [vmem:[%s207 + $0x270] sm:%s200]
                %366 = vst [vmem:[%s208 + $0x138] sm:%s200] %v365
                %v367 = vld [vmem:[%s207 + $0x278] sm:%s200]
                %368 = vst [vmem:[%s208 + $0x13c] sm:%s200] %v367
                %v369 = vld [vmem:[%s207 + $0x280] sm:%s200]
                %370 = vst [vmem:[%s208 + $0x140] sm:%s200] %v369
                %v371 = vld [vmem:[%s207 + $0x288] sm:%s200]
                %372 = vst [vmem:[%s208 + $0x144] sm:%s200] %v371
                %v373 = vld [vmem:[%s207 + $0x290] sm:%s200]
                %374 = vst [vmem:[%s208 + $0x148] sm:%s200] %v373
                %v375 = vld [vmem:[%s207 + $0x298] sm:%s200]
                %376 = vst [vmem:[%s208 + $0x14c] sm:%s200] %v375
                %v377 = vld [vmem:[%s207 + $0x2a0] sm:%s200]
                %378 = vst [vmem:[%s208 + $0x150] sm:%s200] %v377
                %v379 = vld [vmem:[%s207 + $0x2a8] sm:%s200]
                %380 = vst [vmem:[%s208 + $0x154] sm:%s200] %v379
                %v381 = vld [vmem:[%s207 + $0x2b0] sm:%s200]
                %382 = vst [vmem:[%s208 + $0x158] sm:%s200] %v381
                %v383 = vld [vmem:[%s207 + $0x2b8] sm:%s200]
                %384 = vst [vmem:[%s208 + $0x15c] sm:%s200] %v383
                %v385 = vld [vmem:[%s207 + $0x2c0] sm:%s200]
                %386 = vst [vmem:[%s208 + $0x160] sm:%s200] %v385
                %v387 = vld [vmem:[%s207 + $0x2c8] sm:%s200]
                %388 = vst [vmem:[%s208 + $0x164] sm:%s200] %v387
                %v389 = vld [vmem:[%s207 + $0x2d0] sm:%s200]
                %390 = vst [vmem:[%s208 + $0x168] sm:%s200] %v389
                %v391 = vld [vmem:[%s207 + $0x2d8] sm:%s200]
                %392 = vst [vmem:[%s208 + $0x16c] sm:%s200] %v391
                %v393 = vld [vmem:[%s207 + $0x2e0] sm:%s200]
                %394 = vst [vmem:[%s208 + $0x170] sm:%s200] %v393
                %v395 = vld [vmem:[%s207 + $0x2e8] sm:%s200]
                %396 = vst [vmem:[%s208 + $0x174] sm:%s200] %v395
                %v397 = vld [vmem:[%s207 + $0x2f0] sm:%s200]
                %398 = vst [vmem:[%s208 + $0x178] sm:%s200] %v397
                %v399 = vld [vmem:[%s207 + $0x2f8] sm:%s200]
                %400 = vst [vmem:[%s208 + $0x17c] sm:%s200] %v399
                %v401 = vld [vmem:[%s207 + $0x300] sm:%s200]
                %402 = vst [vmem:[%s208 + $0x180] sm:%s200] %v401
                %v403 = vld [vmem:[%s207 + $0x308] sm:%s200]
                %404 = vst [vmem:[%s208 + $0x184] sm:%s200] %v403
                %v405 = vld [vmem:[%s207 + $0x310] sm:%s200]
                %406 = vst [vmem:[%s208 + $0x188] sm:%s200] %v405
                %v407 = vld [vmem:[%s207 + $0x318] sm:%s200]
                %408 = vst [vmem:[%s208 + $0x18c] sm:%s200] %v407
                %v409 = vld [vmem:[%s207 + $0x320] sm:%s200]
                %410 = vst [vmem:[%s208 + $0x190] sm:%s200] %v409
                %v411 = vld [vmem:[%s207 + $0x328] sm:%s200]
                %412 = vst [vmem:[%s208 + $0x194] sm:%s200] %v411
                %v413 = vld [vmem:[%s207 + $0x330] sm:%s200]
                %414 = vst [vmem:[%s208 + $0x198] sm:%s200] %v413
                %v415 = vld [vmem:[%s207 + $0x338] sm:%s200]
                %416 = vst [vmem:[%s208 + $0x19c] sm:%s200] %v415
                %v417 = vld [vmem:[%s207 + $0x340] sm:%s200]
                %418 = vst [vmem:[%s208 + $0x1a0] sm:%s200] %v417
                %v419 = vld [vmem:[%s207 + $0x348] sm:%s200]
                %420 = vst [vmem:[%s208 + $0x1a4] sm:%s200] %v419
                %v421 = vld [vmem:[%s207 + $0x350] sm:%s200]
                %422 = vst [vmem:[%s208 + $0x1a8] sm:%s200] %v421
                %v423 = vld [vmem:[%s207 + $0x358] sm:%s200]
                %424 = vst [vmem:[%s208 + $0x1ac] sm:%s200] %v423
                %v425 = vld [vmem:[%s207 + $0x360] sm:%s200]
                %426 = vst [vmem:[%s208 + $0x1b0] sm:%s200] %v425
                %v427 = vld [vmem:[%s207 + $0x368] sm:%s200]
                %428 = vst [vmem:[%s208 + $0x1b4] sm:%s200] %v427
                %v429 = vld [vmem:[%s207 + $0x370] sm:%s200]
                %430 = vst [vmem:[%s208 + $0x1b8] sm:%s200] %v429
                %v431 = vld [vmem:[%s207 + $0x378] sm:%s200]
                %432 = vst [vmem:[%s208 + $0x1bc] sm:%s200] %v431
                %v433 = vld [vmem:[%s207 + $0x380] sm:%s200]
                %434 = vst [vmem:[%s208 + $0x1c0] sm:%s200] %v433
                %v435 = vld [vmem:[%s207 + $0x388] sm:%s200]
                %436 = vst [vmem:[%s208 + $0x1c4] sm:%s200] %v435
                %v437 = vld [vmem:[%s207 + $0x390] sm:%s200]
                %438 = vst [vmem:[%s208 + $0x1c8] sm:%s200] %v437
                %v439 = vld [vmem:[%s207 + $0x398] sm:%s200]
                %440 = vst [vmem:[%s208 + $0x1cc] sm:%s200] %v439
                %v441 = vld [vmem:[%s207 + $0x3a0] sm:%s200]
                %442 = vst [vmem:[%s208 + $0x1d0] sm:%s200] %v441
                %v443 = vld [vmem:[%s207 + $0x3a8] sm:%s200]
                %444 = vst [vmem:[%s208 + $0x1d4] sm:%s200] %v443
                %v445 = vld [vmem:[%s207 + $0x3b0] sm:%s200]
                %446 = vst [vmem:[%s208 + $0x1d8] sm:%s200] %v445
                %v447 = vld [vmem:[%s207 + $0x3b8] sm:%s200]
                %448 = vst [vmem:[%s208 + $0x1dc] sm:%s200] %v447
                %v449 = vld [vmem:[%s207 + $0x3c0] sm:%s200]
                %450 = vst [vmem:[%s208 + $0x1e0] sm:%s200] %v449
                %v451 = vld [vmem:[%s207 + $0x3c8] sm:%s200]
                %452 = vst [vmem:[%s208 + $0x1e4] sm:%s200] %v451
                %v453 = vld [vmem:[%s207 + $0x3d0] sm:%s200]
                %454 = vst [vmem:[%s208 + $0x1e8] sm:%s200] %v453
                %v455 = vld [vmem:[%s207 + $0x3d8] sm:%s200]
                %456 = vst [vmem:[%s208 + $0x1ec] sm:%s200] %v455
                %v457 = vld [vmem:[%s207 + $0x3e0] sm:%s200]
                %458 = vst [vmem:[%s208 + $0x1f0] sm:%s200] %v457
                %v459 = vld [vmem:[%s207 + $0x3e8] sm:%s200]
                %460 = vst [vmem:[%s208 + $0x1f4] sm:%s200] %v459
                %v461 = vld [vmem:[%s207 + $0x3f0] sm:%s200]
                %462 = vst [vmem:[%s208 + $0x1f8] sm:%s200] %v461
                %v463 = vld [vmem:[%s207 + $0x3f8] sm:%s200]
                %464 = vst [vmem:[%s208 + $0x1fc] sm:%s200] %v463
                %v465 = vld [vmem:[%s207 + $0x400] sm:%s200]
                %466 = vst [vmem:[%s208 + $0x200] sm:%s200] %v465
                %v467 = vld [vmem:[%s207 + $0x408] sm:%s200]
                %468 = vst [vmem:[%s208 + $0x204] sm:%s200] %v467
                %v469 = vld [vmem:[%s207 + $0x410] sm:%s200]
                %470 = vst [vmem:[%s208 + $0x208] sm:%s200] %v469
                %v471 = vld [vmem:[%s207 + $0x418] sm:%s200]
                %472 = vst [vmem:[%s208 + $0x20c] sm:%s200] %v471
                %v473 = vld [vmem:[%s207 + $0x420] sm:%s200]
                %474 = vst [vmem:[%s208 + $0x210] sm:%s200] %v473
                %v475 = vld [vmem:[%s207 + $0x428] sm:%s200]
                %476 = vst [vmem:[%s208 + $0x214] sm:%s200] %v475
                %v477 = vld [vmem:[%s207 + $0x430] sm:%s200]
                %478 = vst [vmem:[%s208 + $0x218] sm:%s200] %v477
                %v479 = vld [vmem:[%s207 + $0x438] sm:%s200]
                %480 = vst [vmem:[%s208 + $0x21c] sm:%s200] %v479
                %v481 = vld [vmem:[%s207 + $0x440] sm:%s200]
                %482 = vst [vmem:[%s208 + $0x220] sm:%s200] %v481
                %v483 = vld [vmem:[%s207 + $0x448] sm:%s200]
                %484 = vst [vmem:[%s208 + $0x224] sm:%s200] %v483
                %v485 = vld [vmem:[%s207 + $0x450] sm:%s200]
                %486 = vst [vmem:[%s208 + $0x228] sm:%s200] %v485
                %v487 = vld [vmem:[%s207 + $0x458] sm:%s200]
                %488 = vst [vmem:[%s208 + $0x22c] sm:%s200] %v487
                %v489 = vld [vmem:[%s207 + $0x460] sm:%s200]
                %490 = vst [vmem:[%s208 + $0x230] sm:%s200] %v489
                %v491 = vld [vmem:[%s207 + $0x468] sm:%s200]
                %492 = vst [vmem:[%s208 + $0x234] sm:%s200] %v491
                %v493 = vld [vmem:[%s207 + $0x470] sm:%s200]
                %494 = vst [vmem:[%s208 + $0x238] sm:%s200] %v493
                %v495 = vld [vmem:[%s207 + $0x478] sm:%s200]
                %496 = vst [vmem:[%s208 + $0x23c] sm:%s200] %v495
                %v497 = vld [vmem:[%s207 + $0x480] sm:%s200]
                %498 = vst [vmem:[%s208 + $0x240] sm:%s200] %v497
                %v499 = vld [vmem:[%s207 + $0x488] sm:%s200]
                %500 = vst [vmem:[%s208 + $0x244] sm:%s200] %v499
                %v501 = vld [vmem:[%s207 + $0x490] sm:%s200]
                %502 = vst [vmem:[%s208 + $0x248] sm:%s200] %v501
                %v503 = vld [vmem:[%s207 + $0x498] sm:%s200]
                %504 = vst [vmem:[%s208 + $0x24c] sm:%s200] %v503
                %v505 = vld [vmem:[%s207 + $0x4a0] sm:%s200]
                %506 = vst [vmem:[%s208 + $0x250] sm:%s200] %v505
                %v507 = vld [vmem:[%s207 + $0x4a8] sm:%s200]
                %508 = vst [vmem:[%s208 + $0x254] sm:%s200] %v507
                %v509 = vld [vmem:[%s207 + $0x4b0] sm:%s200]
                %510 = vst [vmem:[%s208 + $0x258] sm:%s200] %v509
                %v511 = vld [vmem:[%s207 + $0x4b8] sm:%s200]
                %512 = vst [vmem:[%s208 + $0x25c] sm:%s200] %v511
                %v513 = vld [vmem:[%s207 + $0x4c0] sm:%s200]
                %514 = vst [vmem:[%s208 + $0x260] sm:%s200] %v513
                %v515 = vld [vmem:[%s207 + $0x4c8] sm:%s200]
                %516 = vst [vmem:[%s208 + $0x264] sm:%s200] %v515
                %v517 = vld [vmem:[%s207 + $0x4d0] sm:%s200]
                %518 = vst [vmem:[%s208 + $0x268] sm:%s200] %v517
                %v519 = vld [vmem:[%s207 + $0x4d8] sm:%s200]
                %520 = vst [vmem:[%s208 + $0x26c] sm:%s200] %v519
                %v521 = vld [vmem:[%s207 + $0x4e0] sm:%s200]
                %522 = vst [vmem:[%s208 + $0x270] sm:%s200] %v521
                %v523 = vld [vmem:[%s207 + $0x4e8] sm:%s200]
                %524 = vst [vmem:[%s208 + $0x274] sm:%s200] %v523
                %v525 = vld [vmem:[%s207 + $0x4f0] sm:%s200]
                %526 = vst [vmem:[%s208 + $0x278] sm:%s200] %v525
                %v527 = vld [vmem:[%s207 + $0x4f8] sm:%s200]
                %528 = vst [vmem:[%s208 + $0x27c] sm:%s200] %v527
                %v529 = vld [vmem:[%s207 + $0x500] sm:%s200]
                %530 = vst [vmem:[%s208 + $0x280] sm:%s200] %v529
                %v531 = vld [vmem:[%s207 + $0x508] sm:%s200]
                %532 = vst [vmem:[%s208 + $0x284] sm:%s200] %v531
                %v533 = vld [vmem:[%s207 + $0x510] sm:%s200]
                %534 = vst [vmem:[%s208 + $0x288] sm:%s200] %v533
                %v535 = vld [vmem:[%s207 + $0x518] sm:%s200]
                %536 = vst [vmem:[%s208 + $0x28c] sm:%s200] %v535
                %v537 = vld [vmem:[%s207 + $0x520] sm:%s200]
                %538 = vst [vmem:[%s208 + $0x290] sm:%s200] %v537
                %v539 = vld [vmem:[%s207 + $0x528] sm:%s200]
                %540 = vst [vmem:[%s208 + $0x294] sm:%s200] %v539
                %v541 = vld [vmem:[%s207 + $0x530] sm:%s200]
                %542 = vst [vmem:[%s208 + $0x298] sm:%s200] %v541
                %v543 = vld [vmem:[%s207 + $0x538] sm:%s200]
                %544 = vst [vmem:[%s208 + $0x29c] sm:%s200] %v543
              $region41: #{inception_b_forward.10} parent=35 // loop_footer
                %s206 = sadd.s32 1, %s202
              $region42: #{inception_b_forward.10} parent=35 // loop_footer_branch
                %201 = sbr.rel target = $region38
              $region43: #{inception_b_forward.10} parent=35 // loop_exit
                _
            $region36: #{inception_b_forward.10} parent=27 // pred_fallthru
              _
          $region28: #{inception_b_forward.10} parent=23 // pred_fallthru
            _
          %901 = vnop
        $region24: #{inception_b_forward.10} parent=19 // pred_fallthru
          _
        // Predicated region
        $region62: #{inception_b_forward.10} parent=19 // pred_check
          %p902 = pneg %p78
        $region63: #{inception_b_forward.10} parent=19 // pred_check_branch
          %904 = sbr.rel (%p902) target = $region65
        $region64: #{inception_b_forward.10} parent=19 // pred_region
          %p905 = scmp.lt.s32.totalorder %s11, 1
          %s906 = scalar_select %p905, %s11, 1
          %s907 = scalar_lea.vmem %s2, %s906
        $region65: #{inception_b_forward.10} parent=19 // pred_fallthru
          _
        // Predicated region
        $region66: #{inception_b_forward.10} parent=19 // pred_check
          %p908 = pneg %p104
        $region67: #{inception_b_forward.10} parent=19 // pred_check_branch
          %910 = sbr.rel (%p908) target = $region69
        $region68: #{inception_b_forward.10} parent=19 // pred_region
          %p911 = scmp.lt.s32.totalorder %s11, 1
          %s912 = scalar_select %p911, %s11, 1
          %s913 = scalar_lea.vmem %s3, %s912
        $region69: #{inception_b_forward.10} parent=19 // pred_fallthru
          _
        // Predicated region
        $region70: #{inception_b_forward.10} parent=19 // pred_check
          %p914 = pneg %p130
        $region71: #{inception_b_forward.10} parent=19 // pred_check_branch
          %916 = sbr.rel (%p914) target = $region73
        $region72: #{inception_b_forward.10} parent=19 // pred_region
          %p917 = scmp.lt.s32.totalorder %s11, 1
          %s918 = scalar_select %p917, %s11, 1
          %s919 = scalar_lea.vmem %s4, %s918
        $region73: #{inception_b_forward.10} parent=19 // pred_fallthru
          _
      $region20: #{inception_b_forward.10} parent=5 // pred_fallthru
        _
      %p920 = scmp.le.s32.totalorder 1, %s11
      %p921 = scmp.lt.s32.totalorder %s11, 3
      %p922 = pnand %p920, %p921
      %p923 = pneg %p922
      // Predicated region
      $region74: #{inception_b_forward.10} parent=5 // pred_check
        _
      $region75: #{inception_b_forward.10} parent=5 // pred_check_branch
        %925 = sbr.rel (%p922) target = $region77
      $region76: #{inception_b_forward.10} parent=5 // pred_region
        %s926 = ssub.s32 %s11, 1
        %s927 = sand.u32 %s45, 1
        %s928 = sand.u32 %s45, 1
        %s929 = smul.addr %s928, 672
        %s930 = scalar_lea.vmem [#allocation2], %s929
        // Predicated region
        $region78: #{inception_b_forward.10} parent=76 // pred_check
          %p931 = pneg %p58
        $region79: #{inception_b_forward.10} parent=76 // pred_check_branch
          %933 = sbr.rel (%p931) target = $region81
        $region80: #{inception_b_forward.10} parent=76 // pred_region
          _
        $region81: #{inception_b_forward.10} parent=76 // pred_fallthru
          _
        %p934 = pneg %p32
        %p935 = pneg %p29
        %s936 = sand.u32 %s45, 1
        %s937 = sand.u32 %s45, 1
        %s938 = smul.addr %s937, 672
        %s939 = scalar_lea.vmem [#allocation2], %s938
        %p940 = pneg %p58
        %p941 = pneg %p55
        %p942 = scmp.lt.s32.totalorder %s16, 1
        %s943 = scalar_select %p942, %s16, 1
        %s944 = scalar_lea.vmem %s2, %s943
        %p945 = pneg %p84
        %p946 = pneg %p81
        %p947 = scmp.lt.s32.totalorder %s16, 1
        %s948 = scalar_select %p947, %s16, 1
        %s949 = scalar_lea.vmem %s3, %s948
        %p950 = pneg %p110
        %p951 = pneg %p107
        %p952 = scmp.lt.s32.totalorder %s16, 1
        %s953 = scalar_select %p952, %s16, 1
        %s954 = scalar_lea.vmem %s4, %s953
        %p955 = pneg %p136
        %p956 = pneg %p133
        %p957 = pneg %p162
        %p958 = pneg %p159
        %s959 = sand.u32 %s149, 1
        %s960 = sand.u32 %s149, 1
        %s961 = smul.addr %s960, 128
        %s962 = scalar_lea.vmem [#allocation3], %s961
        %p963 = scmp.lt.s32.totalorder %s16, 1
        %s964 = scalar_select %p963, %s16, 1
        %s965 = scalar_lea.vmem %s2, %s964
        %p966 = scmp.lt.s32.totalorder %s16, 1
        %s967 = scalar_select %p966, %s16, 1
        %s968 = scalar_lea.vmem %s3, %s967
        %p969 = scmp.lt.s32.totalorder %s16, 1
        %s970 = scalar_select %p969, %s16, 1
        %s971 = scalar_lea.vmem %s4, %s970
        %v973 = vld [vmem:[%s0] sm:$0xff]
        %v974 = vld [vmem:[%s0 + $0x8] sm:$0xff]
        %v975 = vld [vmem:[%s0 + $0x10] sm:$0xff]
        %v976 = vld [vmem:[%s0 + $0x18] sm:$0xff]
        %v977 = vld [vmem:[%s0 + $0x20] sm:$0xff]
        %v978 = vld [vmem:[%s0 + $0x28] sm:$0xff]
        %v979 = vld [vmem:[%s0 + $0x30] sm:$0xff]
        %v980 = vld [vmem:[%s0 + $0x38] sm:$0xff]
        %v981 = vld [vmem:[%s0 + $0x40] sm:$0xff]
        %v982 = vld [vmem:[%s0 + $0x48] sm:$0xff]
        %v983 = vld [vmem:[%s0 + $0x50] sm:$0xff]
        %v984 = vld [vmem:[%s0 + $0x58] sm:$0xff]
        %v985 = vld [vmem:[%s0 + $0x60] sm:$0xff]
        %v986 = vld [vmem:[%s0 + $0x68] sm:$0xff]
        %v987 = vld [vmem:[%s0 + $0x70] sm:$0xff]
        %v988 = vld [vmem:[%s0 + $0x78] sm:$0xff]
        %v989 = vld [vmem:[%s930] sm:$0xf]
        %v990 = vld [vmem:[%s930 + $0x4] sm:$0xf]
        %v991 = vld [vmem:[%s930 + $0x8] sm:$0xf]
        %v992 = vld [vmem:[%s930 + $0xc] sm:$0xf]
        %v993 = vld [vmem:[%s930 + $0x10] sm:$0xf]
        %v994 = vld [vmem:[%s930 + $0x14] sm:$0xf]
        %v995 = vld [vmem:[%s930 + $0x18] sm:$0xf]
        %v996 = vld [vmem:[%s930 + $0x1c] sm:$0xf]
        %v997 = vld [vmem:[%s930 + $0x20] sm:$0xf]
        %v998 = vld [vmem:[%s930 + $0x24] sm:$0xf]
        %v999 = vld [vmem:[%s930 + $0x28] sm:$0xf]
        %v1000 = vld [vmem:[%s930 + $0x2c] sm:$0xf]
        %v1001 = vld [vmem:[%s930 + $0x30] sm:$0xf]
        %v1002 = vld [vmem:[%s930 + $0x34] sm:$0xf]
        %v1003 = vld [vmem:[%s930 + $0x38] sm:$0xf]
        %v1004 = vld [vmem:[%s930 + $0x3c] sm:$0xf]
        %v1005 = vld [vmem:[%s930 + $0x40] sm:$0xf]
        %v1006 = vld [vmem:[%s930 + $0x44] sm:$0xf]
        %v1007 = vld [vmem:[%s930 + $0x48] sm:$0xf]
        %v1008 = vld [vmem:[%s930 + $0x4c] sm:$0xf]
        %v1009 = vld [vmem:[%s930 + $0x50] sm:$0xf]
        %v1010 = vld [vmem:[%s930 + $0x54] sm:$0xf]
        %v1011 = vld [vmem:[%s930 + $0x58] sm:$0xf]
        %v1012 = vld [vmem:[%s930 + $0x5c] sm:$0xf]
        %v1013 = vld [vmem:[%s0 + $0x80] sm:$0xff]
        %v1014 = vld [vmem:[%s0 + $0x88] sm:$0xff]
        %s1015 = scalar_lea.vmem %s930, 96 [#allocation2]
        %v1016 = vld [vmem:[%s1015] sm:$0xf]
        %v1017 = vld [vmem:[%s1015 + $0x4] sm:$0xf]
        %v1018 = vld [vmem:[%s1015 + $0x8] sm:$0xf]
        %v1019 = vld [vmem:[%s1015 + $0xc] sm:$0xf]
        %v1020 = vld [vmem:[%s1015 + $0x10] sm:$0xf]
        %v1021 = vld [vmem:[%s1015 + $0x14] sm:$0xf]
        %v1022 = vld [vmem:[%s1015 + $0x18] sm:$0xf]
        %v1023 = vld [vmem:[%s1015 + $0x1c] sm:$0xf]
        %v1024 = vld [vmem:[%s1015 + $0x20] sm:$0xf]
        %v1025 = vld [vmem:[%s1015 + $0x24] sm:$0xf]
        %v1026 = vld [vmem:[%s1015 + $0x28] sm:$0xf]
        %v1027 = vld [vmem:[%s1015 + $0x2c] sm:$0xf]
        %v1028 = vld [vmem:[%s1015 + $0x30] sm:$0xf]
        %v1029 = vld [vmem:[%s1015 + $0x34] sm:$0xf]
        %v1030 = vld [vmem:[%s1015 + $0x38] sm:$0xf]
        %v1031 = vld [vmem:[%s1015 + $0x3c] sm:$0xf]
        %v1032 = vld [vmem:[%s1015 + $0x40] sm:$0xf]
        %v1033 = vld [vmem:[%s1015 + $0x44] sm:$0xf]
        %v1034 = vld [vmem:[%s1015 + $0x48] sm:$0xf]
        %v1035 = vld [vmem:[%s1015 + $0x4c] sm:$0xf]
        %v1036 = vld [vmem:[%s1015 + $0x50] sm:$0xf]
        %v1037 = vld [vmem:[%s1015 + $0x54] sm:$0xf]
        %v1038 = vld [vmem:[%s1015 + $0x58] sm:$0xf]
        %v1039 = vld [vmem:[%s1015 + $0x5c] sm:$0xf]
        %v1056 = vunpack.c.l.b16 %v975
        %v1057 = vunpack.c.h.b16 %v975
        %v1058 = vunpack.c.l.b16 %v976
        %v1059 = vunpack.c.h.b16 %v976
        %v1060 = vunpack.c.l.b16 %v977
        %v1061 = vunpack.c.h.b16 %v977
        %v1062 = vunpack.c.l.b16 %v978
        %v1063 = vunpack.c.h.b16 %v978
        %v1064 = vunpack.c.l.b16 %v979
        %v1065 = vunpack.c.h.b16 %v979
        %v1066 = vunpack.c.l.b16 %v980
        %v1067 = vunpack.c.h.b16 %v980
        %v1068 = vunpack.c.l.b16 %v981
        %v1069 = vunpack.c.h.b16 %v981
        %v1070 = vunpack.c.l.b16 %v982
        %v1071 = vunpack.c.h.b16 %v982
        %v1072 = vunpack.c.l.b16 %v983
        %v1073 = vunpack.c.h.b16 %v983
        %v1074 = vunpack.c.l.b16 %v984
        %v1075 = vunpack.c.h.b16 %v984
        %v1076 = vunpack.c.l.b16 %v985
        %v1077 = vunpack.c.h.b16 %v985
        %v1078 = vunpack.c.l.b16 %v986
        %v1079 = vunpack.c.h.b16 %v986
        %v1080 = vunpack.c.l.b16 %v987
        %v1081 = vunpack.c.h.b16 %v987
        %v1082 = vunpack.c.l.b16 %v988
        %v1083 = vunpack.c.h.b16 %v988
        %v1084 = vunpack.c.l.b16 %v1013
        %v1085 = vunpack.c.h.b16 %v1013
        %v1086 = vunpack.c.l.b16 %v1014
        %v1087 = vunpack.c.h.b16 %v1014
        %v1088 = vpack.c.b16 %v1058, %v1056
        %v1089 = vpack.c.b16 %v1059, %v1057
        %v1090 = vpack.c.b16 %v1062, %v1060
        %v1091 = vpack.c.b16 %v1063, %v1061
        %v1092 = vpack.c.b16 %v1066, %v1064
        %v1093 = vpack.c.b16 %v1067, %v1065
        %v1094 = vpack.c.b16 %v1070, %v1068
        %v1095 = vpack.c.b16 %v1071, %v1069
        %v1096 = vpack.c.b16 %v1074, %v1072
        %v1097 = vpack.c.b16 %v1075, %v1073
        %v1098 = vpack.c.b16 %v1078, %v1076
        %v1099 = vpack.c.b16 %v1079, %v1077
        %v1100 = vpack.c.b16 %v1082, %v1080
        %v1101 = vpack.c.b16 %v1083, %v1081
        %v1102 = vpack.c.b16 %v1086, %v1084
        %v1103 = vpack.c.b16 %v1087, %v1085
        %v1136 = vunpack.c.l.b16 %v1016
        %v1137 = vunpack.c.l.b16 %v1017
        %v1138 = vunpack.c.l.b16 %v1018
        %v1139 = vunpack.c.l.b16 %v1019
        %v1140 = vunpack.c.l.b16 %v1020
        %v1141 = vunpack.c.l.b16 %v1021
        %v1142 = vunpack.c.l.b16 %v1022
        %v1143 = vunpack.c.l.b16 %v1023
        %v1144 = vunpack.c.l.b16 %v1024
        %v1145 = vunpack.c.l.b16 %v1025
        %v1146 = vunpack.c.l.b16 %v1026
        %v1147 = vunpack.c.l.b16 %v1027
        %v1148 = vunpack.c.l.b16 %v1028
        %v1149 = vunpack.c.l.b16 %v1029
        %v1150 = vunpack.c.l.b16 %v1030
        %v1151 = vunpack.c.l.b16 %v1031
        %v1152 = vunpack.c.l.b16 %v1032
        %v1153 = vunpack.c.l.b16 %v1033
        %v1154 = vunpack.c.l.b16 %v1034
        %v1155 = vunpack.c.l.b16 %v1035
        %v1156 = vunpack.c.l.b16 %v1036
        %v1157 = vunpack.c.l.b16 %v1037
        %v1158 = vunpack.c.l.b16 %v1038
        %v1159 = vunpack.c.l.b16 %v1039
        %v1160 = vpack.c.b16 %v1137, %v1136
        %v1161 = vpack.c.b16 %v1139, %v1138
        %v1162 = vpack.c.b16 %v1141, %v1140
        %v1163 = vpack.c.b16 %v1143, %v1142
        %v1164 = vpack.c.b16 %v1145, %v1144
        %v1165 = vpack.c.b16 %v1147, %v1146
        %v1166 = vpack.c.b16 %v1149, %v1148
        %v1167 = vpack.c.b16 %v1151, %v1150
        %v1168 = vpack.c.b16 %v1153, %v1152
        %v1169 = vpack.c.b16 %v1155, %v1154
        %v1170 = vpack.c.b16 %v1157, %v1156
        %v1171 = vpack.c.b16 %v1159, %v1158
        %vm1184 = vcmask 523264
        %v1186 = vsel %vm1184, %v1089, 0
        %v1189 = vsel %vm1184, %v1091, 0
        %v1192 = vsel %vm1184, %v1093, 0
        %v1195 = vsel %vm1184, %v1095, 0
        %v1198 = vsel %vm1184, %v1097, 0
        %v1201 = vsel %vm1184, %v1099, 0
        %v1204 = vsel %vm1184, %v1101, 0
        %v1207 = vsel %vm1184, %v1103, 0
        %1209 = vmatpush.bf16.msra.mxu0 %v1167
        %1210 = vmatpush.bf16.msra.mxu0 %v1166
        %1211 = vmatpush.bf16.msra.mxu0 %v1165
        %1212 = vmatpush.bf16.msra.mxu0 %v1164
        %1213 = vmatpush.bf16.msra.mxu0 %v1163
        %1214 = vmatpush.bf16.msra.mxu0 %v1162
        %1215 = vmatpush.bf16.msra.mxu0 %v1161
        %1216 = vmatpush.bf16.msra.mxu0 %v1160
        %1217 = vmatmul.bf16.gmra.mxu0 %v1088
        %v1218 = vpop.f32.mrf.mxu0
        %v1219 = vadd.f32 0.0, %v1218
        %v1220 = vpop.f32.mrf.mxu0
        %v1221 = vadd.f32 0.0, %v1220
        %1222 = vmatmul.bf16.gmra.mxu0 %v1090
        %v1223 = vpop.f32.mrf.mxu0
        %v1224 = vadd.f32 0.0, %v1223
        %v1225 = vpop.f32.mrf.mxu0
        %v1226 = vadd.f32 0.0, %v1225
        %1227 = vmatmul.bf16.gmra.mxu0 %v1092
        %v1228 = vpop.f32.mrf.mxu0
        %v1229 = vadd.f32 0.0, %v1228
        %v1230 = vpop.f32.mrf.mxu0
        %v1231 = vadd.f32 0.0, %v1230
        %1232 = vmatmul.bf16.gmra.mxu0 %v1094
        %v1233 = vpop.f32.mrf.mxu0
        %v1234 = vadd.f32 0.0, %v1233
        %v1235 = vpop.f32.mrf.mxu0
        %v1236 = vadd.f32 0.0, %v1235
        %1237 = vmatmul.bf16.gmra.mxu0 %v1096
        %v1238 = vpop.f32.mrf.mxu0
        %v1239 = vadd.f32 0.0, %v1238
        %v1240 = vpop.f32.mrf.mxu0
        %v1241 = vadd.f32 0.0, %v1240
        %1242 = vmatmul.bf16.gmra.mxu0 %v1098
        %v1243 = vpop.f32.mrf.mxu0
        %v1244 = vadd.f32 0.0, %v1243
        %v1245 = vpop.f32.mrf.mxu0
        %v1246 = vadd.f32 0.0, %v1245
        %1247 = vmatmul.bf16.gmra.mxu0 %v1100
        %v1248 = vpop.f32.mrf.mxu0
        %v1249 = vadd.f32 0.0, %v1248
        %v1250 = vpop.f32.mrf.mxu0
        %v1251 = vadd.f32 0.0, %v1250
        %1252 = vmatmul.bf16.gmra.mxu0 %v1102
        %v1253 = vpop.f32.mrf.mxu0
        %v1254 = vadd.f32 0.0, %v1253
        %v1255 = vpop.f32.mrf.mxu0
        %v1256 = vadd.f32 0.0, %v1255
        %1257 = vdwg.mxu0
        %1258 = vmatpush.bf16.msra.mxu0 0
        %1259 = vmatpush.bf16.msra.mxu0 0
        %1260 = vmatpush.bf16.msra.mxu0 0
        %1261 = vmatpush.bf16.msra.mxu0 0
        %1262 = vmatpush.bf16.msra.mxu0 %v1171
        %1263 = vmatpush.bf16.msra.mxu0 %v1170
        %1264 = vmatpush.bf16.msra.mxu0 %v1169
        %1265 = vmatpush.bf16.msra.mxu0 %v1168
        %1266 = vmatmul.bf16.gmra.mxu0 %v1186
        %v1267 = vpop.f32.mrf.mxu0
        %v1268 = vadd.f32 %v1219, %v1267
        %v1269 = vpop.f32.mrf.mxu0
        %v1270 = vadd.f32 %v1221, %v1269
        %1271 = vmatmul.bf16.gmra.mxu0 %v1189
        %v1272 = vpop.f32.mrf.mxu0
        %v1273 = vadd.f32 %v1224, %v1272
        %v1274 = vpop.f32.mrf.mxu0
        %v1275 = vadd.f32 %v1226, %v1274
        %1276 = vmatmul.bf16.gmra.mxu0 %v1192
        %v1277 = vpop.f32.mrf.mxu0
        %v1278 = vadd.f32 %v1229, %v1277
        %v1279 = vpop.f32.mrf.mxu0
        %v1280 = vadd.f32 %v1231, %v1279
        %1281 = vmatmul.bf16.gmra.mxu0 %v1195
        %v1282 = vpop.f32.mrf.mxu0
        %v1283 = vadd.f32 %v1234, %v1282
        %v1284 = vpop.f32.mrf.mxu0
        %v1285 = vadd.f32 %v1236, %v1284
        %1286 = vmatmul.bf16.gmra.mxu0 %v1198
        %v1287 = vpop.f32.mrf.mxu0
        %v1288 = vadd.f32 %v1239, %v1287
        %v1289 = vpop.f32.mrf.mxu0
        %v1290 = vadd.f32 %v1241, %v1289
        %1291 = vmatmul.bf16.gmra.mxu0 %v1201
        %v1292 = vpop.f32.mrf.mxu0
        %v1293 = vadd.f32 %v1244, %v1292
        %v1294 = vpop.f32.mrf.mxu0
        %v1295 = vadd.f32 %v1246, %v1294
        %1296 = vmatmul.bf16.gmra.mxu0 %v1204
        %v1297 = vpop.f32.mrf.mxu0
        %v1298 = vadd.f32 %v1249, %v1297
        %v1299 = vpop.f32.mrf.mxu0
        %v1300 = vadd.f32 %v1251, %v1299
        %1301 = vmatmul.bf16.gmra.mxu0 %v1207
        %v1302 = vpop.f32.mrf.mxu0
        %v1303 = vadd.f32 %v1254, %v1302
        %v1304 = vpop.f32.mrf.mxu0
        %v1305 = vadd.f32 %v1256, %v1304
        %1306 = vdwg.mxu0
        %v1309 = vunpack.c.l.b16 %v973
        %v1310 = vunpack.c.h.b16 %v973
        %v1311 = vunpack.c.l.b16 %v974
        %v1312 = vunpack.c.h.b16 %v974
        %v1313 = vpack.c.b16 %v1311, %v1309
        %v1314 = vpack.c.b16 %v1312, %v1310
        %v1340 = vunpack.c.l.b16 %v989
        %v1341 = vunpack.c.l.b16 %v990
        %v1342 = vunpack.c.l.b16 %v991
        %v1343 = vunpack.c.l.b16 %v992
        %v1344 = vunpack.c.l.b16 %v993
        %v1345 = vunpack.c.l.b16 %v994
        %v1346 = vunpack.c.l.b16 %v995
        %v1347 = vunpack.c.l.b16 %v996
        %v1348 = vunpack.c.l.b16 %v997
        %v1349 = vunpack.c.l.b16 %v998
        %v1350 = vunpack.c.l.b16 %v999
        %v1351 = vunpack.c.l.b16 %v1000
        %v1352 = vunpack.c.l.b16 %v1001
        %v1353 = vunpack.c.l.b16 %v1002
        %v1354 = vunpack.c.l.b16 %v1003
        %v1355 = vunpack.c.l.b16 %v1004
        %v1356 = vunpack.c.l.b16 %v1005
        %v1357 = vunpack.c.l.b16 %v1006
        %v1358 = vunpack.c.l.b16 %v1007
        %v1359 = vunpack.c.l.b16 %v1008
        %v1360 = vunpack.c.l.b16 %v1009
        %v1361 = vunpack.c.l.b16 %v1010
        %v1362 = vunpack.c.l.b16 %v1011
        %v1363 = vunpack.c.l.b16 %v1012
        %v1364 = vpack.c.b16 %v1341, %v1340
        %v1365 = vpack.c.b16 %v1343, %v1342
        %v1366 = vpack.c.b16 %v1345, %v1344
        %v1367 = vpack.c.b16 %v1347, %v1346
        %v1368 = vpack.c.b16 %v1349, %v1348
        %v1369 = vpack.c.b16 %v1351, %v1350
        %v1370 = vpack.c.b16 %v1353, %v1352
        %v1371 = vpack.c.b16 %v1355, %v1354
        %v1372 = vpack.c.b16 %v1357, %v1356
        %v1373 = vpack.c.b16 %v1359, %v1358
        %v1374 = vpack.c.b16 %v1361, %v1360
        %v1375 = vpack.c.b16 %v1363, %v1362
        %v1389 = vsel %vm1184, %v1314, 0
        %1391 = vmatpush.bf16.msra.mxu0 %v1371
        %1392 = vmatpush.bf16.msra.mxu0 %v1370
        %1393 = vmatpush.bf16.msra.mxu0 %v1369
        %1394 = vmatpush.bf16.msra.mxu0 %v1368
        %1395 = vmatpush.bf16.msra.mxu0 %v1367
        %1396 = vmatpush.bf16.msra.mxu0 %v1366
        %1397 = vmatpush.bf16.msra.mxu0 %v1365
        %1398 = vmatpush.bf16.msra.mxu0 %v1364
        %1399 = vmatmul.bf16.gmra.mxu0 %v1313
        %v1400 = vpop.f32.mrf.mxu0
        %v1401 = vadd.f32 %v1268, %v1400
        %v1402 = vpop.f32.mrf.mxu0
        %v1403 = vadd.f32 %v1270, %v1402
        %1404 = vmatmul.bf16.gmra.mxu0 %v1088
        %v1405 = vpop.f32.mrf.mxu0
        %v1406 = vadd.f32 %v1273, %v1405
        %v1407 = vpop.f32.mrf.mxu0
        %v1408 = vadd.f32 %v1275, %v1407
        %1409 = vmatmul.bf16.gmra.mxu0 %v1090
        %v1410 = vpop.f32.mrf.mxu0
        %v1411 = vadd.f32 %v1278, %v1410
        %v1412 = vpop.f32.mrf.mxu0
        %v1413 = vadd.f32 %v1280, %v1412
        %1414 = vmatmul.bf16.gmra.mxu0 %v1092
        %v1415 = vpop.f32.mrf.mxu0
        %v1416 = vadd.f32 %v1283, %v1415
        %v1417 = vpop.f32.mrf.mxu0
        %v1418 = vadd.f32 %v1285, %v1417
        %1419 = vmatmul.bf16.gmra.mxu0 %v1094
        %v1420 = vpop.f32.mrf.mxu0
        %v1421 = vadd.f32 %v1288, %v1420
        %v1422 = vpop.f32.mrf.mxu0
        %v1423 = vadd.f32 %v1290, %v1422
        %1424 = vmatmul.bf16.gmra.mxu0 %v1096
        %v1425 = vpop.f32.mrf.mxu0
        %v1426 = vadd.f32 %v1293, %v1425
        %v1427 = vpop.f32.mrf.mxu0
        %v1428 = vadd.f32 %v1295, %v1427
        %1429 = vmatmul.bf16.gmra.mxu0 %v1098
        %v1430 = vpop.f32.mrf.mxu0
        %v1431 = vadd.f32 %v1298, %v1430
        %v1432 = vpop.f32.mrf.mxu0
        %v1433 = vadd.f32 %v1300, %v1432
        %1434 = vmatmul.bf16.gmra.mxu0 %v1100
        %v1435 = vpop.f32.mrf.mxu0
        %v1436 = vadd.f32 %v1303, %v1435
        %v1437 = vpop.f32.mrf.mxu0
        %v1438 = vadd.f32 %v1305, %v1437
        %1439 = vdwg.mxu0
        %1440 = vmatpush.bf16.msra.mxu0 0
        %1441 = vmatpush.bf16.msra.mxu0 0
        %1442 = vmatpush.bf16.msra.mxu0 0
        %1443 = vmatpush.bf16.msra.mxu0 0
        %1444 = vmatpush.bf16.msra.mxu0 %v1375
        %1445 = vmatpush.bf16.msra.mxu0 %v1374
        %1446 = vmatpush.bf16.msra.mxu0 %v1373
        %1447 = vmatpush.bf16.msra.mxu0 %v1372
        %1448 = vmatmul.bf16.gmra.mxu0 %v1389
        %v1449 = vpop.f32.mrf.mxu0
        %v1450 = vadd.f32 %v1401, %v1449
        %v1451 = vpop.f32.mrf.mxu0
        %v1452 = vadd.f32 %v1403, %v1451
        %1453 = vmatmul.bf16.gmra.mxu0 %v1186
        %v1454 = vpop.f32.mrf.mxu0
        %v1455 = vadd.f32 %v1406, %v1454
        %v1456 = vpop.f32.mrf.mxu0
        %v1457 = vadd.f32 %v1408, %v1456
        %1458 = vmatmul.bf16.gmra.mxu0 %v1189
        %v1459 = vpop.f32.mrf.mxu0
        %v1460 = vadd.f32 %v1411, %v1459
        %v1461 = vpop.f32.mrf.mxu0
        %v1462 = vadd.f32 %v1413, %v1461
        %1463 = vmatmul.bf16.gmra.mxu0 %v1192
        %v1464 = vpop.f32.mrf.mxu0
        %v1465 = vadd.f32 %v1416, %v1464
        %v1466 = vpop.f32.mrf.mxu0
        %v1467 = vadd.f32 %v1418, %v1466
        %1468 = vmatmul.bf16.gmra.mxu0 %v1195
        %v1469 = vpop.f32.mrf.mxu0
        %v1470 = vadd.f32 %v1421, %v1469
        %v1471 = vpop.f32.mrf.mxu0
        %v1472 = vadd.f32 %v1423, %v1471
        %1473 = vmatmul.bf16.gmra.mxu0 %v1198
        %v1474 = vpop.f32.mrf.mxu0
        %v1475 = vadd.f32 %v1426, %v1474
        %v1476 = vpop.f32.mrf.mxu0
        %v1477 = vadd.f32 %v1428, %v1476
        %1478 = vmatmul.bf16.gmra.mxu0 %v1201
        %v1479 = vpop.f32.mrf.mxu0
        %v1480 = vadd.f32 %v1431, %v1479
        %v1481 = vpop.f32.mrf.mxu0
        %v1482 = vadd.f32 %v1433, %v1481
        %1483 = vmatmul.bf16.gmra.mxu0 %v1204
        %v1484 = vpop.f32.mrf.mxu0
        %v1485 = vadd.f32 %v1436, %v1484
        %v1486 = vpop.f32.mrf.mxu0
        %v1487 = vadd.f32 %v1438, %v1486
        %1488 = vdwg.mxu0
        %v1489 = vld [vmem:[%s0 + $0x20] sm:$0xff]
        %v1490 = vld [vmem:[%s0 + $0x28] sm:$0xff]
        %v1491 = vld [vmem:[%s0 + $0x30] sm:$0xff]
        %v1492 = vld [vmem:[%s0 + $0x38] sm:$0xff]
        %v1493 = vld [vmem:[%s0 + $0x40] sm:$0xff]
        %v1494 = vld [vmem:[%s0 + $0x48] sm:$0xff]
        %v1495 = vld [vmem:[%s0 + $0x50] sm:$0xff]
        %v1496 = vld [vmem:[%s0 + $0x58] sm:$0xff]
        %v1497 = vld [vmem:[%s0 + $0x60] sm:$0xff]
        %v1498 = vld [vmem:[%s0 + $0x68] sm:$0xff]
        %v1499 = vld [vmem:[%s0 + $0x70] sm:$0xff]
        %v1500 = vld [vmem:[%s0 + $0x78] sm:$0xff]
        %v1501 = vld [vmem:[%s0 + $0x80] sm:$0xff]
        %v1502 = vld [vmem:[%s0 + $0x88] sm:$0xff]
        %v1503 = vld [vmem:[%s0 + $0x90] sm:$0xff]
        %v1504 = vld [vmem:[%s0 + $0x98] sm:$0xff]
        %s1505 = scalar_lea.vmem %s930, 192 [#allocation2]
        %v1506 = vld [vmem:[%s1505] sm:$0xf]
        %v1507 = vld [vmem:[%s1505 + $0x4] sm:$0xf]
        %v1508 = vld [vmem:[%s1505 + $0x8] sm:$0xf]
        %v1509 = vld [vmem:[%s1505 + $0xc] sm:$0xf]
        %v1510 = vld [vmem:[%s1505 + $0x10] sm:$0xf]
        %v1511 = vld [vmem:[%s1505 + $0x14] sm:$0xf]
        %v1512 = vld [vmem:[%s1505 + $0x18] sm:$0xf]
        %v1513 = vld [vmem:[%s1505 + $0x1c] sm:$0xf]
        %v1514 = vld [vmem:[%s1505 + $0x20] sm:$0xf]
        %v1515 = vld [vmem:[%s1505 + $0x24] sm:$0xf]
        %v1516 = vld [vmem:[%s1505 + $0x28] sm:$0xf]
        %v1517 = vld [vmem:[%s1505 + $0x2c] sm:$0xf]
        %v1518 = vld [vmem:[%s1505 + $0x30] sm:$0xf]
        %v1519 = vld [vmem:[%s1505 + $0x34] sm:$0xf]
        %v1520 = vld [vmem:[%s1505 + $0x38] sm:$0xf]
        %v1521 = vld [vmem:[%s1505 + $0x3c] sm:$0xf]
        %v1522 = vld [vmem:[%s1505 + $0x40] sm:$0xf]
        %v1523 = vld [vmem:[%s1505 + $0x44] sm:$0xf]
        %v1524 = vld [vmem:[%s1505 + $0x48] sm:$0xf]
        %v1525 = vld [vmem:[%s1505 + $0x4c] sm:$0xf]
        %v1526 = vld [vmem:[%s1505 + $0x50] sm:$0xf]
        %v1527 = vld [vmem:[%s1505 + $0x54] sm:$0xf]
        %v1528 = vld [vmem:[%s1505 + $0x58] sm:$0xf]
        %v1529 = vld [vmem:[%s1505 + $0x5c] sm:$0xf]
        %v1546 = vunpack.c.l.b16 %v1489
        %v1547 = vunpack.c.h.b16 %v1489
        %v1548 = vunpack.c.l.b16 %v1490
        %v1549 = vunpack.c.h.b16 %v1490
        %v1550 = vunpack.c.l.b16 %v1491
        %v1551 = vunpack.c.h.b16 %v1491
        %v1552 = vunpack.c.l.b16 %v1492
        %v1553 = vunpack.c.h.b16 %v1492
        %v1554 = vunpack.c.l.b16 %v1493
        %v1555 = vunpack.c.h.b16 %v1493
        %v1556 = vunpack.c.l.b16 %v1494
        %v1557 = vunpack.c.h.b16 %v1494
        %v1558 = vunpack.c.l.b16 %v1495
        %v1559 = vunpack.c.h.b16 %v1495
        %v1560 = vunpack.c.l.b16 %v1496
        %v1561 = vunpack.c.h.b16 %v1496
        %v1562 = vunpack.c.l.b16 %v1497
        %v1563 = vunpack.c.h.b16 %v1497
        %v1564 = vunpack.c.l.b16 %v1498
        %v1565 = vunpack.c.h.b16 %v1498
        %v1566 = vunpack.c.l.b16 %v1499
        %v1567 = vunpack.c.h.b16 %v1499
        %v1568 = vunpack.c.l.b16 %v1500
        %v1569 = vunpack.c.h.b16 %v1500
        %v1570 = vunpack.c.l.b16 %v1501
        %v1571 = vunpack.c.h.b16 %v1501
        %v1572 = vunpack.c.l.b16 %v1502
        %v1573 = vunpack.c.h.b16 %v1502
        %v1574 = vunpack.c.l.b16 %v1503
        %v1575 = vunpack.c.h.b16 %v1503
        %v1576 = vunpack.c.l.b16 %v1504
        %v1577 = vunpack.c.h.b16 %v1504
        %v1578 = vpack.c.b16 %v1548, %v1546
        %v1579 = vpack.c.b16 %v1549, %v1547
        %v1580 = vpack.c.b16 %v1552, %v1550
        %v1581 = vpack.c.b16 %v1553, %v1551
        %v1582 = vpack.c.b16 %v1556, %v1554
        %v1583 = vpack.c.b16 %v1557, %v1555
        %v1584 = vpack.c.b16 %v1560, %v1558
        %v1585 = vpack.c.b16 %v1561, %v1559
        %v1586 = vpack.c.b16 %v1564, %v1562
        %v1587 = vpack.c.b16 %v1565, %v1563
        %v1588 = vpack.c.b16 %v1568, %v1566
        %v1589 = vpack.c.b16 %v1569, %v1567
        %v1590 = vpack.c.b16 %v1572, %v1570
        %v1591 = vpack.c.b16 %v1573, %v1571
        %v1592 = vpack.c.b16 %v1576, %v1574
        %v1593 = vpack.c.b16 %v1577, %v1575
        %v1626 = vunpack.c.l.b16 %v1506
        %v1627 = vunpack.c.l.b16 %v1507
        %v1628 = vunpack.c.l.b16 %v1508
        %v1629 = vunpack.c.l.b16 %v1509
        %v1630 = vunpack.c.l.b16 %v1510
        %v1631 = vunpack.c.l.b16 %v1511
        %v1632 = vunpack.c.l.b16 %v1512
        %v1633 = vunpack.c.l.b16 %v1513
        %v1634 = vunpack.c.l.b16 %v1514
        %v1635 = vunpack.c.l.b16 %v1515
        %v1636 = vunpack.c.l.b16 %v1516
        %v1637 = vunpack.c.l.b16 %v1517
        %v1638 = vunpack.c.l.b16 %v1518
        %v1639 = vunpack.c.l.b16 %v1519
        %v1640 = vunpack.c.l.b16 %v1520
        %v1641 = vunpack.c.l.b16 %v1521
        %v1642 = vunpack.c.l.b16 %v1522
        %v1643 = vunpack.c.l.b16 %v1523
        %v1644 = vunpack.c.l.b16 %v1524
        %v1645 = vunpack.c.l.b16 %v1525
        %v1646 = vunpack.c.l.b16 %v1526
        %v1647 = vunpack.c.l.b16 %v1527
        %v1648 = vunpack.c.l.b16 %v1528
        %v1649 = vunpack.c.l.b16 %v1529
        %v1650 = vpack.c.b16 %v1627, %v1626
        %v1651 = vpack.c.b16 %v1629, %v1628
        %v1652 = vpack.c.b16 %v1631, %v1630
        %v1653 = vpack.c.b16 %v1633, %v1632
        %v1654 = vpack.c.b16 %v1635, %v1634
        %v1655 = vpack.c.b16 %v1637, %v1636
        %v1656 = vpack.c.b16 %v1639, %v1638
        %v1657 = vpack.c.b16 %v1641, %v1640
        %v1658 = vpack.c.b16 %v1643, %v1642
        %v1659 = vpack.c.b16 %v1645, %v1644
        %v1660 = vpack.c.b16 %v1647, %v1646
        %v1661 = vpack.c.b16 %v1649, %v1648
        %v1675 = vsel %vm1184, %v1579, 0
        %v1678 = vsel %vm1184, %v1581, 0
        %v1681 = vsel %vm1184, %v1583, 0
        %v1684 = vsel %vm1184, %v1585, 0
        %v1687 = vsel %vm1184, %v1587, 0
        %v1690 = vsel %vm1184, %v1589, 0
        %v1693 = vsel %vm1184, %v1591, 0
        %v1696 = vsel %vm1184, %v1593, 0
        %1698 = vmatpush.bf16.msra.mxu0 %v1657
        %1699 = vmatpush.bf16.msra.mxu0 %v1656
        %1700 = vmatpush.bf16.msra.mxu0 %v1655
        %1701 = vmatpush.bf16.msra.mxu0 %v1654
        %1702 = vmatpush.bf16.msra.mxu0 %v1653
        %1703 = vmatpush.bf16.msra.mxu0 %v1652
        %1704 = vmatpush.bf16.msra.mxu0 %v1651
        %1705 = vmatpush.bf16.msra.mxu0 %v1650
        %1706 = vmatmul.bf16.gmra.mxu0 %v1578
        %v1707 = vpop.f32.mrf.mxu0
        %v1708 = vadd.f32 0.0, %v1707
        %v1709 = vpop.f32.mrf.mxu0
        %v1710 = vadd.f32 0.0, %v1709
        %1711 = vmatmul.bf16.gmra.mxu0 %v1580
        %v1712 = vpop.f32.mrf.mxu0
        %v1713 = vadd.f32 0.0, %v1712
        %v1714 = vpop.f32.mrf.mxu0
        %v1715 = vadd.f32 0.0, %v1714
        %1716 = vmatmul.bf16.gmra.mxu0 %v1582
        %v1717 = vpop.f32.mrf.mxu0
        %v1718 = vadd.f32 0.0, %v1717
        %v1719 = vpop.f32.mrf.mxu0
        %v1720 = vadd.f32 0.0, %v1719
        %1721 = vmatmul.bf16.gmra.mxu0 %v1584
        %v1722 = vpop.f32.mrf.mxu0
        %v1723 = vadd.f32 0.0, %v1722
        %v1724 = vpop.f32.mrf.mxu0
        %v1725 = vadd.f32 0.0, %v1724
        %1726 = vmatmul.bf16.gmra.mxu0 %v1586
        %v1727 = vpop.f32.mrf.mxu0
        %v1728 = vadd.f32 0.0, %v1727
        %v1729 = vpop.f32.mrf.mxu0
        %v1730 = vadd.f32 0.0, %v1729
        %1731 = vmatmul.bf16.gmra.mxu0 %v1588
        %v1732 = vpop.f32.mrf.mxu0
        %v1733 = vadd.f32 0.0, %v1732
        %v1734 = vpop.f32.mrf.mxu0
        %v1735 = vadd.f32 0.0, %v1734
        %1736 = vmatmul.bf16.gmra.mxu0 %v1590
        %v1737 = vpop.f32.mrf.mxu0
        %v1738 = vadd.f32 0.0, %v1737
        %v1739 = vpop.f32.mrf.mxu0
        %v1740 = vadd.f32 0.0, %v1739
        %1741 = vmatmul.bf16.gmra.mxu0 %v1592
        %v1742 = vpop.f32.mrf.mxu0
        %v1743 = vadd.f32 0.0, %v1742
        %v1744 = vpop.f32.mrf.mxu0
        %v1745 = vadd.f32 0.0, %v1744
        %1746 = vdwg.mxu0
        %1747 = vmatpush.bf16.msra.mxu0 0
        %1748 = vmatpush.bf16.msra.mxu0 0
        %1749 = vmatpush.bf16.msra.mxu0 0
        %1750 = vmatpush.bf16.msra.mxu0 0
        %1751 = vmatpush.bf16.msra.mxu0 %v1661
        %1752 = vmatpush.bf16.msra.mxu0 %v1660
        %1753 = vmatpush.bf16.msra.mxu0 %v1659
        %1754 = vmatpush.bf16.msra.mxu0 %v1658
        %1755 = vmatmul.bf16.gmra.mxu0 %v1675
        %v1756 = vpop.f32.mrf.mxu0
        %v1757 = vadd.f32 %v1708, %v1756
        %v1758 = vpop.f32.mrf.mxu0
        %v1759 = vadd.f32 %v1710, %v1758
        %1760 = vmatmul.bf16.gmra.mxu0 %v1678
        %v1761 = vpop.f32.mrf.mxu0
        %v1762 = vadd.f32 %v1713, %v1761
        %v1763 = vpop.f32.mrf.mxu0
        %v1764 = vadd.f32 %v1715, %v1763
        %1765 = vmatmul.bf16.gmra.mxu0 %v1681
        %v1766 = vpop.f32.mrf.mxu0
        %v1767 = vadd.f32 %v1718, %v1766
        %v1768 = vpop.f32.mrf.mxu0
        %v1769 = vadd.f32 %v1720, %v1768
        %1770 = vmatmul.bf16.gmra.mxu0 %v1684
        %v1771 = vpop.f32.mrf.mxu0
        %v1772 = vadd.f32 %v1723, %v1771
        %v1773 = vpop.f32.mrf.mxu0
        %v1774 = vadd.f32 %v1725, %v1773
        %1775 = vmatmul.bf16.gmra.mxu0 %v1687
        %v1776 = vpop.f32.mrf.mxu0
        %v1777 = vadd.f32 %v1728, %v1776
        %v1778 = vpop.f32.mrf.mxu0
        %v1779 = vadd.f32 %v1730, %v1778
        %1780 = vmatmul.bf16.gmra.mxu0 %v1690
        %v1781 = vpop.f32.mrf.mxu0
        %v1782 = vadd.f32 %v1733, %v1781
        %v1783 = vpop.f32.mrf.mxu0
        %v1784 = vadd.f32 %v1735, %v1783
        %1785 = vmatmul.bf16.gmra.mxu0 %v1693
        %v1786 = vpop.f32.mrf.mxu0
        %v1787 = vadd.f32 %v1738, %v1786
        %v1788 = vpop.f32.mrf.mxu0
        %v1789 = vadd.f32 %v1740, %v1788
        %1790 = vmatmul.bf16.gmra.mxu0 %v1696
        %v1791 = vpop.f32.mrf.mxu0
        %v1792 = vadd.f32 %v1743, %v1791
        %v1793 = vpop.f32.mrf.mxu0
        %v1794 = vadd.f32 %v1745, %v1793
        %1795 = vdwg.mxu0
        %v1796 = vadd.f32 %v1450, %v1757
        %v1797 = vadd.f32 %v1452, %v1759
        %v1798 = vadd.f32 %v1455, %v1762
        %v1799 = vadd.f32 %v1457, %v1764
        %v1800 = vadd.f32 %v1460, %v1767
        %v1801 = vadd.f32 %v1462, %v1769
        %v1802 = vadd.f32 %v1465, %v1772
        %v1803 = vadd.f32 %v1467, %v1774
        %v1804 = vadd.f32 %v1470, %v1777
        %v1805 = vadd.f32 %v1472, %v1779
        %v1806 = vadd.f32 %v1475, %v1782
        %v1807 = vadd.f32 %v1477, %v1784
        %v1808 = vadd.f32 %v1480, %v1787
        %v1809 = vadd.f32 %v1482, %v1789
        %v1810 = vadd.f32 %v1485, %v1792
        %v1811 = vadd.f32 %v1487, %v1794
        %v1812 = vld [vmem:[%s0 + $0x30] sm:$0xff]
        %v1813 = vld [vmem:[%s0 + $0x38] sm:$0xff]
        %v1814 = vld [vmem:[%s0 + $0x40] sm:$0xff]
        %v1815 = vld [vmem:[%s0 + $0x48] sm:$0xff]
        %v1816 = vld [vmem:[%s0 + $0x50] sm:$0xff]
        %v1817 = vld [vmem:[%s0 + $0x58] sm:$0xff]
        %v1818 = vld [vmem:[%s0 + $0x60] sm:$0xff]
        %v1819 = vld [vmem:[%s0 + $0x68] sm:$0xff]
        %v1820 = vld [vmem:[%s0 + $0x70] sm:$0xff]
        %v1821 = vld [vmem:[%s0 + $0x78] sm:$0xff]
        %v1822 = vld [vmem:[%s0 + $0x80] sm:$0xff]
        %v1823 = vld [vmem:[%s0 + $0x88] sm:$0xff]
        %v1824 = vld [vmem:[%s0 + $0x90] sm:$0xff]
        %v1825 = vld [vmem:[%s0 + $0x98] sm:$0xff]
        %v1826 = vld [vmem:[%s0 + $0xa0] sm:$0xff]
        %v1827 = vld [vmem:[%s0 + $0xa8] sm:$0xff]
        %s1828 = scalar_lea.vmem %s930, 288 [#allocation2]
        %v1829 = vld [vmem:[%s1828] sm:$0xf]
        %v1830 = vld [vmem:[%s1828 + $0x4] sm:$0xf]
        %v1831 = vld [vmem:[%s1828 + $0x8] sm:$0xf]
        %v1832 = vld [vmem:[%s1828 + $0xc] sm:$0xf]
        %v1833 = vld [vmem:[%s1828 + $0x10] sm:$0xf]
        %v1834 = vld [vmem:[%s1828 + $0x14] sm:$0xf]
        %v1835 = vld [vmem:[%s1828 + $0x18] sm:$0xf]
        %v1836 = vld [vmem:[%s1828 + $0x1c] sm:$0xf]
        %v1837 = vld [vmem:[%s1828 + $0x20] sm:$0xf]
        %v1838 = vld [vmem:[%s1828 + $0x24] sm:$0xf]
        %v1839 = vld [vmem:[%s1828 + $0x28] sm:$0xf]
        %v1840 = vld [vmem:[%s1828 + $0x2c] sm:$0xf]
        %v1841 = vld [vmem:[%s1828 + $0x30] sm:$0xf]
        %v1842 = vld [vmem:[%s1828 + $0x34] sm:$0xf]
        %v1843 = vld [vmem:[%s1828 + $0x38] sm:$0xf]
        %v1844 = vld [vmem:[%s1828 + $0x3c] sm:$0xf]
        %v1845 = vld [vmem:[%s1828 + $0x40] sm:$0xf]
        %v1846 = vld [vmem:[%s1828 + $0x44] sm:$0xf]
        %v1847 = vld [vmem:[%s1828 + $0x48] sm:$0xf]
        %v1848 = vld [vmem:[%s1828 + $0x4c] sm:$0xf]
        %v1849 = vld [vmem:[%s1828 + $0x50] sm:$0xf]
        %v1850 = vld [vmem:[%s1828 + $0x54] sm:$0xf]
        %v1851 = vld [vmem:[%s1828 + $0x58] sm:$0xf]
        %v1852 = vld [vmem:[%s1828 + $0x5c] sm:$0xf]
        %v1869 = vunpack.c.l.b16 %v1812
        %v1870 = vunpack.c.h.b16 %v1812
        %v1871 = vunpack.c.l.b16 %v1813
        %v1872 = vunpack.c.h.b16 %v1813
        %v1873 = vunpack.c.l.b16 %v1814
        %v1874 = vunpack.c.h.b16 %v1814
        %v1875 = vunpack.c.l.b16 %v1815
        %v1876 = vunpack.c.h.b16 %v1815
        %v1877 = vunpack.c.l.b16 %v1816
        %v1878 = vunpack.c.h.b16 %v1816
        %v1879 = vunpack.c.l.b16 %v1817
        %v1880 = vunpack.c.h.b16 %v1817
        %v1881 = vunpack.c.l.b16 %v1818
        %v1882 = vunpack.c.h.b16 %v1818
        %v1883 = vunpack.c.l.b16 %v1819
        %v1884 = vunpack.c.h.b16 %v1819
        %v1885 = vunpack.c.l.b16 %v1820
        %v1886 = vunpack.c.h.b16 %v1820
        %v1887 = vunpack.c.l.b16 %v1821
        %v1888 = vunpack.c.h.b16 %v1821
        %v1889 = vunpack.c.l.b16 %v1822
        %v1890 = vunpack.c.h.b16 %v1822
        %v1891 = vunpack.c.l.b16 %v1823
        %v1892 = vunpack.c.h.b16 %v1823
        %v1893 = vunpack.c.l.b16 %v1824
        %v1894 = vunpack.c.h.b16 %v1824
        %v1895 = vunpack.c.l.b16 %v1825
        %v1896 = vunpack.c.h.b16 %v1825
        %v1897 = vunpack.c.l.b16 %v1826
        %v1898 = vunpack.c.h.b16 %v1826
        %v1899 = vunpack.c.l.b16 %v1827
        %v1900 = vunpack.c.h.b16 %v1827
        %v1901 = vpack.c.b16 %v1871, %v1869
        %v1902 = vpack.c.b16 %v1872, %v1870
        %v1903 = vpack.c.b16 %v1875, %v1873
        %v1904 = vpack.c.b16 %v1876, %v1874
        %v1905 = vpack.c.b16 %v1879, %v1877
        %v1906 = vpack.c.b16 %v1880, %v1878
        %v1907 = vpack.c.b16 %v1883, %v1881
        %v1908 = vpack.c.b16 %v1884, %v1882
        %v1909 = vpack.c.b16 %v1887, %v1885
        %v1910 = vpack.c.b16 %v1888, %v1886
        %v1911 = vpack.c.b16 %v1891, %v1889
        %v1912 = vpack.c.b16 %v1892, %v1890
        %v1913 = vpack.c.b16 %v1895, %v1893
        %v1914 = vpack.c.b16 %v1896, %v1894
        %v1915 = vpack.c.b16 %v1899, %v1897
        %v1916 = vpack.c.b16 %v1900, %v1898
        %v1949 = vunpack.c.l.b16 %v1829
        %v1950 = vunpack.c.l.b16 %v1830
        %v1951 = vunpack.c.l.b16 %v1831
        %v1952 = vunpack.c.l.b16 %v1832
        %v1953 = vunpack.c.l.b16 %v1833
        %v1954 = vunpack.c.l.b16 %v1834
        %v1955 = vunpack.c.l.b16 %v1835
        %v1956 = vunpack.c.l.b16 %v1836
        %v1957 = vunpack.c.l.b16 %v1837
        %v1958 = vunpack.c.l.b16 %v1838
        %v1959 = vunpack.c.l.b16 %v1839
        %v1960 = vunpack.c.l.b16 %v1840
        %v1961 = vunpack.c.l.b16 %v1841
        %v1962 = vunpack.c.l.b16 %v1842
        %v1963 = vunpack.c.l.b16 %v1843
        %v1964 = vunpack.c.l.b16 %v1844
        %v1965 = vunpack.c.l.b16 %v1845
        %v1966 = vunpack.c.l.b16 %v1846
        %v1967 = vunpack.c.l.b16 %v1847
        %v1968 = vunpack.c.l.b16 %v1848
        %v1969 = vunpack.c.l.b16 %v1849
        %v1970 = vunpack.c.l.b16 %v1850
        %v1971 = vunpack.c.l.b16 %v1851
        %v1972 = vunpack.c.l.b16 %v1852
        %v1973 = vpack.c.b16 %v1950, %v1949
        %v1974 = vpack.c.b16 %v1952, %v1951
        %v1975 = vpack.c.b16 %v1954, %v1953
        %v1976 = vpack.c.b16 %v1956, %v1955
        %v1977 = vpack.c.b16 %v1958, %v1957
        %v1978 = vpack.c.b16 %v1960, %v1959
        %v1979 = vpack.c.b16 %v1962, %v1961
        %v1980 = vpack.c.b16 %v1964, %v1963
        %v1981 = vpack.c.b16 %v1966, %v1965
        %v1982 = vpack.c.b16 %v1968, %v1967
        %v1983 = vpack.c.b16 %v1970, %v1969
        %v1984 = vpack.c.b16 %v1972, %v1971
        %v1998 = vsel %vm1184, %v1902, 0
        %v2001 = vsel %vm1184, %v1904, 0
        %v2004 = vsel %vm1184, %v1906, 0
        %v2007 = vsel %vm1184, %v1908, 0
        %v2010 = vsel %vm1184, %v1910, 0
        %v2013 = vsel %vm1184, %v1912, 0
        %v2016 = vsel %vm1184, %v1914, 0
        %v2019 = vsel %vm1184, %v1916, 0
        %2021 = vmatpush.bf16.msra.mxu0 %v1980
        %2022 = vmatpush.bf16.msra.mxu0 %v1979
        %2023 = vmatpush.bf16.msra.mxu0 %v1978
        %2024 = vmatpush.bf16.msra.mxu0 %v1977
        %2025 = vmatpush.bf16.msra.mxu0 %v1976
        %2026 = vmatpush.bf16.msra.mxu0 %v1975
        %2027 = vmatpush.bf16.msra.mxu0 %v1974
        %2028 = vmatpush.bf16.msra.mxu0 %v1973
        %2029 = vmatmul.bf16.gmra.mxu0 %v1901
        %v2030 = vpop.f32.mrf.mxu0
        %v2031 = vadd.f32 0.0, %v2030
        %v2032 = vpop.f32.mrf.mxu0
        %v2033 = vadd.f32 0.0, %v2032
        %2034 = vmatmul.bf16.gmra.mxu0 %v1903
        %v2035 = vpop.f32.mrf.mxu0
        %v2036 = vadd.f32 0.0, %v2035
        %v2037 = vpop.f32.mrf.mxu0
        %v2038 = vadd.f32 0.0, %v2037
        %2039 = vmatmul.bf16.gmra.mxu0 %v1905
        %v2040 = vpop.f32.mrf.mxu0
        %v2041 = vadd.f32 0.0, %v2040
        %v2042 = vpop.f32.mrf.mxu0
        %v2043 = vadd.f32 0.0, %v2042
        %2044 = vmatmul.bf16.gmra.mxu0 %v1907
        %v2045 = vpop.f32.mrf.mxu0
        %v2046 = vadd.f32 0.0, %v2045
        %v2047 = vpop.f32.mrf.mxu0
        %v2048 = vadd.f32 0.0, %v2047
        %2049 = vmatmul.bf16.gmra.mxu0 %v1909
        %v2050 = vpop.f32.mrf.mxu0
        %v2051 = vadd.f32 0.0, %v2050
        %v2052 = vpop.f32.mrf.mxu0
        %v2053 = vadd.f32 0.0, %v2052
        %2054 = vmatmul.bf16.gmra.mxu0 %v1911
        %v2055 = vpop.f32.mrf.mxu0
        %v2056 = vadd.f32 0.0, %v2055
        %v2057 = vpop.f32.mrf.mxu0
        %v2058 = vadd.f32 0.0, %v2057
        %2059 = vmatmul.bf16.gmra.mxu0 %v1913
        %v2060 = vpop.f32.mrf.mxu0
        %v2061 = vadd.f32 0.0, %v2060
        %v2062 = vpop.f32.mrf.mxu0
        %v2063 = vadd.f32 0.0, %v2062
        %2064 = vmatmul.bf16.gmra.mxu0 %v1915
        %v2065 = vpop.f32.mrf.mxu0
        %v2066 = vadd.f32 0.0, %v2065
        %v2067 = vpop.f32.mrf.mxu0
        %v2068 = vadd.f32 0.0, %v2067
        %2069 = vdwg.mxu0
        %2070 = vmatpush.bf16.msra.mxu0 0
        %2071 = vmatpush.bf16.msra.mxu0 0
        %2072 = vmatpush.bf16.msra.mxu0 0
        %2073 = vmatpush.bf16.msra.mxu0 0
        %2074 = vmatpush.bf16.msra.mxu0 %v1984
        %2075 = vmatpush.bf16.msra.mxu0 %v1983
        %2076 = vmatpush.bf16.msra.mxu0 %v1982
        %2077 = vmatpush.bf16.msra.mxu0 %v1981
        %2078 = vmatmul.bf16.gmra.mxu0 %v1998
        %v2079 = vpop.f32.mrf.mxu0
        %v2080 = vadd.f32 %v2031, %v2079
        %v2081 = vpop.f32.mrf.mxu0
        %v2082 = vadd.f32 %v2033, %v2081
        %2083 = vmatmul.bf16.gmra.mxu0 %v2001
        %v2084 = vpop.f32.mrf.mxu0
        %v2085 = vadd.f32 %v2036, %v2084
        %v2086 = vpop.f32.mrf.mxu0
        %v2087 = vadd.f32 %v2038, %v2086
        %2088 = vmatmul.bf16.gmra.mxu0 %v2004
        %v2089 = vpop.f32.mrf.mxu0
        %v2090 = vadd.f32 %v2041, %v2089
        %v2091 = vpop.f32.mrf.mxu0
        %v2092 = vadd.f32 %v2043, %v2091
        %2093 = vmatmul.bf16.gmra.mxu0 %v2007
        %v2094 = vpop.f32.mrf.mxu0
        %v2095 = vadd.f32 %v2046, %v2094
        %v2096 = vpop.f32.mrf.mxu0
        %v2097 = vadd.f32 %v2048, %v2096
        %2098 = vmatmul.bf16.gmra.mxu0 %v2010
        %v2099 = vpop.f32.mrf.mxu0
        %v2100 = vadd.f32 %v2051, %v2099
        %v2101 = vpop.f32.mrf.mxu0
        %v2102 = vadd.f32 %v2053, %v2101
        %2103 = vmatmul.bf16.gmra.mxu0 %v2013
        %v2104 = vpop.f32.mrf.mxu0
        %v2105 = vadd.f32 %v2056, %v2104
        %v2106 = vpop.f32.mrf.mxu0
        %v2107 = vadd.f32 %v2058, %v2106
        %2108 = vmatmul.bf16.gmra.mxu0 %v2016
        %v2109 = vpop.f32.mrf.mxu0
        %v2110 = vadd.f32 %v2061, %v2109
        %v2111 = vpop.f32.mrf.mxu0
        %v2112 = vadd.f32 %v2063, %v2111
        %2113 = vmatmul.bf16.gmra.mxu0 %v2019
        %v2114 = vpop.f32.mrf.mxu0
        %v2115 = vadd.f32 %v2066, %v2114
        %v2116 = vpop.f32.mrf.mxu0
        %v2117 = vadd.f32 %v2068, %v2116
        %2118 = vdwg.mxu0
        %v2119 = vadd.f32 %v1796, %v2080
        %v2120 = vadd.f32 %v1797, %v2082
        %v2121 = vadd.f32 %v1798, %v2085
        %v2122 = vadd.f32 %v1799, %v2087
        %v2123 = vadd.f32 %v1800, %v2090
        %v2124 = vadd.f32 %v1801, %v2092
        %v2125 = vadd.f32 %v1802, %v2095
        %v2126 = vadd.f32 %v1803, %v2097
        %v2127 = vadd.f32 %v1804, %v2100
        %v2128 = vadd.f32 %v1805, %v2102
        %v2129 = vadd.f32 %v1806, %v2105
        %v2130 = vadd.f32 %v1807, %v2107
        %v2131 = vadd.f32 %v1808, %v2110
        %v2132 = vadd.f32 %v1809, %v2112
        %v2133 = vadd.f32 %v1810, %v2115
        %v2134 = vadd.f32 %v1811, %v2117
        %v2135 = vld [vmem:[%s0 + $0x40] sm:$0xff]
        %v2136 = vld [vmem:[%s0 + $0x48] sm:$0xff]
        %v2137 = vld [vmem:[%s0 + $0x50] sm:$0xff]
        %v2138 = vld [vmem:[%s0 + $0x58] sm:$0xff]
        %v2139 = vld [vmem:[%s0 + $0x60] sm:$0xff]
        %v2140 = vld [vmem:[%s0 + $0x68] sm:$0xff]
        %v2141 = vld [vmem:[%s0 + $0x70] sm:$0xff]
        %v2142 = vld [vmem:[%s0 + $0x78] sm:$0xff]
        %v2143 = vld [vmem:[%s0 + $0x80] sm:$0xff]
        %v2144 = vld [vmem:[%s0 + $0x88] sm:$0xff]
        %v2145 = vld [vmem:[%s0 + $0x90] sm:$0xff]
        %v2146 = vld [vmem:[%s0 + $0x98] sm:$0xff]
        %v2147 = vld [vmem:[%s0 + $0xa0] sm:$0xff]
        %v2148 = vld [vmem:[%s0 + $0xa8] sm:$0xff]
        %v2149 = vld [vmem:[%s0 + $0xb0] sm:$0xff]
        %v2150 = vld [vmem:[%s0 + $0xb8] sm:$0xff]
        %s2151 = scalar_lea.vmem %s930, 384 [#allocation2]
        %v2152 = vld [vmem:[%s2151] sm:$0xf]
        %v2153 = vld [vmem:[%s2151 + $0x4] sm:$0xf]
        %v2154 = vld [vmem:[%s2151 + $0x8] sm:$0xf]
        %v2155 = vld [vmem:[%s2151 + $0xc] sm:$0xf]
        %v2156 = vld [vmem:[%s2151 + $0x10] sm:$0xf]
        %v2157 = vld [vmem:[%s2151 + $0x14] sm:$0xf]
        %v2158 = vld [vmem:[%s2151 + $0x18] sm:$0xf]
        %v2159 = vld [vmem:[%s2151 + $0x1c] sm:$0xf]
        %v2160 = vld [vmem:[%s2151 + $0x20] sm:$0xf]
        %v2161 = vld [vmem:[%s2151 + $0x24] sm:$0xf]
        %v2162 = vld [vmem:[%s2151 + $0x28] sm:$0xf]
        %v2163 = vld [vmem:[%s2151 + $0x2c] sm:$0xf]
        %v2164 = vld [vmem:[%s2151 + $0x30] sm:$0xf]
        %v2165 = vld [vmem:[%s2151 + $0x34] sm:$0xf]
        %v2166 = vld [vmem:[%s2151 + $0x38] sm:$0xf]
        %v2167 = vld [vmem:[%s2151 + $0x3c] sm:$0xf]
        %v2168 = vld [vmem:[%s2151 + $0x40] sm:$0xf]
        %v2169 = vld [vmem:[%s2151 + $0x44] sm:$0xf]
        %v2170 = vld [vmem:[%s2151 + $0x48] sm:$0xf]
        %v2171 = vld [vmem:[%s2151 + $0x4c] sm:$0xf]
        %v2172 = vld [vmem:[%s2151 + $0x50] sm:$0xf]
        %v2173 = vld [vmem:[%s2151 + $0x54] sm:$0xf]
        %v2174 = vld [vmem:[%s2151 + $0x58] sm:$0xf]
        %v2175 = vld [vmem:[%s2151 + $0x5c] sm:$0xf]
        %v2192 = vunpack.c.l.b16 %v2135
        %v2193 = vunpack.c.h.b16 %v2135
        %v2194 = vunpack.c.l.b16 %v2136
        %v2195 = vunpack.c.h.b16 %v2136
        %v2196 = vunpack.c.l.b16 %v2137
        %v2197 = vunpack.c.h.b16 %v2137
        %v2198 = vunpack.c.l.b16 %v2138
        %v2199 = vunpack.c.h.b16 %v2138
        %v2200 = vunpack.c.l.b16 %v2139
        %v2201 = vunpack.c.h.b16 %v2139
        %v2202 = vunpack.c.l.b16 %v2140
        %v2203 = vunpack.c.h.b16 %v2140
        %v2204 = vunpack.c.l.b16 %v2141
        %v2205 = vunpack.c.h.b16 %v2141
        %v2206 = vunpack.c.l.b16 %v2142
        %v2207 = vunpack.c.h.b16 %v2142
        %v2208 = vunpack.c.l.b16 %v2143
        %v2209 = vunpack.c.h.b16 %v2143
        %v2210 = vunpack.c.l.b16 %v2144
        %v2211 = vunpack.c.h.b16 %v2144
        %v2212 = vunpack.c.l.b16 %v2145
        %v2213 = vunpack.c.h.b16 %v2145
        %v2214 = vunpack.c.l.b16 %v2146
        %v2215 = vunpack.c.h.b16 %v2146
        %v2216 = vunpack.c.l.b16 %v2147
        %v2217 = vunpack.c.h.b16 %v2147
        %v2218 = vunpack.c.l.b16 %v2148
        %v2219 = vunpack.c.h.b16 %v2148
        %v2220 = vunpack.c.l.b16 %v2149
        %v2221 = vunpack.c.h.b16 %v2149
        %v2222 = vunpack.c.l.b16 %v2150
        %v2223 = vunpack.c.h.b16 %v2150
        %v2224 = vpack.c.b16 %v2194, %v2192
        %v2225 = vpack.c.b16 %v2195, %v2193
        %v2226 = vpack.c.b16 %v2198, %v2196
        %v2227 = vpack.c.b16 %v2199, %v2197
        %v2228 = vpack.c.b16 %v2202, %v2200
        %v2229 = vpack.c.b16 %v2203, %v2201
        %v2230 = vpack.c.b16 %v2206, %v2204
        %v2231 = vpack.c.b16 %v2207, %v2205
        %v2232 = vpack.c.b16 %v2210, %v2208
        %v2233 = vpack.c.b16 %v2211, %v2209
        %v2234 = vpack.c.b16 %v2214, %v2212
        %v2235 = vpack.c.b16 %v2215, %v2213
        %v2236 = vpack.c.b16 %v2218, %v2216
        %v2237 = vpack.c.b16 %v2219, %v2217
        %v2238 = vpack.c.b16 %v2222, %v2220
        %v2239 = vpack.c.b16 %v2223, %v2221
        %v2272 = vunpack.c.l.b16 %v2152
        %v2273 = vunpack.c.l.b16 %v2153
        %v2274 = vunpack.c.l.b16 %v2154
        %v2275 = vunpack.c.l.b16 %v2155
        %v2276 = vunpack.c.l.b16 %v2156
        %v2277 = vunpack.c.l.b16 %v2157
        %v2278 = vunpack.c.l.b16 %v2158
        %v2279 = vunpack.c.l.b16 %v2159
        %v2280 = vunpack.c.l.b16 %v2160
        %v2281 = vunpack.c.l.b16 %v2161
        %v2282 = vunpack.c.l.b16 %v2162
        %v2283 = vunpack.c.l.b16 %v2163
        %v2284 = vunpack.c.l.b16 %v2164
        %v2285 = vunpack.c.l.b16 %v2165
        %v2286 = vunpack.c.l.b16 %v2166
        %v2287 = vunpack.c.l.b16 %v2167
        %v2288 = vunpack.c.l.b16 %v2168
        %v2289 = vunpack.c.l.b16 %v2169
        %v2290 = vunpack.c.l.b16 %v2170
        %v2291 = vunpack.c.l.b16 %v2171
        %v2292 = vunpack.c.l.b16 %v2172
        %v2293 = vunpack.c.l.b16 %v2173
        %v2294 = vunpack.c.l.b16 %v2174
        %v2295 = vunpack.c.l.b16 %v2175
        %v2296 = vpack.c.b16 %v2273, %v2272
        %v2297 = vpack.c.b16 %v2275, %v2274
        %v2298 = vpack.c.b16 %v2277, %v2276
        %v2299 = vpack.c.b16 %v2279, %v2278
        %v2300 = vpack.c.b16 %v2281, %v2280
        %v2301 = vpack.c.b16 %v2283, %v2282
        %v2302 = vpack.c.b16 %v2285, %v2284
        %v2303 = vpack.c.b16 %v2287, %v2286
        %v2304 = vpack.c.b16 %v2289, %v2288
        %v2305 = vpack.c.b16 %v2291, %v2290
        %v2306 = vpack.c.b16 %v2293, %v2292
        %v2307 = vpack.c.b16 %v2295, %v2294
        %v2321 = vsel %vm1184, %v2225, 0
        %v2324 = vsel %vm1184, %v2227, 0
        %v2327 = vsel %vm1184, %v2229, 0
        %v2330 = vsel %vm1184, %v2231, 0
        %v2333 = vsel %vm1184, %v2233, 0
        %v2336 = vsel %vm1184, %v2235, 0
        %v2339 = vsel %vm1184, %v2237, 0
        %v2342 = vsel %vm1184, %v2239, 0
        %2344 = vmatpush.bf16.msra.mxu0 %v2303
        %2345 = vmatpush.bf16.msra.mxu0 %v2302
        %2346 = vmatpush.bf16.msra.mxu0 %v2301
        %2347 = vmatpush.bf16.msra.mxu0 %v2300
        %2348 = vmatpush.bf16.msra.mxu0 %v2299
        %2349 = vmatpush.bf16.msra.mxu0 %v2298
        %2350 = vmatpush.bf16.msra.mxu0 %v2297
        %2351 = vmatpush.bf16.msra.mxu0 %v2296
        %2352 = vmatmul.bf16.gmra.mxu0 %v2224
        %v2353 = vpop.f32.mrf.mxu0
        %v2354 = vadd.f32 0.0, %v2353
        %v2355 = vpop.f32.mrf.mxu0
        %v2356 = vadd.f32 0.0, %v2355
        %2357 = vmatmul.bf16.gmra.mxu0 %v2226
        %v2358 = vpop.f32.mrf.mxu0
        %v2359 = vadd.f32 0.0, %v2358
        %v2360 = vpop.f32.mrf.mxu0
        %v2361 = vadd.f32 0.0, %v2360
        %2362 = vmatmul.bf16.gmra.mxu0 %v2228
        %v2363 = vpop.f32.mrf.mxu0
        %v2364 = vadd.f32 0.0, %v2363
        %v2365 = vpop.f32.mrf.mxu0
        %v2366 = vadd.f32 0.0, %v2365
        %2367 = vmatmul.bf16.gmra.mxu0 %v2230
        %v2368 = vpop.f32.mrf.mxu0
        %v2369 = vadd.f32 0.0, %v2368
        %v2370 = vpop.f32.mrf.mxu0
        %v2371 = vadd.f32 0.0, %v2370
        %2372 = vmatmul.bf16.gmra.mxu0 %v2232
        %v2373 = vpop.f32.mrf.mxu0
        %v2374 = vadd.f32 0.0, %v2373
        %v2375 = vpop.f32.mrf.mxu0
        %v2376 = vadd.f32 0.0, %v2375
        %2377 = vmatmul.bf16.gmra.mxu0 %v2234
        %v2378 = vpop.f32.mrf.mxu0
        %v2379 = vadd.f32 0.0, %v2378
        %v2380 = vpop.f32.mrf.mxu0
        %v2381 = vadd.f32 0.0, %v2380
        %2382 = vmatmul.bf16.gmra.mxu0 %v2236
        %v2383 = vpop.f32.mrf.mxu0
        %v2384 = vadd.f32 0.0, %v2383
        %v2385 = vpop.f32.mrf.mxu0
        %v2386 = vadd.f32 0.0, %v2385
        %2387 = vmatmul.bf16.gmra.mxu0 %v2238
        %v2388 = vpop.f32.mrf.mxu0
        %v2389 = vadd.f32 0.0, %v2388
        %v2390 = vpop.f32.mrf.mxu0
        %v2391 = vadd.f32 0.0, %v2390
        %2392 = vdwg.mxu0
        %2393 = vmatpush.bf16.msra.mxu0 0
        %2394 = vmatpush.bf16.msra.mxu0 0
        %2395 = vmatpush.bf16.msra.mxu0 0
        %2396 = vmatpush.bf16.msra.mxu0 0
        %2397 = vmatpush.bf16.msra.mxu0 %v2307
        %2398 = vmatpush.bf16.msra.mxu0 %v2306
        %2399 = vmatpush.bf16.msra.mxu0 %v2305
        %2400 = vmatpush.bf16.msra.mxu0 %v2304
        %2401 = vmatmul.bf16.gmra.mxu0 %v2321
        %v2402 = vpop.f32.mrf.mxu0
        %v2403 = vadd.f32 %v2354, %v2402
        %v2404 = vpop.f32.mrf.mxu0
        %v2405 = vadd.f32 %v2356, %v2404
        %2406 = vmatmul.bf16.gmra.mxu0 %v2324
        %v2407 = vpop.f32.mrf.mxu0
        %v2408 = vadd.f32 %v2359, %v2407
        %v2409 = vpop.f32.mrf.mxu0
        %v2410 = vadd.f32 %v2361, %v2409
        %2411 = vmatmul.bf16.gmra.mxu0 %v2327
        %v2412 = vpop.f32.mrf.mxu0
        %v2413 = vadd.f32 %v2364, %v2412
        %v2414 = vpop.f32.mrf.mxu0
        %v2415 = vadd.f32 %v2366, %v2414
        %2416 = vmatmul.bf16.gmra.mxu0 %v2330
        %v2417 = vpop.f32.mrf.mxu0
        %v2418 = vadd.f32 %v2369, %v2417
        %v2419 = vpop.f32.mrf.mxu0
        %v2420 = vadd.f32 %v2371, %v2419
        %2421 = vmatmul.bf16.gmra.mxu0 %v2333
        %v2422 = vpop.f32.mrf.mxu0
        %v2423 = vadd.f32 %v2374, %v2422
        %v2424 = vpop.f32.mrf.mxu0
        %v2425 = vadd.f32 %v2376, %v2424
        %2426 = vmatmul.bf16.gmra.mxu0 %v2336
        %v2427 = vpop.f32.mrf.mxu0
        %v2428 = vadd.f32 %v2379, %v2427
        %v2429 = vpop.f32.mrf.mxu0
        %v2430 = vadd.f32 %v2381, %v2429
        %2431 = vmatmul.bf16.gmra.mxu0 %v2339
        %v2432 = vpop.f32.mrf.mxu0
        %v2433 = vadd.f32 %v2384, %v2432
        %v2434 = vpop.f32.mrf.mxu0
        %v2435 = vadd.f32 %v2386, %v2434
        %2436 = vmatmul.bf16.gmra.mxu0 %v2342
        %v2437 = vpop.f32.mrf.mxu0
        %v2438 = vadd.f32 %v2389, %v2437
        %v2439 = vpop.f32.mrf.mxu0
        %v2440 = vadd.f32 %v2391, %v2439
        %2441 = vdwg.mxu0
        %v2442 = vadd.f32 %v2119, %v2403
        %v2443 = vadd.f32 %v2120, %v2405
        %v2444 = vadd.f32 %v2121, %v2408
        %v2445 = vadd.f32 %v2122, %v2410
        %v2446 = vadd.f32 %v2123, %v2413
        %v2447 = vadd.f32 %v2124, %v2415
        %v2448 = vadd.f32 %v2125, %v2418
        %v2449 = vadd.f32 %v2126, %v2420
        %v2450 = vadd.f32 %v2127, %v2423
        %v2451 = vadd.f32 %v2128, %v2425
        %v2452 = vadd.f32 %v2129, %v2428
        %v2453 = vadd.f32 %v2130, %v2430
        %v2454 = vadd.f32 %v2131, %v2433
        %v2455 = vadd.f32 %v2132, %v2435
        %v2456 = vadd.f32 %v2133, %v2438
        %v2457 = vadd.f32 %v2134, %v2440
        %v2458 = vld [vmem:[%s0 + $0x50] sm:$0xff]
        %v2459 = vld [vmem:[%s0 + $0x58] sm:$0xff]
        %v2460 = vld [vmem:[%s0 + $0x60] sm:$0xff]
        %v2461 = vld [vmem:[%s0 + $0x68] sm:$0xff]
        %v2462 = vld [vmem:[%s0 + $0x70] sm:$0xff]
        %v2463 = vld [vmem:[%s0 + $0x78] sm:$0xff]
        %v2464 = vld [vmem:[%s0 + $0x80] sm:$0xff]
        %v2465 = vld [vmem:[%s0 + $0x88] sm:$0xff]
        %v2466 = vld [vmem:[%s0 + $0x90] sm:$0xff]
        %v2467 = vld [vmem:[%s0 + $0x98] sm:$0xff]
        %v2468 = vld [vmem:[%s0 + $0xa0] sm:$0xff]
        %v2469 = vld [vmem:[%s0 + $0xa8] sm:$0xff]
        %v2470 = vld [vmem:[%s0 + $0xb0] sm:$0xff]
        %v2471 = vld [vmem:[%s0 + $0xb8] sm:$0xff]
        %v2472 = vld [vmem:[%s0 + $0xc0] sm:$0xff]
        %v2473 = vld [vmem:[%s0 + $0xc8] sm:$0xff]
        %s2474 = scalar_lea.vmem %s930, 480 [#allocation2]
        %v2475 = vld [vmem:[%s2474] sm:$0xf]
        %v2476 = vld [vmem:[%s2474 + $0x4] sm:$0xf]
        %v2477 = vld [vmem:[%s2474 + $0x8] sm:$0xf]
        %v2478 = vld [vmem:[%s2474 + $0xc] sm:$0xf]
        %v2479 = vld [vmem:[%s2474 + $0x10] sm:$0xf]
        %v2480 = vld [vmem:[%s2474 + $0x14] sm:$0xf]
        %v2481 = vld [vmem:[%s2474 + $0x18] sm:$0xf]
        %v2482 = vld [vmem:[%s2474 + $0x1c] sm:$0xf]
        %v2483 = vld [vmem:[%s2474 + $0x20] sm:$0xf]
        %v2484 = vld [vmem:[%s2474 + $0x24] sm:$0xf]
        %v2485 = vld [vmem:[%s2474 + $0x28] sm:$0xf]
        %v2486 = vld [vmem:[%s2474 + $0x2c] sm:$0xf]
        %v2487 = vld [vmem:[%s2474 + $0x30] sm:$0xf]
        %v2488 = vld [vmem:[%s2474 + $0x34] sm:$0xf]
        %v2489 = vld [vmem:[%s2474 + $0x38] sm:$0xf]
        %v2490 = vld [vmem:[%s2474 + $0x3c] sm:$0xf]
        %v2491 = vld [vmem:[%s2474 + $0x40] sm:$0xf]
        %v2492 = vld [vmem:[%s2474 + $0x44] sm:$0xf]
        %v2493 = vld [vmem:[%s2474 + $0x48] sm:$0xf]
        %v2494 = vld [vmem:[%s2474 + $0x4c] sm:$0xf]
        %v2495 = vld [vmem:[%s2474 + $0x50] sm:$0xf]
        %v2496 = vld [vmem:[%s2474 + $0x54] sm:$0xf]
        %v2497 = vld [vmem:[%s2474 + $0x58] sm:$0xf]
        %v2498 = vld [vmem:[%s2474 + $0x5c] sm:$0xf]
        %v2515 = vunpack.c.l.b16 %v2458
        %v2516 = vunpack.c.h.b16 %v2458
        %v2517 = vunpack.c.l.b16 %v2459
        %v2518 = vunpack.c.h.b16 %v2459
        %v2519 = vunpack.c.l.b16 %v2460
        %v2520 = vunpack.c.h.b16 %v2460
        %v2521 = vunpack.c.l.b16 %v2461
        %v2522 = vunpack.c.h.b16 %v2461
        %v2523 = vunpack.c.l.b16 %v2462
        %v2524 = vunpack.c.h.b16 %v2462
        %v2525 = vunpack.c.l.b16 %v2463
        %v2526 = vunpack.c.h.b16 %v2463
        %v2527 = vunpack.c.l.b16 %v2464
        %v2528 = vunpack.c.h.b16 %v2464
        %v2529 = vunpack.c.l.b16 %v2465
        %v2530 = vunpack.c.h.b16 %v2465
        %v2531 = vunpack.c.l.b16 %v2466
        %v2532 = vunpack.c.h.b16 %v2466
        %v2533 = vunpack.c.l.b16 %v2467
        %v2534 = vunpack.c.h.b16 %v2467
        %v2535 = vunpack.c.l.b16 %v2468
        %v2536 = vunpack.c.h.b16 %v2468
        %v2537 = vunpack.c.l.b16 %v2469
        %v2538 = vunpack.c.h.b16 %v2469
        %v2539 = vunpack.c.l.b16 %v2470
        %v2540 = vunpack.c.h.b16 %v2470
        %v2541 = vunpack.c.l.b16 %v2471
        %v2542 = vunpack.c.h.b16 %v2471
        %v2543 = vunpack.c.l.b16 %v2472
        %v2544 = vunpack.c.h.b16 %v2472
        %v2545 = vunpack.c.l.b16 %v2473
        %v2546 = vunpack.c.h.b16 %v2473
        %v2547 = vpack.c.b16 %v2517, %v2515
        %v2548 = vpack.c.b16 %v2518, %v2516
        %v2549 = vpack.c.b16 %v2521, %v2519
        %v2550 = vpack.c.b16 %v2522, %v2520
        %v2551 = vpack.c.b16 %v2525, %v2523
        %v2552 = vpack.c.b16 %v2526, %v2524
        %v2553 = vpack.c.b16 %v2529, %v2527
        %v2554 = vpack.c.b16 %v2530, %v2528
        %v2555 = vpack.c.b16 %v2533, %v2531
        %v2556 = vpack.c.b16 %v2534, %v2532
        %v2557 = vpack.c.b16 %v2537, %v2535
        %v2558 = vpack.c.b16 %v2538, %v2536
        %v2559 = vpack.c.b16 %v2541, %v2539
        %v2560 = vpack.c.b16 %v2542, %v2540
        %v2561 = vpack.c.b16 %v2545, %v2543
        %v2562 = vpack.c.b16 %v2546, %v2544
        %v2595 = vunpack.c.l.b16 %v2475
        %v2596 = vunpack.c.l.b16 %v2476
        %v2597 = vunpack.c.l.b16 %v2477
        %v2598 = vunpack.c.l.b16 %v2478
        %v2599 = vunpack.c.l.b16 %v2479
        %v2600 = vunpack.c.l.b16 %v2480
        %v2601 = vunpack.c.l.b16 %v2481
        %v2602 = vunpack.c.l.b16 %v2482
        %v2603 = vunpack.c.l.b16 %v2483
        %v2604 = vunpack.c.l.b16 %v2484
        %v2605 = vunpack.c.l.b16 %v2485
        %v2606 = vunpack.c.l.b16 %v2486
        %v2607 = vunpack.c.l.b16 %v2487
        %v2608 = vunpack.c.l.b16 %v2488
        %v2609 = vunpack.c.l.b16 %v2489
        %v2610 = vunpack.c.l.b16 %v2490
        %v2611 = vunpack.c.l.b16 %v2491
        %v2612 = vunpack.c.l.b16 %v2492
        %v2613 = vunpack.c.l.b16 %v2493
        %v2614 = vunpack.c.l.b16 %v2494
        %v2615 = vunpack.c.l.b16 %v2495
        %v2616 = vunpack.c.l.b16 %v2496
        %v2617 = vunpack.c.l.b16 %v2497
        %v2618 = vunpack.c.l.b16 %v2498
        %v2619 = vpack.c.b16 %v2596, %v2595
        %v2620 = vpack.c.b16 %v2598, %v2597
        %v2621 = vpack.c.b16 %v2600, %v2599
        %v2622 = vpack.c.b16 %v2602, %v2601
        %v2623 = vpack.c.b16 %v2604, %v2603
        %v2624 = vpack.c.b16 %v2606, %v2605
        %v2625 = vpack.c.b16 %v2608, %v2607
        %v2626 = vpack.c.b16 %v2610, %v2609
        %v2627 = vpack.c.b16 %v2612, %v2611
        %v2628 = vpack.c.b16 %v2614, %v2613
        %v2629 = vpack.c.b16 %v2616, %v2615
        %v2630 = vpack.c.b16 %v2618, %v2617
        %v2644 = vsel %vm1184, %v2548, 0
        %v2647 = vsel %vm1184, %v2550, 0
        %v2650 = vsel %vm1184, %v2552, 0
        %v2653 = vsel %vm1184, %v2554, 0
        %v2656 = vsel %vm1184, %v2556, 0
        %v2659 = vsel %vm1184, %v2558, 0
        %v2662 = vsel %vm1184, %v2560, 0
        %v2665 = vsel %vm1184, %v2562, 0
        %2667 = vmatpush.bf16.msra.mxu0 %v2626
        %2668 = vmatpush.bf16.msra.mxu0 %v2625
        %2669 = vmatpush.bf16.msra.mxu0 %v2624
        %2670 = vmatpush.bf16.msra.mxu0 %v2623
        %2671 = vmatpush.bf16.msra.mxu0 %v2622
        %2672 = vmatpush.bf16.msra.mxu0 %v2621
        %2673 = vmatpush.bf16.msra.mxu0 %v2620
        %2674 = vmatpush.bf16.msra.mxu0 %v2619
        %2675 = vmatmul.bf16.gmra.mxu0 %v2547
        %v2676 = vpop.f32.mrf.mxu0
        %v2677 = vadd.f32 0.0, %v2676
        %v2678 = vpop.f32.mrf.mxu0
        %v2679 = vadd.f32 0.0, %v2678
        %2680 = vmatmul.bf16.gmra.mxu0 %v2549
        %v2681 = vpop.f32.mrf.mxu0
        %v2682 = vadd.f32 0.0, %v2681
        %v2683 = vpop.f32.mrf.mxu0
        %v2684 = vadd.f32 0.0, %v2683
        %2685 = vmatmul.bf16.gmra.mxu0 %v2551
        %v2686 = vpop.f32.mrf.mxu0
        %v2687 = vadd.f32 0.0, %v2686
        %v2688 = vpop.f32.mrf.mxu0
        %v2689 = vadd.f32 0.0, %v2688
        %2690 = vmatmul.bf16.gmra.mxu0 %v2553
        %v2691 = vpop.f32.mrf.mxu0
        %v2692 = vadd.f32 0.0, %v2691
        %v2693 = vpop.f32.mrf.mxu0
        %v2694 = vadd.f32 0.0, %v2693
        %2695 = vmatmul.bf16.gmra.mxu0 %v2555
        %v2696 = vpop.f32.mrf.mxu0
        %v2697 = vadd.f32 0.0, %v2696
        %v2698 = vpop.f32.mrf.mxu0
        %v2699 = vadd.f32 0.0, %v2698
        %2700 = vmatmul.bf16.gmra.mxu0 %v2557
        %v2701 = vpop.f32.mrf.mxu0
        %v2702 = vadd.f32 0.0, %v2701
        %v2703 = vpop.f32.mrf.mxu0
        %v2704 = vadd.f32 0.0, %v2703
        %2705 = vmatmul.bf16.gmra.mxu0 %v2559
        %v2706 = vpop.f32.mrf.mxu0
        %v2707 = vadd.f32 0.0, %v2706
        %v2708 = vpop.f32.mrf.mxu0
        %v2709 = vadd.f32 0.0, %v2708
        %2710 = vmatmul.bf16.gmra.mxu0 %v2561
        %v2711 = vpop.f32.mrf.mxu0
        %v2712 = vadd.f32 0.0, %v2711
        %v2713 = vpop.f32.mrf.mxu0
        %v2714 = vadd.f32 0.0, %v2713
        %2715 = vdwg.mxu0
        %2716 = vmatpush.bf16.msra.mxu0 0
        %2717 = vmatpush.bf16.msra.mxu0 0
        %2718 = vmatpush.bf16.msra.mxu0 0
        %2719 = vmatpush.bf16.msra.mxu0 0
        %2720 = vmatpush.bf16.msra.mxu0 %v2630
        %2721 = vmatpush.bf16.msra.mxu0 %v2629
        %2722 = vmatpush.bf16.msra.mxu0 %v2628
        %2723 = vmatpush.bf16.msra.mxu0 %v2627
        %2724 = vmatmul.bf16.gmra.mxu0 %v2644
        %v2725 = vpop.f32.mrf.mxu0
        %v2726 = vadd.f32 %v2677, %v2725
        %v2727 = vpop.f32.mrf.mxu0
        %v2728 = vadd.f32 %v2679, %v2727
        %2729 = vmatmul.bf16.gmra.mxu0 %v2647
        %v2730 = vpop.f32.mrf.mxu0
        %v2731 = vadd.f32 %v2682, %v2730
        %v2732 = vpop.f32.mrf.mxu0
        %v2733 = vadd.f32 %v2684, %v2732
        %2734 = vmatmul.bf16.gmra.mxu0 %v2650
        %v2735 = vpop.f32.mrf.mxu0
        %v2736 = vadd.f32 %v2687, %v2735
        %v2737 = vpop.f32.mrf.mxu0
        %v2738 = vadd.f32 %v2689, %v2737
        %2739 = vmatmul.bf16.gmra.mxu0 %v2653
        %v2740 = vpop.f32.mrf.mxu0
        %v2741 = vadd.f32 %v2692, %v2740
        %v2742 = vpop.f32.mrf.mxu0
        %v2743 = vadd.f32 %v2694, %v2742
        %2744 = vmatmul.bf16.gmra.mxu0 %v2656
        %v2745 = vpop.f32.mrf.mxu0
        %v2746 = vadd.f32 %v2697, %v2745
        %v2747 = vpop.f32.mrf.mxu0
        %v2748 = vadd.f32 %v2699, %v2747
        %2749 = vmatmul.bf16.gmra.mxu0 %v2659
        %v2750 = vpop.f32.mrf.mxu0
        %v2751 = vadd.f32 %v2702, %v2750
        %v2752 = vpop.f32.mrf.mxu0
        %v2753 = vadd.f32 %v2704, %v2752
        %2754 = vmatmul.bf16.gmra.mxu0 %v2662
        %v2755 = vpop.f32.mrf.mxu0
        %v2756 = vadd.f32 %v2707, %v2755
        %v2757 = vpop.f32.mrf.mxu0
        %v2758 = vadd.f32 %v2709, %v2757
        %2759 = vmatmul.bf16.gmra.mxu0 %v2665
        %v2760 = vpop.f32.mrf.mxu0
        %v2761 = vadd.f32 %v2712, %v2760
        %v2762 = vpop.f32.mrf.mxu0
        %v2763 = vadd.f32 %v2714, %v2762
        %2764 = vdwg.mxu0
        %v2765 = vadd.f32 %v2442, %v2726
        %v2766 = vadd.f32 %v2443, %v2728
        %v2767 = vadd.f32 %v2444, %v2731
        %v2768 = vadd.f32 %v2445, %v2733
        %v2769 = vadd.f32 %v2446, %v2736
        %v2770 = vadd.f32 %v2447, %v2738
        %v2771 = vadd.f32 %v2448, %v2741
        %v2772 = vadd.f32 %v2449, %v2743
        %v2773 = vadd.f32 %v2450, %v2746
        %v2774 = vadd.f32 %v2451, %v2748
        %v2775 = vadd.f32 %v2452, %v2751
        %v2776 = vadd.f32 %v2453, %v2753
        %v2777 = vadd.f32 %v2454, %v2756
        %v2778 = vadd.f32 %v2455, %v2758
        %v2779 = vadd.f32 %v2456, %v2761
        %v2780 = vadd.f32 %v2457, %v2763
        %v2781 = vld [vmem:[%s0 + $0x60] sm:$0xff]
        %v2782 = vld [vmem:[%s0 + $0x68] sm:$0xff]
        %v2783 = vld [vmem:[%s0 + $0x70] sm:$0xff]
        %v2784 = vld [vmem:[%s0 + $0x78] sm:$0xff]
        %v2785 = vld [vmem:[%s0 + $0x80] sm:$0xff]
        %v2786 = vld [vmem:[%s0 + $0x88] sm:$0xff]
        %v2787 = vld [vmem:[%s0 + $0x90] sm:$0xff]
        %v2788 = vld [vmem:[%s0 + $0x98] sm:$0xff]
        %v2789 = vld [vmem:[%s0 + $0xa0] sm:$0xff]
        %v2790 = vld [vmem:[%s0 + $0xa8] sm:$0xff]
        %v2791 = vld [vmem:[%s0 + $0xb0] sm:$0xff]
        %v2792 = vld [vmem:[%s0 + $0xb8] sm:$0xff]
        %v2793 = vld [vmem:[%s0 + $0xc0] sm:$0xff]
        %v2794 = vld [vmem:[%s0 + $0xc8] sm:$0xff]
        %v2795 = vld [vmem:[%s0 + $0xd0] sm:$0xff]
        %v2796 = vld [vmem:[%s0 + $0xd8] sm:$0xff]
        %s2797 = scalar_lea.vmem %s930, 576 [#allocation2]
        %v2798 = vld [vmem:[%s2797] sm:$0xf]
        %v2799 = vld [vmem:[%s2797 + $0x4] sm:$0xf]
        %v2800 = vld [vmem:[%s2797 + $0x8] sm:$0xf]
        %v2801 = vld [vmem:[%s2797 + $0xc] sm:$0xf]
        %v2802 = vld [vmem:[%s2797 + $0x10] sm:$0xf]
        %v2803 = vld [vmem:[%s2797 + $0x14] sm:$0xf]
        %v2804 = vld [vmem:[%s2797 + $0x18] sm:$0xf]
        %v2805 = vld [vmem:[%s2797 + $0x1c] sm:$0xf]
        %v2806 = vld [vmem:[%s2797 + $0x20] sm:$0xf]
        %v2807 = vld [vmem:[%s2797 + $0x24] sm:$0xf]
        %v2808 = vld [vmem:[%s2797 + $0x28] sm:$0xf]
        %v2809 = vld [vmem:[%s2797 + $0x2c] sm:$0xf]
        %v2810 = vld [vmem:[%s2797 + $0x30] sm:$0xf]
        %v2811 = vld [vmem:[%s2797 + $0x34] sm:$0xf]
        %v2812 = vld [vmem:[%s2797 + $0x38] sm:$0xf]
        %v2813 = vld [vmem:[%s2797 + $0x3c] sm:$0xf]
        %v2814 = vld [vmem:[%s2797 + $0x40] sm:$0xf]
        %v2815 = vld [vmem:[%s2797 + $0x44] sm:$0xf]
        %v2816 = vld [vmem:[%s2797 + $0x48] sm:$0xf]
        %v2817 = vld [vmem:[%s2797 + $0x4c] sm:$0xf]
        %v2818 = vld [vmem:[%s2797 + $0x50] sm:$0xf]
        %v2819 = vld [vmem:[%s2797 + $0x54] sm:$0xf]
        %v2820 = vld [vmem:[%s2797 + $0x58] sm:$0xf]
        %v2821 = vld [vmem:[%s2797 + $0x5c] sm:$0xf]
        %v2838 = vunpack.c.l.b16 %v2781
        %v2839 = vunpack.c.h.b16 %v2781
        %v2840 = vunpack.c.l.b16 %v2782
        %v2841 = vunpack.c.h.b16 %v2782
        %v2842 = vunpack.c.l.b16 %v2783
        %v2843 = vunpack.c.h.b16 %v2783
        %v2844 = vunpack.c.l.b16 %v2784
        %v2845 = vunpack.c.h.b16 %v2784
        %v2846 = vunpack.c.l.b16 %v2785
        %v2847 = vunpack.c.h.b16 %v2785
        %v2848 = vunpack.c.l.b16 %v2786
        %v2849 = vunpack.c.h.b16 %v2786
        %v2850 = vunpack.c.l.b16 %v2787
        %v2851 = vunpack.c.h.b16 %v2787
        %v2852 = vunpack.c.l.b16 %v2788
        %v2853 = vunpack.c.h.b16 %v2788
        %v2854 = vunpack.c.l.b16 %v2789
        %v2855 = vunpack.c.h.b16 %v2789
        %v2856 = vunpack.c.l.b16 %v2790
        %v2857 = vunpack.c.h.b16 %v2790
        %v2858 = vunpack.c.l.b16 %v2791
        %v2859 = vunpack.c.h.b16 %v2791
        %v2860 = vunpack.c.l.b16 %v2792
        %v2861 = vunpack.c.h.b16 %v2792
        %v2862 = vunpack.c.l.b16 %v2793
        %v2863 = vunpack.c.h.b16 %v2793
        %v2864 = vunpack.c.l.b16 %v2794
        %v2865 = vunpack.c.h.b16 %v2794
        %v2866 = vunpack.c.l.b16 %v2795
        %v2867 = vunpack.c.h.b16 %v2795
        %v2868 = vunpack.c.l.b16 %v2796
        %v2869 = vunpack.c.h.b16 %v2796
        %v2870 = vpack.c.b16 %v2840, %v2838
        %v2871 = vpack.c.b16 %v2841, %v2839
        %v2872 = vpack.c.b16 %v2844, %v2842
        %v2873 = vpack.c.b16 %v2845, %v2843
        %v2874 = vpack.c.b16 %v2848, %v2846
        %v2875 = vpack.c.b16 %v2849, %v2847
        %v2876 = vpack.c.b16 %v2852, %v2850
        %v2877 = vpack.c.b16 %v2853, %v2851
        %v2878 = vpack.c.b16 %v2856, %v2854
        %v2879 = vpack.c.b16 %v2857, %v2855
        %v2880 = vpack.c.b16 %v2860, %v2858
        %v2881 = vpack.c.b16 %v2861, %v2859
        %v2882 = vpack.c.b16 %v2864, %v2862
        %v2883 = vpack.c.b16 %v2865, %v2863
        %v2884 = vpack.c.b16 %v2868, %v2866
        %v2885 = vpack.c.b16 %v2869, %v2867
        %v2918 = vunpack.c.l.b16 %v2798
        %v2919 = vunpack.c.l.b16 %v2799
        %v2920 = vunpack.c.l.b16 %v2800
        %v2921 = vunpack.c.l.b16 %v2801
        %v2922 = vunpack.c.l.b16 %v2802
        %v2923 = vunpack.c.l.b16 %v2803
        %v2924 = vunpack.c.l.b16 %v2804
        %v2925 = vunpack.c.l.b16 %v2805
        %v2926 = vunpack.c.l.b16 %v2806
        %v2927 = vunpack.c.l.b16 %v2807
        %v2928 = vunpack.c.l.b16 %v2808
        %v2929 = vunpack.c.l.b16 %v2809
        %v2930 = vunpack.c.l.b16 %v2810
        %v2931 = vunpack.c.l.b16 %v2811
        %v2932 = vunpack.c.l.b16 %v2812
        %v2933 = vunpack.c.l.b16 %v2813
        %v2934 = vunpack.c.l.b16 %v2814
        %v2935 = vunpack.c.l.b16 %v2815
        %v2936 = vunpack.c.l.b16 %v2816
        %v2937 = vunpack.c.l.b16 %v2817
        %v2938 = vunpack.c.l.b16 %v2818
        %v2939 = vunpack.c.l.b16 %v2819
        %v2940 = vunpack.c.l.b16 %v2820
        %v2941 = vunpack.c.l.b16 %v2821
        %v2942 = vpack.c.b16 %v2919, %v2918
        %v2943 = vpack.c.b16 %v2921, %v2920
        %v2944 = vpack.c.b16 %v2923, %v2922
        %v2945 = vpack.c.b16 %v2925, %v2924
        %v2946 = vpack.c.b16 %v2927, %v2926
        %v2947 = vpack.c.b16 %v2929, %v2928
        %v2948 = vpack.c.b16 %v2931, %v2930
        %v2949 = vpack.c.b16 %v2933, %v2932
        %v2950 = vpack.c.b16 %v2935, %v2934
        %v2951 = vpack.c.b16 %v2937, %v2936
        %v2952 = vpack.c.b16 %v2939, %v2938
        %v2953 = vpack.c.b16 %v2941, %v2940
        %v2967 = vsel %vm1184, %v2871, 0
        %v2970 = vsel %vm1184, %v2873, 0
        %v2973 = vsel %vm1184, %v2875, 0
        %v2976 = vsel %vm1184, %v2877, 0
        %v2979 = vsel %vm1184, %v2879, 0
        %v2982 = vsel %vm1184, %v2881, 0
        %v2985 = vsel %vm1184, %v2883, 0
        %v2988 = vsel %vm1184, %v2885, 0
        %2990 = vmatpush.bf16.msra.mxu0 %v2949
        %2991 = vmatpush.bf16.msra.mxu0 %v2948
        %2992 = vmatpush.bf16.msra.mxu0 %v2947
        %2993 = vmatpush.bf16.msra.mxu0 %v2946
        %2994 = vmatpush.bf16.msra.mxu0 %v2945
        %2995 = vmatpush.bf16.msra.mxu0 %v2944
        %2996 = vmatpush.bf16.msra.mxu0 %v2943
        %2997 = vmatpush.bf16.msra.mxu0 %v2942
        %2998 = vmatmul.bf16.gmra.mxu0 %v2870
        %v2999 = vpop.f32.mrf.mxu0
        %v3000 = vadd.f32 0.0, %v2999
        %v3001 = vpop.f32.mrf.mxu0
        %v3002 = vadd.f32 0.0, %v3001
        %3003 = vmatmul.bf16.gmra.mxu0 %v2872
        %v3004 = vpop.f32.mrf.mxu0
        %v3005 = vadd.f32 0.0, %v3004
        %v3006 = vpop.f32.mrf.mxu0
        %v3007 = vadd.f32 0.0, %v3006
        %3008 = vmatmul.bf16.gmra.mxu0 %v2874
        %v3009 = vpop.f32.mrf.mxu0
        %v3010 = vadd.f32 0.0, %v3009
        %v3011 = vpop.f32.mrf.mxu0
        %v3012 = vadd.f32 0.0, %v3011
        %3013 = vmatmul.bf16.gmra.mxu0 %v2876
        %v3014 = vpop.f32.mrf.mxu0
        %v3015 = vadd.f32 0.0, %v3014
        %v3016 = vpop.f32.mrf.mxu0
        %v3017 = vadd.f32 0.0, %v3016
        %3018 = vmatmul.bf16.gmra.mxu0 %v2878
        %v3019 = vpop.f32.mrf.mxu0
        %v3020 = vadd.f32 0.0, %v3019
        %v3021 = vpop.f32.mrf.mxu0
        %v3022 = vadd.f32 0.0, %v3021
        %3023 = vmatmul.bf16.gmra.mxu0 %v2880
        %v3024 = vpop.f32.mrf.mxu0
        %v3025 = vadd.f32 0.0, %v3024
        %v3026 = vpop.f32.mrf.mxu0
        %v3027 = vadd.f32 0.0, %v3026
        %3028 = vmatmul.bf16.gmra.mxu0 %v2882
        %v3029 = vpop.f32.mrf.mxu0
        %v3030 = vadd.f32 0.0, %v3029
        %v3031 = vpop.f32.mrf.mxu0
        %v3032 = vadd.f32 0.0, %v3031
        %3033 = vmatmul.bf16.gmra.mxu0 %v2884
        %v3034 = vpop.f32.mrf.mxu0
        %v3035 = vadd.f32 0.0, %v3034
        %v3036 = vpop.f32.mrf.mxu0
        %v3037 = vadd.f32 0.0, %v3036
        %3038 = vdwg.mxu0
        %3039 = vmatpush.bf16.msra.mxu0 0
        %3040 = vmatpush.bf16.msra.mxu0 0
        %3041 = vmatpush.bf16.msra.mxu0 0
        %3042 = vmatpush.bf16.msra.mxu0 0
        %3043 = vmatpush.bf16.msra.mxu0 %v2953
        %3044 = vmatpush.bf16.msra.mxu0 %v2952
        %3045 = vmatpush.bf16.msra.mxu0 %v2951
        %3046 = vmatpush.bf16.msra.mxu0 %v2950
        %3047 = vmatmul.bf16.gmra.mxu0 %v2967
        %v3048 = vpop.f32.mrf.mxu0
        %v3049 = vadd.f32 %v3000, %v3048
        %v3050 = vpop.f32.mrf.mxu0
        %v3051 = vadd.f32 %v3002, %v3050
        %3052 = vmatmul.bf16.gmra.mxu0 %v2970
        %v3053 = vpop.f32.mrf.mxu0
        %v3054 = vadd.f32 %v3005, %v3053
        %v3055 = vpop.f32.mrf.mxu0
        %v3056 = vadd.f32 %v3007, %v3055
        %3057 = vmatmul.bf16.gmra.mxu0 %v2973
        %v3058 = vpop.f32.mrf.mxu0
        %v3059 = vadd.f32 %v3010, %v3058
        %v3060 = vpop.f32.mrf.mxu0
        %v3061 = vadd.f32 %v3012, %v3060
        %3062 = vmatmul.bf16.gmra.mxu0 %v2976
        %v3063 = vpop.f32.mrf.mxu0
        %v3064 = vadd.f32 %v3015, %v3063
        %v3065 = vpop.f32.mrf.mxu0
        %v3066 = vadd.f32 %v3017, %v3065
        %3067 = vmatmul.bf16.gmra.mxu0 %v2979
        %v3068 = vpop.f32.mrf.mxu0
        %v3069 = vadd.f32 %v3020, %v3068
        %v3070 = vpop.f32.mrf.mxu0
        %v3071 = vadd.f32 %v3022, %v3070
        %3072 = vmatmul.bf16.gmra.mxu0 %v2982
        %v3073 = vpop.f32.mrf.mxu0
        %v3074 = vadd.f32 %v3025, %v3073
        %v3075 = vpop.f32.mrf.mxu0
        %v3076 = vadd.f32 %v3027, %v3075
        %3077 = vmatmul.bf16.gmra.mxu0 %v2985
        %v3078 = vpop.f32.mrf.mxu0
        %v3079 = vadd.f32 %v3030, %v3078
        %v3080 = vpop.f32.mrf.mxu0
        %v3081 = vadd.f32 %v3032, %v3080
        %3082 = vmatmul.bf16.gmra.mxu0 %v2988
        %v3083 = vpop.f32.mrf.mxu0
        %v3084 = vadd.f32 %v3035, %v3083
        %v3085 = vpop.f32.mrf.mxu0
        %v3086 = vadd.f32 %v3037, %v3085
        %3087 = vdwg.mxu0
        %v3088 = vadd.f32 %v2765, %v3049
        %v3089 = vadd.f32 %v2766, %v3051
        %v3090 = vadd.f32 %v2767, %v3054
        %v3091 = vadd.f32 %v2768, %v3056
        %v3092 = vadd.f32 %v2769, %v3059
        %v3093 = vadd.f32 %v2770, %v3061
        %v3094 = vadd.f32 %v2771, %v3064
        %v3095 = vadd.f32 %v2772, %v3066
        %v3096 = vadd.f32 %v2773, %v3069
        %v3097 = vadd.f32 %v2774, %v3071
        %v3098 = vadd.f32 %v2775, %v3074
        %v3099 = vadd.f32 %v2776, %v3076
        %v3100 = vadd.f32 %v2777, %v3079
        %v3101 = vadd.f32 %v2778, %v3081
        %v3102 = vadd.f32 %v2779, %v3084
        %v3103 = vadd.f32 %v2780, %v3086
        %v3104 = vld [vmem:[%s965] sm:$0x1]
        %v3106 = vperm.slane %v3104, 0
        %v3108 = vadd.f32 %v3088, %v3106
        %v3109 = vadd.f32 %v3089, %v3106
        %v3110 = vadd.f32 %v3090, %v3106
        %v3111 = vadd.f32 %v3091, %v3106
        %v3112 = vadd.f32 %v3092, %v3106
        %v3113 = vadd.f32 %v3093, %v3106
        %v3114 = vadd.f32 %v3094, %v3106
        %v3115 = vadd.f32 %v3095, %v3106
        %v3116 = vadd.f32 %v3096, %v3106
        %v3117 = vadd.f32 %v3097, %v3106
        %v3118 = vadd.f32 %v3098, %v3106
        %v3119 = vadd.f32 %v3099, %v3106
        %v3120 = vadd.f32 %v3100, %v3106
        %v3121 = vadd.f32 %v3101, %v3106
        %v3122 = vadd.f32 %v3102, %v3106
        %v3123 = vadd.f32 %v3103, %v3106
        %v3124 = vld [vmem:[%s968] sm:$0x1]
        %v3125 = vld [vmem:[%s971] sm:$0x1]
        %v3126 = vadd.f32 %v3108, %v3109
        %v3127 = vadd.f32 %v3126, %v3110
        %v3128 = vadd.f32 %v3127, %v3111
        %v3129 = vadd.f32 %v3128, %v3112
        %v3130 = vadd.f32 %v3129, %v3113
        %v3131 = vadd.f32 %v3130, %v3114
        %v3132 = vadd.f32 %v3131, %v3115
        %v3133 = vadd.f32 %v3132, %v3116
        %v3134 = vadd.f32 %v3133, %v3117
        %v3135 = vadd.f32 %v3134, %v3118
        %v3136 = vadd.f32 %v3135, %v3119
        %v3137 = vadd.f32 %v3136, %v3120
        %v3138 = vadd.f32 %v3137, %v3121
        %v3139 = vadd.f32 %v3138, %v3122
        %v3140 = vadd.f32 %v3139, %v3123
        %v3141 = vrot.slane %v3140, 4
        %v3142 = vadd.f32 %v3140, %v3141
        %v3143 = vrot.slane %v3142, 2
        %v3144 = vadd.f32 %v3142, %v3143
        %v3145 = vrot.slane %v3144, 1
        %v3146 = vadd.f32 %v3144, %v3145
        %v3147 = vmul.f32 %v3146, 0.0078125
        %v3148 = vsub.f32 %v3108, %v3147
        %v3149 = vsub.f32 %v3109, %v3147
        %v3150 = vsub.f32 %v3110, %v3147
        %v3151 = vsub.f32 %v3111, %v3147
        %v3152 = vsub.f32 %v3112, %v3147
        %v3153 = vsub.f32 %v3113, %v3147
        %v3154 = vsub.f32 %v3114, %v3147
        %v3155 = vsub.f32 %v3115, %v3147
        %v3156 = vsub.f32 %v3116, %v3147
        %v3157 = vsub.f32 %v3117, %v3147
        %v3158 = vsub.f32 %v3118, %v3147
        %v3159 = vsub.f32 %v3119, %v3147
        %v3160 = vsub.f32 %v3120, %v3147
        %v3161 = vsub.f32 %v3121, %v3147
        %v3162 = vsub.f32 %v3122, %v3147
        %v3163 = vsub.f32 %v3123, %v3147
        %v3164 = vmul.f32 %v3148, %v3148
        %v3165 = vmul.f32 %v3149, %v3149
        %v3166 = vmul.f32 %v3150, %v3150
        %v3167 = vmul.f32 %v3151, %v3151
        %v3168 = vmul.f32 %v3152, %v3152
        %v3169 = vmul.f32 %v3153, %v3153
        %v3170 = vmul.f32 %v3154, %v3154
        %v3171 = vmul.f32 %v3155, %v3155
        %v3172 = vmul.f32 %v3156, %v3156
        %v3173 = vmul.f32 %v3157, %v3157
        %v3174 = vmul.f32 %v3158, %v3158
        %v3175 = vmul.f32 %v3159, %v3159
        %v3176 = vmul.f32 %v3160, %v3160
        %v3177 = vmul.f32 %v3161, %v3161
        %v3178 = vmul.f32 %v3162, %v3162
        %v3179 = vmul.f32 %v3163, %v3163
        %v3180 = vadd.f32 %v3164, %v3165
        %v3181 = vadd.f32 %v3180, %v3166
        %v3182 = vadd.f32 %v3181, %v3167
        %v3183 = vadd.f32 %v3182, %v3168
        %v3184 = vadd.f32 %v3183, %v3169
        %v3185 = vadd.f32 %v3184, %v3170
        %v3186 = vadd.f32 %v3185, %v3171
        %v3187 = vadd.f32 %v3186, %v3172
        %v3188 = vadd.f32 %v3187, %v3173
        %v3189 = vadd.f32 %v3188, %v3174
        %v3190 = vadd.f32 %v3189, %v3175
        %v3191 = vadd.f32 %v3190, %v3176
        %v3192 = vadd.f32 %v3191, %v3177
        %v3193 = vadd.f32 %v3192, %v3178
        %v3194 = vadd.f32 %v3193, %v3179
        %v3195 = vrot.slane %v3194, 4
        %v3196 = vadd.f32 %v3194, %v3195
        %v3197 = vrot.slane %v3196, 2
        %v3198 = vadd.f32 %v3196, %v3197
        %v3199 = vrot.slane %v3198, 1
        %v3200 = vadd.f32 %v3198, %v3199
        %v3201 = vmul.f32 %v3200, 0.0078125
        %v3202 = vadd.f32 %v3201, 1e-05
        %v3203 = vrsqrt.pop %v3202
        %v3204 = vmul.f32 %v3203, %v3202
        %v3205 = vmul.f32 %v3204, %v3203
        %v3206 = vmul.f32 0.5, %v3205
        %v3207 = vsub.f32 1.5, %v3206
        %v3208 = vmul.f32 %v3203, %v3207
        %vm3209 = vweird.f32 %v3202
        %vm3210 = vweird.f32 %v3203
        %vm3211 = vmor %vm3209, %vm3210
        %v3212 = vsel %vm3211, %v3203, %v3208
        %v3213 = vmul.f32 %v3212, %v3124
        %v3214 = vperm.slane %v3213, 0
        %v3215 = vmul.f32 %v3148, %v3214
        %v3216 = vmul.f32 %v3149, %v3214
        %v3217 = vmul.f32 %v3150, %v3214
        %v3218 = vmul.f32 %v3151, %v3214
        %v3219 = vmul.f32 %v3152, %v3214
        %v3220 = vmul.f32 %v3153, %v3214
        %v3221 = vmul.f32 %v3154, %v3214
        %v3222 = vmul.f32 %v3155, %v3214
        %v3223 = vmul.f32 %v3156, %v3214
        %v3224 = vmul.f32 %v3157, %v3214
        %v3225 = vmul.f32 %v3158, %v3214
        %v3226 = vmul.f32 %v3159, %v3214
        %v3227 = vmul.f32 %v3160, %v3214
        %v3228 = vmul.f32 %v3161, %v3214
        %v3229 = vmul.f32 %v3162, %v3214
        %v3230 = vmul.f32 %v3163, %v3214
        %v3232 = vperm.slane %v3125, 0
        %v3234 = vadd.f32 %v3215, %v3232
        %v3235 = vadd.f32 %v3216, %v3232
        %v3236 = vadd.f32 %v3217, %v3232
        %v3237 = vadd.f32 %v3218, %v3232
        %v3238 = vadd.f32 %v3219, %v3232
        %v3239 = vadd.f32 %v3220, %v3232
        %v3240 = vadd.f32 %v3221, %v3232
        %v3241 = vadd.f32 %v3222, %v3232
        %v3242 = vadd.f32 %v3223, %v3232
        %v3243 = vadd.f32 %v3224, %v3232
        %v3244 = vadd.f32 %v3225, %v3232
        %v3245 = vadd.f32 %v3226, %v3232
        %v3246 = vadd.f32 %v3227, %v3232
        %v3247 = vadd.f32 %v3228, %v3232
        %v3248 = vadd.f32 %v3229, %v3232
        %v3249 = vadd.f32 %v3230, %v3232
        %v3250 = vmax.f32 %v3234, 0.0
        %v3251 = vmax.f32 %v3235, 0.0
        %v3252 = vmax.f32 %v3236, 0.0
        %v3253 = vmax.f32 %v3237, 0.0
        %v3254 = vmax.f32 %v3238, 0.0
        %v3255 = vmax.f32 %v3239, 0.0
        %v3256 = vmax.f32 %v3240, 0.0
        %v3257 = vmax.f32 %v3241, 0.0
        %v3258 = vmax.f32 %v3242, 0.0
        %v3259 = vmax.f32 %v3243, 0.0
        %v3260 = vmax.f32 %v3244, 0.0
        %v3261 = vmax.f32 %v3245, 0.0
        %v3262 = vmax.f32 %v3246, 0.0
        %v3263 = vmax.f32 %v3247, 0.0
        %v3264 = vmax.f32 %v3248, 0.0
        %v3265 = vmax.f32 %v3249, 0.0
        %3266 = vst [vmem:[%s962] sm:$0xff] %v3250
        %3267 = vst [vmem:[%s962 + $0x8] sm:$0xff] %v3251
        %3268 = vst [vmem:[%s962 + $0x10] sm:$0xff] %v3252
        %3269 = vst [vmem:[%s962 + $0x18] sm:$0xff] %v3253
        %3270 = vst [vmem:[%s962 + $0x20] sm:$0xff] %v3254
        %3271 = vst [vmem:[%s962 + $0x28] sm:$0xff] %v3255
        %3272 = vst [vmem:[%s962 + $0x30] sm:$0xff] %v3256
        %3273 = vst [vmem:[%s962 + $0x38] sm:$0xff] %v3257
        %3274 = vst [vmem:[%s962 + $0x40] sm:$0xff] %v3258
        %3275 = vst [vmem:[%s962 + $0x48] sm:$0xff] %v3259
        %3276 = vst [vmem:[%s962 + $0x50] sm:$0xff] %v3260
        %3277 = vst [vmem:[%s962 + $0x58] sm:$0xff] %v3261
        %3278 = vst [vmem:[%s962 + $0x60] sm:$0xff] %v3262
        %3279 = vst [vmem:[%s962 + $0x68] sm:$0xff] %v3263
        %3280 = vst [vmem:[%s962 + $0x70] sm:$0xff] %v3264
        %3281 = vst [vmem:[%s962 + $0x78] sm:$0xff] %v3265
        %s3282 = sand.u32 %s149, 1
        %s3283 = sand.u32 %s149, 1
        %s3284 = smul.addr %s3283, 128
        %s3285 = scalar_lea.vmem [#allocation3], %s3284
        // Predicated region
        $region82: #{inception_b_forward.10} parent=76 // pred_check
          %p3286 = pneg %p159
        $region83: #{inception_b_forward.10} parent=76 // pred_check_branch
          %3288 = sbr.rel (%p3286) target = $region85
        $region84: #{inception_b_forward.10} parent=76 // pred_region
          %s3289 = smul.addr %s16, 8
          %s3290 = scalar_lea.vmem %s5, %s3289
          // Predicated region
          $region86: #{inception_b_forward.10} parent=84 // pred_check
            _
          $region87: #{inception_b_forward.10} parent=84 // pred_check_branch
            %3292 = sbr.rel (0) target = $region89
          $region88: #{inception_b_forward.10} parent=84 // pred_region
            // Predicated region
            $region90: #{inception_b_forward.10} parent=88 // pred_check
              _
            $region91: #{inception_b_forward.10} parent=88 // pred_check_branch
              %3294 = sbr.rel (0) target = $region93
            $region92: #{inception_b_forward.10} parent=88 // pred_region
              // Predicated region
              $region105: #{inception_b_forward.10} parent=92 // pred_check
                _
              $region106: #{inception_b_forward.10} parent=92 // pred_check_branch
                %3340 = sbr.rel (0) target = $region108
              $region107: #{inception_b_forward.10} parent=92 // pred_region
                loop: start=0, step=1, limit=1
                $region109: #{inception_b_forward.10} parent=107 // loop_pre_header
                  _
                $region110: #{inception_b_forward.10} parent=107 // loop_header
                  %s3342 = sphi 0, %s3346
                  %p3343 = scmp.ge.s32.totalorder %s3342, 1
                  %s3347 = sphi %s3285, %s3285
                  %s3348 = sphi %s3290, %s3290
                $region111: #{inception_b_forward.10} parent=107 // loop_header_branch
                  %3345 = sbr.rel (%p3343) target = $region115
                $region112: #{inception_b_forward.10} parent=107 // loop_body
                  %v3349 = vld [vmem:[%s3347] sm:$0xff]
                  %3350 = vst [vmem:[%s3348] sm:$0xff] %v3349
                  %v3351 = vld [vmem:[%s3347 + $0x8] sm:$0xff]
                  %3352 = vst [vmem:[%s3348 + $0x10] sm:$0xff] %v3351
                  %v3353 = vld [vmem:[%s3347 + $0x10] sm:$0xff]
                  %3354 = vst [vmem:[%s3348 + $0x20] sm:$0xff] %v3353
                  %v3355 = vld [vmem:[%s3347 + $0x18] sm:$0xff]
                  %3356 = vst [vmem:[%s3348 + $0x30] sm:$0xff] %v3355
                  %v3357 = vld [vmem:[%s3347 + $0x20] sm:$0xff]
                  %3358 = vst [vmem:[%s3348 + $0x40] sm:$0xff] %v3357
                  %v3359 = vld [vmem:[%s3347 + $0x28] sm:$0xff]
                  %3360 = vst [vmem:[%s3348 + $0x50] sm:$0xff] %v3359
                  %v3361 = vld [vmem:[%s3347 + $0x30] sm:$0xff]
                  %3362 = vst [vmem:[%s3348 + $0x60] sm:$0xff] %v3361
                  %v3363 = vld [vmem:[%s3347 + $0x38] sm:$0xff]
                  %3364 = vst [vmem:[%s3348 + $0x70] sm:$0xff] %v3363
                  %v3365 = vld [vmem:[%s3347 + $0x40] sm:$0xff]
                  %3366 = vst [vmem:[%s3348 + $0x80] sm:$0xff] %v3365
                  %v3367 = vld [vmem:[%s3347 + $0x48] sm:$0xff]
                  %3368 = vst [vmem:[%s3348 + $0x90] sm:$0xff] %v3367
                  %v3369 = vld [vmem:[%s3347 + $0x50] sm:$0xff]
                  %3370 = vst [vmem:[%s3348 + $0xa0] sm:$0xff] %v3369
                  %v3371 = vld [vmem:[%s3347 + $0x58] sm:$0xff]
                  %3372 = vst [vmem:[%s3348 + $0xb0] sm:$0xff] %v3371
                  %v3373 = vld [vmem:[%s3347 + $0x60] sm:$0xff]
                  %3374 = vst [vmem:[%s3348 + $0xc0] sm:$0xff] %v3373
                  %v3375 = vld [vmem:[%s3347 + $0x68] sm:$0xff]
                  %3376 = vst [vmem:[%s3348 + $0xd0] sm:$0xff] %v3375
                  %v3377 = vld [vmem:[%s3347 + $0x70] sm:$0xff]
                  %3378 = vst [vmem:[%s3348 + $0xe0] sm:$0xff] %v3377
                  %v3379 = vld [vmem:[%s3347 + $0x78] sm:$0xff]
                  %3380 = vst [vmem:[%s3348 + $0xf0] sm:$0xff] %v3379
                $region113: #{inception_b_forward.10} parent=107 // loop_footer
                  %s3346 = sadd.s32 1, %s3342
                $region114: #{inception_b_forward.10} parent=107 // loop_footer_branch
                  %3341 = sbr.rel target = $region110
                $region115: #{inception_b_forward.10} parent=107 // loop_exit
                  _
              $region108: #{inception_b_forward.10} parent=92 // pred_fallthru
                _
              // Predicated region
              $region116: #{inception_b_forward.10} parent=92 // pred_check
                _
              $region117: #{inception_b_forward.10} parent=92 // pred_check_branch
                %3382 = sbr.rel target = $region119
              $region118: #{inception_b_forward.10} parent=92 // pred_region
                _
              $region119: #{inception_b_forward.10} parent=92 // pred_fallthru
                _
            $region93: #{inception_b_forward.10} parent=88 // pred_fallthru
              _
            // Predicated region
            $region94: #{inception_b_forward.10} parent=88 // pred_check
              _
            $region95: #{inception_b_forward.10} parent=88 // pred_check_branch
              %3296 = sbr.rel target = $region97
            $region96: #{inception_b_forward.10} parent=88 // pred_region
              %s3298 = ssub.s32 256, 1
              loop: start=0, step=1, limit=1
              $region98: #{inception_b_forward.10} parent=96 // loop_pre_header
                _
              $region99: #{inception_b_forward.10} parent=96 // loop_header
                %s3300 = sphi 0, %s3304
                %p3301 = scmp.ge.s32.totalorder %s3300, 1
                %s3305 = sphi %s3285, %s3285
                %s3306 = sphi %s3290, %s3290
              $region100: #{inception_b_forward.10} parent=96 // loop_header_branch
                %3303 = sbr.rel (%p3301) target = $region104
              $region101: #{inception_b_forward.10} parent=96 // loop_body
                %v3307 = vld [vmem:[%s3305] sm:%s3298]
                %3308 = vst [vmem:[%s3306] sm:%s3298] %v3307
                %v3309 = vld [vmem:[%s3305 + $0x8] sm:%s3298]
                %3310 = vst [vmem:[%s3306 + $0x10] sm:%s3298] %v3309
                %v3311 = vld [vmem:[%s3305 + $0x10] sm:%s3298]
                %3312 = vst [vmem:[%s3306 + $0x20] sm:%s3298] %v3311
                %v3313 = vld [vmem:[%s3305 + $0x18] sm:%s3298]
                %3314 = vst [vmem:[%s3306 + $0x30] sm:%s3298] %v3313
                %v3315 = vld [vmem:[%s3305 + $0x20] sm:%s3298]
                %3316 = vst [vmem:[%s3306 + $0x40] sm:%s3298] %v3315
                %v3317 = vld [vmem:[%s3305 + $0x28] sm:%s3298]
                %3318 = vst [vmem:[%s3306 + $0x50] sm:%s3298] %v3317
                %v3319 = vld [vmem:[%s3305 + $0x30] sm:%s3298]
                %3320 = vst [vmem:[%s3306 + $0x60] sm:%s3298] %v3319
                %v3321 = vld [vmem:[%s3305 + $0x38] sm:%s3298]
                %3322 = vst [vmem:[%s3306 + $0x70] sm:%s3298] %v3321
                %v3323 = vld [vmem:[%s3305 + $0x40] sm:%s3298]
                %3324 = vst [vmem:[%s3306 + $0x80] sm:%s3298] %v3323
                %v3325 = vld [vmem:[%s3305 + $0x48] sm:%s3298]
                %3326 = vst [vmem:[%s3306 + $0x90] sm:%s3298] %v3325
                %v3327 = vld [vmem:[%s3305 + $0x50] sm:%s3298]
                %3328 = vst [vmem:[%s3306 + $0xa0] sm:%s3298] %v3327
                %v3329 = vld [vmem:[%s3305 + $0x58] sm:%s3298]
                %3330 = vst [vmem:[%s3306 + $0xb0] sm:%s3298] %v3329
                %v3331 = vld [vmem:[%s3305 + $0x60] sm:%s3298]
                %3332 = vst [vmem:[%s3306 + $0xc0] sm:%s3298] %v3331
                %v3333 = vld [vmem:[%s3305 + $0x68] sm:%s3298]
                %3334 = vst [vmem:[%s3306 + $0xd0] sm:%s3298] %v3333
                %v3335 = vld [vmem:[%s3305 + $0x70] sm:%s3298]
                %3336 = vst [vmem:[%s3306 + $0xe0] sm:%s3298] %v3335
                %v3337 = vld [vmem:[%s3305 + $0x78] sm:%s3298]
                %3338 = vst [vmem:[%s3306 + $0xf0] sm:%s3298] %v3337
              $region102: #{inception_b_forward.10} parent=96 // loop_footer
                %s3304 = sadd.s32 1, %s3300
              $region103: #{inception_b_forward.10} parent=96 // loop_footer_branch
                %3299 = sbr.rel target = $region99
              $region104: #{inception_b_forward.10} parent=96 // loop_exit
                _
            $region97: #{inception_b_forward.10} parent=88 // pred_fallthru
              _
          $region89: #{inception_b_forward.10} parent=84 // pred_fallthru
            _
          %3383 = vnop
        $region85: #{inception_b_forward.10} parent=76 // pred_fallthru
          _
      $region77: #{inception_b_forward.10} parent=5 // pred_fallthru
        _
      %p3384 = scmp.le.s32.totalorder 2, %s11
      // Predicated region
      $region120: #{inception_b_forward.10} parent=5 // pred_check
        %p3385 = pneg %p3384
      $region121: #{inception_b_forward.10} parent=5 // pred_check_branch
        %3387 = sbr.rel (%p3385) target = $region123
      $region122: #{inception_b_forward.10} parent=5 // pred_region
        %s3388 = ssub.s32 %s11, 2
        // Predicated region
        $region124: #{inception_b_forward.10} parent=122 // pred_check
          %p3389 = pneg %p165
        $region125: #{inception_b_forward.10} parent=122 // pred_check_branch
          %3391 = sbr.rel (%p3389) target = $region127
        $region126: #{inception_b_forward.10} parent=122 // pred_region
          %s3392 = sand.u32 %s150, 1
          %s3393 = sand.u32 %s150, 1
          %s3394 = smul.addr %s3393, 128
          %s3395 = scalar_lea.vmem [#allocation3], %s3394
        $region127: #{inception_b_forward.10} parent=122 // pred_fallthru
          _
      $region123: #{inception_b_forward.10} parent=5 // pred_fallthru
        _
    $region6: #{inception_b_forward.10} parent=1 // loop_footer
      %s15 = sadd.s32 1, %s11
    $region7: #{inception_b_forward.10} parent=1 // loop_footer_branch
      %10 = sbr.rel target = $region3
    $region8: #{inception_b_forward.10} parent=1 // loop_exit
      _

// kernel: inception_b_forward.12
$region0: #{inception_b_forward.12}
  #allocation0 [shape = 'u32[]', space=smem, size = 0x4, offset = 0x4, fixed_abs, tag = 'smem constant byte address 0x4 - core index']
  #allocation1 [shape = 'u32[72,128]{1,0:T(1,128)}', space=vmem, size = 0x9000, scoped, tag = 'internal scratch']
  %s0 = inlined_call_operand.vmem [shape: bf16[224,224], index: 0, kind: input, shape index: {}]
  %s1 = inlined_call_operand.vmem [shape: bf16[7,224,256], index: 1, kind: input, shape index: {}]
  %s2 = inlined_call_operand.vmem [shape: f32[1,256], index: 2, kind: input, shape index: {}]
  %s3 = inlined_call_operand.vmem [shape: f32[1,256], index: 3, kind: input, shape index: {}]
  %s4 = inlined_call_operand.vmem [shape: f32[1,256], index: 4, kind: input, shape index: {}]
  %s5 = inlined_call_operand.vmem [shape: f32[128,256], index: 5, kind: output, shape index: {}]
  %s6 = sld [smem:[#allocation0]]
  $region128: #{inception_b_forward.12} parent=0
    _
  %s8 = ssub.s32 1, %s6
  %s9 = scalar_select 0, %s8, %s6
  $region1: #{inception_b_forward.12} parent=0
    #allocation2 [shape = 'u8[802816]{0}', space=vmem, size = 0xc4000, scoped, tag = 'input window, operand 1']
    #allocation3 [shape = 'u8[131072]{0}', space=vmem, size = 0x20000, scoped, tag = 'output window, operand 0']
    loop: start=0, step=1, limit=4
    $region2: #{inception_b_forward.12} parent=1 // loop_pre_header
      _
    $region3: #{inception_b_forward.12} parent=1 // loop_header
      %s11 = sphi 0, %s15
      %p12 = scmp.ge.s32.totalorder %s11, 4
      %s19 = sphi 0, %s19
      %s21 = sphi 0, %s19
      %s22 = sphi 0, %s21
      %s36 = sphi 0, %s22
      %s42 = sphi 0, %s44
      %s45 = sphi 0, %s42
      %s46 = sphi 0, %s45
      %s62 = sphi 0, %s46
      %s68 = sphi 0, %s70
      %s71 = sphi 0, %s68
      %s72 = sphi 0, %s71
      %s88 = sphi 0, %s72
      %s94 = sphi 0, %s96
      %s97 = sphi 0, %s94
      %s98 = sphi 0, %s97
      %s114 = sphi 0, %s98
      %s120 = sphi 0, %s122
      %s123 = sphi 0, %s120
      %s124 = sphi 0, %s123
      %s140 = sphi 0, %s124
      %s146 = sphi 0, %s148
      %s149 = sphi 0, %s146
      %s150 = sphi 0, %s149
      %s166 = sphi 0, %s150
    $region4: #{inception_b_forward.12} parent=1 // loop_header_branch
      %14 = sbr.rel (%p12) target = $region8
    $region5: #{inception_b_forward.12} parent=1 // loop_body
      %s16 = ssub.s32 %s11, 1
      %s17 = ssub.s32 %s11, 2
      %s18 = sadd.s32 %s11, 1
      %s20 = sadd.s32 %s19, 1
      %p23 = scmp.eq.s32.totalorder %s11, 1
      %p24 = scmp.ne.s32.totalorder %s19, %s21
      %p25 = scmp.eq.s32.totalorder %s11, 0
      %p26 = por %p24, %p25
      %p27 = scmp.ne.s32.totalorder %s19, %s21
      %p28 = scmp.eq.s32.totalorder %s16, 1
      %p29 = por %p27, %p28
      %p30 = scmp.ne.s32.totalorder %s21, %s22
      %p31 = scmp.eq.s32.totalorder %s16, 0
      %p32 = por %p30, %p31
      %p33 = scmp.ne.s32.totalorder %s21, %s22
      %p34 = scmp.eq.s32.totalorder %s17, 1
      %p35 = por %p33, %p34
      %p37 = scmp.ne.s32.totalorder %s22, %s36
      %p38 = scmp.eq.s32.totalorder %s17, 0
      %p39 = por %p37, %p38
      %s40 = ssub.s32 %s11, %s18
      %p41 = scmp.eq.s32.totalorder %s40, 0
      %s43 = sadd.s32 %s42, 1
      %s44 = scalar_select %p41, %s42, %s43
      %p47 = pneg %p41
      %p48 = scmp.eq.s32.totalorder %s11, 1
      %p49 = por %p47, %p48
      %p50 = scmp.ne.s32.totalorder %s42, %s45
      %p51 = scmp.eq.s32.totalorder %s11, 0
      %p52 = por %p50, %p51
      %p53 = scmp.ne.s32.totalorder %s42, %s45
      %p54 = scmp.eq.s32.totalorder %s16, 1
      %p55 = por %p53, %p54
      %p56 = scmp.ne.s32.totalorder %s45, %s46
      %p57 = scmp.eq.s32.totalorder %s16, 0
      %p58 = por %p56, %p57
      %p59 = scmp.ne.s32.totalorder %s45, %s46
      %p60 = scmp.eq.s32.totalorder %s17, 1
      %p61 = por %p59, %p60
      %p63 = scmp.ne.s32.totalorder %s46, %s62
      %p64 = scmp.eq.s32.totalorder %s17, 0
      %p65 = por %p63, %p64
      %s66 = ssub.s32 %s11, %s18
      %p67 = scmp.eq.s32.totalorder %s66, 0
      %s69 = sadd.s32 %s68, 1
      %s70 = scalar_select %p67, %s68, %s69
      %p73 = pneg %p67
      %p74 = scmp.eq.s32.totalorder %s11, 1
      %p75 = por %p73, %p74
      %p76 = scmp.ne.s32.totalorder %s68, %s71
      %p77 = scmp.eq.s32.totalorder %s11, 0
      %p78 = por %p76, %p77
      %p79 = scmp.ne.s32.totalorder %s68, %s71
      %p80 = scmp.eq.s32.totalorder %s16, 1
      %p81 = por %p79, %p80
      %p82 = scmp.ne.s32.totalorder %s71, %s72
      %p83 = scmp.eq.s32.totalorder %s16, 0
      %p84 = por %p82, %p83
      %p85 = scmp.ne.s32.totalorder %s71, %s72
      %p86 = scmp.eq.s32.totalorder %s17, 1
      %p87 = por %p85, %p86
      %p89 = scmp.ne.s32.totalorder %s72, %s88
      %p90 = scmp.eq.s32.totalorder %s17, 0
      %p91 = por %p89, %p90
      %s92 = ssub.s32 %s11, %s18
      %p93 = scmp.eq.s32.totalorder %s92, 0
      %s95 = sadd.s32 %s94, 1
      %s96 = scalar_select %p93, %s94, %s95
      %p99 = pneg %p93
      %p100 = scmp.eq.s32.totalorder %s11, 1
      %p101 = por %p99, %p100
      %p102 = scmp.ne.s32.totalorder %s94, %s97
      %p103 = scmp.eq.s32.totalorder %s11, 0
      %p104 = por %p102, %p103
      %p105 = scmp.ne.s32.totalorder %s94, %s97
      %p106 = scmp.eq.s32.totalorder %s16, 1
      %p107 = por %p105, %p106
      %p108 = scmp.ne.s32.totalorder %s97, %s98
      %p109 = scmp.eq.s32.totalorder %s16, 0
      %p110 = por %p108, %p109
      %p111 = scmp.ne.s32.totalorder %s97, %s98
      %p112 = scmp.eq.s32.totalorder %s17, 1
      %p113 = por %p111, %p112
      %p115 = scmp.ne.s32.totalorder %s98, %s114
      %p116 = scmp.eq.s32.totalorder %s17, 0
      %p117 = por %p115, %p116
      %s118 = ssub.s32 %s11, %s18
      %p119 = scmp.eq.s32.totalorder %s118, 0
      %s121 = sadd.s32 %s120, 1
      %s122 = scalar_select %p119, %s120, %s121
      %p125 = pneg %p119
      %p126 = scmp.eq.s32.totalorder %s11, 1
      %p127 = por %p125, %p126
      %p128 = scmp.ne.s32.totalorder %s120, %s123
      %p129 = scmp.eq.s32.totalorder %s11, 0
      %p130 = por %p128, %p129
      %p131 = scmp.ne.s32.totalorder %s120, %s123
      %p132 = scmp.eq.s32.totalorder %s16, 1
      %p133 = por %p131, %p132
      %p134 = scmp.ne.s32.totalorder %s123, %s124
      %p135 = scmp.eq.s32.totalorder %s16, 0
      %p136 = por %p134, %p135
      %p137 = scmp.ne.s32.totalorder %s123, %s124
      %p138 = scmp.eq.s32.totalorder %s17, 1
      %p139 = por %p137, %p138
      %p141 = scmp.ne.s32.totalorder %s124, %s140
      %p142 = scmp.eq.s32.totalorder %s17, 0
      %p143 = por %p141, %p142
      %s144 = ssub.s32 %s11, %s18
      %p145 = scmp.eq.s32.totalorder %s144, 0
      %s147 = sadd.s32 %s146, 1
      %s148 = scalar_select %p145, %s146, %s147
      %p151 = pneg %p145
      %p152 = scmp.eq.s32.totalorder %s11, 1
      %p153 = por %p151, %p152
      %p154 = scmp.ne.s32.totalorder %s146, %s149
      %p155 = scmp.eq.s32.totalorder %s11, 0
      %p156 = por %p154, %p155
      %p157 = scmp.ne.s32.totalorder %s146, %s149
      %p158 = scmp.eq.s32.totalorder %s16, 1
      %p159 = por %p157, %p158
      %p160 = scmp.ne.s32.totalorder %s149, %s150
      %p161 = scmp.eq.s32.totalorder %s16, 0
      %p162 = por %p160, %p161
      %p163 = scmp.ne.s32.totalorder %s149, %s150
      %p164 = scmp.eq.s32.totalorder %s17, 1
      %p165 = por %p163, %p164
      %p167 = scmp.ne.s32.totalorder %s150, %s166
      %p168 = scmp.eq.s32.totalorder %s17, 0
      %p169 = por %p167, %p168
      %p170 = scmp.le.s32.totalorder 1, %s11
      %p171 = scmp.lt.s32.totalorder %s11, 3
      %p172 = pnand %p170, %p171
      %p173 = pneg %p172
      // Predicated region
      $region9: #{inception_b_forward.12} parent=5 // pred_check
        _
      $region10: #{inception_b_forward.12} parent=5 // pred_check_branch
        %175 = sbr.rel (%p172) target = $region12
      $region11: #{inception_b_forward.12} parent=5 // pred_region
        %s176 = ssub.s32 %s11, 1
        // Predicated region
        $region13: #{inception_b_forward.12} parent=11 // pred_check
          %p177 = pneg %p32
        $region14: #{inception_b_forward.12} parent=11 // pred_check_branch
          %179 = sbr.rel (%p177) target = $region16
        $region15: #{inception_b_forward.12} parent=11 // pred_region
          _
        $region16: #{inception_b_forward.12} parent=11 // pred_fallthru
          _
      $region12: #{inception_b_forward.12} parent=5 // pred_fallthru
        _
      %p180 = scmp.lt.s32.totalorder %s11, 2
      // Predicated region
      $region17: #{inception_b_forward.12} parent=5 // pred_check
        %p181 = pneg %p180
      $region18: #{inception_b_forward.12} parent=5 // pred_check_branch
        %183 = sbr.rel (%p181) target = $region20
      $region19: #{inception_b_forward.12} parent=5 // pred_region
        // Predicated region
        $region21: #{inception_b_forward.12} parent=19 // pred_check
          %p184 = pneg %p52
        $region22: #{inception_b_forward.12} parent=19 // pred_check_branch
          %186 = sbr.rel (%p184) target = $region24
        $region23: #{inception_b_forward.12} parent=19 // pred_region
          %s187 = sand.u32 %s42, 1
          %s188 = sand.u32 %s42, 1
          %s189 = smul.addr %s188, 784
          %s190 = scalar_lea.vmem [#allocation2], %s189
          %s191 = smul.addr %s11, 4
          %s192 = scalar_lea.vmem %s1, %s191
          // Predicated region
          $region25: #{inception_b_forward.12} parent=23 // pred_check
            _
          $region26: #{inception_b_forward.12} parent=23 // pred_check_branch
            %194 = sbr.rel (0) target = $region28
          $region27: #{inception_b_forward.12} parent=23 // pred_region
            // Predicated region
            $region29: #{inception_b_forward.12} parent=27 // pred_check
              _
            $region30: #{inception_b_forward.12} parent=27 // pred_check_branch
              %196 = sbr.rel target = $region32
            $region31: #{inception_b_forward.12} parent=27 // pred_region
              // Predicated region
              $region44: #{inception_b_forward.12} parent=31 // pred_check
                _
              $region45: #{inception_b_forward.12} parent=31 // pred_check_branch
                %602 = sbr.rel (0) target = $region47
              $region46: #{inception_b_forward.12} parent=31 // pred_region
                loop: start=0, step=1, limit=1
                $region48: #{inception_b_forward.12} parent=46 // loop_pre_header
                  _
                $region49: #{inception_b_forward.12} parent=46 // loop_header
                  %s604 = sphi 0, %s608
                  %p605 = scmp.ge.s32.totalorder %s604, 1
                  %s609 = sphi %s192, %s192
                  %s610 = sphi %s190, %s190
                $region50: #{inception_b_forward.12} parent=46 // loop_header_branch
                  %607 = sbr.rel (%p605) target = $region54
                $region51: #{inception_b_forward.12} parent=46 // loop_body
                  _
                $region52: #{inception_b_forward.12} parent=46 // loop_footer
                  %s608 = sadd.s32 1, %s604
                $region53: #{inception_b_forward.12} parent=46 // loop_footer_branch
                  %603 = sbr.rel target = $region49
                $region54: #{inception_b_forward.12} parent=46 // loop_exit
                  _
                %s612 = ssub.s32 16, 1
                loop: start=0, step=1, limit=1
                $region55: #{inception_b_forward.12} parent=46 // loop_pre_header
                  _
                $region56: #{inception_b_forward.12} parent=46 // loop_header
                  %s614 = sphi 0, %s618
                  %p615 = scmp.ge.s32.totalorder %s614, 1
                  %s619 = sphi %s192, %s192
                  %s620 = sphi %s190, %s190
                $region57: #{inception_b_forward.12} parent=46 // loop_header_branch
                  %617 = sbr.rel (%p615) target = $region61
                $region58: #{inception_b_forward.12} parent=46 // loop_body
                  %v621 = vld [vmem:[%s619] sm:%s612]
                  %622 = vst [vmem:[%s620] sm:%s612] %v621
                  %v623 = vld [vmem:[%s619 + $0x8] sm:%s612]
                  %624 = vst [vmem:[%s620 + $0x4] sm:%s612] %v623
                  %v625 = vld [vmem:[%s619 + $0x10] sm:%s612]
                  %626 = vst [vmem:[%s620 + $0x8] sm:%s612] %v625
                  %v627 = vld [vmem:[%s619 + $0x18] sm:%s612]
                  %628 = vst [vmem:[%s620 + $0xc] sm:%s612] %v627
                  %v629 = vld [vmem:[%s619 + $0x20] sm:%s612]
                  %630 = vst [vmem:[%s620 + $0x10] sm:%s612] %v629
                  %v631 = vld [vmem:[%s619 + $0x28] sm:%s612]
                  %632 = vst [vmem:[%s620 + $0x14] sm:%s612] %v631
                  %v633 = vld [vmem:[%s619 + $0x30] sm:%s612]
                  %634 = vst [vmem:[%s620 + $0x18] sm:%s612] %v633
                  %v635 = vld [vmem:[%s619 + $0x38] sm:%s612]
                  %636 = vst [vmem:[%s620 + $0x1c] sm:%s612] %v635
                  %v637 = vld [vmem:[%s619 + $0x40] sm:%s612]
                  %638 = vst [vmem:[%s620 + $0x20] sm:%s612] %v637
                  %v639 = vld [vmem:[%s619 + $0x48] sm:%s612]
                  %640 = vst [vmem:[%s620 + $0x24] sm:%s612] %v639
                  %v641 = vld [vmem:[%s619 + $0x50] sm:%s612]
                  %642 = vst [vmem:[%s620 + $0x28] sm:%s612] %v641
                  %v643 = vld [vmem:[%s619 + $0x58] sm:%s612]
                  %644 = vst [vmem:[%s620 + $0x2c] sm:%s612] %v643
                  %v645 = vld [vmem:[%s619 + $0x60] sm:%s612]
                  %646 = vst [vmem:[%s620 + $0x30] sm:%s612] %v645
                  %v647 = vld [vmem:[%s619 + $0x68] sm:%s612]
                  %648 = vst [vmem:[%s620 + $0x34] sm:%s612] %v647
                  %v649 = vld [vmem:[%s619 + $0x70] sm:%s612]
                  %650 = vst [vmem:[%s620 + $0x38] sm:%s612] %v649
                  %v651 = vld [vmem:[%s619 + $0x78] sm:%s612]
                  %652 = vst [vmem:[%s620 + $0x3c] sm:%s612] %v651
                  %v653 = vld [vmem:[%s619 + $0x80] sm:%s612]
                  %654 = vst [vmem:[%s620 + $0x40] sm:%s612] %v653
                  %v655 = vld [vmem:[%s619 + $0x88] sm:%s612]
                  %656 = vst [vmem:[%s620 + $0x44] sm:%s612] %v655
                  %v657 = vld [vmem:[%s619 + $0x90] sm:%s612]
                  %658 = vst [vmem:[%s620 + $0x48] sm:%s612] %v657
                  %v659 = vld [vmem:[%s619 + $0x98] sm:%s612]
                  %660 = vst [vmem:[%s620 + $0x4c] sm:%s612] %v659
                  %v661 = vld [vmem:[%s619 + $0xa0] sm:%s612]
                  %662 = vst [vmem:[%s620 + $0x50] sm:%s612] %v661
                  %v663 = vld [vmem:[%s619 + $0xa8] sm:%s612]
                  %664 = vst [vmem:[%s620 + $0x54] sm:%s612] %v663
                  %v665 = vld [vmem:[%s619 + $0xb0] sm:%s612]
                  %666 = vst [vmem:[%s620 + $0x58] sm:%s612] %v665
                  %v667 = vld [vmem:[%s619 + $0xb8] sm:%s612]
                  %668 = vst [vmem:[%s620 + $0x5c] sm:%s612] %v667
                  %v669 = vld [vmem:[%s619 + $0xc0] sm:%s612]
                  %670 = vst [vmem:[%s620 + $0x60] sm:%s612] %v669
                  %v671 = vld [vmem:[%s619 + $0xc8] sm:%s612]
                  %672 = vst [vmem:[%s620 + $0x64] sm:%s612] %v671
                  %v673 = vld [vmem:[%s619 + $0xd0] sm:%s612]
                  %674 = vst [vmem:[%s620 + $0x68] sm:%s612] %v673
                  %v675 = vld [vmem:[%s619 + $0xd8] sm:%s612]
                  %676 = vst [vmem:[%s620 + $0x6c] sm:%s612] %v675
                  %v677 = vld [vmem:[%s619 + $0xe0] sm:%s612]
                  %678 = vst [vmem:[%s620 + $0x70] sm:%s612] %v677
                  %v679 = vld [vmem:[%s619 + $0xe8] sm:%s612]
                  %680 = vst [vmem:[%s620 + $0x74] sm:%s612] %v679
                  %v681 = vld [vmem:[%s619 + $0xf0] sm:%s612]
                  %682 = vst [vmem:[%s620 + $0x78] sm:%s612] %v681
                  %v683 = vld [vmem:[%s619 + $0xf8] sm:%s612]
                  %684 = vst [vmem:[%s620 + $0x7c] sm:%s612] %v683
                  %v685 = vld [vmem:[%s619 + $0x100] sm:%s612]
                  %686 = vst [vmem:[%s620 + $0x80] sm:%s612] %v685
                  %v687 = vld [vmem:[%s619 + $0x108] sm:%s612]
                  %688 = vst [vmem:[%s620 + $0x84] sm:%s612] %v687
                  %v689 = vld [vmem:[%s619 + $0x110] sm:%s612]
                  %690 = vst [vmem:[%s620 + $0x88] sm:%s612] %v689
                  %v691 = vld [vmem:[%s619 + $0x118] sm:%s612]
                  %692 = vst [vmem:[%s620 + $0x8c] sm:%s612] %v691
                  %v693 = vld [vmem:[%s619 + $0x120] sm:%s612]
                  %694 = vst [vmem:[%s620 + $0x90] sm:%s612] %v693
                  %v695 = vld [vmem:[%s619 + $0x128] sm:%s612]
                  %696 = vst [vmem:[%s620 + $0x94] sm:%s612] %v695
                  %v697 = vld [vmem:[%s619 + $0x130] sm:%s612]
                  %698 = vst [vmem:[%s620 + $0x98] sm:%s612] %v697
                  %v699 = vld [vmem:[%s619 + $0x138] sm:%s612]
                  %700 = vst [vmem:[%s620 + $0x9c] sm:%s612] %v699
                  %v701 = vld [vmem:[%s619 + $0x140] sm:%s612]
                  %702 = vst [vmem:[%s620 + $0xa0] sm:%s612] %v701
                  %v703 = vld [vmem:[%s619 + $0x148] sm:%s612]
                  %704 = vst [vmem:[%s620 + $0xa4] sm:%s612] %v703
                  %v705 = vld [vmem:[%s619 + $0x150] sm:%s612]
                  %706 = vst [vmem:[%s620 + $0xa8] sm:%s612] %v705
                  %v707 = vld [vmem:[%s619 + $0x158] sm:%s612]
                  %708 = vst [vmem:[%s620 + $0xac] sm:%s612] %v707
                  %v709 = vld [vmem:[%s619 + $0x160] sm:%s612]
                  %710 = vst [vmem:[%s620 + $0xb0] sm:%s612] %v709
                  %v711 = vld [vmem:[%s619 + $0x168] sm:%s612]
                  %712 = vst [vmem:[%s620 + $0xb4] sm:%s612] %v711
                  %v713 = vld [vmem:[%s619 + $0x170] sm:%s612]
                  %714 = vst [vmem:[%s620 + $0xb8] sm:%s612] %v713
                  %v715 = vld [vmem:[%s619 + $0x178] sm:%s612]
                  %716 = vst [vmem:[%s620 + $0xbc] sm:%s612] %v715
                  %v717 = vld [vmem:[%s619 + $0x180] sm:%s612]
                  %718 = vst [vmem:[%s620 + $0xc0] sm:%s612] %v717
                  %v719 = vld [vmem:[%s619 + $0x188] sm:%s612]
                  %720 = vst [vmem:[%s620 + $0xc4] sm:%s612] %v719
                  %v721 = vld [vmem:[%s619 + $0x190] sm:%s612]
                  %722 = vst [vmem:[%s620 + $0xc8] sm:%s612] %v721
                  %v723 = vld [vmem:[%s619 + $0x198] sm:%s612]
                  %724 = vst [vmem:[%s620 + $0xcc] sm:%s612] %v723
                  %v725 = vld [vmem:[%s619 + $0x1a0] sm:%s612]
                  %726 = vst [vmem:[%s620 + $0xd0] sm:%s612] %v725
                  %v727 = vld [vmem:[%s619 + $0x1a8] sm:%s612]
                  %728 = vst [vmem:[%s620 + $0xd4] sm:%s612] %v727
                  %v729 = vld [vmem:[%s619 + $0x1b0] sm:%s612]
                  %730 = vst [vmem:[%s620 + $0xd8] sm:%s612] %v729
                  %v731 = vld [vmem:[%s619 + $0x1b8] sm:%s612]
                  %732 = vst [vmem:[%s620 + $0xdc] sm:%s612] %v731
                  %v733 = vld [vmem:[%s619 + $0x1c0] sm:%s612]
                  %734 = vst [vmem:[%s620 + $0xe0] sm:%s612] %v733
                  %v735 = vld [vmem:[%s619 + $0x1c8] sm:%s612]
                  %736 = vst [vmem:[%s620 + $0xe4] sm:%s612] %v735
                  %v737 = vld [vmem:[%s619 + $0x1d0] sm:%s612]
                  %738 = vst [vmem:[%s620 + $0xe8] sm:%s612] %v737
                  %v739 = vld [vmem:[%s619 + $0x1d8] sm:%s612]
                  %740 = vst [vmem:[%s620 + $0xec] sm:%s612] %v739
                  %v741 = vld [vmem:[%s619 + $0x1e0] sm:%s612]
                  %742 = vst [vmem:[%s620 + $0xf0] sm:%s612] %v741
                  %v743 = vld [vmem:[%s619 + $0x1e8] sm:%s612]
                  %744 = vst [vmem:[%s620 + $0xf4] sm:%s612] %v743
                  %v745 = vld [vmem:[%s619 + $0x1f0] sm:%s612]
                  %746 = vst [vmem:[%s620 + $0xf8] sm:%s612] %v745
                  %v747 = vld [vmem:[%s619 + $0x1f8] sm:%s612]
                  %748 = vst [vmem:[%s620 + $0xfc] sm:%s612] %v747
                  %v749 = vld [vmem:[%s619 + $0x200] sm:%s612]
                  %750 = vst [vmem:[%s620 + $0x100] sm:%s612] %v749
                  %v751 = vld [vmem:[%s619 + $0x208] sm:%s612]
                  %752 = vst [vmem:[%s620 + $0x104] sm:%s612] %v751
                  %v753 = vld [vmem:[%s619 + $0x210] sm:%s612]
                  %754 = vst [vmem:[%s620 + $0x108] sm:%s612] %v753
                  %v755 = vld [vmem:[%s619 + $0x218] sm:%s612]
                  %756 = vst [vmem:[%s620 + $0x10c] sm:%s612] %v755
                  %v757 = vld [vmem:[%s619 + $0x220] sm:%s612]
                  %758 = vst [vmem:[%s620 + $0x110] sm:%s612] %v757
                  %v759 = vld [vmem:[%s619 + $0x228] sm:%s612]
                  %760 = vst [vmem:[%s620 + $0x114] sm:%s612] %v759
                  %v761 = vld [vmem:[%s619 + $0x230] sm:%s612]
                  %762 = vst [vmem:[%s620 + $0x118] sm:%s612] %v761
                  %v763 = vld [vmem:[%s619 + $0x238] sm:%s612]
                  %764 = vst [vmem:[%s620 + $0x11c] sm:%s612] %v763
                  %v765 = vld [vmem:[%s619 + $0x240] sm:%s612]
                  %766 = vst [vmem:[%s620 + $0x120] sm:%s612] %v765
                  %v767 = vld [vmem:[%s619 + $0x248] sm:%s612]
                  %768 = vst [vmem:[%s620 + $0x124] sm:%s612] %v767
                  %v769 = vld [vmem:[%s619 + $0x250] sm:%s612]
                  %770 = vst [vmem:[%s620 + $0x128] sm:%s612] %v769
                  %v771 = vld [vmem:[%s619 + $0x258] sm:%s612]
                  %772 = vst [vmem:[%s620 + $0x12c] sm:%s612] %v771
                  %v773 = vld [vmem:[%s619 + $0x260] sm:%s612]
                  %774 = vst [vmem:[%s620 + $0x130] sm:%s612] %v773
                  %v775 = vld [vmem:[%s619 + $0x268] sm:%s612]
                  %776 = vst [vmem:[%s620 + $0x134] sm:%s612] %v775
                  %v777 = vld [vmem:[%s619 + $0x270] sm:%s612]
                  %778 = vst [vmem:[%s620 + $0x138] sm:%s612] %v777
                  %v779 = vld [vmem:[%s619 + $0x278] sm:%s612]
                  %780 = vst [vmem:[%s620 + $0x13c] sm:%s612] %v779
                  %v781 = vld [vmem:[%s619 + $0x280] sm:%s612]
                  %782 = vst [vmem:[%s620 + $0x140] sm:%s612] %v781
                  %v783 = vld [vmem:[%s619 + $0x288] sm:%s612]
                  %784 = vst [vmem:[%s620 + $0x144] sm:%s612] %v783
                  %v785 = vld [vmem:[%s619 + $0x290] sm:%s612]
                  %786 = vst [vmem:[%s620 + $0x148] sm:%s612] %v785
                  %v787 = vld [vmem:[%s619 + $0x298] sm:%s612]
                  %788 = vst [vmem:[%s620 + $0x14c] sm:%s612] %v787
                  %v789 = vld [vmem:[%s619 + $0x2a0] sm:%s612]
                  %790 = vst [vmem:[%s620 + $0x150] sm:%s612] %v789
                  %v791 = vld [vmem:[%s619 + $0x2a8] sm:%s612]
                  %792 = vst [vmem:[%s620 + $0x154] sm:%s612] %v791
                  %v793 = vld [vmem:[%s619 + $0x2b0] sm:%s612]
                  %794 = vst [vmem:[%s620 + $0x158] sm:%s612] %v793
                  %v795 = vld [vmem:[%s619 + $0x2b8] sm:%s612]
                  %796 = vst [vmem:[%s620 + $0x15c] sm:%s612] %v795
                  %v797 = vld [vmem:[%s619 + $0x2c0] sm:%s612]
                  %798 = vst [vmem:[%s620 + $0x160] sm:%s612] %v797
                  %v799 = vld [vmem:[%s619 + $0x2c8] sm:%s612]
                  %800 = vst [vmem:[%s620 + $0x164] sm:%s612] %v799
                  %v801 = vld [vmem:[%s619 + $0x2d0] sm:%s612]
                  %802 = vst [vmem:[%s620 + $0x168] sm:%s612] %v801
                  %v803 = vld [vmem:[%s619 + $0x2d8] sm:%s612]
                  %804 = vst [vmem:[%s620 + $0x16c] sm:%s612] %v803
                  %v805 = vld [vmem:[%s619 + $0x2e0] sm:%s612]
                  %806 = vst [vmem:[%s620 + $0x170] sm:%s612] %v805
                  %v807 = vld [vmem:[%s619 + $0x2e8] sm:%s612]
                  %808 = vst [vmem:[%s620 + $0x174] sm:%s612] %v807
                  %v809 = vld [vmem:[%s619 + $0x2f0] sm:%s612]
                  %810 = vst [vmem:[%s620 + $0x178] sm:%s612] %v809
                  %v811 = vld [vmem:[%s619 + $0x2f8] sm:%s612]
                  %812 = vst [vmem:[%s620 + $0x17c] sm:%s612] %v811
                  %v813 = vld [vmem:[%s619 + $0x300] sm:%s612]
                  %814 = vst [vmem:[%s620 + $0x180] sm:%s612] %v813
                  %v815 = vld [vmem:[%s619 + $0x308] sm:%s612]
                  %816 = vst [vmem:[%s620 + $0x184] sm:%s612] %v815
                  %v817 = vld [vmem:[%s619 + $0x310] sm:%s612]
                  %818 = vst [vmem:[%s620 + $0x188] sm:%s612] %v817
                  %v819 = vld [vmem:[%s619 + $0x318] sm:%s612]
                  %820 = vst [vmem:[%s620 + $0x18c] sm:%s612] %v819
                  %v821 = vld [vmem:[%s619 + $0x320] sm:%s612]
                  %822 = vst [vmem:[%s620 + $0x190] sm:%s612] %v821
                  %v823 = vld [vmem:[%s619 + $0x328] sm:%s612]
                  %824 = vst [vmem:[%s620 + $0x194] sm:%s612] %v823
                  %v825 = vld [vmem:[%s619 + $0x330] sm:%s612]
                  %826 = vst [vmem:[%s620 + $0x198] sm:%s612] %v825
                  %v827 = vld [vmem:[%s619 + $0x338] sm:%s612]
                  %828 = vst [vmem:[%s620 + $0x19c] sm:%s612] %v827
                  %v829 = vld [vmem:[%s619 + $0x340] sm:%s612]
                  %830 = vst [vmem:[%s620 + $0x1a0] sm:%s612] %v829
                  %v831 = vld [vmem:[%s619 + $0x348] sm:%s612]
                  %832 = vst [vmem:[%s620 + $0x1a4] sm:%s612] %v831
                  %v833 = vld [vmem:[%s619 + $0x350] sm:%s612]
                  %834 = vst [vmem:[%s620 + $0x1a8] sm:%s612] %v833
                  %v835 = vld [vmem:[%s619 + $0x358] sm:%s612]
                  %836 = vst [vmem:[%s620 + $0x1ac] sm:%s612] %v835
                  %v837 = vld [vmem:[%s619 + $0x360] sm:%s612]
                  %838 = vst [vmem:[%s620 + $0x1b0] sm:%s612] %v837
                  %v839 = vld [vmem:[%s619 + $0x368] sm:%s612]
                  %840 = vst [vmem:[%s620 + $0x1b4] sm:%s612] %v839
                  %v841 = vld [vmem:[%s619 + $0x370] sm:%s612]
                  %842 = vst [vmem:[%s620 + $0x1b8] sm:%s612] %v841
                  %v843 = vld [vmem:[%s619 + $0x378] sm:%s612]
                  %844 = vst [vmem:[%s620 + $0x1bc] sm:%s612] %v843
                  %v845 = vld [vmem:[%s619 + $0x380] sm:%s612]
                  %846 = vst [vmem:[%s620 + $0x1c0] sm:%s612] %v845
                  %v847 = vld [vmem:[%s619 + $0x388] sm:%s612]
                  %848 = vst [vmem:[%s620 + $0x1c4] sm:%s612] %v847
                  %v849 = vld [vmem:[%s619 + $0x390] sm:%s612]
                  %850 = vst [vmem:[%s620 + $0x1c8] sm:%s612] %v849
                  %v851 = vld [vmem:[%s619 + $0x398] sm:%s612]
                  %852 = vst [vmem:[%s620 + $0x1cc] sm:%s612] %v851
                  %v853 = vld [vmem:[%s619 + $0x3a0] sm:%s612]
                  %854 = vst [vmem:[%s620 + $0x1d0] sm:%s612] %v853
                  %v855 = vld [vmem:[%s619 + $0x3a8] sm:%s612]
                  %856 = vst [vmem:[%s620 + $0x1d4] sm:%s612] %v855
                  %v857 = vld [vmem:[%s619 + $0x3b0] sm:%s612]
                  %858 = vst [vmem:[%s620 + $0x1d8] sm:%s612] %v857
                  %v859 = vld [vmem:[%s619 + $0x3b8] sm:%s612]
                  %860 = vst [vmem:[%s620 + $0x1dc] sm:%s612] %v859
                  %v861 = vld [vmem:[%s619 + $0x3c0] sm:%s612]
                  %862 = vst [vmem:[%s620 + $0x1e0] sm:%s612] %v861
                  %v863 = vld [vmem:[%s619 + $0x3c8] sm:%s612]
                  %864 = vst [vmem:[%s620 + $0x1e4] sm:%s612] %v863
                  %v865 = vld [vmem:[%s619 + $0x3d0] sm:%s612]
                  %866 = vst [vmem:[%s620 + $0x1e8] sm:%s612] %v865
                  %v867 = vld [vmem:[%s619 + $0x3d8] sm:%s612]
                  %868 = vst [vmem:[%s620 + $0x1ec] sm:%s612] %v867
                  %v869 = vld [vmem:[%s619 + $0x3e0] sm:%s612]
                  %870 = vst [vmem:[%s620 + $0x1f0] sm:%s612] %v869
                  %v871 = vld [vmem:[%s619 + $0x3e8] sm:%s612]
                  %872 = vst [vmem:[%s620 + $0x1f4] sm:%s612] %v871
                  %v873 = vld [vmem:[%s619 + $0x3f0] sm:%s612]
                  %874 = vst [vmem:[%s620 + $0x1f8] sm:%s612] %v873
                  %v875 = vld [vmem:[%s619 + $0x3f8] sm:%s612]
                  %876 = vst [vmem:[%s620 + $0x1fc] sm:%s612] %v875
                  %v877 = vld [vmem:[%s619 + $0x400] sm:%s612]
                  %878 = vst [vmem:[%s620 + $0x200] sm:%s612] %v877
                  %v879 = vld [vmem:[%s619 + $0x408] sm:%s612]
                  %880 = vst [vmem:[%s620 + $0x204] sm:%s612] %v879
                  %v881 = vld [vmem:[%s619 + $0x410] sm:%s612]
                  %882 = vst [vmem:[%s620 + $0x208] sm:%s612] %v881
                  %v883 = vld [vmem:[%s619 + $0x418] sm:%s612]
                  %884 = vst [vmem:[%s620 + $0x20c] sm:%s612] %v883
                  %v885 = vld [vmem:[%s619 + $0x420] sm:%s612]
                  %886 = vst [vmem:[%s620 + $0x210] sm:%s612] %v885
                  %v887 = vld [vmem:[%s619 + $0x428] sm:%s612]
                  %888 = vst [vmem:[%s620 + $0x214] sm:%s612] %v887
                  %v889 = vld [vmem:[%s619 + $0x430] sm:%s612]
                  %890 = vst [vmem:[%s620 + $0x218] sm:%s612] %v889
                  %v891 = vld [vmem:[%s619 + $0x438] sm:%s612]
                  %892 = vst [vmem:[%s620 + $0x21c] sm:%s612] %v891
                  %v893 = vld [vmem:[%s619 + $0x440] sm:%s612]
                  %894 = vst [vmem:[%s620 + $0x220] sm:%s612] %v893
                  %v895 = vld [vmem:[%s619 + $0x448] sm:%s612]
                  %896 = vst [vmem:[%s620 + $0x224] sm:%s612] %v895
                  %v897 = vld [vmem:[%s619 + $0x450] sm:%s612]
                  %898 = vst [vmem:[%s620 + $0x228] sm:%s612] %v897
                  %v899 = vld [vmem:[%s619 + $0x458] sm:%s612]
                  %900 = vst [vmem:[%s620 + $0x22c] sm:%s612] %v899
                  %v901 = vld [vmem:[%s619 + $0x460] sm:%s612]
                  %902 = vst [vmem:[%s620 + $0x230] sm:%s612] %v901
                  %v903 = vld [vmem:[%s619 + $0x468] sm:%s612]
                  %904 = vst [vmem:[%s620 + $0x234] sm:%s612] %v903
                  %v905 = vld [vmem:[%s619 + $0x470] sm:%s612]
                  %906 = vst [vmem:[%s620 + $0x238] sm:%s612] %v905
                  %v907 = vld [vmem:[%s619 + $0x478] sm:%s612]
                  %908 = vst [vmem:[%s620 + $0x23c] sm:%s612] %v907
                  %v909 = vld [vmem:[%s619 + $0x480] sm:%s612]
                  %910 = vst [vmem:[%s620 + $0x240] sm:%s612] %v909
                  %v911 = vld [vmem:[%s619 + $0x488] sm:%s612]
                  %912 = vst [vmem:[%s620 + $0x244] sm:%s612] %v911
                  %v913 = vld [vmem:[%s619 + $0x490] sm:%s612]
                  %914 = vst [vmem:[%s620 + $0x248] sm:%s612] %v913
                  %v915 = vld [vmem:[%s619 + $0x498] sm:%s612]
                  %916 = vst [vmem:[%s620 + $0x24c] sm:%s612] %v915
                  %v917 = vld [vmem:[%s619 + $0x4a0] sm:%s612]
                  %918 = vst [vmem:[%s620 + $0x250] sm:%s612] %v917
                  %v919 = vld [vmem:[%s619 + $0x4a8] sm:%s612]
                  %920 = vst [vmem:[%s620 + $0x254] sm:%s612] %v919
                  %v921 = vld [vmem:[%s619 + $0x4b0] sm:%s612]
                  %922 = vst [vmem:[%s620 + $0x258] sm:%s612] %v921
                  %v923 = vld [vmem:[%s619 + $0x4b8] sm:%s612]
                  %924 = vst [vmem:[%s620 + $0x25c] sm:%s612] %v923
                  %v925 = vld [vmem:[%s619 + $0x4c0] sm:%s612]
                  %926 = vst [vmem:[%s620 + $0x260] sm:%s612] %v925
                  %v927 = vld [vmem:[%s619 + $0x4c8] sm:%s612]
                  %928 = vst [vmem:[%s620 + $0x264] sm:%s612] %v927
                  %v929 = vld [vmem:[%s619 + $0x4d0] sm:%s612]
                  %930 = vst [vmem:[%s620 + $0x268] sm:%s612] %v929
                  %v931 = vld [vmem:[%s619 + $0x4d8] sm:%s612]
                  %932 = vst [vmem:[%s620 + $0x26c] sm:%s612] %v931
                  %v933 = vld [vmem:[%s619 + $0x4e0] sm:%s612]
                  %934 = vst [vmem:[%s620 + $0x270] sm:%s612] %v933
                  %v935 = vld [vmem:[%s619 + $0x4e8] sm:%s612]
                  %936 = vst [vmem:[%s620 + $0x274] sm:%s612] %v935
                  %v937 = vld [vmem:[%s619 + $0x4f0] sm:%s612]
                  %938 = vst [vmem:[%s620 + $0x278] sm:%s612] %v937
                  %v939 = vld [vmem:[%s619 + $0x4f8] sm:%s612]
                  %940 = vst [vmem:[%s620 + $0x27c] sm:%s612] %v939
                  %v941 = vld [vmem:[%s619 + $0x500] sm:%s612]
                  %942 = vst [vmem:[%s620 + $0x280] sm:%s612] %v941
                  %v943 = vld [vmem:[%s619 + $0x508] sm:%s612]
                  %944 = vst [vmem:[%s620 + $0x284] sm:%s612] %v943
                  %v945 = vld [vmem:[%s619 + $0x510] sm:%s612]
                  %946 = vst [vmem:[%s620 + $0x288] sm:%s612] %v945
                  %v947 = vld [vmem:[%s619 + $0x518] sm:%s612]
                  %948 = vst [vmem:[%s620 + $0x28c] sm:%s612] %v947
                  %v949 = vld [vmem:[%s619 + $0x520] sm:%s612]
                  %950 = vst [vmem:[%s620 + $0x290] sm:%s612] %v949
                  %v951 = vld [vmem:[%s619 + $0x528] sm:%s612]
                  %952 = vst [vmem:[%s620 + $0x294] sm:%s612] %v951
                  %v953 = vld [vmem:[%s619 + $0x530] sm:%s612]
                  %954 = vst [vmem:[%s620 + $0x298] sm:%s612] %v953
                  %v955 = vld [vmem:[%s619 + $0x538] sm:%s612]
                  %956 = vst [vmem:[%s620 + $0x29c] sm:%s612] %v955
                  %v957 = vld [vmem:[%s619 + $0x540] sm:%s612]
                  %958 = vst [vmem:[%s620 + $0x2a0] sm:%s612] %v957
                  %v959 = vld [vmem:[%s619 + $0x548] sm:%s612]
                  %960 = vst [vmem:[%s620 + $0x2a4] sm:%s612] %v959
                  %v961 = vld [vmem:[%s619 + $0x550] sm:%s612]
                  %962 = vst [vmem:[%s620 + $0x2a8] sm:%s612] %v961
                  %v963 = vld [vmem:[%s619 + $0x558] sm:%s612]
                  %964 = vst [vmem:[%s620 + $0x2ac] sm:%s612] %v963
                  %v965 = vld [vmem:[%s619 + $0x560] sm:%s612]
                  %966 = vst [vmem:[%s620 + $0x2b0] sm:%s612] %v965
                  %v967 = vld [vmem:[%s619 + $0x568] sm:%s612]
                  %968 = vst [vmem:[%s620 + $0x2b4] sm:%s612] %v967
                  %v969 = vld [vmem:[%s619 + $0x570] sm:%s612]
                  %970 = vst [vmem:[%s620 + $0x2b8] sm:%s612] %v969
                  %v971 = vld [vmem:[%s619 + $0x578] sm:%s612]
                  %972 = vst [vmem:[%s620 + $0x2bc] sm:%s612] %v971
                  %v973 = vld [vmem:[%s619 + $0x580] sm:%s612]
                  %974 = vst [vmem:[%s620 + $0x2c0] sm:%s612] %v973
                  %v975 = vld [vmem:[%s619 + $0x588] sm:%s612]
                  %976 = vst [vmem:[%s620 + $0x2c4] sm:%s612] %v975
                  %v977 = vld [vmem:[%s619 + $0x590] sm:%s612]
                  %978 = vst [vmem:[%s620 + $0x2c8] sm:%s612] %v977
                  %v979 = vld [vmem:[%s619 + $0x598] sm:%s612]
                  %980 = vst [vmem:[%s620 + $0x2cc] sm:%s612] %v979
                  %v981 = vld [vmem:[%s619 + $0x5a0] sm:%s612]
                  %982 = vst [vmem:[%s620 + $0x2d0] sm:%s612] %v981
                  %v983 = vld [vmem:[%s619 + $0x5a8] sm:%s612]
                  %984 = vst [vmem:[%s620 + $0x2d4] sm:%s612] %v983
                  %v985 = vld [vmem:[%s619 + $0x5b0] sm:%s612]
                  %986 = vst [vmem:[%s620 + $0x2d8] sm:%s612] %v985
                  %v987 = vld [vmem:[%s619 + $0x5b8] sm:%s612]
                  %988 = vst [vmem:[%s620 + $0x2dc] sm:%s612] %v987
                  %v989 = vld [vmem:[%s619 + $0x5c0] sm:%s612]
                  %990 = vst [vmem:[%s620 + $0x2e0] sm:%s612] %v989
                  %v991 = vld [vmem:[%s619 + $0x5c8] sm:%s612]
                  %992 = vst [vmem:[%s620 + $0x2e4] sm:%s612] %v991
                  %v993 = vld [vmem:[%s619 + $0x5d0] sm:%s612]
                  %994 = vst [vmem:[%s620 + $0x2e8] sm:%s612] %v993
                  %v995 = vld [vmem:[%s619 + $0x5d8] sm:%s612]
                  %996 = vst [vmem:[%s620 + $0x2ec] sm:%s612] %v995
                  %v997 = vld [vmem:[%s619 + $0x5e0] sm:%s612]
                  %998 = vst [vmem:[%s620 + $0x2f0] sm:%s612] %v997
                  %v999 = vld [vmem:[%s619 + $0x5e8] sm:%s612]
                  %1000 = vst [vmem:[%s620 + $0x2f4] sm:%s612] %v999
                  %v1001 = vld [vmem:[%s619 + $0x5f0] sm:%s612]
                  %1002 = vst [vmem:[%s620 + $0x2f8] sm:%s612] %v1001
                  %v1003 = vld [vmem:[%s619 + $0x5f8] sm:%s612]
                  %1004 = vst [vmem:[%s620 + $0x2fc] sm:%s612] %v1003
                  %v1005 = vld [vmem:[%s619 + $0x600] sm:%s612]
                  %1006 = vst [vmem:[%s620 + $0x300] sm:%s612] %v1005
                  %v1007 = vld [vmem:[%s619 + $0x608] sm:%s612]
                  %1008 = vst [vmem:[%s620 + $0x304] sm:%s612] %v1007
                  %v1009 = vld [vmem:[%s619 + $0x610] sm:%s612]
                  %1010 = vst [vmem:[%s620 + $0x308] sm:%s612] %v1009
                  %v1011 = vld [vmem:[%s619 + $0x618] sm:%s612]
                  %1012 = vst [vmem:[%s620 + $0x30c] sm:%s612] %v1011
                $region59: #{inception_b_forward.12} parent=46 // loop_footer
                  %s618 = sadd.s32 1, %s614
                $region60: #{inception_b_forward.12} parent=46 // loop_footer_branch
                  %613 = sbr.rel target = $region56
                $region61: #{inception_b_forward.12} parent=46 // loop_exit
                  _
              $region47: #{inception_b_forward.12} parent=31 // pred_fallthru
                _
            $region32: #{inception_b_forward.12} parent=27 // pred_fallthru
              _
            // Predicated region
            $region33: #{inception_b_forward.12} parent=27 // pred_check
              _
            $region34: #{inception_b_forward.12} parent=27 // pred_check_branch
              %198 = sbr.rel (0) target = $region36
            $region35: #{inception_b_forward.12} parent=27 // pred_region
              %s200 = ssub.s32 16, 1
              loop: start=0, step=1, limit=1
              $region37: #{inception_b_forward.12} parent=35 // loop_pre_header
                _
              $region38: #{inception_b_forward.12} parent=35 // loop_header
                %s202 = sphi 0, %s206
                %p203 = scmp.ge.s32.totalorder %s202, 1
                %s207 = sphi %s192, %s192
                %s208 = sphi %s190, %s190
              $region39: #{inception_b_forward.12} parent=35 // loop_header_branch
                %205 = sbr.rel (%p203) target = $region43
              $region40: #{inception_b_forward.12} parent=35 // loop_body
                %v209 = vld [vmem:[%s207] sm:%s200]
                %210 = vst [vmem:[%s208] sm:%s200] %v209
                %v211 = vld [vmem:[%s207 + $0x8] sm:%s200]
                %212 = vst [vmem:[%s208 + $0x4] sm:%s200] %v211
                %v213 = vld [vmem:[%s207 + $0x10] sm:%s200]
                %214 = vst [vmem:[%s208 + $0x8] sm:%s200] %v213
                %v215 = vld [vmem:[%s207 + $0x18] sm:%s200]
                %216 = vst [vmem:[%s208 + $0xc] sm:%s200] %v215
                %v217 = vld [vmem:[%s207 + $0x20] sm:%s200]
                %218 = vst [vmem:[%s208 + $0x10] sm:%s200] %v217
                %v219 = vld [vmem:[%s207 + $0x28] sm:%s200]
                %220 = vst [vmem:[%s208 + $0x14] sm:%s200] %v219
                %v221 = vld [vmem:[%s207 + $0x30] sm:%s200]
                %222 = vst [vmem:[%s208 + $0x18] sm:%s200] %v221
                %v223 = vld [vmem:[%s207 + $0x38] sm:%s200]
                %224 = vst [vmem:[%s208 + $0x1c] sm:%s200] %v223
                %v225 = vld [vmem:[%s207 + $0x40] sm:%s200]
                %226 = vst [vmem:[%s208 + $0x20] sm:%s200] %v225
                %v227 = vld [vmem:[%s207 + $0x48] sm:%s200]
                %228 = vst [vmem:[%s208 + $0x24] sm:%s200] %v227
                %v229 = vld [vmem:[%s207 + $0x50] sm:%s200]
                %230 = vst [vmem:[%s208 + $0x28] sm:%s200] %v229
                %v231 = vld [vmem:[%s207 + $0x58] sm:%s200]
                %232 = vst [vmem:[%s208 + $0x2c] sm:%s200] %v231
                %v233 = vld [vmem:[%s207 + $0x60] sm:%s200]
                %234 = vst [vmem:[%s208 + $0x30] sm:%s200] %v233
                %v235 = vld [vmem:[%s207 + $0x68] sm:%s200]
                %236 = vst [vmem:[%s208 + $0x34] sm:%s200] %v235
                %v237 = vld [vmem:[%s207 + $0x70] sm:%s200]
                %238 = vst [vmem:[%s208 + $0x38] sm:%s200] %v237
                %v239 = vld [vmem:[%s207 + $0x78] sm:%s200]
                %240 = vst [vmem:[%s208 + $0x3c] sm:%s200] %v239
                %v241 = vld [vmem:[%s207 + $0x80] sm:%s200]
                %242 = vst [vmem:[%s208 + $0x40] sm:%s200] %v241
                %v243 = vld [vmem:[%s207 + $0x88] sm:%s200]
                %244 = vst [vmem:[%s208 + $0x44] sm:%s200] %v243
                %v245 = vld [vmem:[%s207 + $0x90] sm:%s200]
                %246 = vst [vmem:[%s208 + $0x48] sm:%s200] %v245
                %v247 = vld [vmem:[%s207 + $0x98] sm:%s200]
                %248 = vst [vmem:[%s208 + $0x4c] sm:%s200] %v247
                %v249 = vld [vmem:[%s207 + $0xa0] sm:%s200]
                %250 = vst [vmem:[%s208 + $0x50] sm:%s200] %v249
                %v251 = vld [vmem:[%s207 + $0xa8] sm:%s200]
                %252 = vst [vmem:[%s208 + $0x54] sm:%s200] %v251
                %v253 = vld [vmem:[%s207 + $0xb0] sm:%s200]
                %254 = vst [vmem:[%s208 + $0x58] sm:%s200] %v253
                %v255 = vld [vmem:[%s207 + $0xb8] sm:%s200]
                %256 = vst [vmem:[%s208 + $0x5c] sm:%s200] %v255
                %v257 = vld [vmem:[%s207 + $0xc0] sm:%s200]
                %258 = vst [vmem:[%s208 + $0x60] sm:%s200] %v257
                %v259 = vld [vmem:[%s207 + $0xc8] sm:%s200]
                %260 = vst [vmem:[%s208 + $0x64] sm:%s200] %v259
                %v261 = vld [vmem:[%s207 + $0xd0] sm:%s200]
                %262 = vst [vmem:[%s208 + $0x68] sm:%s200] %v261
                %v263 = vld [vmem:[%s207 + $0xd8] sm:%s200]
                %264 = vst [vmem:[%s208 + $0x6c] sm:%s200] %v263
                %v265 = vld [vmem:[%s207 + $0xe0] sm:%s200]
                %266 = vst [vmem:[%s208 + $0x70] sm:%s200] %v265
                %v267 = vld [vmem:[%s207 + $0xe8] sm:%s200]
                %268 = vst [vmem:[%s208 + $0x74] sm:%s200] %v267
                %v269 = vld [vmem:[%s207 + $0xf0] sm:%s200]
                %270 = vst [vmem:[%s208 + $0x78] sm:%s200] %v269
                %v271 = vld [vmem:[%s207 + $0xf8] sm:%s200]
                %272 = vst [vmem:[%s208 + $0x7c] sm:%s200] %v271
                %v273 = vld [vmem:[%s207 + $0x100] sm:%s200]
                %274 = vst [vmem:[%s208 + $0x80] sm:%s200] %v273
                %v275 = vld [vmem:[%s207 + $0x108] sm:%s200]
                %276 = vst [vmem:[%s208 + $0x84] sm:%s200] %v275
                %v277 = vld [vmem:[%s207 + $0x110] sm:%s200]
                %278 = vst [vmem:[%s208 + $0x88] sm:%s200] %v277
                %v279 = vld [vmem:[%s207 + $0x118] sm:%s200]
                %280 = vst [vmem:[%s208 + $0x8c] sm:%s200] %v279
                %v281 = vld [vmem:[%s207 + $0x120] sm:%s200]
                %282 = vst [vmem:[%s208 + $0x90] sm:%s200] %v281
                %v283 = vld [vmem:[%s207 + $0x128] sm:%s200]
                %284 = vst [vmem:[%s208 + $0x94] sm:%s200] %v283
                %v285 = vld [vmem:[%s207 + $0x130] sm:%s200]
                %286 = vst [vmem:[%s208 + $0x98] sm:%s200] %v285
                %v287 = vld [vmem:[%s207 + $0x138] sm:%s200]
                %288 = vst [vmem:[%s208 + $0x9c] sm:%s200] %v287
                %v289 = vld [vmem:[%s207 + $0x140] sm:%s200]
                %290 = vst [vmem:[%s208 + $0xa0] sm:%s200] %v289
                %v291 = vld [vmem:[%s207 + $0x148] sm:%s200]
                %292 = vst [vmem:[%s208 + $0xa4] sm:%s200] %v291
                %v293 = vld [vmem:[%s207 + $0x150] sm:%s200]
                %294 = vst [vmem:[%s208 + $0xa8] sm:%s200] %v293
                %v295 = vld [vmem:[%s207 + $0x158] sm:%s200]
                %296 = vst [vmem:[%s208 + $0xac] sm:%s200] %v295
                %v297 = vld [vmem:[%s207 + $0x160] sm:%s200]
                %298 = vst [vmem:[%s208 + $0xb0] sm:%s200] %v297
                %v299 = vld [vmem:[%s207 + $0x168] sm:%s200]
                %300 = vst [vmem:[%s208 + $0xb4] sm:%s200] %v299
                %v301 = vld [vmem:[%s207 + $0x170] sm:%s200]
                %302 = vst [vmem:[%s208 + $0xb8] sm:%s200] %v301
                %v303 = vld [vmem:[%s207 + $0x178] sm:%s200]
                %304 = vst [vmem:[%s208 + $0xbc] sm:%s200] %v303
                %v305 = vld [vmem:[%s207 + $0x180] sm:%s200]
                %306 = vst [vmem:[%s208 + $0xc0] sm:%s200] %v305
                %v307 = vld [vmem:[%s207 + $0x188] sm:%s200]
                %308 = vst [vmem:[%s208 + $0xc4] sm:%s200] %v307
                %v309 = vld [vmem:[%s207 + $0x190] sm:%s200]
                %310 = vst [vmem:[%s208 + $0xc8] sm:%s200] %v309
                %v311 = vld [vmem:[%s207 + $0x198] sm:%s200]
                %312 = vst [vmem:[%s208 + $0xcc] sm:%s200] %v311
                %v313 = vld [vmem:[%s207 + $0x1a0] sm:%s200]
                %314 = vst [vmem:[%s208 + $0xd0] sm:%s200] %v313
                %v315 = vld [vmem:[%s207 + $0x1a8] sm:%s200]
                %316 = vst [vmem:[%s208 + $0xd4] sm:%s200] %v315
                %v317 = vld [vmem:[%s207 + $0x1b0] sm:%s200]
                %318 = vst [vmem:[%s208 + $0xd8] sm:%s200] %v317
                %v319 = vld [vmem:[%s207 + $0x1b8] sm:%s200]
                %320 = vst [vmem:[%s208 + $0xdc] sm:%s200] %v319
                %v321 = vld [vmem:[%s207 + $0x1c0] sm:%s200]
                %322 = vst [vmem:[%s208 + $0xe0] sm:%s200] %v321
                %v323 = vld [vmem:[%s207 + $0x1c8] sm:%s200]
                %324 = vst [vmem:[%s208 + $0xe4] sm:%s200] %v323
                %v325 = vld [vmem:[%s207 + $0x1d0] sm:%s200]
                %326 = vst [vmem:[%s208 + $0xe8] sm:%s200] %v325
                %v327 = vld [vmem:[%s207 + $0x1d8] sm:%s200]
                %328 = vst [vmem:[%s208 + $0xec] sm:%s200] %v327
                %v329 = vld [vmem:[%s207 + $0x1e0] sm:%s200]
                %330 = vst [vmem:[%s208 + $0xf0] sm:%s200] %v329
                %v331 = vld [vmem:[%s207 + $0x1e8] sm:%s200]
                %332 = vst [vmem:[%s208 + $0xf4] sm:%s200] %v331
                %v333 = vld [vmem:[%s207 + $0x1f0] sm:%s200]
                %334 = vst [vmem:[%s208 + $0xf8] sm:%s200] %v333
                %v335 = vld [vmem:[%s207 + $0x1f8] sm:%s200]
                %336 = vst [vmem:[%s208 + $0xfc] sm:%s200] %v335
                %v337 = vld [vmem:[%s207 + $0x200] sm:%s200]
                %338 = vst [vmem:[%s208 + $0x100] sm:%s200] %v337
                %v339 = vld [vmem:[%s207 + $0x208] sm:%s200]
                %340 = vst [vmem:[%s208 + $0x104] sm:%s200] %v339
                %v341 = vld [vmem:[%s207 + $0x210] sm:%s200]
                %342 = vst [vmem:[%s208 + $0x108] sm:%s200] %v341
                %v343 = vld [vmem:[%s207 + $0x218] sm:%s200]
                %344 = vst [vmem:[%s208 + $0x10c] sm:%s200] %v343
                %v345 = vld [vmem:[%s207 + $0x220] sm:%s200]
                %346 = vst [vmem:[%s208 + $0x110] sm:%s200] %v345
                %v347 = vld [vmem:[%s207 + $0x228] sm:%s200]
                %348 = vst [vmem:[%s208 + $0x114] sm:%s200] %v347
                %v349 = vld [vmem:[%s207 + $0x230] sm:%s200]
                %350 = vst [vmem:[%s208 + $0x118] sm:%s200] %v349
                %v351 = vld [vmem:[%s207 + $0x238] sm:%s200]
                %352 = vst [vmem:[%s208 + $0x11c] sm:%s200] %v351
                %v353 = vld [vmem:[%s207 + $0x240] sm:%s200]
                %354 = vst [vmem:[%s208 + $0x120] sm:%s200] %v353
                %v355 = vld [vmem:[%s207 + $0x248] sm:%s200]
                %356 = vst [vmem:[%s208 + $0x124] sm:%s200] %v355
                %v357 = vld [vmem:[%s207 + $0x250] sm:%s200]
                %358 = vst [vmem:[%s208 + $0x128] sm:%s200] %v357
                %v359 = vld [vmem:[%s207 + $0x258] sm:%s200]
                %360 = vst [vmem:[%s208 + $0x12c] sm:%s200] %v359
                %v361 = vld [vmem:[%s207 + $0x260] sm:%s200]
                %362 = vst [vmem:[%s208 + $0x130] sm:%s200] %v361
                %v363 = vld [vmem:[%s207 + $0x268] sm:%s200]
                %364 = vst [vmem:[%s208 + $0x134] sm:%s200] %v363
                %v365 = vld [vmem:[%s207 + $0x270] sm:%s200]
                %366 = vst [vmem:[%s208 + $0x138] sm:%s200] %v365
                %v367 = vld [vmem:[%s207 + $0x278] sm:%s200]
                %368 = vst [vmem:[%s208 + $0x13c] sm:%s200] %v367
                %v369 = vld [vmem:[%s207 + $0x280] sm:%s200]
                %370 = vst [vmem:[%s208 + $0x140] sm:%s200] %v369
                %v371 = vld [vmem:[%s207 + $0x288] sm:%s200]
                %372 = vst [vmem:[%s208 + $0x144] sm:%s200] %v371
                %v373 = vld [vmem:[%s207 + $0x290] sm:%s200]
                %374 = vst [vmem:[%s208 + $0x148] sm:%s200] %v373
                %v375 = vld [vmem:[%s207 + $0x298] sm:%s200]
                %376 = vst [vmem:[%s208 + $0x14c] sm:%s200] %v375
                %v377 = vld [vmem:[%s207 + $0x2a0] sm:%s200]
                %378 = vst [vmem:[%s208 + $0x150] sm:%s200] %v377
                %v379 = vld [vmem:[%s207 + $0x2a8] sm:%s200]
                %380 = vst [vmem:[%s208 + $0x154] sm:%s200] %v379
                %v381 = vld [vmem:[%s207 + $0x2b0] sm:%s200]
                %382 = vst [vmem:[%s208 + $0x158] sm:%s200] %v381
                %v383 = vld [vmem:[%s207 + $0x2b8] sm:%s200]
                %384 = vst [vmem:[%s208 + $0x15c] sm:%s200] %v383
                %v385 = vld [vmem:[%s207 + $0x2c0] sm:%s200]
                %386 = vst [vmem:[%s208 + $0x160] sm:%s200] %v385
                %v387 = vld [vmem:[%s207 + $0x2c8] sm:%s200]
                %388 = vst [vmem:[%s208 + $0x164] sm:%s200] %v387
                %v389 = vld [vmem:[%s207 + $0x2d0] sm:%s200]
                %390 = vst [vmem:[%s208 + $0x168] sm:%s200] %v389
                %v391 = vld [vmem:[%s207 + $0x2d8] sm:%s200]
                %392 = vst [vmem:[%s208 + $0x16c] sm:%s200] %v391
                %v393 = vld [vmem:[%s207 + $0x2e0] sm:%s200]
                %394 = vst [vmem:[%s208 + $0x170] sm:%s200] %v393
                %v395 = vld [vmem:[%s207 + $0x2e8] sm:%s200]
                %396 = vst [vmem:[%s208 + $0x174] sm:%s200] %v395
                %v397 = vld [vmem:[%s207 + $0x2f0] sm:%s200]
                %398 = vst [vmem:[%s208 + $0x178] sm:%s200] %v397
                %v399 = vld [vmem:[%s207 + $0x2f8] sm:%s200]
                %400 = vst [vmem:[%s208 + $0x17c] sm:%s200] %v399
                %v401 = vld [vmem:[%s207 + $0x300] sm:%s200]
                %402 = vst [vmem:[%s208 + $0x180] sm:%s200] %v401
                %v403 = vld [vmem:[%s207 + $0x308] sm:%s200]
                %404 = vst [vmem:[%s208 + $0x184] sm:%s200] %v403
                %v405 = vld [vmem:[%s207 + $0x310] sm:%s200]
                %406 = vst [vmem:[%s208 + $0x188] sm:%s200] %v405
                %v407 = vld [vmem:[%s207 + $0x318] sm:%s200]
                %408 = vst [vmem:[%s208 + $0x18c] sm:%s200] %v407
                %v409 = vld [vmem:[%s207 + $0x320] sm:%s200]
                %410 = vst [vmem:[%s208 + $0x190] sm:%s200] %v409
                %v411 = vld [vmem:[%s207 + $0x328] sm:%s200]
                %412 = vst [vmem:[%s208 + $0x194] sm:%s200] %v411
                %v413 = vld [vmem:[%s207 + $0x330] sm:%s200]
                %414 = vst [vmem:[%s208 + $0x198] sm:%s200] %v413
                %v415 = vld [vmem:[%s207 + $0x338] sm:%s200]
                %416 = vst [vmem:[%s208 + $0x19c] sm:%s200] %v415
                %v417 = vld [vmem:[%s207 + $0x340] sm:%s200]
                %418 = vst [vmem:[%s208 + $0x1a0] sm:%s200] %v417
                %v419 = vld [vmem:[%s207 + $0x348] sm:%s200]
                %420 = vst [vmem:[%s208 + $0x1a4] sm:%s200] %v419
                %v421 = vld [vmem:[%s207 + $0x350] sm:%s200]
                %422 = vst [vmem:[%s208 + $0x1a8] sm:%s200] %v421
                %v423 = vld [vmem:[%s207 + $0x358] sm:%s200]
                %424 = vst [vmem:[%s208 + $0x1ac] sm:%s200] %v423
                %v425 = vld [vmem:[%s207 + $0x360] sm:%s200]
                %426 = vst [vmem:[%s208 + $0x1b0] sm:%s200] %v425
                %v427 = vld [vmem:[%s207 + $0x368] sm:%s200]
                %428 = vst [vmem:[%s208 + $0x1b4] sm:%s200] %v427
                %v429 = vld [vmem:[%s207 + $0x370] sm:%s200]
                %430 = vst [vmem:[%s208 + $0x1b8] sm:%s200] %v429
                %v431 = vld [vmem:[%s207 + $0x378] sm:%s200]
                %432 = vst [vmem:[%s208 + $0x1bc] sm:%s200] %v431
                %v433 = vld [vmem:[%s207 + $0x380] sm:%s200]
                %434 = vst [vmem:[%s208 + $0x1c0] sm:%s200] %v433
                %v435 = vld [vmem:[%s207 + $0x388] sm:%s200]
                %436 = vst [vmem:[%s208 + $0x1c4] sm:%s200] %v435
                %v437 = vld [vmem:[%s207 + $0x390] sm:%s200]
                %438 = vst [vmem:[%s208 + $0x1c8] sm:%s200] %v437
                %v439 = vld [vmem:[%s207 + $0x398] sm:%s200]
                %440 = vst [vmem:[%s208 + $0x1cc] sm:%s200] %v439
                %v441 = vld [vmem:[%s207 + $0x3a0] sm:%s200]
                %442 = vst [vmem:[%s208 + $0x1d0] sm:%s200] %v441
                %v443 = vld [vmem:[%s207 + $0x3a8] sm:%s200]
                %444 = vst [vmem:[%s208 + $0x1d4] sm:%s200] %v443
                %v445 = vld [vmem:[%s207 + $0x3b0] sm:%s200]
                %446 = vst [vmem:[%s208 + $0x1d8] sm:%s200] %v445
                %v447 = vld [vmem:[%s207 + $0x3b8] sm:%s200]
                %448 = vst [vmem:[%s208 + $0x1dc] sm:%s200] %v447
                %v449 = vld [vmem:[%s207 + $0x3c0] sm:%s200]
                %450 = vst [vmem:[%s208 + $0x1e0] sm:%s200] %v449
                %v451 = vld [vmem:[%s207 + $0x3c8] sm:%s200]
                %452 = vst [vmem:[%s208 + $0x1e4] sm:%s200] %v451
                %v453 = vld [vmem:[%s207 + $0x3d0] sm:%s200]
                %454 = vst [vmem:[%s208 + $0x1e8] sm:%s200] %v453
                %v455 = vld [vmem:[%s207 + $0x3d8] sm:%s200]
                %456 = vst [vmem:[%s208 + $0x1ec] sm:%s200] %v455
                %v457 = vld [vmem:[%s207 + $0x3e0] sm:%s200]
                %458 = vst [vmem:[%s208 + $0x1f0] sm:%s200] %v457
                %v459 = vld [vmem:[%s207 + $0x3e8] sm:%s200]
                %460 = vst [vmem:[%s208 + $0x1f4] sm:%s200] %v459
                %v461 = vld [vmem:[%s207 + $0x3f0] sm:%s200]
                %462 = vst [vmem:[%s208 + $0x1f8] sm:%s200] %v461
                %v463 = vld [vmem:[%s207 + $0x3f8] sm:%s200]
                %464 = vst [vmem:[%s208 + $0x1fc] sm:%s200] %v463
                %v465 = vld [vmem:[%s207 + $0x400] sm:%s200]
                %466 = vst [vmem:[%s208 + $0x200] sm:%s200] %v465
                %v467 = vld [vmem:[%s207 + $0x408] sm:%s200]
                %468 = vst [vmem:[%s208 + $0x204] sm:%s200] %v467
                %v469 = vld [vmem:[%s207 + $0x410] sm:%s200]
                %470 = vst [vmem:[%s208 + $0x208] sm:%s200] %v469
                %v471 = vld [vmem:[%s207 + $0x418] sm:%s200]
                %472 = vst [vmem:[%s208 + $0x20c] sm:%s200] %v471
                %v473 = vld [vmem:[%s207 + $0x420] sm:%s200]
                %474 = vst [vmem:[%s208 + $0x210] sm:%s200] %v473
                %v475 = vld [vmem:[%s207 + $0x428] sm:%s200]
                %476 = vst [vmem:[%s208 + $0x214] sm:%s200] %v475
                %v477 = vld [vmem:[%s207 + $0x430] sm:%s200]
                %478 = vst [vmem:[%s208 + $0x218] sm:%s200] %v477
                %v479 = vld [vmem:[%s207 + $0x438] sm:%s200]
                %480 = vst [vmem:[%s208 + $0x21c] sm:%s200] %v479
                %v481 = vld [vmem:[%s207 + $0x440] sm:%s200]
                %482 = vst [vmem:[%s208 + $0x220] sm:%s200] %v481
                %v483 = vld [vmem:[%s207 + $0x448] sm:%s200]
                %484 = vst [vmem:[%s208 + $0x224] sm:%s200] %v483
                %v485 = vld [vmem:[%s207 + $0x450] sm:%s200]
                %486 = vst [vmem:[%s208 + $0x228] sm:%s200] %v485
                %v487 = vld [vmem:[%s207 + $0x458] sm:%s200]
                %488 = vst [vmem:[%s208 + $0x22c] sm:%s200] %v487
                %v489 = vld [vmem:[%s207 + $0x460] sm:%s200]
                %490 = vst [vmem:[%s208 + $0x230] sm:%s200] %v489
                %v491 = vld [vmem:[%s207 + $0x468] sm:%s200]
                %492 = vst [vmem:[%s208 + $0x234] sm:%s200] %v491
                %v493 = vld [vmem:[%s207 + $0x470] sm:%s200]
                %494 = vst [vmem:[%s208 + $0x238] sm:%s200] %v493
                %v495 = vld [vmem:[%s207 + $0x478] sm:%s200]
                %496 = vst [vmem:[%s208 + $0x23c] sm:%s200] %v495
                %v497 = vld [vmem:[%s207 + $0x480] sm:%s200]
                %498 = vst [vmem:[%s208 + $0x240] sm:%s200] %v497
                %v499 = vld [vmem:[%s207 + $0x488] sm:%s200]
                %500 = vst [vmem:[%s208 + $0x244] sm:%s200] %v499
                %v501 = vld [vmem:[%s207 + $0x490] sm:%s200]
                %502 = vst [vmem:[%s208 + $0x248] sm:%s200] %v501
                %v503 = vld [vmem:[%s207 + $0x498] sm:%s200]
                %504 = vst [vmem:[%s208 + $0x24c] sm:%s200] %v503
                %v505 = vld [vmem:[%s207 + $0x4a0] sm:%s200]
                %506 = vst [vmem:[%s208 + $0x250] sm:%s200] %v505
                %v507 = vld [vmem:[%s207 + $0x4a8] sm:%s200]
                %508 = vst [vmem:[%s208 + $0x254] sm:%s200] %v507
                %v509 = vld [vmem:[%s207 + $0x4b0] sm:%s200]
                %510 = vst [vmem:[%s208 + $0x258] sm:%s200] %v509
                %v511 = vld [vmem:[%s207 + $0x4b8] sm:%s200]
                %512 = vst [vmem:[%s208 + $0x25c] sm:%s200] %v511
                %v513 = vld [vmem:[%s207 + $0x4c0] sm:%s200]
                %514 = vst [vmem:[%s208 + $0x260] sm:%s200] %v513
                %v515 = vld [vmem:[%s207 + $0x4c8] sm:%s200]
                %516 = vst [vmem:[%s208 + $0x264] sm:%s200] %v515
                %v517 = vld [vmem:[%s207 + $0x4d0] sm:%s200]
                %518 = vst [vmem:[%s208 + $0x268] sm:%s200] %v517
                %v519 = vld [vmem:[%s207 + $0x4d8] sm:%s200]
                %520 = vst [vmem:[%s208 + $0x26c] sm:%s200] %v519
                %v521 = vld [vmem:[%s207 + $0x4e0] sm:%s200]
                %522 = vst [vmem:[%s208 + $0x270] sm:%s200] %v521
                %v523 = vld [vmem:[%s207 + $0x4e8] sm:%s200]
                %524 = vst [vmem:[%s208 + $0x274] sm:%s200] %v523
                %v525 = vld [vmem:[%s207 + $0x4f0] sm:%s200]
                %526 = vst [vmem:[%s208 + $0x278] sm:%s200] %v525
                %v527 = vld [vmem:[%s207 + $0x4f8] sm:%s200]
                %528 = vst [vmem:[%s208 + $0x27c] sm:%s200] %v527
                %v529 = vld [vmem:[%s207 + $0x500] sm:%s200]
                %530 = vst [vmem:[%s208 + $0x280] sm:%s200] %v529
                %v531 = vld [vmem:[%s207 + $0x508] sm:%s200]
                %532 = vst [vmem:[%s208 + $0x284] sm:%s200] %v531
                %v533 = vld [vmem:[%s207 + $0x510] sm:%s200]
                %534 = vst [vmem:[%s208 + $0x288] sm:%s200] %v533
                %v535 = vld [vmem:[%s207 + $0x518] sm:%s200]
                %536 = vst [vmem:[%s208 + $0x28c] sm:%s200] %v535
                %v537 = vld [vmem:[%s207 + $0x520] sm:%s200]
                %538 = vst [vmem:[%s208 + $0x290] sm:%s200] %v537
                %v539 = vld [vmem:[%s207 + $0x528] sm:%s200]
                %540 = vst [vmem:[%s208 + $0x294] sm:%s200] %v539
                %v541 = vld [vmem:[%s207 + $0x530] sm:%s200]
                %542 = vst [vmem:[%s208 + $0x298] sm:%s200] %v541
                %v543 = vld [vmem:[%s207 + $0x538] sm:%s200]
                %544 = vst [vmem:[%s208 + $0x29c] sm:%s200] %v543
                %v545 = vld [vmem:[%s207 + $0x540] sm:%s200]
                %546 = vst [vmem:[%s208 + $0x2a0] sm:%s200] %v545
                %v547 = vld [vmem:[%s207 + $0x548] sm:%s200]
                %548 = vst [vmem:[%s208 + $0x2a4] sm:%s200] %v547
                %v549 = vld [vmem:[%s207 + $0x550] sm:%s200]
                %550 = vst [vmem:[%s208 + $0x2a8] sm:%s200] %v549
                %v551 = vld [vmem:[%s207 + $0x558] sm:%s200]
                %552 = vst [vmem:[%s208 + $0x2ac] sm:%s200] %v551
                %v553 = vld [vmem:[%s207 + $0x560] sm:%s200]
                %554 = vst [vmem:[%s208 + $0x2b0] sm:%s200] %v553
                %v555 = vld [vmem:[%s207 + $0x568] sm:%s200]
                %556 = vst [vmem:[%s208 + $0x2b4] sm:%s200] %v555
                %v557 = vld [vmem:[%s207 + $0x570] sm:%s200]
                %558 = vst [vmem:[%s208 + $0x2b8] sm:%s200] %v557
                %v559 = vld [vmem:[%s207 + $0x578] sm:%s200]
                %560 = vst [vmem:[%s208 + $0x2bc] sm:%s200] %v559
                %v561 = vld [vmem:[%s207 + $0x580] sm:%s200]
                %562 = vst [vmem:[%s208 + $0x2c0] sm:%s200] %v561
                %v563 = vld [vmem:[%s207 + $0x588] sm:%s200]
                %564 = vst [vmem:[%s208 + $0x2c4] sm:%s200] %v563
                %v565 = vld [vmem:[%s207 + $0x590] sm:%s200]
                %566 = vst [vmem:[%s208 + $0x2c8] sm:%s200] %v565
                %v567 = vld [vmem:[%s207 + $0x598] sm:%s200]
                %568 = vst [vmem:[%s208 + $0x2cc] sm:%s200] %v567
                %v569 = vld [vmem:[%s207 + $0x5a0] sm:%s200]
                %570 = vst [vmem:[%s208 + $0x2d0] sm:%s200] %v569
                %v571 = vld [vmem:[%s207 + $0x5a8] sm:%s200]
                %572 = vst [vmem:[%s208 + $0x2d4] sm:%s200] %v571
                %v573 = vld [vmem:[%s207 + $0x5b0] sm:%s200]
                %574 = vst [vmem:[%s208 + $0x2d8] sm:%s200] %v573
                %v575 = vld [vmem:[%s207 + $0x5b8] sm:%s200]
                %576 = vst [vmem:[%s208 + $0x2dc] sm:%s200] %v575
                %v577 = vld [vmem:[%s207 + $0x5c0] sm:%s200]
                %578 = vst [vmem:[%s208 + $0x2e0] sm:%s200] %v577
                %v579 = vld [vmem:[%s207 + $0x5c8] sm:%s200]
                %580 = vst [vmem:[%s208 + $0x2e4] sm:%s200] %v579
                %v581 = vld [vmem:[%s207 + $0x5d0] sm:%s200]
                %582 = vst [vmem:[%s208 + $0x2e8] sm:%s200] %v581
                %v583 = vld [vmem:[%s207 + $0x5d8] sm:%s200]
                %584 = vst [vmem:[%s208 + $0x2ec] sm:%s200] %v583
                %v585 = vld [vmem:[%s207 + $0x5e0] sm:%s200]
                %586 = vst [vmem:[%s208 + $0x2f0] sm:%s200] %v585
                %v587 = vld [vmem:[%s207 + $0x5e8] sm:%s200]
                %588 = vst [vmem:[%s208 + $0x2f4] sm:%s200] %v587
                %v589 = vld [vmem:[%s207 + $0x5f0] sm:%s200]
                %590 = vst [vmem:[%s208 + $0x2f8] sm:%s200] %v589
                %v591 = vld [vmem:[%s207 + $0x5f8] sm:%s200]
                %592 = vst [vmem:[%s208 + $0x2fc] sm:%s200] %v591
                %v593 = vld [vmem:[%s207 + $0x600] sm:%s200]
                %594 = vst [vmem:[%s208 + $0x300] sm:%s200] %v593
                %v595 = vld [vmem:[%s207 + $0x608] sm:%s200]
                %596 = vst [vmem:[%s208 + $0x304] sm:%s200] %v595
                %v597 = vld [vmem:[%s207 + $0x610] sm:%s200]
                %598 = vst [vmem:[%s208 + $0x308] sm:%s200] %v597
                %v599 = vld [vmem:[%s207 + $0x618] sm:%s200]
                %600 = vst [vmem:[%s208 + $0x30c] sm:%s200] %v599
              $region41: #{inception_b_forward.12} parent=35 // loop_footer
                %s206 = sadd.s32 1, %s202
              $region42: #{inception_b_forward.12} parent=35 // loop_footer_branch
                %201 = sbr.rel target = $region38
              $region43: #{inception_b_forward.12} parent=35 // loop_exit
                _
            $region36: #{inception_b_forward.12} parent=27 // pred_fallthru
              _
          $region28: #{inception_b_forward.12} parent=23 // pred_fallthru
            _
          %1013 = vnop
        $region24: #{inception_b_forward.12} parent=19 // pred_fallthru
          _
        // Predicated region
        $region62: #{inception_b_forward.12} parent=19 // pred_check
          %p1014 = pneg %p78
        $region63: #{inception_b_forward.12} parent=19 // pred_check_branch
          %1016 = sbr.rel (%p1014) target = $region65
        $region64: #{inception_b_forward.12} parent=19 // pred_region
          %p1017 = scmp.lt.s32.totalorder %s11, 1
          %s1018 = scalar_select %p1017, %s11, 1
          %s1019 = scalar_lea.vmem %s2, %s1018
        $region65: #{inception_b_forward.12} parent=19 // pred_fallthru
          _
        // Predicated region
        $region66: #{inception_b_forward.12} parent=19 // pred_check
          %p1020 = pneg %p104
        $region67: #{inception_b_forward.12} parent=19 // pred_check_branch
          %1022 = sbr.rel (%p1020) target = $region69
        $region68: #{inception_b_forward.12} parent=19 // pred_region
          %p1023 = scmp.lt.s32.totalorder %s11, 1
          %s1024 = scalar_select %p1023, %s11, 1
          %s1025 = scalar_lea.vmem %s3, %s1024
        $region69: #{inception_b_forward.12} parent=19 // pred_fallthru
          _
        // Predicated region
        $region70: #{inception_b_forward.12} parent=19 // pred_check
          %p1026 = pneg %p130
        $region71: #{inception_b_forward.12} parent=19 // pred_check_branch
          %1028 = sbr.rel (%p1026) target = $region73
        $region72: #{inception_b_forward.12} parent=19 // pred_region
          %p1029 = scmp.lt.s32.totalorder %s11, 1
          %s1030 = scalar_select %p1029, %s11, 1
          %s1031 = scalar_lea.vmem %s4, %s1030
        $region73: #{inception_b_forward.12} parent=19 // pred_fallthru
          _
      $region20: #{inception_b_forward.12} parent=5 // pred_fallthru
        _
      %p1032 = scmp.le.s32.totalorder 1, %s11
      %p1033 = scmp.lt.s32.totalorder %s11, 3
      %p1034 = pnand %p1032, %p1033
      %p1035 = pneg %p1034
      // Predicated region
      $region74: #{inception_b_forward.12} parent=5 // pred_check
        _
      $region75: #{inception_b_forward.12} parent=5 // pred_check_branch
        %1037 = sbr.rel (%p1034) target = $region77
      $region76: #{inception_b_forward.12} parent=5 // pred_region
        %s1038 = ssub.s32 %s11, 1
        %s1039 = sand.u32 %s45, 1
        %s1040 = sand.u32 %s45, 1
        %s1041 = smul.addr %s1040, 784
        %s1042 = scalar_lea.vmem [#allocation2], %s1041
        // Predicated region
        $region78: #{inception_b_forward.12} parent=76 // pred_check
          %p1043 = pneg %p58
        $region79: #{inception_b_forward.12} parent=76 // pred_check_branch
          %1045 = sbr.rel (%p1043) target = $region81
        $region80: #{inception_b_forward.12} parent=76 // pred_region
          _
        $region81: #{inception_b_forward.12} parent=76 // pred_fallthru
          _
        %p1046 = pneg %p32
        %p1047 = pneg %p29
        %s1048 = sand.u32 %s45, 1
        %s1049 = sand.u32 %s45, 1
        %s1050 = smul.addr %s1049, 784
        %s1051 = scalar_lea.vmem [#allocation2], %s1050
        %p1052 = pneg %p58
        %p1053 = pneg %p55
        %p1054 = scmp.lt.s32.totalorder %s16, 1
        %s1055 = scalar_select %p1054, %s16, 1
        %s1056 = scalar_lea.vmem %s2, %s1055
        %p1057 = pneg %p84
        %p1058 = pneg %p81
        %p1059 = scmp.lt.s32.totalorder %s16, 1
        %s1060 = scalar_select %p1059, %s16, 1
        %s1061 = scalar_lea.vmem %s3, %s1060
        %p1062 = pneg %p110
        %p1063 = pneg %p107
        %p1064 = scmp.lt.s32.totalorder %s16, 1
        %s1065 = scalar_select %p1064, %s16, 1
        %s1066 = scalar_lea.vmem %s4, %s1065
        %p1067 = pneg %p136
        %p1068 = pneg %p133
        %p1069 = pneg %p162
        %p1070 = pneg %p159
        %s1071 = sand.u32 %s149, 1
        %s1072 = sand.u32 %s149, 1
        %s1073 = smul.addr %s1072, 128
        %s1074 = scalar_lea.vmem [#allocation3], %s1073
        %p1075 = scmp.lt.s32.totalorder %s16, 1
        %s1076 = scalar_select %p1075, %s16, 1
        %s1077 = scalar_lea.vmem %s2, %s1076
        %p1078 = scmp.lt.s32.totalorder %s16, 1
        %s1079 = scalar_select %p1078, %s16, 1
        %s1080 = scalar_lea.vmem %s3, %s1079
        %p1081 = scmp.lt.s32.totalorder %s16, 1
        %s1082 = scalar_select %p1081, %s16, 1
        %s1083 = scalar_lea.vmem %s4, %s1082
        %v1085 = vld [vmem:[%s0] sm:$0xff]
        %v1086 = vld [vmem:[%s0 + $0x8] sm:$0xff]
        %v1087 = vld [vmem:[%s0 + $0x10] sm:$0xff]
        %v1088 = vld [vmem:[%s0 + $0x18] sm:$0xff]
        %v1089 = vld [vmem:[%s0 + $0x20] sm:$0xff]
        %v1090 = vld [vmem:[%s0 + $0x28] sm:$0xff]
        %v1091 = vld [vmem:[%s0 + $0x30] sm:$0xff]
        %v1092 = vld [vmem:[%s0 + $0x38] sm:$0xff]
        %v1093 = vld [vmem:[%s0 + $0x40] sm:$0xff]
        %v1094 = vld [vmem:[%s0 + $0x48] sm:$0xff]
        %v1095 = vld [vmem:[%s0 + $0x50] sm:$0xff]
        %v1096 = vld [vmem:[%s0 + $0x58] sm:$0xff]
        %v1097 = vld [vmem:[%s0 + $0x60] sm:$0xff]
        %v1098 = vld [vmem:[%s0 + $0x68] sm:$0xff]
        %v1099 = vld [vmem:[%s0 + $0x70] sm:$0xff]
        %v1100 = vld [vmem:[%s0 + $0x78] sm:$0xff]
        %v1101 = vld [vmem:[%s1042] sm:$0xf]
        %v1102 = vld [vmem:[%s1042 + $0x4] sm:$0xf]
        %v1103 = vld [vmem:[%s1042 + $0x8] sm:$0xf]
        %v1104 = vld [vmem:[%s1042 + $0xc] sm:$0xf]
        %v1105 = vld [vmem:[%s1042 + $0x10] sm:$0xf]
        %v1106 = vld [vmem:[%s1042 + $0x14] sm:$0xf]
        %v1107 = vld [vmem:[%s1042 + $0x18] sm:$0xf]
        %v1108 = vld [vmem:[%s1042 + $0x1c] sm:$0xf]
        %v1109 = vld [vmem:[%s1042 + $0x20] sm:$0xf]
        %v1110 = vld [vmem:[%s1042 + $0x24] sm:$0xf]
        %v1111 = vld [vmem:[%s1042 + $0x28] sm:$0xf]
        %v1112 = vld [vmem:[%s1042 + $0x2c] sm:$0xf]
        %v1113 = vld [vmem:[%s1042 + $0x30] sm:$0xf]
        %v1114 = vld [vmem:[%s1042 + $0x34] sm:$0xf]
        %v1115 = vld [vmem:[%s1042 + $0x38] sm:$0xf]
        %v1116 = vld [vmem:[%s1042 + $0x3c] sm:$0xf]
        %v1117 = vld [vmem:[%s1042 + $0x40] sm:$0xf]
        %v1118 = vld [vmem:[%s1042 + $0x44] sm:$0xf]
        %v1119 = vld [vmem:[%s1042 + $0x48] sm:$0xf]
        %v1120 = vld [vmem:[%s1042 + $0x4c] sm:$0xf]
        %v1121 = vld [vmem:[%s1042 + $0x50] sm:$0xf]
        %v1122 = vld [vmem:[%s1042 + $0x54] sm:$0xf]
        %v1123 = vld [vmem:[%s1042 + $0x58] sm:$0xf]
        %v1124 = vld [vmem:[%s1042 + $0x5c] sm:$0xf]
        %v1125 = vld [vmem:[%s1042 + $0x60] sm:$0xf]
        %v1126 = vld [vmem:[%s1042 + $0x64] sm:$0xf]
        %v1127 = vld [vmem:[%s1042 + $0x68] sm:$0xf]
        %v1128 = vld [vmem:[%s1042 + $0x6c] sm:$0xf]
        %v1129 = vld [vmem:[%s0 + $0x80] sm:$0xff]
        %v1130 = vld [vmem:[%s0 + $0x88] sm:$0xff]
        %s1131 = scalar_lea.vmem %s1042, 112 [#allocation2]
        %v1132 = vld [vmem:[%s1131] sm:$0xf]
        %v1133 = vld [vmem:[%s1131 + $0x4] sm:$0xf]
        %v1134 = vld [vmem:[%s1131 + $0x8] sm:$0xf]
        %v1135 = vld [vmem:[%s1131 + $0xc] sm:$0xf]
        %v1136 = vld [vmem:[%s1131 + $0x10] sm:$0xf]
        %v1137 = vld [vmem:[%s1131 + $0x14] sm:$0xf]
        %v1138 = vld [vmem:[%s1131 + $0x18] sm:$0xf]
        %v1139 = vld [vmem:[%s1131 + $0x1c] sm:$0xf]
        %v1140 = vld [vmem:[%s1131 + $0x20] sm:$0xf]
        %v1141 = vld [vmem:[%s1131 + $0x24] sm:$0xf]
        %v1142 = vld [vmem:[%s1131 + $0x28] sm:$0xf]
        %v1143 = vld [vmem:[%s1131 + $0x2c] sm:$0xf]
        %v1144 = vld [vmem:[%s1131 + $0x30] sm:$0xf]
        %v1145 = vld [vmem:[%s1131 + $0x34] sm:$0xf]
        %v1146 = vld [vmem:[%s1131 + $0x38] sm:$0xf]
        %v1147 = vld [vmem:[%s1131 + $0x3c] sm:$0xf]
        %v1148 = vld [vmem:[%s1131 + $0x40] sm:$0xf]
        %v1149 = vld [vmem:[%s1131 + $0x44] sm:$0xf]
        %v1150 = vld [vmem:[%s1131 + $0x48] sm:$0xf]
        %v1151 = vld [vmem:[%s1131 + $0x4c] sm:$0xf]
        %v1152 = vld [vmem:[%s1131 + $0x50] sm:$0xf]
        %v1153 = vld [vmem:[%s1131 + $0x54] sm:$0xf]
        %v1154 = vld [vmem:[%s1131 + $0x58] sm:$0xf]
        %v1155 = vld [vmem:[%s1131 + $0x5c] sm:$0xf]
        %v1156 = vld [vmem:[%s1131 + $0x60] sm:$0xf]
        %v1157 = vld [vmem:[%s1131 + $0x64] sm:$0xf]
        %v1158 = vld [vmem:[%s1131 + $0x68] sm:$0xf]
        %v1159 = vld [vmem:[%s1131 + $0x6c] sm:$0xf]
        %v1176 = vunpack.c.l.b16 %v1087
        %v1177 = vunpack.c.h.b16 %v1087
        %v1178 = vunpack.c.l.b16 %v1088
        %v1179 = vunpack.c.h.b16 %v1088
        %v1180 = vunpack.c.l.b16 %v1089
        %v1181 = vunpack.c.h.b16 %v1089
        %v1182 = vunpack.c.l.b16 %v1090
        %v1183 = vunpack.c.h.b16 %v1090
        %v1184 = vunpack.c.l.b16 %v1091
        %v1185 = vunpack.c.h.b16 %v1091
        %v1186 = vunpack.c.l.b16 %v1092
        %v1187 = vunpack.c.h.b16 %v1092
        %v1188 = vunpack.c.l.b16 %v1093
        %v1189 = vunpack.c.h.b16 %v1093
        %v1190 = vunpack.c.l.b16 %v1094
        %v1191 = vunpack.c.h.b16 %v1094
        %v1192 = vunpack.c.l.b16 %v1095
        %v1193 = vunpack.c.h.b16 %v1095
        %v1194 = vunpack.c.l.b16 %v1096
        %v1195 = vunpack.c.h.b16 %v1096
        %v1196 = vunpack.c.l.b16 %v1097
        %v1197 = vunpack.c.h.b16 %v1097
        %v1198 = vunpack.c.l.b16 %v1098
        %v1199 = vunpack.c.h.b16 %v1098
        %v1200 = vunpack.c.l.b16 %v1099
        %v1201 = vunpack.c.h.b16 %v1099
        %v1202 = vunpack.c.l.b16 %v1100
        %v1203 = vunpack.c.h.b16 %v1100
        %v1204 = vunpack.c.l.b16 %v1129
        %v1205 = vunpack.c.h.b16 %v1129
        %v1206 = vunpack.c.l.b16 %v1130
        %v1207 = vunpack.c.h.b16 %v1130
        %v1208 = vpack.c.b16 %v1178, %v1176
        %v1209 = vpack.c.b16 %v1179, %v1177
        %v1210 = vpack.c.b16 %v1182, %v1180
        %v1211 = vpack.c.b16 %v1183, %v1181
        %v1212 = vpack.c.b16 %v1186, %v1184
        %v1213 = vpack.c.b16 %v1187, %v1185
        %v1214 = vpack.c.b16 %v1190, %v1188
        %v1215 = vpack.c.b16 %v1191, %v1189
        %v1216 = vpack.c.b16 %v1194, %v1192
        %v1217 = vpack.c.b16 %v1195, %v1193
        %v1218 = vpack.c.b16 %v1198, %v1196
        %v1219 = vpack.c.b16 %v1199, %v1197
        %v1220 = vpack.c.b16 %v1202, %v1200
        %v1221 = vpack.c.b16 %v1203, %v1201
        %v1222 = vpack.c.b16 %v1206, %v1204
        %v1223 = vpack.c.b16 %v1207, %v1205
        %v1260 = vunpack.c.l.b16 %v1132
        %v1261 = vunpack.c.l.b16 %v1133
        %v1262 = vunpack.c.l.b16 %v1134
        %v1263 = vunpack.c.l.b16 %v1135
        %v1264 = vunpack.c.l.b16 %v1136
        %v1265 = vunpack.c.l.b16 %v1137
        %v1266 = vunpack.c.l.b16 %v1138
        %v1267 = vunpack.c.l.b16 %v1139
        %v1268 = vunpack.c.l.b16 %v1140
        %v1269 = vunpack.c.l.b16 %v1141
        %v1270 = vunpack.c.l.b16 %v1142
        %v1271 = vunpack.c.l.b16 %v1143
        %v1272 = vunpack.c.l.b16 %v1144
        %v1273 = vunpack.c.l.b16 %v1145
        %v1274 = vunpack.c.l.b16 %v1146
        %v1275 = vunpack.c.l.b16 %v1147
        %v1276 = vunpack.c.l.b16 %v1148
        %v1277 = vunpack.c.l.b16 %v1149
        %v1278 = vunpack.c.l.b16 %v1150
        %v1279 = vunpack.c.l.b16 %v1151
        %v1280 = vunpack.c.l.b16 %v1152
        %v1281 = vunpack.c.l.b16 %v1153
        %v1282 = vunpack.c.l.b16 %v1154
        %v1283 = vunpack.c.l.b16 %v1155
        %v1284 = vunpack.c.l.b16 %v1156
        %v1285 = vunpack.c.l.b16 %v1157
        %v1286 = vunpack.c.l.b16 %v1158
        %v1287 = vunpack.c.l.b16 %v1159
        %v1288 = vpack.c.b16 %v1261, %v1260
        %v1289 = vpack.c.b16 %v1263, %v1262
        %v1290 = vpack.c.b16 %v1265, %v1264
        %v1291 = vpack.c.b16 %v1267, %v1266
        %v1292 = vpack.c.b16 %v1269, %v1268
        %v1293 = vpack.c.b16 %v1271, %v1270
        %v1294 = vpack.c.b16 %v1273, %v1272
        %v1295 = vpack.c.b16 %v1275, %v1274
        %v1296 = vpack.c.b16 %v1277, %v1276
        %v1297 = vpack.c.b16 %v1279, %v1278
        %v1298 = vpack.c.b16 %v1281, %v1280
        %v1299 = vpack.c.b16 %v1283, %v1282
        %v1300 = vpack.c.b16 %v1285, %v1284
        %v1301 = vpack.c.b16 %v1287, %v1286
        %vm1316 = vcmask 785408
        %v1318 = vsel %vm1316, %v1209, 0
        %v1321 = vsel %vm1316, %v1211, 0
        %v1324 = vsel %vm1316, %v1213, 0
        %v1327 = vsel %vm1316, %v1215, 0
        %v1330 = vsel %vm1316, %v1217, 0
        %v1333 = vsel %vm1316, %v1219, 0
        %v1336 = vsel %vm1316, %v1221, 0
        %v1339 = vsel %vm1316, %v1223, 0
        %1341 = vmatpush.bf16.msra.mxu0 %v1295
        %1342 = vmatpush.bf16.msra.mxu0 %v1294
        %1343 = vmatpush.bf16.msra.mxu0 %v1293
        %1344 = vmatpush.bf16.msra.mxu0 %v1292
        %1345 = vmatpush.bf16.msra.mxu0 %v1291
        %1346 = vmatpush.bf16.msra.mxu0 %v1290
        %1347 = vmatpush.bf16.msra.mxu0 %v1289
        %1348 = vmatpush.bf16.msra.mxu0 %v1288
        %1349 = vmatmul.bf16.gmra.mxu0 %v1208
        %v1350 = vpop.f32.mrf.mxu0
        %v1351 = vadd.f32 0.0, %v1350
        %v1352 = vpop.f32.mrf.mxu0
        %v1353 = vadd.f32 0.0, %v1352
        %1354 = vmatmul.bf16.gmra.mxu0 %v1210
        %v1355 = vpop.f32.mrf.mxu0
        %v1356 = vadd.f32 0.0, %v1355
        %v1357 = vpop.f32.mrf.mxu0
        %v1358 = vadd.f32 0.0, %v1357
        %1359 = vmatmul.bf16.gmra.mxu0 %v1212
        %v1360 = vpop.f32.mrf.mxu0
        %v1361 = vadd.f32 0.0, %v1360
        %v1362 = vpop.f32.mrf.mxu0
        %v1363 = vadd.f32 0.0, %v1362
        %1364 = vmatmul.bf16.gmra.mxu0 %v1214
        %v1365 = vpop.f32.mrf.mxu0
        %v1366 = vadd.f32 0.0, %v1365
        %v1367 = vpop.f32.mrf.mxu0
        %v1368 = vadd.f32 0.0, %v1367
        %1369 = vmatmul.bf16.gmra.mxu0 %v1216
        %v1370 = vpop.f32.mrf.mxu0
        %v1371 = vadd.f32 0.0, %v1370
        %v1372 = vpop.f32.mrf.mxu0
        %v1373 = vadd.f32 0.0, %v1372
        %1374 = vmatmul.bf16.gmra.mxu0 %v1218
        %v1375 = vpop.f32.mrf.mxu0
        %v1376 = vadd.f32 0.0, %v1375
        %v1377 = vpop.f32.mrf.mxu0
        %v1378 = vadd.f32 0.0, %v1377
        %1379 = vmatmul.bf16.gmra.mxu0 %v1220
        %v1380 = vpop.f32.mrf.mxu0
        %v1381 = vadd.f32 0.0, %v1380
        %v1382 = vpop.f32.mrf.mxu0
        %v1383 = vadd.f32 0.0, %v1382
        %1384 = vmatmul.bf16.gmra.mxu0 %v1222
        %v1385 = vpop.f32.mrf.mxu0
        %v1386 = vadd.f32 0.0, %v1385
        %v1387 = vpop.f32.mrf.mxu0
        %v1388 = vadd.f32 0.0, %v1387
        %1389 = vdwg.mxu0
        %1390 = vmatpush.bf16.msra.mxu0 0
        %1391 = vmatpush.bf16.msra.mxu0 0
        %1392 = vmatpush.bf16.msra.mxu0 %v1301
        %1393 = vmatpush.bf16.msra.mxu0 %v1300
        %1394 = vmatpush.bf16.msra.mxu0 %v1299
        %1395 = vmatpush.bf16.msra.mxu0 %v1298
        %1396 = vmatpush.bf16.msra.mxu0 %v1297
        %1397 = vmatpush.bf16.msra.mxu0 %v1296
        %1398 = vmatmul.bf16.gmra.mxu0 %v1318
        %v1399 = vpop.f32.mrf.mxu0
        %v1400 = vadd.f32 %v1351, %v1399
        %v1401 = vpop.f32.mrf.mxu0
        %v1402 = vadd.f32 %v1353, %v1401
        %1403 = vmatmul.bf16.gmra.mxu0 %v1321
        %v1404 = vpop.f32.mrf.mxu0
        %v1405 = vadd.f32 %v1356, %v1404
        %v1406 = vpop.f32.mrf.mxu0
        %v1407 = vadd.f32 %v1358, %v1406
        %1408 = vmatmul.bf16.gmra.mxu0 %v1324
        %v1409 = vpop.f32.mrf.mxu0
        %v1410 = vadd.f32 %v1361, %v1409
        %v1411 = vpop.f32.mrf.mxu0
        %v1412 = vadd.f32 %v1363, %v1411
        %1413 = vmatmul.bf16.gmra.mxu0 %v1327
        %v1414 = vpop.f32.mrf.mxu0
        %v1415 = vadd.f32 %v1366, %v1414
        %v1416 = vpop.f32.mrf.mxu0
        %v1417 = vadd.f32 %v1368, %v1416
        %1418 = vmatmul.bf16.gmra.mxu0 %v1330
        %v1419 = vpop.f32.mrf.mxu0
        %v1420 = vadd.f32 %v1371, %v1419
        %v1421 = vpop.f32.mrf.mxu0
        %v1422 = vadd.f32 %v1373, %v1421
        %1423 = vmatmul.bf16.gmra.mxu0 %v1333
        %v1424 = vpop.f32.mrf.mxu0
        %v1425 = vadd.f32 %v1376, %v1424
        %v1426 = vpop.f32.mrf.mxu0
        %v1427 = vadd.f32 %v1378, %v1426
        %1428 = vmatmul.bf16.gmra.mxu0 %v1336
        %v1429 = vpop.f32.mrf.mxu0
        %v1430 = vadd.f32 %v1381, %v1429
        %v1431 = vpop.f32.mrf.mxu0
        %v1432 = vadd.f32 %v1383, %v1431
        %1433 = vmatmul.bf16.gmra.mxu0 %v1339
        %v1434 = vpop.f32.mrf.mxu0
        %v1435 = vadd.f32 %v1386, %v1434
        %v1436 = vpop.f32.mrf.mxu0
        %v1437 = vadd.f32 %v1388, %v1436
        %1438 = vdwg.mxu0
        %v1441 = vunpack.c.l.b16 %v1085
        %v1442 = vunpack.c.h.b16 %v1085
        %v1443 = vunpack.c.l.b16 %v1086
        %v1444 = vunpack.c.h.b16 %v1086
        %v1445 = vpack.c.b16 %v1443, %v1441
        %v1446 = vpack.c.b16 %v1444, %v1442
        %v1476 = vunpack.c.l.b16 %v1101
        %v1477 = vunpack.c.l.b16 %v1102
        %v1478 = vunpack.c.l.b16 %v1103
        %v1479 = vunpack.c.l.b16 %v1104
        %v1480 = vunpack.c.l.b16 %v1105
        %v1481 = vunpack.c.l.b16 %v1106
        %v1482 = vunpack.c.l.b16 %v1107
        %v1483 = vunpack.c.l.b16 %v1108
        %v1484 = vunpack.c.l.b16 %v1109
        %v1485 = vunpack.c.l.b16 %v1110
        %v1486 = vunpack.c.l.b16 %v1111
        %v1487 = vunpack.c.l.b16 %v1112
        %v1488 = vunpack.c.l.b16 %v1113
        %v1489 = vunpack.c.l.b16 %v1114
        %v1490 = vunpack.c.l.b16 %v1115
        %v1491 = vunpack.c.l.b16 %v1116
        %v1492 = vunpack.c.l.b16 %v1117
        %v1493 = vunpack.c.l.b16 %v1118
        %v1494 = vunpack.c.l.b16 %v1119
        %v1495 = vunpack.c.l.b16 %v1120
        %v1496 = vunpack.c.l.b16 %v1121
        %v1497 = vunpack.c.l.b16 %v1122
        %v1498 = vunpack.c.l.b16 %v1123
        %v1499 = vunpack.c.l.b16 %v1124
        %v1500 = vunpack.c.l.b16 %v1125
        %v1501 = vunpack.c.l.b16 %v1126
        %v1502 = vunpack.c.l.b16 %v1127
        %v1503 = vunpack.c.l.b16 %v1128
        %v1504 = vpack.c.b16 %v1477, %v1476
        %v1505 = vpack.c.b16 %v1479, %v1478
        %v1506 = vpack.c.b16 %v1481, %v1480
        %v1507 = vpack.c.b16 %v1483, %v1482
        %v1508 = vpack.c.b16 %v1485, %v1484
        %v1509 = vpack.c.b16 %v1487, %v1486
        %v1510 = vpack.c.b16 %v1489, %v1488
        %v1511 = vpack.c.b16 %v1491, %v1490
        %v1512 = vpack.c.b16 %v1493, %v1492
        %v1513 = vpack.c.b16 %v1495, %v1494
        %v1514 = vpack.c.b16 %v1497, %v1496
        %v1515 = vpack.c.b16 %v1499, %v1498
        %v1516 = vpack.c.b16 %v1501, %v1500
        %v1517 = vpack.c.b16 %v1503, %v1502
        %v1533 = vsel %vm1316, %v1446, 0
        %1535 = vmatpush.bf16.msra.mxu0 %v1511
        %1536 = vmatpush.bf16.msra.mxu0 %v1510
        %1537 = vmatpush.bf16.msra.mxu0 %v1509
        %1538 = vmatpush.bf16.msra.mxu0 %v1508
        %1539 = vmatpush.bf16.msra.mxu0 %v1507
        %1540 = vmatpush.bf16.msra.mxu0 %v1506
        %1541 = vmatpush.bf16.msra.mxu0 %v1505
        %1542 = vmatpush.bf16.msra.mxu0 %v1504
        %1543 = vmatmul.bf16.gmra.mxu0 %v1445
        %v1544 = vpop.f32.mrf.mxu0
        %v1545 = vadd.f32 %v1400, %v1544
        %v1546 = vpop.f32.mrf.mxu0
        %v1547 = vadd.f32 %v1402, %v1546
        %1548 = vmatmul.bf16.gmra.mxu0 %v1208
        %v1549 = vpop.f32.mrf.mxu0
        %v1550 = vadd.f32 %v1405, %v1549
        %v1551 = vpop.f32.mrf.mxu0
        %v1552 = vadd.f32 %v1407, %v1551
        %1553 = vmatmul.bf16.gmra.mxu0 %v1210
        %v1554 = vpop.f32.mrf.mxu0
        %v1555 = vadd.f32 %v1410, %v1554
        %v1556 = vpop.f32.mrf.mxu0
        %v1557 = vadd.f32 %v1412, %v1556
        %1558 = vmatmul.bf16.gmra.mxu0 %v1212
        %v1559 = vpop.f32.mrf.mxu0
        %v1560 = vadd.f32 %v1415, %v1559
        %v1561 = vpop.f32.mrf.mxu0
        %v1562 = vadd.f32 %v1417, %v1561
        %1563 = vmatmul.bf16.gmra.mxu0 %v1214
        %v1564 = vpop.f32.mrf.mxu0
        %v1565 = vadd.f32 %v1420, %v1564
        %v1566 = vpop.f32.mrf.mxu0
        %v1567 = vadd.f32 %v1422, %v1566
        %1568 = vmatmul.bf16.gmra.mxu0 %v1216
        %v1569 = vpop.f32.mrf.mxu0
        %v1570 = vadd.f32 %v1425, %v1569
        %v1571 = vpop.f32.mrf.mxu0
        %v1572 = vadd.f32 %v1427, %v1571
        %1573 = vmatmul.bf16.gmra.mxu0 %v1218
        %v1574 = vpop.f32.mrf.mxu0
        %v1575 = vadd.f32 %v1430, %v1574
        %v1576 = vpop.f32.mrf.mxu0
        %v1577 = vadd.f32 %v1432, %v1576
        %1578 = vmatmul.bf16.gmra.mxu0 %v1220
        %v1579 = vpop.f32.mrf.mxu0
        %v1580 = vadd.f32 %v1435, %v1579
        %v1581 = vpop.f32.mrf.mxu0
        %v1582 = vadd.f32 %v1437, %v1581
        %1583 = vdwg.mxu0
        %1584 = vmatpush.bf16.msra.mxu0 0
        %1585 = vmatpush.bf16.msra.mxu0 0
        %1586 = vmatpush.bf16.msra.mxu0 %v1517
        %1587 = vmatpush.bf16.msra.mxu0 %v1516
        %1588 = vmatpush.bf16.msra.mxu0 %v1515
        %1589 = vmatpush.bf16.msra.mxu0 %v1514
        %1590 = vmatpush.bf16.msra.mxu0 %v1513
        %1591 = vmatpush.bf16.msra.mxu0 %v1512
        %1592 = vmatmul.bf16.gmra.mxu0 %v1533
        %v1593 = vpop.f32.mrf.mxu0
        %v1594 = vadd.f32 %v1545, %v1593
        %v1595 = vpop.f32.mrf.mxu0
        %v1596 = vadd.f32 %v1547, %v1595
        %1597 = vmatmul.bf16.gmra.mxu0 %v1318
        %v1598 = vpop.f32.mrf.mxu0
        %v1599 = vadd.f32 %v1550, %v1598
        %v1600 = vpop.f32.mrf.mxu0
        %v1601 = vadd.f32 %v1552, %v1600
        %1602 = vmatmul.bf16.gmra.mxu0 %v1321
        %v1603 = vpop.f32.mrf.mxu0
        %v1604 = vadd.f32 %v1555, %v1603
        %v1605 = vpop.f32.mrf.mxu0
        %v1606 = vadd.f32 %v1557, %v1605
        %1607 = vmatmul.bf16.gmra.mxu0 %v1324
        %v1608 = vpop.f32.mrf.mxu0
        %v1609 = vadd.f32 %v1560, %v1608
        %v1610 = vpop.f32.mrf.mxu0
        %v1611 = vadd.f32 %v1562, %v1610
        %1612 = vmatmul.bf16.gmra.mxu0 %v1327
        %v1613 = vpop.f32.mrf.mxu0
        %v1614 = vadd.f32 %v1565, %v1613
        %v1615 = vpop.f32.mrf.mxu0
        %v1616 = vadd.f32 %v1567, %v1615
        %1617 = vmatmul.bf16.gmra.mxu0 %v1330
        %v1618 = vpop.f32.mrf.mxu0
        %v1619 = vadd.f32 %v1570, %v1618
        %v1620 = vpop.f32.mrf.mxu0
        %v1621 = vadd.f32 %v1572, %v1620
        %1622 = vmatmul.bf16.gmra.mxu0 %v1333
        %v1623 = vpop.f32.mrf.mxu0
        %v1624 = vadd.f32 %v1575, %v1623
        %v1625 = vpop.f32.mrf.mxu0
        %v1626 = vadd.f32 %v1577, %v1625
        %1627 = vmatmul.bf16.gmra.mxu0 %v1336
        %v1628 = vpop.f32.mrf.mxu0
        %v1629 = vadd.f32 %v1580, %v1628
        %v1630 = vpop.f32.mrf.mxu0
        %v1631 = vadd.f32 %v1582, %v1630
        %1632 = vdwg.mxu0
        %v1633 = vld [vmem:[%s0 + $0x20] sm:$0xff]
        %v1634 = vld [vmem:[%s0 + $0x28] sm:$0xff]
        %v1635 = vld [vmem:[%s0 + $0x30] sm:$0xff]
        %v1636 = vld [vmem:[%s0 + $0x38] sm:$0xff]
        %v1637 = vld [vmem:[%s0 + $0x40] sm:$0xff]
        %v1638 = vld [vmem:[%s0 + $0x48] sm:$0xff]
        %v1639 = vld [vmem:[%s0 + $0x50] sm:$0xff]
        %v1640 = vld [vmem:[%s0 + $0x58] sm:$0xff]
        %v1641 = vld [vmem:[%s0 + $0x60] sm:$0xff]
        %v1642 = vld [vmem:[%s0 + $0x68] sm:$0xff]
        %v1643 = vld [vmem:[%s0 + $0x70] sm:$0xff]
        %v1644 = vld [vmem:[%s0 + $0x78] sm:$0xff]
        %v1645 = vld [vmem:[%s0 + $0x80] sm:$0xff]
        %v1646 = vld [vmem:[%s0 + $0x88] sm:$0xff]
        %v1647 = vld [vmem:[%s0 + $0x90] sm:$0xff]
        %v1648 = vld [vmem:[%s0 + $0x98] sm:$0xff]
        %s1649 = scalar_lea.vmem %s1042, 224 [#allocation2]
        %v1650 = vld [vmem:[%s1649] sm:$0xf]
        %v1651 = vld [vmem:[%s1649 + $0x4] sm:$0xf]
        %v1652 = vld [vmem:[%s1649 + $0x8] sm:$0xf]
        %v1653 = vld [vmem:[%s1649 + $0xc] sm:$0xf]
        %v1654 = vld [vmem:[%s1649 + $0x10] sm:$0xf]
        %v1655 = vld [vmem:[%s1649 + $0x14] sm:$0xf]
        %v1656 = vld [vmem:[%s1649 + $0x18] sm:$0xf]
        %v1657 = vld [vmem:[%s1649 + $0x1c] sm:$0xf]
        %v1658 = vld [vmem:[%s1649 + $0x20] sm:$0xf]
        %v1659 = vld [vmem:[%s1649 + $0x24] sm:$0xf]
        %v1660 = vld [vmem:[%s1649 + $0x28] sm:$0xf]
        %v1661 = vld [vmem:[%s1649 + $0x2c] sm:$0xf]
        %v1662 = vld [vmem:[%s1649 + $0x30] sm:$0xf]
        %v1663 = vld [vmem:[%s1649 + $0x34] sm:$0xf]
        %v1664 = vld [vmem:[%s1649 + $0x38] sm:$0xf]
        %v1665 = vld [vmem:[%s1649 + $0x3c] sm:$0xf]
        %v1666 = vld [vmem:[%s1649 + $0x40] sm:$0xf]
        %v1667 = vld [vmem:[%s1649 + $0x44] sm:$0xf]
        %v1668 = vld [vmem:[%s1649 + $0x48] sm:$0xf]
        %v1669 = vld [vmem:[%s1649 + $0x4c] sm:$0xf]
        %v1670 = vld [vmem:[%s1649 + $0x50] sm:$0xf]
        %v1671 = vld [vmem:[%s1649 + $0x54] sm:$0xf]
        %v1672 = vld [vmem:[%s1649 + $0x58] sm:$0xf]
        %v1673 = vld [vmem:[%s1649 + $0x5c] sm:$0xf]
        %v1674 = vld [vmem:[%s1649 + $0x60] sm:$0xf]
        %v1675 = vld [vmem:[%s1649 + $0x64] sm:$0xf]
        %v1676 = vld [vmem:[%s1649 + $0x68] sm:$0xf]
        %v1677 = vld [vmem:[%s1649 + $0x6c] sm:$0xf]
        %v1694 = vunpack.c.l.b16 %v1633
        %v1695 = vunpack.c.h.b16 %v1633
        %v1696 = vunpack.c.l.b16 %v1634
        %v1697 = vunpack.c.h.b16 %v1634
        %v1698 = vunpack.c.l.b16 %v1635
        %v1699 = vunpack.c.h.b16 %v1635
        %v1700 = vunpack.c.l.b16 %v1636
        %v1701 = vunpack.c.h.b16 %v1636
        %v1702 = vunpack.c.l.b16 %v1637
        %v1703 = vunpack.c.h.b16 %v1637
        %v1704 = vunpack.c.l.b16 %v1638
        %v1705 = vunpack.c.h.b16 %v1638
        %v1706 = vunpack.c.l.b16 %v1639
        %v1707 = vunpack.c.h.b16 %v1639
        %v1708 = vunpack.c.l.b16 %v1640
        %v1709 = vunpack.c.h.b16 %v1640
        %v1710 = vunpack.c.l.b16 %v1641
        %v1711 = vunpack.c.h.b16 %v1641
        %v1712 = vunpack.c.l.b16 %v1642
        %v1713 = vunpack.c.h.b16 %v1642
        %v1714 = vunpack.c.l.b16 %v1643
        %v1715 = vunpack.c.h.b16 %v1643
        %v1716 = vunpack.c.l.b16 %v1644
        %v1717 = vunpack.c.h.b16 %v1644
        %v1718 = vunpack.c.l.b16 %v1645
        %v1719 = vunpack.c.h.b16 %v1645
        %v1720 = vunpack.c.l.b16 %v1646
        %v1721 = vunpack.c.h.b16 %v1646
        %v1722 = vunpack.c.l.b16 %v1647
        %v1723 = vunpack.c.h.b16 %v1647
        %v1724 = vunpack.c.l.b16 %v1648
        %v1725 = vunpack.c.h.b16 %v1648
        %v1726 = vpack.c.b16 %v1696, %v1694
        %v1727 = vpack.c.b16 %v1697, %v1695
        %v1728 = vpack.c.b16 %v1700, %v1698
        %v1729 = vpack.c.b16 %v1701, %v1699
        %v1730 = vpack.c.b16 %v1704, %v1702
        %v1731 = vpack.c.b16 %v1705, %v1703
        %v1732 = vpack.c.b16 %v1708, %v1706
        %v1733 = vpack.c.b16 %v1709, %v1707
        %v1734 = vpack.c.b16 %v1712, %v1710
        %v1735 = vpack.c.b16 %v1713, %v1711
        %v1736 = vpack.c.b16 %v1716, %v1714
        %v1737 = vpack.c.b16 %v1717, %v1715
        %v1738 = vpack.c.b16 %v1720, %v1718
        %v1739 = vpack.c.b16 %v1721, %v1719
        %v1740 = vpack.c.b16 %v1724, %v1722
        %v1741 = vpack.c.b16 %v1725, %v1723
        %v1778 = vunpack.c.l.b16 %v1650
        %v1779 = vunpack.c.l.b16 %v1651
        %v1780 = vunpack.c.l.b16 %v1652
        %v1781 = vunpack.c.l.b16 %v1653
        %v1782 = vunpack.c.l.b16 %v1654
        %v1783 = vunpack.c.l.b16 %v1655
        %v1784 = vunpack.c.l.b16 %v1656
        %v1785 = vunpack.c.l.b16 %v1657
        %v1786 = vunpack.c.l.b16 %v1658
        %v1787 = vunpack.c.l.b16 %v1659
        %v1788 = vunpack.c.l.b16 %v1660
        %v1789 = vunpack.c.l.b16 %v1661
        %v1790 = vunpack.c.l.b16 %v1662
        %v1791 = vunpack.c.l.b16 %v1663
        %v1792 = vunpack.c.l.b16 %v1664
        %v1793 = vunpack.c.l.b16 %v1665
        %v1794 = vunpack.c.l.b16 %v1666
        %v1795 = vunpack.c.l.b16 %v1667
        %v1796 = vunpack.c.l.b16 %v1668
        %v1797 = vunpack.c.l.b16 %v1669
        %v1798 = vunpack.c.l.b16 %v1670
        %v1799 = vunpack.c.l.b16 %v1671
        %v1800 = vunpack.c.l.b16 %v1672
        %v1801 = vunpack.c.l.b16 %v1673
        %v1802 = vunpack.c.l.b16 %v1674
        %v1803 = vunpack.c.l.b16 %v1675
        %v1804 = vunpack.c.l.b16 %v1676
        %v1805 = vunpack.c.l.b16 %v1677
        %v1806 = vpack.c.b16 %v1779, %v1778
        %v1807 = vpack.c.b16 %v1781, %v1780
        %v1808 = vpack.c.b16 %v1783, %v1782
        %v1809 = vpack.c.b16 %v1785, %v1784
        %v1810 = vpack.c.b16 %v1787, %v1786
        %v1811 = vpack.c.b16 %v1789, %v1788
        %v1812 = vpack.c.b16 %v1791, %v1790
        %v1813 = vpack.c.b16 %v1793, %v1792
        %v1814 = vpack.c.b16 %v1795, %v1794
        %v1815 = vpack.c.b16 %v1797, %v1796
        %v1816 = vpack.c.b16 %v1799, %v1798
        %v1817 = vpack.c.b16 %v1801, %v1800
        %v1818 = vpack.c.b16 %v1803, %v1802
        %v1819 = vpack.c.b16 %v1805, %v1804
        %v1835 = vsel %vm1316, %v1727, 0
        %v1838 = vsel %vm1316, %v1729, 0
        %v1841 = vsel %vm1316, %v1731, 0
        %v1844 = vsel %vm1316, %v1733, 0
        %v1847 = vsel %vm1316, %v1735, 0
        %v1850 = vsel %vm1316, %v1737, 0
        %v1853 = vsel %vm1316, %v1739, 0
        %v1856 = vsel %vm1316, %v1741, 0
        %1858 = vmatpush.bf16.msra.mxu0 %v1813
        %1859 = vmatpush.bf16.msra.mxu0 %v1812
        %1860 = vmatpush.bf16.msra.mxu0 %v1811
        %1861 = vmatpush.bf16.msra.mxu0 %v1810
        %1862 = vmatpush.bf16.msra.mxu0 %v1809
        %1863 = vmatpush.bf16.msra.mxu0 %v1808
        %1864 = vmatpush.bf16.msra.mxu0 %v1807
        %1865 = vmatpush.bf16.msra.mxu0 %v1806
        %1866 = vmatmul.bf16.gmra.mxu0 %v1726
        %v1867 = vpop.f32.mrf.mxu0
        %v1868 = vadd.f32 0.0, %v1867
        %v1869 = vpop.f32.mrf.mxu0
        %v1870 = vadd.f32 0.0, %v1869
        %1871 = vmatmul.bf16.gmra.mxu0 %v1728
        %v1872 = vpop.f32.mrf.mxu0
        %v1873 = vadd.f32 0.0, %v1872
        %v1874 = vpop.f32.mrf.mxu0
        %v1875 = vadd.f32 0.0, %v1874
        %1876 = vmatmul.bf16.gmra.mxu0 %v1730
        %v1877 = vpop.f32.mrf.mxu0
        %v1878 = vadd.f32 0.0, %v1877
        %v1879 = vpop.f32.mrf.mxu0
        %v1880 = vadd.f32 0.0, %v1879
        %1881 = vmatmul.bf16.gmra.mxu0 %v1732
        %v1882 = vpop.f32.mrf.mxu0
        %v1883 = vadd.f32 0.0, %v1882
        %v1884 = vpop.f32.mrf.mxu0
        %v1885 = vadd.f32 0.0, %v1884
        %1886 = vmatmul.bf16.gmra.mxu0 %v1734
        %v1887 = vpop.f32.mrf.mxu0
        %v1888 = vadd.f32 0.0, %v1887
        %v1889 = vpop.f32.mrf.mxu0
        %v1890 = vadd.f32 0.0, %v1889
        %1891 = vmatmul.bf16.gmra.mxu0 %v1736
        %v1892 = vpop.f32.mrf.mxu0
        %v1893 = vadd.f32 0.0, %v1892
        %v1894 = vpop.f32.mrf.mxu0
        %v1895 = vadd.f32 0.0, %v1894
        %1896 = vmatmul.bf16.gmra.mxu0 %v1738
        %v1897 = vpop.f32.mrf.mxu0
        %v1898 = vadd.f32 0.0, %v1897
        %v1899 = vpop.f32.mrf.mxu0
        %v1900 = vadd.f32 0.0, %v1899
        %1901 = vmatmul.bf16.gmra.mxu0 %v1740
        %v1902 = vpop.f32.mrf.mxu0
        %v1903 = vadd.f32 0.0, %v1902
        %v1904 = vpop.f32.mrf.mxu0
        %v1905 = vadd.f32 0.0, %v1904
        %1906 = vdwg.mxu0
        %1907 = vmatpush.bf16.msra.mxu0 0
        %1908 = vmatpush.bf16.msra.mxu0 0
        %1909 = vmatpush.bf16.msra.mxu0 %v1819
        %1910 = vmatpush.bf16.msra.mxu0 %v1818
        %1911 = vmatpush.bf16.msra.mxu0 %v1817
        %1912 = vmatpush.bf16.msra.mxu0 %v1816
        %1913 = vmatpush.bf16.msra.mxu0 %v1815
        %1914 = vmatpush.bf16.msra.mxu0 %v1814
        %1915 = vmatmul.bf16.gmra.mxu0 %v1835
        %v1916 = vpop.f32.mrf.mxu0
        %v1917 = vadd.f32 %v1868, %v1916
        %v1918 = vpop.f32.mrf.mxu0
        %v1919 = vadd.f32 %v1870, %v1918
        %1920 = vmatmul.bf16.gmra.mxu0 %v1838
        %v1921 = vpop.f32.mrf.mxu0
        %v1922 = vadd.f32 %v1873, %v1921
        %v1923 = vpop.f32.mrf.mxu0
        %v1924 = vadd.f32 %v1875, %v1923
        %1925 = vmatmul.bf16.gmra.mxu0 %v1841
        %v1926 = vpop.f32.mrf.mxu0
        %v1927 = vadd.f32 %v1878, %v1926
        %v1928 = vpop.f32.mrf.mxu0
        %v1929 = vadd.f32 %v1880, %v1928
        %1930 = vmatmul.bf16.gmra.mxu0 %v1844
        %v1931 = vpop.f32.mrf.mxu0
        %v1932 = vadd.f32 %v1883, %v1931
        %v1933 = vpop.f32.mrf.mxu0
        %v1934 = vadd.f32 %v1885, %v1933
        %1935 = vmatmul.bf16.gmra.mxu0 %v1847
        %v1936 = vpop.f32.mrf.mxu0
        %v1937 = vadd.f32 %v1888, %v1936
        %v1938 = vpop.f32.mrf.mxu0
        %v1939 = vadd.f32 %v1890, %v1938
        %1940 = vmatmul.bf16.gmra.mxu0 %v1850
        %v1941 = vpop.f32.mrf.mxu0
        %v1942 = vadd.f32 %v1893, %v1941
        %v1943 = vpop.f32.mrf.mxu0
        %v1944 = vadd.f32 %v1895, %v1943
        %1945 = vmatmul.bf16.gmra.mxu0 %v1853
        %v1946 = vpop.f32.mrf.mxu0
        %v1947 = vadd.f32 %v1898, %v1946
        %v1948 = vpop.f32.mrf.mxu0
        %v1949 = vadd.f32 %v1900, %v1948
        %1950 = vmatmul.bf16.gmra.mxu0 %v1856
        %v1951 = vpop.f32.mrf.mxu0
        %v1952 = vadd.f32 %v1903, %v1951
        %v1953 = vpop.f32.mrf.mxu0
        %v1954 = vadd.f32 %v1905, %v1953
        %1955 = vdwg.mxu0
        %v1956 = vadd.f32 %v1594, %v1917
        %v1957 = vadd.f32 %v1596, %v1919
        %v1958 = vadd.f32 %v1599, %v1922
        %v1959 = vadd.f32 %v1601, %v1924
        %v1960 = vadd.f32 %v1604, %v1927
        %v1961 = vadd.f32 %v1606, %v1929
        %v1962 = vadd.f32 %v1609, %v1932
        %v1963 = vadd.f32 %v1611, %v1934
        %v1964 = vadd.f32 %v1614, %v1937
        %v1965 = vadd.f32 %v1616, %v1939
        %v1966 = vadd.f32 %v1619, %v1942
        %v1967 = vadd.f32 %v1621, %v1944
        %v1968 = vadd.f32 %v1624, %v1947
        %v1969 = vadd.f32 %v1626, %v1949
        %v1970 = vadd.f32 %v1629, %v1952
        %v1971 = vadd.f32 %v1631, %v1954
        %v1972 = vld [vmem:[%s0 + $0x30] sm:$0xff]
        %v1973 = vld [vmem:[%s0 + $0x38] sm:$0xff]
        %v1974 = vld [vmem:[%s0 + $0x40] sm:$0xff]
        %v1975 = vld [vmem:[%s0 + $0x48] sm:$0xff]
        %v1976 = vld [vmem:[%s0 + $0x50] sm:$0xff]
        %v1977 = vld [vmem:[%s0 + $0x58] sm:$0xff]
        %v1978 = vld [vmem:[%s0 + $0x60] sm:$0xff]
        %v1979 = vld [vmem:[%s0 + $0x68] sm:$0xff]
        %v1980 = vld [vmem:[%s0 + $0x70] sm:$0xff]
        %v1981 = vld [vmem:[%s0 + $0x78] sm:$0xff]
        %v1982 = vld [vmem:[%s0 + $0x80] sm:$0xff]
        %v1983 = vld [vmem:[%s0 + $0x88] sm:$0xff]
        %v1984 = vld [vmem:[%s0 + $0x90] sm:$0xff]
        %v1985 = vld [vmem:[%s0 + $0x98] sm:$0xff]
        %v1986 = vld [vmem:[%s0 + $0xa0] sm:$0xff]
        %v1987 = vld [vmem:[%s0 + $0xa8] sm:$0xff]
        %s1988 = scalar_lea.vmem %s1042, 336 [#allocation2]
        %v1989 = vld [vmem:[%s1988] sm:$0xf]
        %v1990 = vld [vmem:[%s1988 + $0x4] sm:$0xf]
        %v1991 = vld [vmem:[%s1988 + $0x8] sm:$0xf]
        %v1992 = vld [vmem:[%s1988 + $0xc] sm:$0xf]
        %v1993 = vld [vmem:[%s1988 + $0x10] sm:$0xf]
        %v1994 = vld [vmem:[%s1988 + $0x14] sm:$0xf]
        %v1995 = vld [vmem:[%s1988 + $0x18] sm:$0xf]
        %v1996 = vld [vmem:[%s1988 + $0x1c] sm:$0xf]
        %v1997 = vld [vmem:[%s1988 + $0x20] sm:$0xf]
        %v1998 = vld [vmem:[%s1988 + $0x24] sm:$0xf]
        %v1999 = vld [vmem:[%s1988 + $0x28] sm:$0xf]
        %v2000 = vld [vmem:[%s1988 + $0x2c] sm:$0xf]
        %v2001 = vld [vmem:[%s1988 + $0x30] sm:$0xf]
        %v2002 = vld [vmem:[%s1988 + $0x34] sm:$0xf]
        %v2003 = vld [vmem:[%s1988 + $0x38] sm:$0xf]
        %v2004 = vld [vmem:[%s1988 + $0x3c] sm:$0xf]
        %v2005 = vld [vmem:[%s1988 + $0x40] sm:$0xf]
        %v2006 = vld [vmem:[%s1988 + $0x44] sm:$0xf]
        %v2007 = vld [vmem:[%s1988 + $0x48] sm:$0xf]
        %v2008 = vld [vmem:[%s1988 + $0x4c] sm:$0xf]
        %v2009 = vld [vmem:[%s1988 + $0x50] sm:$0xf]
        %v2010 = vld [vmem:[%s1988 + $0x54] sm:$0xf]
        %v2011 = vld [vmem:[%s1988 + $0x58] sm:$0xf]
        %v2012 = vld [vmem:[%s1988 + $0x5c] sm:$0xf]
        %v2013 = vld [vmem:[%s1988 + $0x60] sm:$0xf]
        %v2014 = vld [vmem:[%s1988 + $0x64] sm:$0xf]
        %v2015 = vld [vmem:[%s1988 + $0x68] sm:$0xf]
        %v2016 = vld [vmem:[%s1988 + $0x6c] sm:$0xf]
        %v2033 = vunpack.c.l.b16 %v1972
        %v2034 = vunpack.c.h.b16 %v1972
        %v2035 = vunpack.c.l.b16 %v1973
        %v2036 = vunpack.c.h.b16 %v1973
        %v2037 = vunpack.c.l.b16 %v1974
        %v2038 = vunpack.c.h.b16 %v1974
        %v2039 = vunpack.c.l.b16 %v1975
        %v2040 = vunpack.c.h.b16 %v1975
        %v2041 = vunpack.c.l.b16 %v1976
        %v2042 = vunpack.c.h.b16 %v1976
        %v2043 = vunpack.c.l.b16 %v1977
        %v2044 = vunpack.c.h.b16 %v1977
        %v2045 = vunpack.c.l.b16 %v1978
        %v2046 = vunpack.c.h.b16 %v1978
        %v2047 = vunpack.c.l.b16 %v1979
        %v2048 = vunpack.c.h.b16 %v1979
        %v2049 = vunpack.c.l.b16 %v1980
        %v2050 = vunpack.c.h.b16 %v1980
        %v2051 = vunpack.c.l.b16 %v1981
        %v2052 = vunpack.c.h.b16 %v1981
        %v2053 = vunpack.c.l.b16 %v1982
        %v2054 = vunpack.c.h.b16 %v1982
        %v2055 = vunpack.c.l.b16 %v1983
        %v2056 = vunpack.c.h.b16 %v1983
        %v2057 = vunpack.c.l.b16 %v1984
        %v2058 = vunpack.c.h.b16 %v1984
        %v2059 = vunpack.c.l.b16 %v1985
        %v2060 = vunpack.c.h.b16 %v1985
        %v2061 = vunpack.c.l.b16 %v1986
        %v2062 = vunpack.c.h.b16 %v1986
        %v2063 = vunpack.c.l.b16 %v1987
        %v2064 = vunpack.c.h.b16 %v1987
        %v2065 = vpack.c.b16 %v2035, %v2033
        %v2066 = vpack.c.b16 %v2036, %v2034
        %v2067 = vpack.c.b16 %v2039, %v2037
        %v2068 = vpack.c.b16 %v2040, %v2038
        %v2069 = vpack.c.b16 %v2043, %v2041
        %v2070 = vpack.c.b16 %v2044, %v2042
        %v2071 = vpack.c.b16 %v2047, %v2045
        %v2072 = vpack.c.b16 %v2048, %v2046
        %v2073 = vpack.c.b16 %v2051, %v2049
        %v2074 = vpack.c.b16 %v2052, %v2050
        %v2075 = vpack.c.b16 %v2055, %v2053
        %v2076 = vpack.c.b16 %v2056, %v2054
        %v2077 = vpack.c.b16 %v2059, %v2057
        %v2078 = vpack.c.b16 %v2060, %v2058
        %v2079 = vpack.c.b16 %v2063, %v2061
        %v2080 = vpack.c.b16 %v2064, %v2062
        %v2117 = vunpack.c.l.b16 %v1989
        %v2118 = vunpack.c.l.b16 %v1990
        %v2119 = vunpack.c.l.b16 %v1991
        %v2120 = vunpack.c.l.b16 %v1992
        %v2121 = vunpack.c.l.b16 %v1993
        %v2122 = vunpack.c.l.b16 %v1994
        %v2123 = vunpack.c.l.b16 %v1995
        %v2124 = vunpack.c.l.b16 %v1996
        %v2125 = vunpack.c.l.b16 %v1997
        %v2126 = vunpack.c.l.b16 %v1998
        %v2127 = vunpack.c.l.b16 %v1999
        %v2128 = vunpack.c.l.b16 %v2000
        %v2129 = vunpack.c.l.b16 %v2001
        %v2130 = vunpack.c.l.b16 %v2002
        %v2131 = vunpack.c.l.b16 %v2003
        %v2132 = vunpack.c.l.b16 %v2004
        %v2133 = vunpack.c.l.b16 %v2005
        %v2134 = vunpack.c.l.b16 %v2006
        %v2135 = vunpack.c.l.b16 %v2007
        %v2136 = vunpack.c.l.b16 %v2008
        %v2137 = vunpack.c.l.b16 %v2009
        %v2138 = vunpack.c.l.b16 %v2010
        %v2139 = vunpack.c.l.b16 %v2011
        %v2140 = vunpack.c.l.b16 %v2012
        %v2141 = vunpack.c.l.b16 %v2013
        %v2142 = vunpack.c.l.b16 %v2014
        %v2143 = vunpack.c.l.b16 %v2015
        %v2144 = vunpack.c.l.b16 %v2016
        %v2145 = vpack.c.b16 %v2118, %v2117
        %v2146 = vpack.c.b16 %v2120, %v2119
        %v2147 = vpack.c.b16 %v2122, %v2121
        %v2148 = vpack.c.b16 %v2124, %v2123
        %v2149 = vpack.c.b16 %v2126, %v2125
        %v2150 = vpack.c.b16 %v2128, %v2127
        %v2151 = vpack.c.b16 %v2130, %v2129
        %v2152 = vpack.c.b16 %v2132, %v2131
        %v2153 = vpack.c.b16 %v2134, %v2133
        %v2154 = vpack.c.b16 %v2136, %v2135
        %v2155 = vpack.c.b16 %v2138, %v2137
        %v2156 = vpack.c.b16 %v2140, %v2139
        %v2157 = vpack.c.b16 %v2142, %v2141
        %v2158 = vpack.c.b16 %v2144, %v2143
        %v2174 = vsel %vm1316, %v2066, 0
        %v2177 = vsel %vm1316, %v2068, 0
        %v2180 = vsel %vm1316, %v2070, 0
        %v2183 = vsel %vm1316, %v2072, 0
        %v2186 = vsel %vm1316, %v2074, 0
        %v2189 = vsel %vm1316, %v2076, 0
        %v2192 = vsel %vm1316, %v2078, 0
        %v2195 = vsel %vm1316, %v2080, 0
        %2197 = vmatpush.bf16.msra.mxu0 %v2152
        %2198 = vmatpush.bf16.msra.mxu0 %v2151
        %2199 = vmatpush.bf16.msra.mxu0 %v2150
        %2200 = vmatpush.bf16.msra.mxu0 %v2149
        %2201 = vmatpush.bf16.msra.mxu0 %v2148
        %2202 = vmatpush.bf16.msra.mxu0 %v2147
        %2203 = vmatpush.bf16.msra.mxu0 %v2146
        %2204 = vmatpush.bf16.msra.mxu0 %v2145
        %2205 = vmatmul.bf16.gmra.mxu0 %v2065
        %v2206 = vpop.f32.mrf.mxu0
        %v2207 = vadd.f32 0.0, %v2206
        %v2208 = vpop.f32.mrf.mxu0
        %v2209 = vadd.f32 0.0, %v2208
        %2210 = vmatmul.bf16.gmra.mxu0 %v2067
        %v2211 = vpop.f32.mrf.mxu0
        %v2212 = vadd.f32 0.0, %v2211
        %v2213 = vpop.f32.mrf.mxu0
        %v2214 = vadd.f32 0.0, %v2213
        %2215 = vmatmul.bf16.gmra.mxu0 %v2069
        %v2216 = vpop.f32.mrf.mxu0
        %v2217 = vadd.f32 0.0, %v2216
        %v2218 = vpop.f32.mrf.mxu0
        %v2219 = vadd.f32 0.0, %v2218
        %2220 = vmatmul.bf16.gmra.mxu0 %v2071
        %v2221 = vpop.f32.mrf.mxu0
        %v2222 = vadd.f32 0.0, %v2221
        %v2223 = vpop.f32.mrf.mxu0
        %v2224 = vadd.f32 0.0, %v2223
        %2225 = vmatmul.bf16.gmra.mxu0 %v2073
        %v2226 = vpop.f32.mrf.mxu0
        %v2227 = vadd.f32 0.0, %v2226
        %v2228 = vpop.f32.mrf.mxu0
        %v2229 = vadd.f32 0.0, %v2228
        %2230 = vmatmul.bf16.gmra.mxu0 %v2075
        %v2231 = vpop.f32.mrf.mxu0
        %v2232 = vadd.f32 0.0, %v2231
        %v2233 = vpop.f32.mrf.mxu0
        %v2234 = vadd.f32 0.0, %v2233
        %2235 = vmatmul.bf16.gmra.mxu0 %v2077
        %v2236 = vpop.f32.mrf.mxu0
        %v2237 = vadd.f32 0.0, %v2236
        %v2238 = vpop.f32.mrf.mxu0
        %v2239 = vadd.f32 0.0, %v2238
        %2240 = vmatmul.bf16.gmra.mxu0 %v2079
        %v2241 = vpop.f32.mrf.mxu0
        %v2242 = vadd.f32 0.0, %v2241
        %v2243 = vpop.f32.mrf.mxu0
        %v2244 = vadd.f32 0.0, %v2243
        %2245 = vdwg.mxu0
        %2246 = vmatpush.bf16.msra.mxu0 0
        %2247 = vmatpush.bf16.msra.mxu0 0
        %2248 = vmatpush.bf16.msra.mxu0 %v2158
        %2249 = vmatpush.bf16.msra.mxu0 %v2157
        %2250 = vmatpush.bf16.msra.mxu0 %v2156
        %2251 = vmatpush.bf16.msra.mxu0 %v2155
        %2252 = vmatpush.bf16.msra.mxu0 %v2154
        %2253 = vmatpush.bf16.msra.mxu0 %v2153
        %2254 = vmatmul.bf16.gmra.mxu0 %v2174
        %v2255 = vpop.f32.mrf.mxu0
        %v2256 = vadd.f32 %v2207, %v2255
        %v2257 = vpop.f32.mrf.mxu0
        %v2258 = vadd.f32 %v2209, %v2257
        %2259 = vmatmul.bf16.gmra.mxu0 %v2177
        %v2260 = vpop.f32.mrf.mxu0
        %v2261 = vadd.f32 %v2212, %v2260
        %v2262 = vpop.f32.mrf.mxu0
        %v2263 = vadd.f32 %v2214, %v2262
        %2264 = vmatmul.bf16.gmra.mxu0 %v2180
        %v2265 = vpop.f32.mrf.mxu0
        %v2266 = vadd.f32 %v2217, %v2265
        %v2267 = vpop.f32.mrf.mxu0
        %v2268 = vadd.f32 %v2219, %v2267
        %2269 = vmatmul.bf16.gmra.mxu0 %v2183
        %v2270 = vpop.f32.mrf.mxu0
        %v2271 = vadd.f32 %v2222, %v2270
        %v2272 = vpop.f32.mrf.mxu0
        %v2273 = vadd.f32 %v2224, %v2272
        %2274 = vmatmul.bf16.gmra.mxu0 %v2186
        %v2275 = vpop.f32.mrf.mxu0
        %v2276 = vadd.f32 %v2227, %v2275
        %v2277 = vpop.f32.mrf.mxu0
        %v2278 = vadd.f32 %v2229, %v2277
        %2279 = vmatmul.bf16.gmra.mxu0 %v2189
        %v2280 = vpop.f32.mrf.mxu0
        %v2281 = vadd.f32 %v2232, %v2280
        %v2282 = vpop.f32.mrf.mxu0
        %v2283 = vadd.f32 %v2234, %v2282
        %2284 = vmatmul.bf16.gmra.mxu0 %v2192
        %v2285 = vpop.f32.mrf.mxu0
        %v2286 = vadd.f32 %v2237, %v2285
        %v2287 = vpop.f32.mrf.mxu0
        %v2288 = vadd.f32 %v2239, %v2287
        %2289 = vmatmul.bf16.gmra.mxu0 %v2195
        %v2290 = vpop.f32.mrf.mxu0
        %v2291 = vadd.f32 %v2242, %v2290
        %v2292 = vpop.f32.mrf.mxu0
        %v2293 = vadd.f32 %v2244, %v2292
        %2294 = vdwg.mxu0
        %v2295 = vadd.f32 %v1956, %v2256
        %v2296 = vadd.f32 %v1957, %v2258
        %v2297 = vadd.f32 %v1958, %v2261
        %v2298 = vadd.f32 %v1959, %v2263
        %v2299 = vadd.f32 %v1960, %v2266
        %v2300 = vadd.f32 %v1961, %v2268
        %v2301 = vadd.f32 %v1962, %v2271
        %v2302 = vadd.f32 %v1963, %v2273
        %v2303 = vadd.f32 %v1964, %v2276
        %v2304 = vadd.f32 %v1965, %v2278
        %v2305 = vadd.f32 %v1966, %v2281
        %v2306 = vadd.f32 %v1967, %v2283
        %v2307 = vadd.f32 %v1968, %v2286
        %v2308 = vadd.f32 %v1969, %v2288
        %v2309 = vadd.f32 %v1970, %v2291
        %v2310 = vadd.f32 %v1971, %v2293
        %v2311 = vld [vmem:[%s0 + $0x40] sm:$0xff]
        %v2312 = vld [vmem:[%s0 + $0x48] sm:$0xff]
        %v2313 = vld [vmem:[%s0 + $0x50] sm:$0xff]
        %v2314 = vld [vmem:[%s0 + $0x58] sm:$0xff]
        %v2315 = vld [vmem:[%s0 + $0x60] sm:$0xff]
        %v2316 = vld [vmem:[%s0 + $0x68] sm:$0xff]
        %v2317 = vld [vmem:[%s0 + $0x70] sm:$0xff]
        %v2318 = vld [vmem:[%s0 + $0x78] sm:$0xff]
        %v2319 = vld [vmem:[%s0 + $0x80] sm:$0xff]
        %v2320 = vld [vmem:[%s0 + $0x88] sm:$0xff]
        %v2321 = vld [vmem:[%s0 + $0x90] sm:$0xff]
        %v2322 = vld [vmem:[%s0 + $0x98] sm:$0xff]
        %v2323 = vld [vmem:[%s0 + $0xa0] sm:$0xff]
        %v2324 = vld [vmem:[%s0 + $0xa8] sm:$0xff]
        %v2325 = vld [vmem:[%s0 + $0xb0] sm:$0xff]
        %v2326 = vld [vmem:[%s0 + $0xb8] sm:$0xff]
        %s2327 = scalar_lea.vmem %s1042, 448 [#allocation2]
        %v2328 = vld [vmem:[%s2327] sm:$0xf]
        %v2329 = vld [vmem:[%s2327 + $0x4] sm:$0xf]
        %v2330 = vld [vmem:[%s2327 + $0x8] sm:$0xf]
        %v2331 = vld [vmem:[%s2327 + $0xc] sm:$0xf]
        %v2332 = vld [vmem:[%s2327 + $0x10] sm:$0xf]
        %v2333 = vld [vmem:[%s2327 + $0x14] sm:$0xf]
        %v2334 = vld [vmem:[%s2327 + $0x18] sm:$0xf]
        %v2335 = vld [vmem:[%s2327 + $0x1c] sm:$0xf]
        %v2336 = vld [vmem:[%s2327 + $0x20] sm:$0xf]
        %v2337 = vld [vmem:[%s2327 + $0x24] sm:$0xf]
        %v2338 = vld [vmem:[%s2327 + $0x28] sm:$0xf]
        %v2339 = vld [vmem:[%s2327 + $0x2c] sm:$0xf]
        %v2340 = vld [vmem:[%s2327 + $0x30] sm:$0xf]
        %v2341 = vld [vmem:[%s2327 + $0x34] sm:$0xf]
        %v2342 = vld [vmem:[%s2327 + $0x38] sm:$0xf]
        %v2343 = vld [vmem:[%s2327 + $0x3c] sm:$0xf]
        %v2344 = vld [vmem:[%s2327 + $0x40] sm:$0xf]
        %v2345 = vld [vmem:[%s2327 + $0x44] sm:$0xf]
        %v2346 = vld [vmem:[%s2327 + $0x48] sm:$0xf]
        %v2347 = vld [vmem:[%s2327 + $0x4c] sm:$0xf]
        %v2348 = vld [vmem:[%s2327 + $0x50] sm:$0xf]
        %v2349 = vld [vmem:[%s2327 + $0x54] sm:$0xf]
        %v2350 = vld [vmem:[%s2327 + $0x58] sm:$0xf]
        %v2351 = vld [vmem:[%s2327 + $0x5c] sm:$0xf]
        %v2352 = vld [vmem:[%s2327 + $0x60] sm:$0xf]
        %v2353 = vld [vmem:[%s2327 + $0x64] sm:$0xf]
        %v2354 = vld [vmem:[%s2327 + $0x68] sm:$0xf]
        %v2355 = vld [vmem:[%s2327 + $0x6c] sm:$0xf]
        %v2372 = vunpack.c.l.b16 %v2311
        %v2373 = vunpack.c.h.b16 %v2311
        %v2374 = vunpack.c.l.b16 %v2312
        %v2375 = vunpack.c.h.b16 %v2312
        %v2376 = vunpack.c.l.b16 %v2313
        %v2377 = vunpack.c.h.b16 %v2313
        %v2378 = vunpack.c.l.b16 %v2314
        %v2379 = vunpack.c.h.b16 %v2314
        %v2380 = vunpack.c.l.b16 %v2315
        %v2381 = vunpack.c.h.b16 %v2315
        %v2382 = vunpack.c.l.b16 %v2316
        %v2383 = vunpack.c.h.b16 %v2316
        %v2384 = vunpack.c.l.b16 %v2317
        %v2385 = vunpack.c.h.b16 %v2317
        %v2386 = vunpack.c.l.b16 %v2318
        %v2387 = vunpack.c.h.b16 %v2318
        %v2388 = vunpack.c.l.b16 %v2319
        %v2389 = vunpack.c.h.b16 %v2319
        %v2390 = vunpack.c.l.b16 %v2320
        %v2391 = vunpack.c.h.b16 %v2320
        %v2392 = vunpack.c.l.b16 %v2321
        %v2393 = vunpack.c.h.b16 %v2321
        %v2394 = vunpack.c.l.b16 %v2322
        %v2395 = vunpack.c.h.b16 %v2322
        %v2396 = vunpack.c.l.b16 %v2323
        %v2397 = vunpack.c.h.b16 %v2323
        %v2398 = vunpack.c.l.b16 %v2324
        %v2399 = vunpack.c.h.b16 %v2324
        %v2400 = vunpack.c.l.b16 %v2325
        %v2401 = vunpack.c.h.b16 %v2325
        %v2402 = vunpack.c.l.b16 %v2326
        %v2403 = vunpack.c.h.b16 %v2326
        %v2404 = vpack.c.b16 %v2374, %v2372
        %v2405 = vpack.c.b16 %v2375, %v2373
        %v2406 = vpack.c.b16 %v2378, %v2376
        %v2407 = vpack.c.b16 %v2379, %v2377
        %v2408 = vpack.c.b16 %v2382, %v2380
        %v2409 = vpack.c.b16 %v2383, %v2381
        %v2410 = vpack.c.b16 %v2386, %v2384
        %v2411 = vpack.c.b16 %v2387, %v2385
        %v2412 = vpack.c.b16 %v2390, %v2388
        %v2413 = vpack.c.b16 %v2391, %v2389
        %v2414 = vpack.c.b16 %v2394, %v2392
        %v2415 = vpack.c.b16 %v2395, %v2393
        %v2416 = vpack.c.b16 %v2398, %v2396
        %v2417 = vpack.c.b16 %v2399, %v2397
        %v2418 = vpack.c.b16 %v2402, %v2400
        %v2419 = vpack.c.b16 %v2403, %v2401
        %v2456 = vunpack.c.l.b16 %v2328
        %v2457 = vunpack.c.l.b16 %v2329
        %v2458 = vunpack.c.l.b16 %v2330
        %v2459 = vunpack.c.l.b16 %v2331
        %v2460 = vunpack.c.l.b16 %v2332
        %v2461 = vunpack.c.l.b16 %v2333
        %v2462 = vunpack.c.l.b16 %v2334
        %v2463 = vunpack.c.l.b16 %v2335
        %v2464 = vunpack.c.l.b16 %v2336
        %v2465 = vunpack.c.l.b16 %v2337
        %v2466 = vunpack.c.l.b16 %v2338
        %v2467 = vunpack.c.l.b16 %v2339
        %v2468 = vunpack.c.l.b16 %v2340
        %v2469 = vunpack.c.l.b16 %v2341
        %v2470 = vunpack.c.l.b16 %v2342
        %v2471 = vunpack.c.l.b16 %v2343
        %v2472 = vunpack.c.l.b16 %v2344
        %v2473 = vunpack.c.l.b16 %v2345
        %v2474 = vunpack.c.l.b16 %v2346
        %v2475 = vunpack.c.l.b16 %v2347
        %v2476 = vunpack.c.l.b16 %v2348
        %v2477 = vunpack.c.l.b16 %v2349
        %v2478 = vunpack.c.l.b16 %v2350
        %v2479 = vunpack.c.l.b16 %v2351
        %v2480 = vunpack.c.l.b16 %v2352
        %v2481 = vunpack.c.l.b16 %v2353
        %v2482 = vunpack.c.l.b16 %v2354
        %v2483 = vunpack.c.l.b16 %v2355
        %v2484 = vpack.c.b16 %v2457, %v2456
        %v2485 = vpack.c.b16 %v2459, %v2458
        %v2486 = vpack.c.b16 %v2461, %v2460
        %v2487 = vpack.c.b16 %v2463, %v2462
        %v2488 = vpack.c.b16 %v2465, %v2464
        %v2489 = vpack.c.b16 %v2467, %v2466
        %v2490 = vpack.c.b16 %v2469, %v2468
        %v2491 = vpack.c.b16 %v2471, %v2470
        %v2492 = vpack.c.b16 %v2473, %v2472
        %v2493 = vpack.c.b16 %v2475, %v2474
        %v2494 = vpack.c.b16 %v2477, %v2476
        %v2495 = vpack.c.b16 %v2479, %v2478
        %v2496 = vpack.c.b16 %v2481, %v2480
        %v2497 = vpack.c.b16 %v2483, %v2482
        %v2513 = vsel %vm1316, %v2405, 0
        %v2516 = vsel %vm1316, %v2407, 0
        %v2519 = vsel %vm1316, %v2409, 0
        %v2522 = vsel %vm1316, %v2411, 0
        %v2525 = vsel %vm1316, %v2413, 0
        %v2528 = vsel %vm1316, %v2415, 0
        %v2531 = vsel %vm1316, %v2417, 0
        %v2534 = vsel %vm1316, %v2419, 0
        %2536 = vmatpush.bf16.msra.mxu0 %v2491
        %2537 = vmatpush.bf16.msra.mxu0 %v2490
        %2538 = vmatpush.bf16.msra.mxu0 %v2489
        %2539 = vmatpush.bf16.msra.mxu0 %v2488
        %2540 = vmatpush.bf16.msra.mxu0 %v2487
        %2541 = vmatpush.bf16.msra.mxu0 %v2486
        %2542 = vmatpush.bf16.msra.mxu0 %v2485
        %2543 = vmatpush.bf16.msra.mxu0 %v2484
        %2544 = vmatmul.bf16.gmra.mxu0 %v2404
        %v2545 = vpop.f32.mrf.mxu0
        %v2546 = vadd.f32 0.0, %v2545
        %v2547 = vpop.f32.mrf.mxu0
        %v2548 = vadd.f32 0.0, %v2547
        %2549 = vmatmul.bf16.gmra.mxu0 %v2406
        %v2550 = vpop.f32.mrf.mxu0
        %v2551 = vadd.f32 0.0, %v2550
        %v2552 = vpop.f32.mrf.mxu0
        %v2553 = vadd.f32 0.0, %v2552
        %2554 = vmatmul.bf16.gmra.mxu0 %v2408
        %v2555 = vpop.f32.mrf.mxu0
        %v2556 = vadd.f32 0.0, %v2555
        %v2557 = vpop.f32.mrf.mxu0
        %v2558 = vadd.f32 0.0, %v2557
        %2559 = vmatmul.bf16.gmra.mxu0 %v2410
        %v2560 = vpop.f32.mrf.mxu0
        %v2561 = vadd.f32 0.0, %v2560
        %v2562 = vpop.f32.mrf.mxu0
        %v2563 = vadd.f32 0.0, %v2562
        %2564 = vmatmul.bf16.gmra.mxu0 %v2412
        %v2565 = vpop.f32.mrf.mxu0
        %v2566 = vadd.f32 0.0, %v2565
        %v2567 = vpop.f32.mrf.mxu0
        %v2568 = vadd.f32 0.0, %v2567
        %2569 = vmatmul.bf16.gmra.mxu0 %v2414
        %v2570 = vpop.f32.mrf.mxu0
        %v2571 = vadd.f32 0.0, %v2570
        %v2572 = vpop.f32.mrf.mxu0
        %v2573 = vadd.f32 0.0, %v2572
        %2574 = vmatmul.bf16.gmra.mxu0 %v2416
        %v2575 = vpop.f32.mrf.mxu0
        %v2576 = vadd.f32 0.0, %v2575
        %v2577 = vpop.f32.mrf.mxu0
        %v2578 = vadd.f32 0.0, %v2577
        %2579 = vmatmul.bf16.gmra.mxu0 %v2418
        %v2580 = vpop.f32.mrf.mxu0
        %v2581 = vadd.f32 0.0, %v2580
        %v2582 = vpop.f32.mrf.mxu0
        %v2583 = vadd.f32 0.0, %v2582
        %2584 = vdwg.mxu0
        %2585 = vmatpush.bf16.msra.mxu0 0
        %2586 = vmatpush.bf16.msra.mxu0 0
        %2587 = vmatpush.bf16.msra.mxu0 %v2497
        %2588 = vmatpush.bf16.msra.mxu0 %v2496
        %2589 = vmatpush.bf16.msra.mxu0 %v2495
        %2590 = vmatpush.bf16.msra.mxu0 %v2494
        %2591 = vmatpush.bf16.msra.mxu0 %v2493
        %2592 = vmatpush.bf16.msra.mxu0 %v2492
        %2593 = vmatmul.bf16.gmra.mxu0 %v2513
        %v2594 = vpop.f32.mrf.mxu0
        %v2595 = vadd.f32 %v2546, %v2594
        %v2596 = vpop.f32.mrf.mxu0
        %v2597 = vadd.f32 %v2548, %v2596
        %2598 = vmatmul.bf16.gmra.mxu0 %v2516
        %v2599 = vpop.f32.mrf.mxu0
        %v2600 = vadd.f32 %v2551, %v2599
        %v2601 = vpop.f32.mrf.mxu0
        %v2602 = vadd.f32 %v2553, %v2601
        %2603 = vmatmul.bf16.gmra.mxu0 %v2519
        %v2604 = vpop.f32.mrf.mxu0
        %v2605 = vadd.f32 %v2556, %v2604
        %v2606 = vpop.f32.mrf.mxu0
        %v2607 = vadd.f32 %v2558, %v2606
        %2608 = vmatmul.bf16.gmra.mxu0 %v2522
        %v2609 = vpop.f32.mrf.mxu0
        %v2610 = vadd.f32 %v2561, %v2609
        %v2611 = vpop.f32.mrf.mxu0
        %v2612 = vadd.f32 %v2563, %v2611
        %2613 = vmatmul.bf16.gmra.mxu0 %v2525
        %v2614 = vpop.f32.mrf.mxu0
        %v2615 = vadd.f32 %v2566, %v2614
        %v2616 = vpop.f32.mrf.mxu0
        %v2617 = vadd.f32 %v2568, %v2616
        %2618 = vmatmul.bf16.gmra.mxu0 %v2528
        %v2619 = vpop.f32.mrf.mxu0
        %v2620 = vadd.f32 %v2571, %v2619
        %v2621 = vpop.f32.mrf.mxu0
        %v2622 = vadd.f32 %v2573, %v2621
        %2623 = vmatmul.bf16.gmra.mxu0 %v2531
        %v2624 = vpop.f32.mrf.mxu0
        %v2625 = vadd.f32 %v2576, %v2624
        %v2626 = vpop.f32.mrf.mxu0
        %v2627 = vadd.f32 %v2578, %v2626
        %2628 = vmatmul.bf16.gmra.mxu0 %v2534
        %v2629 = vpop.f32.mrf.mxu0
        %v2630 = vadd.f32 %v2581, %v2629
        %v2631 = vpop.f32.mrf.mxu0
        %v2632 = vadd.f32 %v2583, %v2631
        %2633 = vdwg.mxu0
        %v2634 = vadd.f32 %v2295, %v2595
        %v2635 = vadd.f32 %v2296, %v2597
        %v2636 = vadd.f32 %v2297, %v2600
        %v2637 = vadd.f32 %v2298, %v2602
        %v2638 = vadd.f32 %v2299, %v2605
        %v2639 = vadd.f32 %v2300, %v2607
        %v2640 = vadd.f32 %v2301, %v2610
        %v2641 = vadd.f32 %v2302, %v2612
        %v2642 = vadd.f32 %v2303, %v2615
        %v2643 = vadd.f32 %v2304, %v2617
        %v2644 = vadd.f32 %v2305, %v2620
        %v2645 = vadd.f32 %v2306, %v2622
        %v2646 = vadd.f32 %v2307, %v2625
        %v2647 = vadd.f32 %v2308, %v2627
        %v2648 = vadd.f32 %v2309, %v2630
        %v2649 = vadd.f32 %v2310, %v2632
        %v2650 = vld [vmem:[%s0 + $0x50] sm:$0xff]
        %v2651 = vld [vmem:[%s0 + $0x58] sm:$0xff]
        %v2652 = vld [vmem:[%s0 + $0x60] sm:$0xff]
        %v2653 = vld [vmem:[%s0 + $0x68] sm:$0xff]
        %v2654 = vld [vmem:[%s0 + $0x70] sm:$0xff]
        %v2655 = vld [vmem:[%s0 + $0x78] sm:$0xff]
        %v2656 = vld [vmem:[%s0 + $0x80] sm:$0xff]
        %v2657 = vld [vmem:[%s0 + $0x88] sm:$0xff]
        %v2658 = vld [vmem:[%s0 + $0x90] sm:$0xff]
        %v2659 = vld [vmem:[%s0 + $0x98] sm:$0xff]
        %v2660 = vld [vmem:[%s0 + $0xa0] sm:$0xff]
        %v2661 = vld [vmem:[%s0 + $0xa8] sm:$0xff]
        %v2662 = vld [vmem:[%s0 + $0xb0] sm:$0xff]
        %v2663 = vld [vmem:[%s0 + $0xb8] sm:$0xff]
        %v2664 = vld [vmem:[%s0 + $0xc0] sm:$0xff]
        %v2665 = vld [vmem:[%s0 + $0xc8] sm:$0xff]
        %s2666 = scalar_lea.vmem %s1042, 560 [#allocation2]
        %v2667 = vld [vmem:[%s2666] sm:$0xf]
        %v2668 = vld [vmem:[%s2666 + $0x4] sm:$0xf]
        %v2669 = vld [vmem:[%s2666 + $0x8] sm:$0xf]
        %v2670 = vld [vmem:[%s2666 + $0xc] sm:$0xf]
        %v2671 = vld [vmem:[%s2666 + $0x10] sm:$0xf]
        %v2672 = vld [vmem:[%s2666 + $0x14] sm:$0xf]
        %v2673 = vld [vmem:[%s2666 + $0x18] sm:$0xf]
        %v2674 = vld [vmem:[%s2666 + $0x1c] sm:$0xf]
        %v2675 = vld [vmem:[%s2666 + $0x20] sm:$0xf]
        %v2676 = vld [vmem:[%s2666 + $0x24] sm:$0xf]
        %v2677 = vld [vmem:[%s2666 + $0x28] sm:$0xf]
        %v2678 = vld [vmem:[%s2666 + $0x2c] sm:$0xf]
        %v2679 = vld [vmem:[%s2666 + $0x30] sm:$0xf]
        %v2680 = vld [vmem:[%s2666 + $0x34] sm:$0xf]
        %v2681 = vld [vmem:[%s2666 + $0x38] sm:$0xf]
        %v2682 = vld [vmem:[%s2666 + $0x3c] sm:$0xf]
        %v2683 = vld [vmem:[%s2666 + $0x40] sm:$0xf]
        %v2684 = vld [vmem:[%s2666 + $0x44] sm:$0xf]
        %v2685 = vld [vmem:[%s2666 + $0x48] sm:$0xf]
        %v2686 = vld [vmem:[%s2666 + $0x4c] sm:$0xf]
        %v2687 = vld [vmem:[%s2666 + $0x50] sm:$0xf]
        %v2688 = vld [vmem:[%s2666 + $0x54] sm:$0xf]
        %v2689 = vld [vmem:[%s2666 + $0x58] sm:$0xf]
        %v2690 = vld [vmem:[%s2666 + $0x5c] sm:$0xf]
        %v2691 = vld [vmem:[%s2666 + $0x60] sm:$0xf]
        %v2692 = vld [vmem:[%s2666 + $0x64] sm:$0xf]
        %v2693 = vld [vmem:[%s2666 + $0x68] sm:$0xf]
        %v2694 = vld [vmem:[%s2666 + $0x6c] sm:$0xf]
        %v2711 = vunpack.c.l.b16 %v2650
        %v2712 = vunpack.c.h.b16 %v2650
        %v2713 = vunpack.c.l.b16 %v2651
        %v2714 = vunpack.c.h.b16 %v2651
        %v2715 = vunpack.c.l.b16 %v2652
        %v2716 = vunpack.c.h.b16 %v2652
        %v2717 = vunpack.c.l.b16 %v2653
        %v2718 = vunpack.c.h.b16 %v2653
        %v2719 = vunpack.c.l.b16 %v2654
        %v2720 = vunpack.c.h.b16 %v2654
        %v2721 = vunpack.c.l.b16 %v2655
        %v2722 = vunpack.c.h.b16 %v2655
        %v2723 = vunpack.c.l.b16 %v2656
        %v2724 = vunpack.c.h.b16 %v2656
        %v2725 = vunpack.c.l.b16 %v2657
        %v2726 = vunpack.c.h.b16 %v2657
        %v2727 = vunpack.c.l.b16 %v2658
        %v2728 = vunpack.c.h.b16 %v2658
        %v2729 = vunpack.c.l.b16 %v2659
        %v2730 = vunpack.c.h.b16 %v2659
        %v2731 = vunpack.c.l.b16 %v2660
        %v2732 = vunpack.c.h.b16 %v2660
        %v2733 = vunpack.c.l.b16 %v2661
        %v2734 = vunpack.c.h.b16 %v2661
        %v2735 = vunpack.c.l.b16 %v2662
        %v2736 = vunpack.c.h.b16 %v2662
        %v2737 = vunpack.c.l.b16 %v2663
        %v2738 = vunpack.c.h.b16 %v2663
        %v2739 = vunpack.c.l.b16 %v2664
        %v2740 = vunpack.c.h.b16 %v2664
        %v2741 = vunpack.c.l.b16 %v2665
        %v2742 = vunpack.c.h.b16 %v2665
        %v2743 = vpack.c.b16 %v2713, %v2711
        %v2744 = vpack.c.b16 %v2714, %v2712
        %v2745 = vpack.c.b16 %v2717, %v2715
        %v2746 = vpack.c.b16 %v2718, %v2716
        %v2747 = vpack.c.b16 %v2721, %v2719
        %v2748 = vpack.c.b16 %v2722, %v2720
        %v2749 = vpack.c.b16 %v2725, %v2723
        %v2750 = vpack.c.b16 %v2726, %v2724
        %v2751 = vpack.c.b16 %v2729, %v2727
        %v2752 = vpack.c.b16 %v2730, %v2728
        %v2753 = vpack.c.b16 %v2733, %v2731
        %v2754 = vpack.c.b16 %v2734, %v2732
        %v2755 = vpack.c.b16 %v2737, %v2735
        %v2756 = vpack.c.b16 %v2738, %v2736
        %v2757 = vpack.c.b16 %v2741, %v2739
        %v2758 = vpack.c.b16 %v2742, %v2740
        %v2795 = vunpack.c.l.b16 %v2667
        %v2796 = vunpack.c.l.b16 %v2668
        %v2797 = vunpack.c.l.b16 %v2669
        %v2798 = vunpack.c.l.b16 %v2670
        %v2799 = vunpack.c.l.b16 %v2671
        %v2800 = vunpack.c.l.b16 %v2672
        %v2801 = vunpack.c.l.b16 %v2673
        %v2802 = vunpack.c.l.b16 %v2674
        %v2803 = vunpack.c.l.b16 %v2675
        %v2804 = vunpack.c.l.b16 %v2676
        %v2805 = vunpack.c.l.b16 %v2677
        %v2806 = vunpack.c.l.b16 %v2678
        %v2807 = vunpack.c.l.b16 %v2679
        %v2808 = vunpack.c.l.b16 %v2680
        %v2809 = vunpack.c.l.b16 %v2681
        %v2810 = vunpack.c.l.b16 %v2682
        %v2811 = vunpack.c.l.b16 %v2683
        %v2812 = vunpack.c.l.b16 %v2684
        %v2813 = vunpack.c.l.b16 %v2685
        %v2814 = vunpack.c.l.b16 %v2686
        %v2815 = vunpack.c.l.b16 %v2687
        %v2816 = vunpack.c.l.b16 %v2688
        %v2817 = vunpack.c.l.b16 %v2689
        %v2818 = vunpack.c.l.b16 %v2690
        %v2819 = vunpack.c.l.b16 %v2691
        %v2820 = vunpack.c.l.b16 %v2692
        %v2821 = vunpack.c.l.b16 %v2693
        %v2822 = vunpack.c.l.b16 %v2694
        %v2823 = vpack.c.b16 %v2796, %v2795
        %v2824 = vpack.c.b16 %v2798, %v2797
        %v2825 = vpack.c.b16 %v2800, %v2799
        %v2826 = vpack.c.b16 %v2802, %v2801
        %v2827 = vpack.c.b16 %v2804, %v2803
        %v2828 = vpack.c.b16 %v2806, %v2805
        %v2829 = vpack.c.b16 %v2808, %v2807
        %v2830 = vpack.c.b16 %v2810, %v2809
        %v2831 = vpack.c.b16 %v2812, %v2811
        %v2832 = vpack.c.b16 %v2814, %v2813
        %v2833 = vpack.c.b16 %v2816, %v2815
        %v2834 = vpack.c.b16 %v2818, %v2817
        %v2835 = vpack.c.b16 %v2820, %v2819
        %v2836 = vpack.c.b16 %v2822, %v2821
        %v2852 = vsel %vm1316, %v2744, 0
        %v2855 = vsel %vm1316, %v2746, 0
        %v2858 = vsel %vm1316, %v2748, 0
        %v2861 = vsel %vm1316, %v2750, 0
        %v2864 = vsel %vm1316, %v2752, 0
        %v2867 = vsel %vm1316, %v2754, 0
        %v2870 = vsel %vm1316, %v2756, 0
        %v2873 = vsel %vm1316, %v2758, 0
        %2875 = vmatpush.bf16.msra.mxu0 %v2830
        %2876 = vmatpush.bf16.msra.mxu0 %v2829
        %2877 = vmatpush.bf16.msra.mxu0 %v2828
        %2878 = vmatpush.bf16.msra.mxu0 %v2827
        %2879 = vmatpush.bf16.msra.mxu0 %v2826
        %2880 = vmatpush.bf16.msra.mxu0 %v2825
        %2881 = vmatpush.bf16.msra.mxu0 %v2824
        %2882 = vmatpush.bf16.msra.mxu0 %v2823
        %2883 = vmatmul.bf16.gmra.mxu0 %v2743
        %v2884 = vpop.f32.mrf.mxu0
        %v2885 = vadd.f32 0.0, %v2884
        %v2886 = vpop.f32.mrf.mxu0
        %v2887 = vadd.f32 0.0, %v2886
        %2888 = vmatmul.bf16.gmra.mxu0 %v2745
        %v2889 = vpop.f32.mrf.mxu0
        %v2890 = vadd.f32 0.0, %v2889
        %v2891 = vpop.f32.mrf.mxu0
        %v2892 = vadd.f32 0.0, %v2891
        %2893 = vmatmul.bf16.gmra.mxu0 %v2747
        %v2894 = vpop.f32.mrf.mxu0
        %v2895 = vadd.f32 0.0, %v2894
        %v2896 = vpop.f32.mrf.mxu0
        %v2897 = vadd.f32 0.0, %v2896
        %2898 = vmatmul.bf16.gmra.mxu0 %v2749
        %v2899 = vpop.f32.mrf.mxu0
        %v2900 = vadd.f32 0.0, %v2899
        %v2901 = vpop.f32.mrf.mxu0
        %v2902 = vadd.f32 0.0, %v2901
        %2903 = vmatmul.bf16.gmra.mxu0 %v2751
        %v2904 = vpop.f32.mrf.mxu0
        %v2905 = vadd.f32 0.0, %v2904
        %v2906 = vpop.f32.mrf.mxu0
        %v2907 = vadd.f32 0.0, %v2906
        %2908 = vmatmul.bf16.gmra.mxu0 %v2753
        %v2909 = vpop.f32.mrf.mxu0
        %v2910 = vadd.f32 0.0, %v2909
        %v2911 = vpop.f32.mrf.mxu0
        %v2912 = vadd.f32 0.0, %v2911
        %2913 = vmatmul.bf16.gmra.mxu0 %v2755
        %v2914 = vpop.f32.mrf.mxu0
        %v2915 = vadd.f32 0.0, %v2914
        %v2916 = vpop.f32.mrf.mxu0
        %v2917 = vadd.f32 0.0, %v2916
        %2918 = vmatmul.bf16.gmra.mxu0 %v2757
        %v2919 = vpop.f32.mrf.mxu0
        %v2920 = vadd.f32 0.0, %v2919
        %v2921 = vpop.f32.mrf.mxu0
        %v2922 = vadd.f32 0.0, %v2921
        %2923 = vdwg.mxu0
        %2924 = vmatpush.bf16.msra.mxu0 0
        %2925 = vmatpush.bf16.msra.mxu0 0
        %2926 = vmatpush.bf16.msra.mxu0 %v2836
        %2927 = vmatpush.bf16.msra.mxu0 %v2835
        %2928 = vmatpush.bf16.msra.mxu0 %v2834
        %2929 = vmatpush.bf16.msra.mxu0 %v2833
        %2930 = vmatpush.bf16.msra.mxu0 %v2832
        %2931 = vmatpush.bf16.msra.mxu0 %v2831
        %2932 = vmatmul.bf16.gmra.mxu0 %v2852
        %v2933 = vpop.f32.mrf.mxu0
        %v2934 = vadd.f32 %v2885, %v2933
        %v2935 = vpop.f32.mrf.mxu0
        %v2936 = vadd.f32 %v2887, %v2935
        %2937 = vmatmul.bf16.gmra.mxu0 %v2855
        %v2938 = vpop.f32.mrf.mxu0
        %v2939 = vadd.f32 %v2890, %v2938
        %v2940 = vpop.f32.mrf.mxu0
        %v2941 = vadd.f32 %v2892, %v2940
        %2942 = vmatmul.bf16.gmra.mxu0 %v2858
        %v2943 = vpop.f32.mrf.mxu0
        %v2944 = vadd.f32 %v2895, %v2943
        %v2945 = vpop.f32.mrf.mxu0
        %v2946 = vadd.f32 %v2897, %v2945
        %2947 = vmatmul.bf16.gmra.mxu0 %v2861
        %v2948 = vpop.f32.mrf.mxu0
        %v2949 = vadd.f32 %v2900, %v2948
        %v2950 = vpop.f32.mrf.mxu0
        %v2951 = vadd.f32 %v2902, %v2950
        %2952 = vmatmul.bf16.gmra.mxu0 %v2864
        %v2953 = vpop.f32.mrf.mxu0
        %v2954 = vadd.f32 %v2905, %v2953
        %v2955 = vpop.f32.mrf.mxu0
        %v2956 = vadd.f32 %v2907, %v2955
        %2957 = vmatmul.bf16.gmra.mxu0 %v2867
        %v2958 = vpop.f32.mrf.mxu0
        %v2959 = vadd.f32 %v2910, %v2958
        %v2960 = vpop.f32.mrf.mxu0
        %v2961 = vadd.f32 %v2912, %v2960
        %2962 = vmatmul.bf16.gmra.mxu0 %v2870
        %v2963 = vpop.f32.mrf.mxu0
        %v2964 = vadd.f32 %v2915, %v2963
        %v2965 = vpop.f32.mrf.mxu0
        %v2966 = vadd.f32 %v2917, %v2965
        %2967 = vmatmul.bf16.gmra.mxu0 %v2873
        %v2968 = vpop.f32.mrf.mxu0
        %v2969 = vadd.f32 %v2920, %v2968
        %v2970 = vpop.f32.mrf.mxu0
        %v2971 = vadd.f32 %v2922, %v2970
        %2972 = vdwg.mxu0
        %v2973 = vadd.f32 %v2634, %v2934
        %v2974 = vadd.f32 %v2635, %v2936
        %v2975 = vadd.f32 %v2636, %v2939
        %v2976 = vadd.f32 %v2637, %v2941
        %v2977 = vadd.f32 %v2638, %v2944
        %v2978 = vadd.f32 %v2639, %v2946
        %v2979 = vadd.f32 %v2640, %v2949
        %v2980 = vadd.f32 %v2641, %v2951
        %v2981 = vadd.f32 %v2642, %v2954
        %v2982 = vadd.f32 %v2643, %v2956
        %v2983 = vadd.f32 %v2644, %v2959
        %v2984 = vadd.f32 %v2645, %v2961
        %v2985 = vadd.f32 %v2646, %v2964
        %v2986 = vadd.f32 %v2647, %v2966
        %v2987 = vadd.f32 %v2648, %v2969
        %v2988 = vadd.f32 %v2649, %v2971
        %v2989 = vld [vmem:[%s0 + $0x60] sm:$0xff]
        %v2990 = vld [vmem:[%s0 + $0x68] sm:$0xff]
        %v2991 = vld [vmem:[%s0 + $0x70] sm:$0xff]
        %v2992 = vld [vmem:[%s0 + $0x78] sm:$0xff]
        %v2993 = vld [vmem:[%s0 + $0x80] sm:$0xff]
        %v2994 = vld [vmem:[%s0 + $0x88] sm:$0xff]
        %v2995 = vld [vmem:[%s0 + $0x90] sm:$0xff]
        %v2996 = vld [vmem:[%s0 + $0x98] sm:$0xff]
        %v2997 = vld [vmem:[%s0 + $0xa0] sm:$0xff]
        %v2998 = vld [vmem:[%s0 + $0xa8] sm:$0xff]
        %v2999 = vld [vmem:[%s0 + $0xb0] sm:$0xff]
        %v3000 = vld [vmem:[%s0 + $0xb8] sm:$0xff]
        %v3001 = vld [vmem:[%s0 + $0xc0] sm:$0xff]
        %v3002 = vld [vmem:[%s0 + $0xc8] sm:$0xff]
        %v3003 = vld [vmem:[%s0 + $0xd0] sm:$0xff]
        %v3004 = vld [vmem:[%s0 + $0xd8] sm:$0xff]
        %s3005 = scalar_lea.vmem %s1042, 672 [#allocation2]
        %v3006 = vld [vmem:[%s3005] sm:$0xf]
        %v3007 = vld [vmem:[%s3005 + $0x4] sm:$0xf]
        %v3008 = vld [vmem:[%s3005 + $0x8] sm:$0xf]
        %v3009 = vld [vmem:[%s3005 + $0xc] sm:$0xf]
        %v3010 = vld [vmem:[%s3005 + $0x10] sm:$0xf]
        %v3011 = vld [vmem:[%s3005 + $0x14] sm:$0xf]
        %v3012 = vld [vmem:[%s3005 + $0x18] sm:$0xf]
        %v3013 = vld [vmem:[%s3005 + $0x1c] sm:$0xf]
        %v3014 = vld [vmem:[%s3005 + $0x20] sm:$0xf]
        %v3015 = vld [vmem:[%s3005 + $0x24] sm:$0xf]
        %v3016 = vld [vmem:[%s3005 + $0x28] sm:$0xf]
        %v3017 = vld [vmem:[%s3005 + $0x2c] sm:$0xf]
        %v3018 = vld [vmem:[%s3005 + $0x30] sm:$0xf]
        %v3019 = vld [vmem:[%s3005 + $0x34] sm:$0xf]
        %v3020 = vld [vmem:[%s3005 + $0x38] sm:$0xf]
        %v3021 = vld [vmem:[%s3005 + $0x3c] sm:$0xf]
        %v3022 = vld [vmem:[%s3005 + $0x40] sm:$0xf]
        %v3023 = vld [vmem:[%s3005 + $0x44] sm:$0xf]
        %v3024 = vld [vmem:[%s3005 + $0x48] sm:$0xf]
        %v3025 = vld [vmem:[%s3005 + $0x4c] sm:$0xf]
        %v3026 = vld [vmem:[%s3005 + $0x50] sm:$0xf]
        %v3027 = vld [vmem:[%s3005 + $0x54] sm:$0xf]
        %v3028 = vld [vmem:[%s3005 + $0x58] sm:$0xf]
        %v3029 = vld [vmem:[%s3005 + $0x5c] sm:$0xf]
        %v3030 = vld [vmem:[%s3005 + $0x60] sm:$0xf]
        %v3031 = vld [vmem:[%s3005 + $0x64] sm:$0xf]
        %v3032 = vld [vmem:[%s3005 + $0x68] sm:$0xf]
        %v3033 = vld [vmem:[%s3005 + $0x6c] sm:$0xf]
        %v3050 = vunpack.c.l.b16 %v2989
        %v3051 = vunpack.c.h.b16 %v2989
        %v3052 = vunpack.c.l.b16 %v2990
        %v3053 = vunpack.c.h.b16 %v2990
        %v3054 = vunpack.c.l.b16 %v2991
        %v3055 = vunpack.c.h.b16 %v2991
        %v3056 = vunpack.c.l.b16 %v2992
        %v3057 = vunpack.c.h.b16 %v2992
        %v3058 = vunpack.c.l.b16 %v2993
        %v3059 = vunpack.c.h.b16 %v2993
        %v3060 = vunpack.c.l.b16 %v2994
        %v3061 = vunpack.c.h.b16 %v2994
        %v3062 = vunpack.c.l.b16 %v2995
        %v3063 = vunpack.c.h.b16 %v2995
        %v3064 = vunpack.c.l.b16 %v2996
        %v3065 = vunpack.c.h.b16 %v2996
        %v3066 = vunpack.c.l.b16 %v2997
        %v3067 = vunpack.c.h.b16 %v2997
        %v3068 = vunpack.c.l.b16 %v2998
        %v3069 = vunpack.c.h.b16 %v2998
        %v3070 = vunpack.c.l.b16 %v2999
        %v3071 = vunpack.c.h.b16 %v2999
        %v3072 = vunpack.c.l.b16 %v3000
        %v3073 = vunpack.c.h.b16 %v3000
        %v3074 = vunpack.c.l.b16 %v3001
        %v3075 = vunpack.c.h.b16 %v3001
        %v3076 = vunpack.c.l.b16 %v3002
        %v3077 = vunpack.c.h.b16 %v3002
        %v3078 = vunpack.c.l.b16 %v3003
        %v3079 = vunpack.c.h.b16 %v3003
        %v3080 = vunpack.c.l.b16 %v3004
        %v3081 = vunpack.c.h.b16 %v3004
        %v3082 = vpack.c.b16 %v3052, %v3050
        %v3083 = vpack.c.b16 %v3053, %v3051
        %v3084 = vpack.c.b16 %v3056, %v3054
        %v3085 = vpack.c.b16 %v3057, %v3055
        %v3086 = vpack.c.b16 %v3060, %v3058
        %v3087 = vpack.c.b16 %v3061, %v3059
        %v3088 = vpack.c.b16 %v3064, %v3062
        %v3089 = vpack.c.b16 %v3065, %v3063
        %v3090 = vpack.c.b16 %v3068, %v3066
        %v3091 = vpack.c.b16 %v3069, %v3067
        %v3092 = vpack.c.b16 %v3072, %v3070
        %v3093 = vpack.c.b16 %v3073, %v3071
        %v3094 = vpack.c.b16 %v3076, %v3074
        %v3095 = vpack.c.b16 %v3077, %v3075
        %v3096 = vpack.c.b16 %v3080, %v3078
        %v3097 = vpack.c.b16 %v3081, %v3079
        %v3134 = vunpack.c.l.b16 %v3006
        %v3135 = vunpack.c.l.b16 %v3007
        %v3136 = vunpack.c.l.b16 %v3008
        %v3137 = vunpack.c.l.b16 %v3009
        %v3138 = vunpack.c.l.b16 %v3010
        %v3139 = vunpack.c.l.b16 %v3011
        %v3140 = vunpack.c.l.b16 %v3012
        %v3141 = vunpack.c.l.b16 %v3013
        %v3142 = vunpack.c.l.b16 %v3014
        %v3143 = vunpack.c.l.b16 %v3015
        %v3144 = vunpack.c.l.b16 %v3016
        %v3145 = vunpack.c.l.b16 %v3017
        %v3146 = vunpack.c.l.b16 %v3018
        %v3147 = vunpack.c.l.b16 %v3019
        %v3148 = vunpack.c.l.b16 %v3020
        %v3149 = vunpack.c.l.b16 %v3021
        %v3150 = vunpack.c.l.b16 %v3022
        %v3151 = vunpack.c.l.b16 %v3023
        %v3152 = vunpack.c.l.b16 %v3024
        %v3153 = vunpack.c.l.b16 %v3025
        %v3154 = vunpack.c.l.b16 %v3026
        %v3155 = vunpack.c.l.b16 %v3027
        %v3156 = vunpack.c.l.b16 %v3028
        %v3157 = vunpack.c.l.b16 %v3029
        %v3158 = vunpack.c.l.b16 %v3030
        %v3159 = vunpack.c.l.b16 %v3031
        %v3160 = vunpack.c.l.b16 %v3032
        %v3161 = vunpack.c.l.b16 %v3033
        %v3162 = vpack.c.b16 %v3135, %v3134
        %v3163 = vpack.c.b16 %v3137, %v3136
        %v3164 = vpack.c.b16 %v3139, %v3138
        %v3165 = vpack.c.b16 %v3141, %v3140
        %v3166 = vpack.c.b16 %v3143, %v3142
        %v3167 = vpack.c.b16 %v3145, %v3144
        %v3168 = vpack.c.b16 %v3147, %v3146
        %v3169 = vpack.c.b16 %v3149, %v3148
        %v3170 = vpack.c.b16 %v3151, %v3150
        %v3171 = vpack.c.b16 %v3153, %v3152
        %v3172 = vpack.c.b16 %v3155, %v3154
        %v3173 = vpack.c.b16 %v3157, %v3156
        %v3174 = vpack.c.b16 %v3159, %v3158
        %v3175 = vpack.c.b16 %v3161, %v3160
        %v3191 = vsel %vm1316, %v3083, 0
        %v3194 = vsel %vm1316, %v3085, 0
        %v3197 = vsel %vm1316, %v3087, 0
        %v3200 = vsel %vm1316, %v3089, 0
        %v3203 = vsel %vm1316, %v3091, 0
        %v3206 = vsel %vm1316, %v3093, 0
        %v3209 = vsel %vm1316, %v3095, 0
        %v3212 = vsel %vm1316, %v3097, 0
        %3214 = vmatpush.bf16.msra.mxu0 %v3169
        %3215 = vmatpush.bf16.msra.mxu0 %v3168
        %3216 = vmatpush.bf16.msra.mxu0 %v3167
        %3217 = vmatpush.bf16.msra.mxu0 %v3166
        %3218 = vmatpush.bf16.msra.mxu0 %v3165
        %3219 = vmatpush.bf16.msra.mxu0 %v3164
        %3220 = vmatpush.bf16.msra.mxu0 %v3163
        %3221 = vmatpush.bf16.msra.mxu0 %v3162
        %3222 = vmatmul.bf16.gmra.mxu0 %v3082
        %v3223 = vpop.f32.mrf.mxu0
        %v3224 = vadd.f32 0.0, %v3223
        %v3225 = vpop.f32.mrf.mxu0
        %v3226 = vadd.f32 0.0, %v3225
        %3227 = vmatmul.bf16.gmra.mxu0 %v3084
        %v3228 = vpop.f32.mrf.mxu0
        %v3229 = vadd.f32 0.0, %v3228
        %v3230 = vpop.f32.mrf.mxu0
        %v3231 = vadd.f32 0.0, %v3230
        %3232 = vmatmul.bf16.gmra.mxu0 %v3086
        %v3233 = vpop.f32.mrf.mxu0
        %v3234 = vadd.f32 0.0, %v3233
        %v3235 = vpop.f32.mrf.mxu0
        %v3236 = vadd.f32 0.0, %v3235
        %3237 = vmatmul.bf16.gmra.mxu0 %v3088
        %v3238 = vpop.f32.mrf.mxu0
        %v3239 = vadd.f32 0.0, %v3238
        %v3240 = vpop.f32.mrf.mxu0
        %v3241 = vadd.f32 0.0, %v3240
        %3242 = vmatmul.bf16.gmra.mxu0 %v3090
        %v3243 = vpop.f32.mrf.mxu0
        %v3244 = vadd.f32 0.0, %v3243
        %v3245 = vpop.f32.mrf.mxu0
        %v3246 = vadd.f32 0.0, %v3245
        %3247 = vmatmul.bf16.gmra.mxu0 %v3092
        %v3248 = vpop.f32.mrf.mxu0
        %v3249 = vadd.f32 0.0, %v3248
        %v3250 = vpop.f32.mrf.mxu0
        %v3251 = vadd.f32 0.0, %v3250
        %3252 = vmatmul.bf16.gmra.mxu0 %v3094
        %v3253 = vpop.f32.mrf.mxu0
        %v3254 = vadd.f32 0.0, %v3253
        %v3255 = vpop.f32.mrf.mxu0
        %v3256 = vadd.f32 0.0, %v3255
        %3257 = vmatmul.bf16.gmra.mxu0 %v3096
        %v3258 = vpop.f32.mrf.mxu0
        %v3259 = vadd.f32 0.0, %v3258
        %v3260 = vpop.f32.mrf.mxu0
        %v3261 = vadd.f32 0.0, %v3260
        %3262 = vdwg.mxu0
        %3263 = vmatpush.bf16.msra.mxu0 0
        %3264 = vmatpush.bf16.msra.mxu0 0
        %3265 = vmatpush.bf16.msra.mxu0 %v3175
        %3266 = vmatpush.bf16.msra.mxu0 %v3174
        %3267 = vmatpush.bf16.msra.mxu0 %v3173
        %3268 = vmatpush.bf16.msra.mxu0 %v3172
        %3269 = vmatpush.bf16.msra.mxu0 %v3171
        %3270 = vmatpush.bf16.msra.mxu0 %v3170
        %3271 = vmatmul.bf16.gmra.mxu0 %v3191
        %v3272 = vpop.f32.mrf.mxu0
        %v3273 = vadd.f32 %v3224, %v3272
        %v3274 = vpop.f32.mrf.mxu0
        %v3275 = vadd.f32 %v3226, %v3274
        %3276 = vmatmul.bf16.gmra.mxu0 %v3194
        %v3277 = vpop.f32.mrf.mxu0
        %v3278 = vadd.f32 %v3229, %v3277
        %v3279 = vpop.f32.mrf.mxu0
        %v3280 = vadd.f32 %v3231, %v3279
        %3281 = vmatmul.bf16.gmra.mxu0 %v3197
        %v3282 = vpop.f32.mrf.mxu0
        %v3283 = vadd.f32 %v3234, %v3282
        %v3284 = vpop.f32.mrf.mxu0
        %v3285 = vadd.f32 %v3236, %v3284
        %3286 = vmatmul.bf16.gmra.mxu0 %v3200
        %v3287 = vpop.f32.mrf.mxu0
        %v3288 = vadd.f32 %v3239, %v3287
        %v3289 = vpop.f32.mrf.mxu0
        %v3290 = vadd.f32 %v3241, %v3289
        %3291 = vmatmul.bf16.gmra.mxu0 %v3203
        %v3292 = vpop.f32.mrf.mxu0
        %v3293 = vadd.f32 %v3244, %v3292
        %v3294 = vpop.f32.mrf.mxu0
        %v3295 = vadd.f32 %v3246, %v3294
        %3296 = vmatmul.bf16.gmra.mxu0 %v3206
        %v3297 = vpop.f32.mrf.mxu0
        %v3298 = vadd.f32 %v3249, %v3297
        %v3299 = vpop.f32.mrf.mxu0
        %v3300 = vadd.f32 %v3251, %v3299
        %3301 = vmatmul.bf16.gmra.mxu0 %v3209
        %v3302 = vpop.f32.mrf.mxu0
        %v3303 = vadd.f32 %v3254, %v3302
        %v3304 = vpop.f32.mrf.mxu0
        %v3305 = vadd.f32 %v3256, %v3304
        %3306 = vmatmul.bf16.gmra.mxu0 %v3212
        %v3307 = vpop.f32.mrf.mxu0
        %v3308 = vadd.f32 %v3259, %v3307
        %v3309 = vpop.f32.mrf.mxu0
        %v3310 = vadd.f32 %v3261, %v3309
        %3311 = vdwg.mxu0
        %v3312 = vadd.f32 %v2973, %v3273
        %v3313 = vadd.f32 %v2974, %v3275
        %v3314 = vadd.f32 %v2975, %v3278
        %v3315 = vadd.f32 %v2976, %v3280
        %v3316 = vadd.f32 %v2977, %v3283
        %v3317 = vadd.f32 %v2978, %v3285
        %v3318 = vadd.f32 %v2979, %v3288
        %v3319 = vadd.f32 %v2980, %v3290
        %v3320 = vadd.f32 %v2981, %v3293
        %v3321 = vadd.f32 %v2982, %v3295
        %v3322 = vadd.f32 %v2983, %v3298
        %v3323 = vadd.f32 %v2984, %v3300
        %v3324 = vadd.f32 %v2985, %v3303
        %v3325 = vadd.f32 %v2986, %v3305
        %v3326 = vadd.f32 %v2987, %v3308
        %v3327 = vadd.f32 %v2988, %v3310
        %v3328 = vld [vmem:[%s1077] sm:$0x1]
        %v3330 = vperm.slane %v3328, 0
        %v3332 = vadd.f32 %v3312, %v3330
        %v3333 = vadd.f32 %v3313, %v3330
        %v3334 = vadd.f32 %v3314, %v3330
        %v3335 = vadd.f32 %v3315, %v3330
        %v3336 = vadd.f32 %v3316, %v3330
        %v3337 = vadd.f32 %v3317, %v3330
        %v3338 = vadd.f32 %v3318, %v3330
        %v3339 = vadd.f32 %v3319, %v3330
        %v3340 = vadd.f32 %v3320, %v3330
        %v3341 = vadd.f32 %v3321, %v3330
        %v3342 = vadd.f32 %v3322, %v3330
        %v3343 = vadd.f32 %v3323, %v3330
        %v3344 = vadd.f32 %v3324, %v3330
        %v3345 = vadd.f32 %v3325, %v3330
        %v3346 = vadd.f32 %v3326, %v3330
        %v3347 = vadd.f32 %v3327, %v3330
        %v3348 = vld [vmem:[%s1080] sm:$0x1]
        %v3349 = vld [vmem:[%s1083] sm:$0x1]
        %v3350 = vadd.f32 %v3332, %v3333
        %v3351 = vadd.f32 %v3350, %v3334
        %v3352 = vadd.f32 %v3351, %v3335
        %v3353 = vadd.f32 %v3352, %v3336
        %v3354 = vadd.f32 %v3353, %v3337
        %v3355 = vadd.f32 %v3354, %v3338
        %v3356 = vadd.f32 %v3355, %v3339
        %v3357 = vadd.f32 %v3356, %v3340
        %v3358 = vadd.f32 %v3357, %v3341
        %v3359 = vadd.f32 %v3358, %v3342
        %v3360 = vadd.f32 %v3359, %v3343
        %v3361 = vadd.f32 %v3360, %v3344
        %v3362 = vadd.f32 %v3361, %v3345
        %v3363 = vadd.f32 %v3362, %v3346
        %v3364 = vadd.f32 %v3363, %v3347
        %v3365 = vrot.slane %v3364, 4
        %v3366 = vadd.f32 %v3364, %v3365
        %v3367 = vrot.slane %v3366, 2
        %v3368 = vadd.f32 %v3366, %v3367
        %v3369 = vrot.slane %v3368, 1
        %v3370 = vadd.f32 %v3368, %v3369
        %v3371 = vmul.f32 %v3370, 0.0078125
        %v3372 = vsub.f32 %v3332, %v3371
        %v3373 = vsub.f32 %v3333, %v3371
        %v3374 = vsub.f32 %v3334, %v3371
        %v3375 = vsub.f32 %v3335, %v3371
        %v3376 = vsub.f32 %v3336, %v3371
        %v3377 = vsub.f32 %v3337, %v3371
        %v3378 = vsub.f32 %v3338, %v3371
        %v3379 = vsub.f32 %v3339, %v3371
        %v3380 = vsub.f32 %v3340, %v3371
        %v3381 = vsub.f32 %v3341, %v3371
        %v3382 = vsub.f32 %v3342, %v3371
        %v3383 = vsub.f32 %v3343, %v3371
        %v3384 = vsub.f32 %v3344, %v3371
        %v3385 = vsub.f32 %v3345, %v3371
        %v3386 = vsub.f32 %v3346, %v3371
        %v3387 = vsub.f32 %v3347, %v3371
        %v3388 = vmul.f32 %v3372, %v3372
        %v3389 = vmul.f32 %v3373, %v3373
        %v3390 = vmul.f32 %v3374, %v3374
        %v3391 = vmul.f32 %v3375, %v3375
        %v3392 = vmul.f32 %v3376, %v3376
        %v3393 = vmul.f32 %v3377, %v3377
        %v3394 = vmul.f32 %v3378, %v3378
        %v3395 = vmul.f32 %v3379, %v3379
        %v3396 = vmul.f32 %v3380, %v3380
        %v3397 = vmul.f32 %v3381, %v3381
        %v3398 = vmul.f32 %v3382, %v3382
        %v3399 = vmul.f32 %v3383, %v3383
        %v3400 = vmul.f32 %v3384, %v3384
        %v3401 = vmul.f32 %v3385, %v3385
        %v3402 = vmul.f32 %v3386, %v3386
        %v3403 = vmul.f32 %v3387, %v3387
        %v3404 = vadd.f32 %v3388, %v3389
        %v3405 = vadd.f32 %v3404, %v3390
        %v3406 = vadd.f32 %v3405, %v3391
        %v3407 = vadd.f32 %v3406, %v3392
        %v3408 = vadd.f32 %v3407, %v3393
        %v3409 = vadd.f32 %v3408, %v3394
        %v3410 = vadd.f32 %v3409, %v3395
        %v3411 = vadd.f32 %v3410, %v3396
        %v3412 = vadd.f32 %v3411, %v3397
        %v3413 = vadd.f32 %v3412, %v3398
        %v3414 = vadd.f32 %v3413, %v3399
        %v3415 = vadd.f32 %v3414, %v3400
        %v3416 = vadd.f32 %v3415, %v3401
        %v3417 = vadd.f32 %v3416, %v3402
        %v3418 = vadd.f32 %v3417, %v3403
        %v3419 = vrot.slane %v3418, 4
        %v3420 = vadd.f32 %v3418, %v3419
        %v3421 = vrot.slane %v3420, 2
        %v3422 = vadd.f32 %v3420, %v3421
        %v3423 = vrot.slane %v3422, 1
        %v3424 = vadd.f32 %v3422, %v3423
        %v3425 = vmul.f32 %v3424, 0.0078125
        %v3426 = vadd.f32 %v3425, 1e-05
        %v3427 = vrsqrt.pop %v3426
        %v3428 = vmul.f32 %v3427, %v3426
        %v3429 = vmul.f32 %v3428, %v3427
        %v3430 = vmul.f32 0.5, %v3429
        %v3431 = vsub.f32 1.5, %v3430
        %v3432 = vmul.f32 %v3427, %v3431
        %vm3433 = vweird.f32 %v3426
        %vm3434 = vweird.f32 %v3427
        %vm3435 = vmor %vm3433, %vm3434
        %v3436 = vsel %vm3435, %v3427, %v3432
        %v3437 = vmul.f32 %v3436, %v3348
        %v3438 = vperm.slane %v3437, 0
        %v3439 = vmul.f32 %v3372, %v3438
        %v3440 = vmul.f32 %v3373, %v3438
        %v3441 = vmul.f32 %v3374, %v3438
        %v3442 = vmul.f32 %v3375, %v3438
        %v3443 = vmul.f32 %v3376, %v3438
        %v3444 = vmul.f32 %v3377, %v3438
        %v3445 = vmul.f32 %v3378, %v3438
        %v3446 = vmul.f32 %v3379, %v3438
        %v3447 = vmul.f32 %v3380, %v3438
        %v3448 = vmul.f32 %v3381, %v3438
        %v3449 = vmul.f32 %v3382, %v3438
        %v3450 = vmul.f32 %v3383, %v3438
        %v3451 = vmul.f32 %v3384, %v3438
        %v3452 = vmul.f32 %v3385, %v3438
        %v3453 = vmul.f32 %v3386, %v3438
        %v3454 = vmul.f32 %v3387, %v3438
        %v3456 = vperm.slane %v3349, 0
        %v3458 = vadd.f32 %v3439, %v3456
        %v3459 = vadd.f32 %v3440, %v3456
        %v3460 = vadd.f32 %v3441, %v3456
        %v3461 = vadd.f32 %v3442, %v3456
        %v3462 = vadd.f32 %v3443, %v3456
        %v3463 = vadd.f32 %v3444, %v3456
        %v3464 = vadd.f32 %v3445, %v3456
        %v3465 = vadd.f32 %v3446, %v3456
        %v3466 = vadd.f32 %v3447, %v3456
        %v3467 = vadd.f32 %v3448, %v3456
        %v3468 = vadd.f32 %v3449, %v3456
        %v3469 = vadd.f32 %v3450, %v3456
        %v3470 = vadd.f32 %v3451, %v3456
        %v3471 = vadd.f32 %v3452, %v3456
        %v3472 = vadd.f32 %v3453, %v3456
        %v3473 = vadd.f32 %v3454, %v3456
        %v3474 = vmax.f32 %v3458, 0.0
        %v3475 = vmax.f32 %v3459, 0.0
        %v3476 = vmax.f32 %v3460, 0.0
        %v3477 = vmax.f32 %v3461, 0.0
        %v3478 = vmax.f32 %v3462, 0.0
        %v3479 = vmax.f32 %v3463, 0.0
        %v3480 = vmax.f32 %v3464, 0.0
        %v3481 = vmax.f32 %v3465, 0.0
        %v3482 = vmax.f32 %v3466, 0.0
        %v3483 = vmax.f32 %v3467, 0.0
        %v3484 = vmax.f32 %v3468, 0.0
        %v3485 = vmax.f32 %v3469, 0.0
        %v3486 = vmax.f32 %v3470, 0.0
        %v3487 = vmax.f32 %v3471, 0.0
        %v3488 = vmax.f32 %v3472, 0.0
        %v3489 = vmax.f32 %v3473, 0.0
        %3490 = vst [vmem:[%s1074] sm:$0xff] %v3474
        %3491 = vst [vmem:[%s1074 + $0x8] sm:$0xff] %v3475
        %3492 = vst [vmem:[%s1074 + $0x10] sm:$0xff] %v3476
        %3493 = vst [vmem:[%s1074 + $0x18] sm:$0xff] %v3477
        %3494 = vst [vmem:[%s1074 + $0x20] sm:$0xff] %v3478
        %3495 = vst [vmem:[%s1074 + $0x28] sm:$0xff] %v3479
        %3496 = vst [vmem:[%s1074 + $0x30] sm:$0xff] %v3480
        %3497 = vst [vmem:[%s1074 + $0x38] sm:$0xff] %v3481
        %3498 = vst [vmem:[%s1074 + $0x40] sm:$0xff] %v3482
        %3499 = vst [vmem:[%s1074 + $0x48] sm:$0xff] %v3483
        %3500 = vst [vmem:[%s1074 + $0x50] sm:$0xff] %v3484
        %3501 = vst [vmem:[%s1074 + $0x58] sm:$0xff] %v3485
        %3502 = vst [vmem:[%s1074 + $0x60] sm:$0xff] %v3486
        %3503 = vst [vmem:[%s1074 + $0x68] sm:$0xff] %v3487
        %3504 = vst [vmem:[%s1074 + $0x70] sm:$0xff] %v3488
        %3505 = vst [vmem:[%s1074 + $0x78] sm:$0xff] %v3489
        %s3506 = sand.u32 %s149, 1
        %s3507 = sand.u32 %s149, 1
        %s3508 = smul.addr %s3507, 128
        %s3509 = scalar_lea.vmem [#allocation3], %s3508
        // Predicated region
        $region82: #{inception_b_forward.12} parent=76 // pred_check
          %p3510 = pneg %p159
        $region83: #{inception_b_forward.12} parent=76 // pred_check_branch
          %3512 = sbr.rel (%p3510) target = $region85
        $region84: #{inception_b_forward.12} parent=76 // pred_region
          %s3513 = smul.addr %s16, 8
          %s3514 = scalar_lea.vmem %s5, %s3513
          // Predicated region
          $region86: #{inception_b_forward.12} parent=84 // pred_check
            _
          $region87: #{inception_b_forward.12} parent=84 // pred_check_branch
            %3516 = sbr.rel (0) target = $region89
          $region88: #{inception_b_forward.12} parent=84 // pred_region
            // Predicated region
            $region90: #{inception_b_forward.12} parent=88 // pred_check
              _
            $region91: #{inception_b_forward.12} parent=88 // pred_check_branch
              %3518 = sbr.rel (0) target = $region93
            $region92: #{inception_b_forward.12} parent=88 // pred_region
              // Predicated region
              $region105: #{inception_b_forward.12} parent=92 // pred_check
                _
              $region106: #{inception_b_forward.12} parent=92 // pred_check_branch
                %3564 = sbr.rel (0) target = $region108
              $region107: #{inception_b_forward.12} parent=92 // pred_region
                loop: start=0, step=1, limit=1
                $region109: #{inception_b_forward.12} parent=107 // loop_pre_header
                  _
                $region110: #{inception_b_forward.12} parent=107 // loop_header
                  %s3566 = sphi 0, %s3570
                  %p3567 = scmp.ge.s32.totalorder %s3566, 1
                  %s3571 = sphi %s3509, %s3509
                  %s3572 = sphi %s3514, %s3514
                $region111: #{inception_b_forward.12} parent=107 // loop_header_branch
                  %3569 = sbr.rel (%p3567) target = $region115
                $region112: #{inception_b_forward.12} parent=107 // loop_body
                  %v3573 = vld [vmem:[%s3571] sm:$0xff]
                  %3574 = vst [vmem:[%s3572] sm:$0xff] %v3573
                  %v3575 = vld [vmem:[%s3571 + $0x8] sm:$0xff]
                  %3576 = vst [vmem:[%s3572 + $0x10] sm:$0xff] %v3575
                  %v3577 = vld [vmem:[%s3571 + $0x10] sm:$0xff]
                  %3578 = vst [vmem:[%s3572 + $0x20] sm:$0xff] %v3577
                  %v3579 = vld [vmem:[%s3571 + $0x18] sm:$0xff]
                  %3580 = vst [vmem:[%s3572 + $0x30] sm:$0xff] %v3579
                  %v3581 = vld [vmem:[%s3571 + $0x20] sm:$0xff]
                  %3582 = vst [vmem:[%s3572 + $0x40] sm:$0xff] %v3581
                  %v3583 = vld [vmem:[%s3571 + $0x28] sm:$0xff]
                  %3584 = vst [vmem:[%s3572 + $0x50] sm:$0xff] %v3583
                  %v3585 = vld [vmem:[%s3571 + $0x30] sm:$0xff]
                  %3586 = vst [vmem:[%s3572 + $0x60] sm:$0xff] %v3585
                  %v3587 = vld [vmem:[%s3571 + $0x38] sm:$0xff]
                  %3588 = vst [vmem:[%s3572 + $0x70] sm:$0xff] %v3587
                  %v3589 = vld [vmem:[%s3571 + $0x40] sm:$0xff]
                  %3590 = vst [vmem:[%s3572 + $0x80] sm:$0xff] %v3589
                  %v3591 = vld [vmem:[%s3571 + $0x48] sm:$0xff]
                  %3592 = vst [vmem:[%s3572 + $0x90] sm:$0xff] %v3591
                  %v3593 = vld [vmem:[%s3571 + $0x50] sm:$0xff]
                  %3594 = vst [vmem:[%s3572 + $0xa0] sm:$0xff] %v3593
                  %v3595 = vld [vmem:[%s3571 + $0x58] sm:$0xff]
                  %3596 = vst [vmem:[%s3572 + $0xb0] sm:$0xff] %v3595
                  %v3597 = vld [vmem:[%s3571 + $0x60] sm:$0xff]
                  %3598 = vst [vmem:[%s3572 + $0xc0] sm:$0xff] %v3597
                  %v3599 = vld [vmem:[%s3571 + $0x68] sm:$0xff]
                  %3600 = vst [vmem:[%s3572 + $0xd0] sm:$0xff] %v3599
                  %v3601 = vld [vmem:[%s3571 + $0x70] sm:$0xff]
                  %3602 = vst [vmem:[%s3572 + $0xe0] sm:$0xff] %v3601
                  %v3603 = vld [vmem:[%s3571 + $0x78] sm:$0xff]
                  %3604 = vst [vmem:[%s3572 + $0xf0] sm:$0xff] %v3603
                $region113: #{inception_b_forward.12} parent=107 // loop_footer
                  %s3570 = sadd.s32 1, %s3566
                $region114: #{inception_b_forward.12} parent=107 // loop_footer_branch
                  %3565 = sbr.rel target = $region110
                $region115: #{inception_b_forward.12} parent=107 // loop_exit
                  _
              $region108: #{inception_b_forward.12} parent=92 // pred_fallthru
                _
              // Predicated region
              $region116: #{inception_b_forward.12} parent=92 // pred_check
                _
              $region117: #{inception_b_forward.12} parent=92 // pred_check_branch
                %3606 = sbr.rel target = $region119
              $region118: #{inception_b_forward.12} parent=92 // pred_region
                _
              $region119: #{inception_b_forward.12} parent=92 // pred_fallthru
                _
            $region93: #{inception_b_forward.12} parent=88 // pred_fallthru
              _
            // Predicated region
            $region94: #{inception_b_forward.12} parent=88 // pred_check
              _
            $region95: #{inception_b_forward.12} parent=88 // pred_check_branch
              %3520 = sbr.rel target = $region97
            $region96: #{inception_b_forward.12} parent=88 // pred_region
              %s3522 = ssub.s32 256, 1
              loop: start=0, step=1, limit=1
              $region98: #{inception_b_forward.12} parent=96 // loop_pre_header
                _
              $region99: #{inception_b_forward.12} parent=96 // loop_header
                %s3524 = sphi 0, %s3528
                %p3525 = scmp.ge.s32.totalorder %s3524, 1
                %s3529 = sphi %s3509, %s3509
                %s3530 = sphi %s3514, %s3514
              $region100: #{inception_b_forward.12} parent=96 // loop_header_branch
                %3527 = sbr.rel (%p3525) target = $region104
              $region101: #{inception_b_forward.12} parent=96 // loop_body
                %v3531 = vld [vmem:[%s3529] sm:%s3522]
                %3532 = vst [vmem:[%s3530] sm:%s3522] %v3531
                %v3533 = vld [vmem:[%s3529 + $0x8] sm:%s3522]
                %3534 = vst [vmem:[%s3530 + $0x10] sm:%s3522] %v3533
                %v3535 = vld [vmem:[%s3529 + $0x10] sm:%s3522]
                %3536 = vst [vmem:[%s3530 + $0x20] sm:%s3522] %v3535
                %v3537 = vld [vmem:[%s3529 + $0x18] sm:%s3522]
                %3538 = vst [vmem:[%s3530 + $0x30] sm:%s3522] %v3537
                %v3539 = vld [vmem:[%s3529 + $0x20] sm:%s3522]
                %3540 = vst [vmem:[%s3530 + $0x40] sm:%s3522] %v3539
                %v3541 = vld [vmem:[%s3529 + $0x28] sm:%s3522]
                %3542 = vst [vmem:[%s3530 + $0x50] sm:%s3522] %v3541
                %v3543 = vld [vmem:[%s3529 + $0x30] sm:%s3522]
                %3544 = vst [vmem:[%s3530 + $0x60] sm:%s3522] %v3543
                %v3545 = vld [vmem:[%s3529 + $0x38] sm:%s3522]
                %3546 = vst [vmem:[%s3530 + $0x70] sm:%s3522] %v3545
                %v3547 = vld [vmem:[%s3529 + $0x40] sm:%s3522]
                %3548 = vst [vmem:[%s3530 + $0x80] sm:%s3522] %v3547
                %v3549 = vld [vmem:[%s3529 + $0x48] sm:%s3522]
                %3550 = vst [vmem:[%s3530 + $0x90] sm:%s3522] %v3549
                %v3551 = vld [vmem:[%s3529 + $0x50] sm:%s3522]
                %3552 = vst [vmem:[%s3530 + $0xa0] sm:%s3522] %v3551
                %v3553 = vld [vmem:[%s3529 + $0x58] sm:%s3522]
                %3554 = vst [vmem:[%s3530 + $0xb0] sm:%s3522] %v3553
                %v3555 = vld [vmem:[%s3529 + $0x60] sm:%s3522]
                %3556 = vst [vmem:[%s3530 + $0xc0] sm:%s3522] %v3555
                %v3557 = vld [vmem:[%s3529 + $0x68] sm:%s3522]
                %3558 = vst [vmem:[%s3530 + $0xd0] sm:%s3522] %v3557
                %v3559 = vld [vmem:[%s3529 + $0x70] sm:%s3522]
                %3560 = vst [vmem:[%s3530 + $0xe0] sm:%s3522] %v3559
                %v3561 = vld [vmem:[%s3529 + $0x78] sm:%s3522]
                %3562 = vst [vmem:[%s3530 + $0xf0] sm:%s3522] %v3561
              $region102: #{inception_b_forward.12} parent=96 // loop_footer
                %s3528 = sadd.s32 1, %s3524
              $region103: #{inception_b_forward.12} parent=96 // loop_footer_branch
                %3523 = sbr.rel target = $region99
              $region104: #{inception_b_forward.12} parent=96 // loop_exit
                _
            $region97: #{inception_b_forward.12} parent=88 // pred_fallthru
              _
          $region89: #{inception_b_forward.12} parent=84 // pred_fallthru
            _
          %3607 = vnop
        $region85: #{inception_b_forward.12} parent=76 // pred_fallthru
          _
      $region77: #{inception_b_forward.12} parent=5 // pred_fallthru
        _
      %p3608 = scmp.le.s32.totalorder 2, %s11
      // Predicated region
      $region120: #{inception_b_forward.12} parent=5 // pred_check
        %p3609 = pneg %p3608
      $region121: #{inception_b_forward.12} parent=5 // pred_check_branch
        %3611 = sbr.rel (%p3609) target = $region123
      $region122: #{inception_b_forward.12} parent=5 // pred_region
        %s3612 = ssub.s32 %s11, 2
        // Predicated region
        $region124: #{inception_b_forward.12} parent=122 // pred_check
          %p3613 = pneg %p165
        $region125: #{inception_b_forward.12} parent=122 // pred_check_branch
          %3615 = sbr.rel (%p3613) target = $region127
        $region126: #{inception_b_forward.12} parent=122 // pred_region
          %s3616 = sand.u32 %s150, 1
          %s3617 = sand.u32 %s150, 1
          %s3618 = smul.addr %s3617, 128
          %s3619 = scalar_lea.vmem [#allocation3], %s3618
        $region127: #{inception_b_forward.12} parent=122 // pred_fallthru
          _
      $region123: #{inception_b_forward.12} parent=5 // pred_fallthru
        _
    $region6: #{inception_b_forward.12} parent=1 // loop_footer
      %s15 = sadd.s32 1, %s11
    $region7: #{inception_b_forward.12} parent=1 // loop_footer_branch
      %10 = sbr.rel target = $region3
    $region8: #{inception_b_forward.12} parent=1 // loop_exit
      _

</llo_original>
